<compile_context>
chip_gen: v6e
topology: v6e:2x2x1
jax: 0.10.0
libtpu: 0.0.40
codegen_flags: <defaults>
</compile_context>

<pallas_src>
import jax
import jax.numpy as jnp
from jax.experimental import pallas as pl
from jax.experimental.pallas import tpu as pltpu

BN_EPS = 1e-5
_TAPS = tuple((dh, dw) for dh in range(3) for dw in range(3))


# ----------------------------- in-kernel helpers -----------------------------

def _conv3x3(pad_ref, w_all, n, h, w, cin, cout):
    """3x3 'same' conv as 9 tap-wise (M,Cin)@(Cin,Cout) f32 matmuls over the halo scratch."""
    m = n * h * w
    acc = jnp.zeros((m, cout), jnp.float32)
    for t, (dh, dw) in enumerate(_TAPS):
        a_t = pad_ref[:, dh:dh + h, dw:dw + w, :].reshape(m, cin)
        acc = acc + jnp.dot(a_t, w_all[t], preferred_element_type=jnp.float32)
    return acc                                                    # (m, cout) f32


def _bn_relu(acc, gamma, beta, m):
    """Training-mode BatchNorm (batch mean, biased var) + ReLU, stats computed in-kernel."""
    inv_m = 1.0 / m
    mean = jnp.sum(acc, axis=0, keepdims=True) * inv_m            # (1, c)
    var = jnp.maximum(jnp.sum(acc * acc, axis=0, keepdims=True) * inv_m - mean * mean, 0.0)
    scale = gamma * jax.lax.rsqrt(var + BN_EPS)
    shift = beta - mean * scale
    return jnp.maximum(acc * scale + shift, 0.0)                  # (m, c)


# ----------------------------- fused Down-stage kernel -----------------------------

def _down_stage_kernel(x_ref, w1_ref, g1_ref, bt1_ref, w2_ref, g2_ref, bt2_ref,
                       o_ref, pad1_ref, pad2_ref):
    # x_ref: (n, 2h, w, 2*cin) -- the 2x2-window W-pairs are folded onto the lane axis
    n, h2, w, c2 = x_ref.shape
    h, cin = h2 // 2, c2 // 2
    c1 = w1_ref.shape[-1]
    cout = w2_ref.shape[-1]
    m = float(n * h * w)

    # ---- MaxPool2d(2) ----
    x = x_ref[...].reshape(n, h, 2, w, c2)                        # split H into row pairs (outer dim)
    hm = jnp.maximum(x[:, :, 0, :, :], x[:, :, 1, :, :])          # (n, h, w, 2*cin)
    pooled = jnp.maximum(hm[:, :, :, :cin], hm[:, :, :, cin:])    # (n, h, w, cin)

    # ---- conv1 (bias dropped: cancels exactly under training-mode BN) ----
    pad1_ref[...] = jnp.zeros(pad1_ref.shape, pad1_ref.dtype)     # zero halo (single invocation)
    pad1_ref[:, 1:h + 1, 1:w + 1, :] = pooled
    acc1 = _conv3x3(pad1_ref, w1_ref[...], n, h, w, cin, c1)      # (n*h*w, c1)

    # ---- BN1 + ReLU (in-kernel batch stats) ----
    a1 = _bn_relu(acc1, g1_ref[...], bt1_ref[...], m)

    # ---- conv2 ----
    pad2_ref[...] = jnp.zeros(pad2_ref.shape, pad2_ref.dtype)
    pad2_ref[:, 1:h + 1, 1:w + 1, :] = a1.reshape(n, h, w, c1)
    acc2 = _conv3x3(pad2_ref, w2_ref[...], n, h, w, c1, cout)     # (n*h*w, cout)

    # ---- BN2 + ReLU -> stage output ----
    o_ref[...] = _bn_relu(acc2, g2_ref[...], bt2_ref[...], m).reshape(n, h, w, cout)


# ----------------------------- wrapper -----------------------------

def down_stage(x_nhwc, p):
    """One fused pallas_call: MaxPool2d(2) + DoubleConv with training-mode BN."""
    n, H, W, cin = x_nhwc.shape
    He, We = (H // 2) * 2, (W // 2) * 2                           # MaxPool2d floor semantics
    h, w = He // 2, We // 2
    c1 = p["w1"].shape[-1]
    cout = p["w2"].shape[-1]
    xr = x_nhwc[:, :He, :We, :].reshape(n, He, w, 2 * cin)        # free contiguous view

    return pl.pallas_call(
        _down_stage_kernel,
        grid=(1,),                                                # whole batch in one step
        out_shape=jax.ShapeDtypeStruct((n, h, w, cout), jnp.float32),
        in_specs=[
            pl.BlockSpec((n, He, w, 2 * cin), lambda i: (0, 0, 0, 0)),
            pl.BlockSpec((9, cin, c1), lambda i: (0, 0, 0)),
            pl.BlockSpec((1, c1), lambda i: (0, 0)),
            pl.BlockSpec((1, c1), lambda i: (0, 0)),
            pl.BlockSpec((9, c1, cout), lambda i: (0, 0, 0)),
            pl.BlockSpec((1, cout), lambda i: (0, 0)),
            pl.BlockSpec((1, cout), lambda i: (0, 0)),
        ],
        out_specs=pl.BlockSpec((n, h, w, cout), lambda i: (0, 0, 0, 0)),
        scratch_shapes=[
            pltpu.VMEM((n, h + 2, w + 2, cin), jnp.float32),      # conv1 halo
            pltpu.VMEM((n, h + 2, w + 2, c1), jnp.float32),       # conv2 halo
        ],
        compiler_params=pltpu.CompilerParams(dimension_semantics=("arbitrary",)),
    )(xr, p["w1"], p["g1"], p["bt1"], p["w2"], p["g2"], p["bt2"])


def init_params(topology, key):
    n_layers = len(topology)
    params = []
    for idx in range(n_layers):
        in_dim = topology[idx]
        out_dim = topology[idx + 1] if idx != n_layers - 1 else topology[idx]
        key, k1, k2 = jax.random.split(key, 3)
        w1 = 0.1 * jax.random.normal(k1, (3, 3, in_dim, out_dim), jnp.float32)
        w2 = 0.1 * jax.random.normal(k2, (3, 3, out_dim, out_dim), jnp.float32)
        params.append({
            # weights in tap-major layout (9, Cin, Cout); f32 (tiny matmuls, accuracy > speed)
            "w1": w1.reshape(9, in_dim, out_dim),
            "g1": jnp.ones((1, out_dim), jnp.float32),
            "bt1": jnp.zeros((1, out_dim), jnp.float32),
            "w2": w2.reshape(9, out_dim, out_dim),
            "g2": jnp.ones((1, out_dim), jnp.float32),
            "bt2": jnp.zeros((1, out_dim), jnp.float32),
            # conv biases omitted: a per-channel constant before training-mode BN cancels exactly
        })
    return params


def encoder_forward(x_nchw, params):
    """Matches Encoder.forward: returns [deepest, ..., input] as NCHW tensors."""
    x = jnp.transpose(x_nchw, (0, 2, 3, 1))                       # NCHW -> NHWC
    feats = [x]
    for p in params:
        feats.append(down_stage(feats[-1], p))
    feats.reverse()
    return [jnp.transpose(f, (0, 3, 1, 2)) for f in feats]        # back to NCHW


if __name__ == "__main__":
    topology = [4, 8, 16]          # Encoder(topology): down1 4->8, down2 8->16, down3 16->16
    key = jax.random.PRNGKey(0)
    pkey, xkey = jax.random.split(key)
    params = init_params(topology, pkey)
    x = jax.random.normal(xkey, (2, 4, 16, 16), jnp.float32)      # NCHW like the torch module

    outs = jax.jit(encoder_forward)(x, params)
    outs = [jax.block_until_ready(o) for o in outs]

    expected = [(2, 16, 2, 2), (2, 16, 4, 4), (2, 8, 8, 8), (2, 4, 16, 16)]
    assert [tuple(o.shape) for o in outs] == expected, [o.shape for o in outs]
    assert all(bool(jnp.all(jnp.isfinite(o))) for o in outs)
    print("KERNEL_OK")
</pallas_src>

<mosaic_0001>
module attributes {stable_mosaic.version = 11 : i64} {
  func.func @_down_stage_kernel(%arg0: i32, %arg1: memref<2x4x2x32xf32, #tpu.memory_space<vmem>>, %arg2: memref<9x16x16xf32, #tpu.memory_space<vmem>>, %arg3: memref<1x16xf32, #tpu.memory_space<vmem>>, %arg4: memref<1x16xf32, #tpu.memory_space<vmem>>, %arg5: memref<9x16x16xf32, #tpu.memory_space<vmem>>, %arg6: memref<1x16xf32, #tpu.memory_space<vmem>>, %arg7: memref<1x16xf32, #tpu.memory_space<vmem>>, %arg8: memref<2x2x2x16xf32, #tpu.memory_space<vmem>>, %arg9: memref<2x4x4x16xf32, #tpu.memory_space<vmem>>, %arg10: memref<2x4x4x16xf32, #tpu.memory_space<vmem>>) attributes {dimension_semantics = [#tpu.dimension_semantics<arbitrary>], iteration_bounds = array<i64: 1>, scalar_prefetch = 0 : i64, scratch_operands = 2 : i64, tpu.core_type = #tpu.core_type<tc>, window_params = [{pipeline_mode = #tpu.pipeline_mode<synchronous>, transform_indices = @transform_0, window_bounds = array<i64: 2, 4, 2, 32>}, {pipeline_mode = #tpu.pipeline_mode<synchronous>, transform_indices = @transform_1, window_bounds = array<i64: 9, 16, 16>}, {pipeline_mode = #tpu.pipeline_mode<synchronous>, transform_indices = @transform_2, window_bounds = array<i64: 1, 16>}, {pipeline_mode = #tpu.pipeline_mode<synchronous>, transform_indices = @transform_3, window_bounds = array<i64: 1, 16>}, {pipeline_mode = #tpu.pipeline_mode<synchronous>, transform_indices = @transform_4, window_bounds = array<i64: 9, 16, 16>}, {pipeline_mode = #tpu.pipeline_mode<synchronous>, transform_indices = @transform_5, window_bounds = array<i64: 1, 16>}, {pipeline_mode = #tpu.pipeline_mode<synchronous>, transform_indices = @transform_6, window_bounds = array<i64: 1, 16>}, {pipeline_mode = #tpu.pipeline_mode<synchronous>, transform_indices = @transform_7, window_bounds = array<i64: 2, 2, 2, 16>}]} {
    %c0 = arith.constant 0 : index
    %c0_0 = arith.constant 0 : index
    %c0_1 = arith.constant 0 : index
    %c0_2 = arith.constant 0 : index
    %0 = vector.load %arg1[%c0, %c0_0, %c0_1, %c0_2] : memref<2x4x2x32xf32, #tpu.memory_space<vmem>>, vector<2x4x2x32xf32>
    %1 = vector.shape_cast %0 : vector<2x4x2x32xf32> to vector<2x2x2x2x32xf32>
    %2 = vector.extract_strided_slice %1 {offsets = [0, 0, 0, 0, 0], sizes = [2, 2, 1, 2, 32], strides = [1, 1, 1, 1, 1]} : vector<2x2x2x2x32xf32> to vector<2x2x1x2x32xf32>
    %3 = vector.shape_cast %2 : vector<2x2x1x2x32xf32> to vector<2x2x2x32xf32>
    %4 = vector.extract_strided_slice %1 {offsets = [0, 0, 1, 0, 0], sizes = [2, 2, 1, 2, 32], strides = [1, 1, 1, 1, 1]} : vector<2x2x2x2x32xf32> to vector<2x2x1x2x32xf32>
    %5 = vector.shape_cast %4 : vector<2x2x1x2x32xf32> to vector<2x2x2x32xf32>
    %6 = arith.maximumf %3, %5 : vector<2x2x2x32xf32>
    %7 = vector.extract_strided_slice %6 {offsets = [0, 0, 0, 0], sizes = [2, 2, 2, 16], strides = [1, 1, 1, 1]} : vector<2x2x2x32xf32> to vector<2x2x2x16xf32>
    %8 = vector.extract_strided_slice %6 {offsets = [0, 0, 0, 16], sizes = [2, 2, 2, 16], strides = [1, 1, 1, 1]} : vector<2x2x2x32xf32> to vector<2x2x2x16xf32>
    %9 = arith.maximumf %7, %8 : vector<2x2x2x16xf32>
    %cst = arith.constant 0.000000e+00 : f32
    %10 = vector.broadcast %cst : f32 to vector<2x4x4x16xf32>
    %c0_3 = arith.constant 0 : index
    %c0_4 = arith.constant 0 : index
    %c0_5 = arith.constant 0 : index
    %c0_6 = arith.constant 0 : index
    %11 = vector.load %arg9[%c0_3, %c0_4, %c0_5, %c0_6] : memref<2x4x4x16xf32, #tpu.memory_space<vmem>>, vector<2x4x4x16xf32>
    tpu.vector_store %arg9[%c0_3, %c0_4, %c0_5, %c0_6], %10 {strides = array<i32>} : memref<2x4x4x16xf32, #tpu.memory_space<vmem>>, vector<2x4x4x16xf32>,
    %c0_7 = arith.constant 0 : index
    %c1 = arith.constant 1 : index
    %c1_8 = arith.constant 1 : index
    %c0_9 = arith.constant 0 : index
    %12 = vector.load %arg9[%c0_7, %c1, %c1_8, %c0_9] : memref<2x4x4x16xf32, #tpu.memory_space<vmem>>, vector<2x2x2x16xf32>
    tpu.vector_store %arg9[%c0_7, %c1, %c1_8, %c0_9], %9 {strides = array<i32>} : memref<2x4x4x16xf32, #tpu.memory_space<vmem>>, vector<2x2x2x16xf32>,
    %c0_10 = arith.constant 0 : index
    %c0_11 = arith.constant 0 : index
    %c0_12 = arith.constant 0 : index
    %13 = vector.load %arg2[%c0_10, %c0_11, %c0_12] : memref<9x16x16xf32, #tpu.memory_space<vmem>>, vector<9x16x16xf32>
    %cst_13 = arith.constant 0.000000e+00 : f32
    %14 = vector.broadcast %cst_13 : f32 to vector<8x16xf32>
    %c0_14 = arith.constant 0 : index
    %c0_15 = arith.constant 0 : index
    %c0_16 = arith.constant 0 : index
    %c0_17 = arith.constant 0 : index
    %15 = vector.load %arg9[%c0_14, %c0_15, %c0_16, %c0_17] : memref<2x4x4x16xf32, #tpu.memory_space<vmem>>, vector<2x2x2x16xf32>
    %16 = vector.shape_cast %15 : vector<2x2x2x16xf32> to vector<8x16xf32>
    %17 = vector.extract_strided_slice %13 {offsets = [0, 0, 0], sizes = [1, 16, 16], strides = [1, 1, 1]} : vector<9x16x16xf32> to vector<1x16x16xf32>
    %18 = vector.shape_cast %17 : vector<1x16x16xf32> to vector<16x16xf32>
    %cst_18 = arith.constant dense<0.000000e+00> : vector<8x16xf32>
    %19 = tpu.matmul %16, %18, %cst_18 {dimension_numbers = #tpu.dot_dimension_numbers<[1], [0], [0], [1], [0, 0, 1, 1], [], []>} : vector<8x16xf32>, vector<16x16xf32>, vector<8x16xf32> -> vector<8x16xf32>
    %20 = arith.addf %14, %19 : vector<8x16xf32>
    %c0_19 = arith.constant 0 : index
    %c0_20 = arith.constant 0 : index
    %c1_21 = arith.constant 1 : index
    %c0_22 = arith.constant 0 : index
    %21 = vector.load %arg9[%c0_19, %c0_20, %c1_21, %c0_22] : memref<2x4x4x16xf32, #tpu.memory_space<vmem>>, vector<2x2x2x16xf32>
    %22 = vector.shape_cast %21 : vector<2x2x2x16xf32> to vector<8x16xf32>
    %23 = vector.extract_strided_slice %13 {offsets = [1, 0, 0], sizes = [1, 16, 16], strides = [1, 1, 1]} : vector<9x16x16xf32> to vector<1x16x16xf32>
    %24 = vector.shape_cast %23 : vector<1x16x16xf32> to vector<16x16xf32>
    %cst_23 = arith.constant dense<0.000000e+00> : vector<8x16xf32>
    %25 = tpu.matmul %22, %24, %cst_23 {dimension_numbers = #tpu.dot_dimension_numbers<[1], [0], [0], [1], [0, 0, 1, 1], [], []>} : vector<8x16xf32>, vector<16x16xf32>, vector<8x16xf32> -> vector<8x16xf32>
    %26 = arith.addf %20, %25 : vector<8x16xf32>
    %c0_24 = arith.constant 0 : index
    %c0_25 = arith.constant 0 : index
    %c2 = arith.constant 2 : index
    %c0_26 = arith.constant 0 : index
    %27 = vector.load %arg9[%c0_24, %c0_25, %c2, %c0_26] : memref<2x4x4x16xf32, #tpu.memory_space<vmem>>, vector<2x2x2x16xf32>
    %28 = vector.shape_cast %27 : vector<2x2x2x16xf32> to vector<8x16xf32>
    %29 = vector.extract_strided_slice %13 {offsets = [2, 0, 0], sizes = [1, 16, 16], strides = [1, 1, 1]} : vector<9x16x16xf32> to vector<1x16x16xf32>
    %30 = vector.shape_cast %29 : vector<1x16x16xf32> to vector<16x16xf32>
    %cst_27 = arith.constant dense<0.000000e+00> : vector<8x16xf32>
    %31 = tpu.matmul %28, %30, %cst_27 {dimension_numbers = #tpu.dot_dimension_numbers<[1], [0], [0], [1], [0, 0, 1, 1], [], []>} : vector<8x16xf32>, vector<16x16xf32>, vector<8x16xf32> -> vector<8x16xf32>
    %32 = arith.addf %26, %31 : vector<8x16xf32>
    %c0_28 = arith.constant 0 : index
    %c1_29 = arith.constant 1 : index
    %c0_30 = arith.constant 0 : index
    %c0_31 = arith.constant 0 : index
    %33 = vector.load %arg9[%c0_28, %c1_29, %c0_30, %c0_31] : memref<2x4x4x16xf32, #tpu.memory_space<vmem>>, vector<2x2x2x16xf32>
    %34 = vector.shape_cast %33 : vector<2x2x2x16xf32> to vector<8x16xf32>
    %35 = vector.extract_strided_slice %13 {offsets = [3, 0, 0], sizes = [1, 16, 16], strides = [1, 1, 1]} : vector<9x16x16xf32> to vector<1x16x16xf32>
    %36 = vector.shape_cast %35 : vector<1x16x16xf32> to vector<16x16xf32>
    %cst_32 = arith.constant dense<0.000000e+00> : vector<8x16xf32>
    %37 = tpu.matmul %34, %36, %cst_32 {dimension_numbers = #tpu.dot_dimension_numbers<[1], [0], [0], [1], [0, 0, 1, 1], [], []>} : vector<8x16xf32>, vector<16x16xf32>, vector<8x16xf32> -> vector<8x16xf32>
    %38 = arith.addf %32, %37 : vector<8x16xf32>
    %c0_33 = arith.constant 0 : index
    %c1_34 = arith.constant 1 : index
    %c1_35 = arith.constant 1 : index
    %c0_36 = arith.constant 0 : index
    %39 = vector.load %arg9[%c0_33, %c1_34, %c1_35, %c0_36] : memref<2x4x4x16xf32, #tpu.memory_space<vmem>>, vector<2x2x2x16xf32>
    %40 = vector.shape_cast %39 : vector<2x2x2x16xf32> to vector<8x16xf32>
    %41 = vector.extract_strided_slice %13 {offsets = [4, 0, 0], sizes = [1, 16, 16], strides = [1, 1, 1]} : vector<9x16x16xf32> to vector<1x16x16xf32>
    %42 = vector.shape_cast %41 : vector<1x16x16xf32> to vector<16x16xf32>
    %cst_37 = arith.constant dense<0.000000e+00> : vector<8x16xf32>
    %43 = tpu.matmul %40, %42, %cst_37 {dimension_numbers = #tpu.dot_dimension_numbers<[1], [0], [0], [1], [0, 0, 1, 1], [], []>} : vector<8x16xf32>, vector<16x16xf32>, vector<8x16xf32> -> vector<8x16xf32>
    %44 = arith.addf %38, %43 : vector<8x16xf32>
    %c0_38 = arith.constant 0 : index
    %c1_39 = arith.constant 1 : index
    %c2_40 = arith.constant 2 : index
    %c0_41 = arith.constant 0 : index
    %45 = vector.load %arg9[%c0_38, %c1_39, %c2_40, %c0_41] : memref<2x4x4x16xf32, #tpu.memory_space<vmem>>, vector<2x2x2x16xf32>
    %46 = vector.shape_cast %45 : vector<2x2x2x16xf32> to vector<8x16xf32>
    %47 = vector.extract_strided_slice %13 {offsets = [5, 0, 0], sizes = [1, 16, 16], strides = [1, 1, 1]} : vector<9x16x16xf32> to vector<1x16x16xf32>
    %48 = vector.shape_cast %47 : vector<1x16x16xf32> to vector<16x16xf32>
    %cst_42 = arith.constant dense<0.000000e+00> : vector<8x16xf32>
    %49 = tpu.matmul %46, %48, %cst_42 {dimension_numbers = #tpu.dot_dimension_numbers<[1], [0], [0], [1], [0, 0, 1, 1], [], []>} : vector<8x16xf32>, vector<16x16xf32>, vector<8x16xf32> -> vector<8x16xf32>
    %50 = arith.addf %44, %49 : vector<8x16xf32>
    %c0_43 = arith.constant 0 : index
    %c2_44 = arith.constant 2 : index
    %c0_45 = arith.constant 0 : index
    %c0_46 = arith.constant 0 : index
    %51 = vector.load %arg9[%c0_43, %c2_44, %c0_45, %c0_46] : memref<2x4x4x16xf32, #tpu.memory_space<vmem>>, vector<2x2x2x16xf32>
    %52 = vector.shape_cast %51 : vector<2x2x2x16xf32> to vector<8x16xf32>
    %53 = vector.extract_strided_slice %13 {offsets = [6, 0, 0], sizes = [1, 16, 16], strides = [1, 1, 1]} : vector<9x16x16xf32> to vector<1x16x16xf32>
    %54 = vector.shape_cast %53 : vector<1x16x16xf32> to vector<16x16xf32>
    %cst_47 = arith.constant dense<0.000000e+00> : vector<8x16xf32>
    %55 = tpu.matmul %52, %54, %cst_47 {dimension_numbers = #tpu.dot_dimension_numbers<[1], [0], [0], [1], [0, 0, 1, 1], [], []>} : vector<8x16xf32>, vector<16x16xf32>, vector<8x16xf32> -> vector<8x16xf32>
    %56 = arith.addf %50, %55 : vector<8x16xf32>
    %c0_48 = arith.constant 0 : index
    %c2_49 = arith.constant 2 : index
    %c1_50 = arith.constant 1 : index
    %c0_51 = arith.constant 0 : index
    %57 = vector.load %arg9[%c0_48, %c2_49, %c1_50, %c0_51] : memref<2x4x4x16xf32, #tpu.memory_space<vmem>>, vector<2x2x2x16xf32>
    %58 = vector.shape_cast %57 : vector<2x2x2x16xf32> to vector<8x16xf32>
    %59 = vector.extract_strided_slice %13 {offsets = [7, 0, 0], sizes = [1, 16, 16], strides = [1, 1, 1]} : vector<9x16x16xf32> to vector<1x16x16xf32>
    %60 = vector.shape_cast %59 : vector<1x16x16xf32> to vector<16x16xf32>
    %cst_52 = arith.constant dense<0.000000e+00> : vector<8x16xf32>
    %61 = tpu.matmul %58, %60, %cst_52 {dimension_numbers = #tpu.dot_dimension_numbers<[1], [0], [0], [1], [0, 0, 1, 1], [], []>} : vector<8x16xf32>, vector<16x16xf32>, vector<8x16xf32> -> vector<8x16xf32>
    %62 = arith.addf %56, %61 : vector<8x16xf32>
    %c0_53 = arith.constant 0 : index
    %c2_54 = arith.constant 2 : index
    %c2_55 = arith.constant 2 : index
    %c0_56 = arith.constant 0 : index
    %63 = vector.load %arg9[%c0_53, %c2_54, %c2_55, %c0_56] : memref<2x4x4x16xf32, #tpu.memory_space<vmem>>, vector<2x2x2x16xf32>
    %64 = vector.shape_cast %63 : vector<2x2x2x16xf32> to vector<8x16xf32>
    %65 = vector.extract_strided_slice %13 {offsets = [8, 0, 0], sizes = [1, 16, 16], strides = [1, 1, 1]} : vector<9x16x16xf32> to vector<1x16x16xf32>
    %66 = vector.shape_cast %65 : vector<1x16x16xf32> to vector<16x16xf32>
    %cst_57 = arith.constant dense<0.000000e+00> : vector<8x16xf32>
    %67 = tpu.matmul %64, %66, %cst_57 {dimension_numbers = #tpu.dot_dimension_numbers<[1], [0], [0], [1], [0, 0, 1, 1], [], []>} : vector<8x16xf32>, vector<16x16xf32>, vector<8x16xf32> -> vector<8x16xf32>
    %68 = arith.addf %62, %67 : vector<8x16xf32>
    %c0_58 = arith.constant 0 : index
    %c0_59 = arith.constant 0 : index
    %69 = vector.load %arg3[%c0_58, %c0_59] : memref<1x16xf32, #tpu.memory_space<vmem>>, vector<1x16xf32>
    %c0_60 = arith.constant 0 : index
    %c0_61 = arith.constant 0 : index
    %70 = vector.load %arg4[%c0_60, %c0_61] : memref<1x16xf32, #tpu.memory_space<vmem>>, vector<1x16xf32>
    %cst_62 = arith.constant dense<0.000000e+00> : vector<16xf32>
    %71 = vector.multi_reduction <add>, %68, %cst_62 [0] : vector<8x16xf32> to vector<16xf32>
    %72 = vector.shape_cast %71 : vector<16xf32> to vector<1x16xf32>
    %cst_63 = arith.constant 1.250000e-01 : f32
    %73 = vector.broadcast %cst_63 : f32 to vector<1x16xf32>
    %74 = arith.mulf %72, %73 : vector<1x16xf32>
    %75 = arith.mulf %68, %68 : vector<8x16xf32>
    %cst_64 = arith.constant dense<0.000000e+00> : vector<16xf32>
    %76 = vector.multi_reduction <add>, %75, %cst_64 [0] : vector<8x16xf32> to vector<16xf32>
    %77 = vector.shape_cast %76 : vector<16xf32> to vector<1x16xf32>
    %cst_65 = arith.constant 1.250000e-01 : f32
    %78 = vector.broadcast %cst_65 : f32 to vector<1x16xf32>
    %79 = arith.mulf %77, %78 : vector<1x16xf32>
    %80 = arith.mulf %74, %74 : vector<1x16xf32>
    %81 = arith.subf %79, %80 : vector<1x16xf32>
    %cst_66 = arith.constant 0.000000e+00 : f32
    %82 = vector.broadcast %cst_66 : f32 to vector<1x16xf32>
    %83 = arith.maximumf %81, %82 : vector<1x16xf32>
    %cst_67 = arith.constant 9.99999974E-6 : f32
    %84 = vector.broadcast %cst_67 : f32 to vector<1x16xf32>
    %85 = arith.addf %83, %84 : vector<1x16xf32>
    %86 = math.rsqrt %85 : vector<1x16xf32>
    %87 = arith.mulf %69, %86 : vector<1x16xf32>
    %88 = arith.mulf %74, %87 : vector<1x16xf32>
    %89 = arith.subf %70, %88 : vector<1x16xf32>
    %90 = vector.broadcast %87 : vector<1x16xf32> to vector<8x16xf32>
    %91 = arith.mulf %68, %90 : vector<8x16xf32>
    %92 = vector.broadcast %89 : vector<1x16xf32> to vector<8x16xf32>
    %93 = arith.addf %91, %92 : vector<8x16xf32>
    %cst_68 = arith.constant 0.000000e+00 : f32
    %94 = vector.broadcast %cst_68 : f32 to vector<8x16xf32>
    %95 = arith.maximumf %93, %94 : vector<8x16xf32>
    %cst_69 = arith.constant 0.000000e+00 : f32
    %96 = vector.broadcast %cst_69 : f32 to vector<2x4x4x16xf32>
    %c0_70 = arith.constant 0 : index
    %c0_71 = arith.constant 0 : index
    %c0_72 = arith.constant 0 : index
    %c0_73 = arith.constant 0 : index
    %97 = vector.load %arg10[%c0_70, %c0_71, %c0_72, %c0_73] : memref<2x4x4x16xf32, #tpu.memory_space<vmem>>, vector<2x4x4x16xf32>
    tpu.vector_store %arg10[%c0_70, %c0_71, %c0_72, %c0_73], %96 {strides = array<i32>} : memref<2x4x4x16xf32, #tpu.memory_space<vmem>>, vector<2x4x4x16xf32>,
    %98 = vector.shape_cast %95 : vector<8x16xf32> to vector<2x2x2x16xf32>
    %c0_74 = arith.constant 0 : index
    %c1_75 = arith.constant 1 : index
    %c1_76 = arith.constant 1 : index
    %c0_77 = arith.constant 0 : index
    %99 = vector.load %arg10[%c0_74, %c1_75, %c1_76, %c0_77] : memref<2x4x4x16xf32, #tpu.memory_space<vmem>>, vector<2x2x2x16xf32>
    tpu.vector_store %arg10[%c0_74, %c1_75, %c1_76, %c0_77], %98 {strides = array<i32>} : memref<2x4x4x16xf32, #tpu.memory_space<vmem>>, vector<2x2x2x16xf32>,
    %c0_78 = arith.constant 0 : index
    %c0_79 = arith.constant 0 : index
    %c0_80 = arith.constant 0 : index
    %100 = vector.load %arg5[%c0_78, %c0_79, %c0_80] : memref<9x16x16xf32, #tpu.memory_space<vmem>>, vector<9x16x16xf32>
    %cst_81 = arith.constant 0.000000e+00 : f32
    %101 = vector.broadcast %cst_81 : f32 to vector<8x16xf32>
    %c0_82 = arith.constant 0 : index
    %c0_83 = arith.constant 0 : index
    %c0_84 = arith.constant 0 : index
    %c0_85 = arith.constant 0 : index
    %102 = vector.load %arg10[%c0_82, %c0_83, %c0_84, %c0_85] : memref<2x4x4x16xf32, #tpu.memory_space<vmem>>, vector<2x2x2x16xf32>
    %103 = vector.shape_cast %102 : vector<2x2x2x16xf32> to vector<8x16xf32>
    %104 = vector.extract_strided_slice %100 {offsets = [0, 0, 0], sizes = [1, 16, 16], strides = [1, 1, 1]} : vector<9x16x16xf32> to vector<1x16x16xf32>
    %105 = vector.shape_cast %104 : vector<1x16x16xf32> to vector<16x16xf32>
    %cst_86 = arith.constant dense<0.000000e+00> : vector<8x16xf32>
    %106 = tpu.matmul %103, %105, %cst_86 {dimension_numbers = #tpu.dot_dimension_numbers<[1], [0], [0], [1], [0, 0, 1, 1], [], []>} : vector<8x16xf32>, vector<16x16xf32>, vector<8x16xf32> -> vector<8x16xf32>
    %107 = arith.addf %101, %106 : vector<8x16xf32>
    %c0_87 = arith.constant 0 : index
    %c0_88 = arith.constant 0 : index
    %c1_89 = arith.constant 1 : index
    %c0_90 = arith.constant 0 : index
    %108 = vector.load %arg10[%c0_87, %c0_88, %c1_89, %c0_90] : memref<2x4x4x16xf32, #tpu.memory_space<vmem>>, vector<2x2x2x16xf32>
    %109 = vector.shape_cast %108 : vector<2x2x2x16xf32> to vector<8x16xf32>
    %110 = vector.extract_strided_slice %100 {offsets = [1, 0, 0], sizes = [1, 16, 16], strides = [1, 1, 1]} : vector<9x16x16xf32> to vector<1x16x16xf32>
    %111 = vector.shape_cast %110 : vector<1x16x16xf32> to vector<16x16xf32>
    %cst_91 = arith.constant dense<0.000000e+00> : vector<8x16xf32>
    %112 = tpu.matmul %109, %111, %cst_91 {dimension_numbers = #tpu.dot_dimension_numbers<[1], [0], [0], [1], [0, 0, 1, 1], [], []>} : vector<8x16xf32>, vector<16x16xf32>, vector<8x16xf32> -> vector<8x16xf32>
    %113 = arith.addf %107, %112 : vector<8x16xf32>
    %c0_92 = arith.constant 0 : index
    %c0_93 = arith.constant 0 : index
    %c2_94 = arith.constant 2 : index
    %c0_95 = arith.constant 0 : index
    %114 = vector.load %arg10[%c0_92, %c0_93, %c2_94, %c0_95] : memref<2x4x4x16xf32, #tpu.memory_space<vmem>>, vector<2x2x2x16xf32>
    %115 = vector.shape_cast %114 : vector<2x2x2x16xf32> to vector<8x16xf32>
    %116 = vector.extract_strided_slice %100 {offsets = [2, 0, 0], sizes = [1, 16, 16], strides = [1, 1, 1]} : vector<9x16x16xf32> to vector<1x16x16xf32>
    %117 = vector.shape_cast %116 : vector<1x16x16xf32> to vector<16x16xf32>
    %cst_96 = arith.constant dense<0.000000e+00> : vector<8x16xf32>
    %118 = tpu.matmul %115, %117, %cst_96 {dimension_numbers = #tpu.dot_dimension_numbers<[1], [0], [0], [1], [0, 0, 1, 1], [], []>} : vector<8x16xf32>, vector<16x16xf32>, vector<8x16xf32> -> vector<8x16xf32>
    %119 = arith.addf %113, %118 : vector<8x16xf32>
    %c0_97 = arith.constant 0 : index
    %c1_98 = arith.constant 1 : index
    %c0_99 = arith.constant 0 : index
    %c0_100 = arith.constant 0 : index
    %120 = vector.load %arg10[%c0_97, %c1_98, %c0_99, %c0_100] : memref<2x4x4x16xf32, #tpu.memory_space<vmem>>, vector<2x2x2x16xf32>
    %121 = vector.shape_cast %120 : vector<2x2x2x16xf32> to vector<8x16xf32>
    %122 = vector.extract_strided_slice %100 {offsets = [3, 0, 0], sizes = [1, 16, 16], strides = [1, 1, 1]} : vector<9x16x16xf32> to vector<1x16x16xf32>
    %123 = vector.shape_cast %122 : vector<1x16x16xf32> to vector<16x16xf32>
    %cst_101 = arith.constant dense<0.000000e+00> : vector<8x16xf32>
    %124 = tpu.matmul %121, %123, %cst_101 {dimension_numbers = #tpu.dot_dimension_numbers<[1], [0], [0], [1], [0, 0, 1, 1], [], []>} : vector<8x16xf32>, vector<16x16xf32>, vector<8x16xf32> -> vector<8x16xf32>
    %125 = arith.addf %119, %124 : vector<8x16xf32>
    %c0_102 = arith.constant 0 : index
    %c1_103 = arith.constant 1 : index
    %c1_104 = arith.constant 1 : index
    %c0_105 = arith.constant 0 : index
    %126 = vector.load %arg10[%c0_102, %c1_103, %c1_104, %c0_105] : memref<2x4x4x16xf32, #tpu.memory_space<vmem>>, vector<2x2x2x16xf32>
    %127 = vector.shape_cast %126 : vector<2x2x2x16xf32> to vector<8x16xf32>
    %128 = vector.extract_strided_slice %100 {offsets = [4, 0, 0], sizes = [1, 16, 16], strides = [1, 1, 1]} : vector<9x16x16xf32> to vector<1x16x16xf32>
    %129 = vector.shape_cast %128 : vector<1x16x16xf32> to vector<16x16xf32>
    %cst_106 = arith.constant dense<0.000000e+00> : vector<8x16xf32>
    %130 = tpu.matmul %127, %129, %cst_106 {dimension_numbers = #tpu.dot_dimension_numbers<[1], [0], [0], [1], [0, 0, 1, 1], [], []>} : vector<8x16xf32>, vector<16x16xf32>, vector<8x16xf32> -> vector<8x16xf32>
    %131 = arith.addf %125, %130 : vector<8x16xf32>
    %c0_107 = arith.constant 0 : index
    %c1_108 = arith.constant 1 : index
    %c2_109 = arith.constant 2 : index
    %c0_110 = arith.constant 0 : index
    %132 = vector.load %arg10[%c0_107, %c1_108, %c2_109, %c0_110] : memref<2x4x4x16xf32, #tpu.memory_space<vmem>>, vector<2x2x2x16xf32>
    %133 = vector.shape_cast %132 : vector<2x2x2x16xf32> to vector<8x16xf32>
    %134 = vector.extract_strided_slice %100 {offsets = [5, 0, 0], sizes = [1, 16, 16], strides = [1, 1, 1]} : vector<9x16x16xf32> to vector<1x16x16xf32>
    %135 = vector.shape_cast %134 : vector<1x16x16xf32> to vector<16x16xf32>
    %cst_111 = arith.constant dense<0.000000e+00> : vector<8x16xf32>
    %136 = tpu.matmul %133, %135, %cst_111 {dimension_numbers = #tpu.dot_dimension_numbers<[1], [0], [0], [1], [0, 0, 1, 1], [], []>} : vector<8x16xf32>, vector<16x16xf32>, vector<8x16xf32> -> vector<8x16xf32>
    %137 = arith.addf %131, %136 : vector<8x16xf32>
    %c0_112 = arith.constant 0 : index
    %c2_113 = arith.constant 2 : index
    %c0_114 = arith.constant 0 : index
    %c0_115 = arith.constant 0 : index
    %138 = vector.load %arg10[%c0_112, %c2_113, %c0_114, %c0_115] : memref<2x4x4x16xf32, #tpu.memory_space<vmem>>, vector<2x2x2x16xf32>
    %139 = vector.shape_cast %138 : vector<2x2x2x16xf32> to vector<8x16xf32>
    %140 = vector.extract_strided_slice %100 {offsets = [6, 0, 0], sizes = [1, 16, 16], strides = [1, 1, 1]} : vector<9x16x16xf32> to vector<1x16x16xf32>
    %141 = vector.shape_cast %140 : vector<1x16x16xf32> to vector<16x16xf32>
    %cst_116 = arith.constant dense<0.000000e+00> : vector<8x16xf32>
    %142 = tpu.matmul %139, %141, %cst_116 {dimension_numbers = #tpu.dot_dimension_numbers<[1], [0], [0], [1], [0, 0, 1, 1], [], []>} : vector<8x16xf32>, vector<16x16xf32>, vector<8x16xf32> -> vector<8x16xf32>
    %143 = arith.addf %137, %142 : vector<8x16xf32>
    %c0_117 = arith.constant 0 : index
    %c2_118 = arith.constant 2 : index
    %c1_119 = arith.constant 1 : index
    %c0_120 = arith.constant 0 : index
    %144 = vector.load %arg10[%c0_117, %c2_118, %c1_119, %c0_120] : memref<2x4x4x16xf32, #tpu.memory_space<vmem>>, vector<2x2x2x16xf32>
    %145 = vector.shape_cast %144 : vector<2x2x2x16xf32> to vector<8x16xf32>
    %146 = vector.extract_strided_slice %100 {offsets = [7, 0, 0], sizes = [1, 16, 16], strides = [1, 1, 1]} : vector<9x16x16xf32> to vector<1x16x16xf32>
    %147 = vector.shape_cast %146 : vector<1x16x16xf32> to vector<16x16xf32>
    %cst_121 = arith.constant dense<0.000000e+00> : vector<8x16xf32>
    %148 = tpu.matmul %145, %147, %cst_121 {dimension_numbers = #tpu.dot_dimension_numbers<[1], [0], [0], [1], [0, 0, 1, 1], [], []>} : vector<8x16xf32>, vector<16x16xf32>, vector<8x16xf32> -> vector<8x16xf32>
    %149 = arith.addf %143, %148 : vector<8x16xf32>
    %c0_122 = arith.constant 0 : index
    %c2_123 = arith.constant 2 : index
    %c2_124 = arith.constant 2 : index
    %c0_125 = arith.constant 0 : index
    %150 = vector.load %arg10[%c0_122, %c2_123, %c2_124, %c0_125] : memref<2x4x4x16xf32, #tpu.memory_space<vmem>>, vector<2x2x2x16xf32>
    %151 = vector.shape_cast %150 : vector<2x2x2x16xf32> to vector<8x16xf32>
    %152 = vector.extract_strided_slice %100 {offsets = [8, 0, 0], sizes = [1, 16, 16], strides = [1, 1, 1]} : vector<9x16x16xf32> to vector<1x16x16xf32>
    %153 = vector.shape_cast %152 : vector<1x16x16xf32> to vector<16x16xf32>
    %cst_126 = arith.constant dense<0.000000e+00> : vector<8x16xf32>
    %154 = tpu.matmul %151, %153, %cst_126 {dimension_numbers = #tpu.dot_dimension_numbers<[1], [0], [0], [1], [0, 0, 1, 1], [], []>} : vector<8x16xf32>, vector<16x16xf32>, vector<8x16xf32> -> vector<8x16xf32>
    %155 = arith.addf %149, %154 : vector<8x16xf32>
    %c0_127 = arith.constant 0 : index
    %c0_128 = arith.constant 0 : index
    %156 = vector.load %arg6[%c0_127, %c0_128] : memref<1x16xf32, #tpu.memory_space<vmem>>, vector<1x16xf32>
    %c0_129 = arith.constant 0 : index
    %c0_130 = arith.constant 0 : index
    %157 = vector.load %arg7[%c0_129, %c0_130] : memref<1x16xf32, #tpu.memory_space<vmem>>, vector<1x16xf32>
    %cst_131 = arith.constant dense<0.000000e+00> : vector<16xf32>
    %158 = vector.multi_reduction <add>, %155, %cst_131 [0] : vector<8x16xf32> to vector<16xf32>
    %159 = vector.shape_cast %158 : vector<16xf32> to vector<1x16xf32>
    %cst_132 = arith.constant 1.250000e-01 : f32
    %160 = vector.broadcast %cst_132 : f32 to vector<1x16xf32>
    %161 = arith.mulf %159, %160 : vector<1x16xf32>
    %162 = arith.mulf %155, %155 : vector<8x16xf32>
    %cst_133 = arith.constant dense<0.000000e+00> : vector<16xf32>
    %163 = vector.multi_reduction <add>, %162, %cst_133 [0] : vector<8x16xf32> to vector<16xf32>
    %164 = vector.shape_cast %163 : vector<16xf32> to vector<1x16xf32>
    %cst_134 = arith.constant 1.250000e-01 : f32
    %165 = vector.broadcast %cst_134 : f32 to vector<1x16xf32>
    %166 = arith.mulf %164, %165 : vector<1x16xf32>
    %167 = arith.mulf %161, %161 : vector<1x16xf32>
    %168 = arith.subf %166, %167 : vector<1x16xf32>
    %cst_135 = arith.constant 0.000000e+00 : f32
    %169 = vector.broadcast %cst_135 : f32 to vector<1x16xf32>
    %170 = arith.maximumf %168, %169 : vector<1x16xf32>
    %cst_136 = arith.constant 9.99999974E-6 : f32
    %171 = vector.broadcast %cst_136 : f32 to vector<1x16xf32>
    %172 = arith.addf %170, %171 : vector<1x16xf32>
    %173 = math.rsqrt %172 : vector<1x16xf32>
    %174 = arith.mulf %156, %173 : vector<1x16xf32>
    %175 = arith.mulf %161, %174 : vector<1x16xf32>
    %176 = arith.subf %157, %175 : vector<1x16xf32>
    %177 = vector.broadcast %174 : vector<1x16xf32> to vector<8x16xf32>
    %178 = arith.mulf %155, %177 : vector<8x16xf32>
    %179 = vector.broadcast %176 : vector<1x16xf32> to vector<8x16xf32>
    %180 = arith.addf %178, %179 : vector<8x16xf32>
    %cst_137 = arith.constant 0.000000e+00 : f32
    %181 = vector.broadcast %cst_137 : f32 to vector<8x16xf32>
    %182 = arith.maximumf %180, %181 : vector<8x16xf32>
    %183 = vector.shape_cast %182 : vector<8x16xf32> to vector<2x2x2x16xf32>
    %c0_138 = arith.constant 0 : index
    %c0_139 = arith.constant 0 : index
    %c0_140 = arith.constant 0 : index
    %c0_141 = arith.constant 0 : index
    %184 = vector.load %arg8[%c0_138, %c0_139, %c0_140, %c0_141] : memref<2x2x2x16xf32, #tpu.memory_space<vmem>>, vector<2x2x2x16xf32>
    tpu.vector_store %arg8[%c0_138, %c0_139, %c0_140, %c0_141], %183 {strides = array<i32>} : memref<2x2x2x16xf32, #tpu.memory_space<vmem>>, vector<2x2x2x16xf32>,
    return
  }
  func.func @transform_0(%arg0: i32) -> (i32, i32, i32, i32) {
    %c0_i32 = arith.constant 0 : i32
    %c0_i32_0 = arith.constant 0 : i32
    %c0_i32_1 = arith.constant 0 : i32
    %c0_i32_2 = arith.constant 0 : i32
    %c0_i32_3 = arith.constant 0 : i32
    return %c0_i32, %c0_i32_0, %c0_i32_1, %c0_i32_2 : i32, i32, i32, i32
  }
  func.func @transform_1(%arg0: i32) -> (i32, i32, i32) {
    %c0_i32 = arith.constant 0 : i32
    %c0_i32_0 = arith.constant 0 : i32
    %c0_i32_1 = arith.constant 0 : i32
    %c0_i32_2 = arith.constant 0 : i32
    return %c0_i32, %c0_i32_0, %c0_i32_1 : i32, i32, i32
  }
  func.func @transform_2(%arg0: i32) -> (i32, i32) {
    %c0_i32 = arith.constant 0 : i32
    %c0_i32_0 = arith.constant 0 : i32
    %c0_i32_1 = arith.constant 0 : i32
    return %c0_i32, %c0_i32_0 : i32, i32
  }
  func.func @transform_3(%arg0: i32) -> (i32, i32) {
    %c0_i32 = arith.constant 0 : i32
    %c0_i32_0 = arith.constant 0 : i32
    %c0_i32_1 = arith.constant 0 : i32
    return %c0_i32, %c0_i32_0 : i32, i32
  }
  func.func @transform_4(%arg0: i32) -> (i32, i32, i32) {
    %c0_i32 = arith.constant 0 : i32
    %c0_i32_0 = arith.constant 0 : i32
    %c0_i32_1 = arith.constant 0 : i32
    %c0_i32_2 = arith.constant 0 : i32
    return %c0_i32, %c0_i32_0, %c0_i32_1 : i32, i32, i32
  }
  func.func @transform_5(%arg0: i32) -> (i32, i32) {
    %c0_i32 = arith.constant 0 : i32
    %c0_i32_0 = arith.constant 0 : i32
    %c0_i32_1 = arith.constant 0 : i32
    return %c0_i32, %c0_i32_0 : i32, i32
  }
  func.func @transform_6(%arg0: i32) -> (i32, i32) {
    %c0_i32 = arith.constant 0 : i32
    %c0_i32_0 = arith.constant 0 : i32
    %c0_i32_1 = arith.constant 0 : i32
    return %c0_i32, %c0_i32_0 : i32, i32
  }
  func.func @transform_7(%arg0: i32) -> (i32, i32, i32, i32) {
    %c0_i32 = arith.constant 0 : i32
    %c0_i32_0 = arith.constant 0 : i32
    %c0_i32_1 = arith.constant 0 : i32
    %c0_i32_2 = arith.constant 0 : i32
    %c0_i32_3 = arith.constant 0 : i32
    return %c0_i32, %c0_i32_0, %c0_i32_1, %c0_i32_2 : i32, i32, i32, i32
  }
}

module attributes {stable_mosaic.version = 11 : i64} {
  func.func @_down_stage_kernel(%arg0: i32, %arg1: memref<2x8x4x16xf32, #tpu.memory_space<vmem>>, %arg2: memref<9x8x16xf32, #tpu.memory_space<vmem>>, %arg3: memref<1x16xf32, #tpu.memory_space<vmem>>, %arg4: memref<1x16xf32, #tpu.memory_space<vmem>>, %arg5: memref<9x16x16xf32, #tpu.memory_space<vmem>>, %arg6: memref<1x16xf32, #tpu.memory_space<vmem>>, %arg7: memref<1x16xf32, #tpu.memory_space<vmem>>, %arg8: memref<2x4x4x16xf32, #tpu.memory_space<vmem>>, %arg9: memref<2x6x6x8xf32, #tpu.memory_space<vmem>>, %arg10: memref<2x6x6x16xf32, #tpu.memory_space<vmem>>) attributes {dimension_semantics = [#tpu.dimension_semantics<arbitrary>], iteration_bounds = array<i64: 1>, scalar_prefetch = 0 : i64, scratch_operands = 2 : i64, tpu.core_type = #tpu.core_type<tc>, window_params = [{pipeline_mode = #tpu.pipeline_mode<synchronous>, transform_indices = @transform_0, window_bounds = array<i64: 2, 8, 4, 16>}, {pipeline_mode = #tpu.pipeline_mode<synchronous>, transform_indices = @transform_1, window_bounds = array<i64: 9, 8, 16>}, {pipeline_mode = #tpu.pipeline_mode<synchronous>, transform_indices = @transform_2, window_bounds = array<i64: 1, 16>}, {pipeline_mode = #tpu.pipeline_mode<synchronous>, transform_indices = @transform_3, window_bounds = array<i64: 1, 16>}, {pipeline_mode = #tpu.pipeline_mode<synchronous>, transform_indices = @transform_4, window_bounds = array<i64: 9, 16, 16>}, {pipeline_mode = #tpu.pipeline_mode<synchronous>, transform_indices = @transform_5, window_bounds = array<i64: 1, 16>}, {pipeline_mode = #tpu.pipeline_mode<synchronous>, transform_indices = @transform_6, window_bounds = array<i64: 1, 16>}, {pipeline_mode = #tpu.pipeline_mode<synchronous>, transform_indices = @transform_7, window_bounds = array<i64: 2, 4, 4, 16>}]} {
    %c0 = arith.constant 0 : index
    %c0_0 = arith.constant 0 : index
    %c0_1 = arith.constant 0 : index
    %c0_2 = arith.constant 0 : index
    %0 = vector.load %arg1[%c0, %c0_0, %c0_1, %c0_2] : memref<2x8x4x16xf32, #tpu.memory_space<vmem>>, vector<2x8x4x16xf32>
    %1 = vector.shape_cast %0 : vector<2x8x4x16xf32> to vector<2x4x2x4x16xf32>
    %2 = vector.extract_strided_slice %1 {offsets = [0, 0, 0, 0, 0], sizes = [2, 4, 1, 4, 16], strides = [1, 1, 1, 1, 1]} : vector<2x4x2x4x16xf32> to vector<2x4x1x4x16xf32>
    %3 = vector.shape_cast %2 : vector<2x4x1x4x16xf32> to vector<2x4x4x16xf32>
    %4 = vector.extract_strided_slice %1 {offsets = [0, 0, 1, 0, 0], sizes = [2, 4, 1, 4, 16], strides = [1, 1, 1, 1, 1]} : vector<2x4x2x4x16xf32> to vector<2x4x1x4x16xf32>
    %5 = vector.shape_cast %4 : vector<2x4x1x4x16xf32> to vector<2x4x4x16xf32>
    %6 = arith.maximumf %3, %5 : vector<2x4x4x16xf32>
    %7 = vector.extract_strided_slice %6 {offsets = [0, 0, 0, 0], sizes = [2, 4, 4, 8], strides = [1, 1, 1, 1]} : vector<2x4x4x16xf32> to vector<2x4x4x8xf32>
    %8 = vector.extract_strided_slice %6 {offsets = [0, 0, 0, 8], sizes = [2, 4, 4, 8], strides = [1, 1, 1, 1]} : vector<2x4x4x16xf32> to vector<2x4x4x8xf32>
    %9 = arith.maximumf %7, %8 : vector<2x4x4x8xf32>
    %cst = arith.constant 0.000000e+00 : f32
    %10 = vector.broadcast %cst : f32 to vector<2x6x6x8xf32>
    %c0_3 = arith.constant 0 : index
    %c0_4 = arith.constant 0 : index
    %c0_5 = arith.constant 0 : index
    %c0_6 = arith.constant 0 : index
    %11 = vector.load %arg9[%c0_3, %c0_4, %c0_5, %c0_6] : memref<2x6x6x8xf32, #tpu.memory_space<vmem>>, vector<2x6x6x8xf32>
    tpu.vector_store %arg9[%c0_3, %c0_4, %c0_5, %c0_6], %10 {strides = array<i32>} : memref<2x6x6x8xf32, #tpu.memory_space<vmem>>, vector<2x6x6x8xf32>,
    %c0_7 = arith.constant 0 : index
    %c1 = arith.constant 1 : index
    %c1_8 = arith.constant 1 : index
    %c0_9 = arith.constant 0 : index
    %12 = vector.load %arg9[%c0_7, %c1, %c1_8, %c0_9] : memref<2x6x6x8xf32, #tpu.memory_space<vmem>>, vector<2x4x4x8xf32>
    tpu.vector_store %arg9[%c0_7, %c1, %c1_8, %c0_9], %9 {strides = array<i32>} : memref<2x6x6x8xf32, #tpu.memory_space<vmem>>, vector<2x4x4x8xf32>,
    %c0_10 = arith.constant 0 : index
    %c0_11 = arith.constant 0 : index
    %c0_12 = arith.constant 0 : index
    %13 = vector.load %arg2[%c0_10, %c0_11, %c0_12] : memref<9x8x16xf32, #tpu.memory_space<vmem>>, vector<9x8x16xf32>
    %cst_13 = arith.constant 0.000000e+00 : f32
    %14 = vector.broadcast %cst_13 : f32 to vector<32x16xf32>
    %c0_14 = arith.constant 0 : index
    %c0_15 = arith.constant 0 : index
    %c0_16 = arith.constant 0 : index
    %c0_17 = arith.constant 0 : index
    %15 = vector.load %arg9[%c0_14, %c0_15, %c0_16, %c0_17] : memref<2x6x6x8xf32, #tpu.memory_space<vmem>>, vector<2x4x4x8xf32>
    %16 = vector.shape_cast %15 : vector<2x4x4x8xf32> to vector<32x8xf32>
    %17 = vector.extract_strided_slice %13 {offsets = [0, 0, 0], sizes = [1, 8, 16], strides = [1, 1, 1]} : vector<9x8x16xf32> to vector<1x8x16xf32>
    %18 = vector.shape_cast %17 : vector<1x8x16xf32> to vector<8x16xf32>
    %cst_18 = arith.constant dense<0.000000e+00> : vector<32x16xf32>
    %19 = tpu.matmul %16, %18, %cst_18 {dimension_numbers = #tpu.dot_dimension_numbers<[1], [0], [0], [1], [0, 0, 1, 1], [], []>} : vector<32x8xf32>, vector<8x16xf32>, vector<32x16xf32> -> vector<32x16xf32>
    %20 = arith.addf %14, %19 : vector<32x16xf32>
    %c0_19 = arith.constant 0 : index
    %c0_20 = arith.constant 0 : index
    %c1_21 = arith.constant 1 : index
    %c0_22 = arith.constant 0 : index
    %21 = vector.load %arg9[%c0_19, %c0_20, %c1_21, %c0_22] : memref<2x6x6x8xf32, #tpu.memory_space<vmem>>, vector<2x4x4x8xf32>
    %22 = vector.shape_cast %21 : vector<2x4x4x8xf32> to vector<32x8xf32>
    %23 = vector.extract_strided_slice %13 {offsets = [1, 0, 0], sizes = [1, 8, 16], strides = [1, 1, 1]} : vector<9x8x16xf32> to vector<1x8x16xf32>
    %24 = vector.shape_cast %23 : vector<1x8x16xf32> to vector<8x16xf32>
    %cst_23 = arith.constant dense<0.000000e+00> : vector<32x16xf32>
    %25 = tpu.matmul %22, %24, %cst_23 {dimension_numbers = #tpu.dot_dimension_numbers<[1], [0], [0], [1], [0, 0, 1, 1], [], []>} : vector<32x8xf32>, vector<8x16xf32>, vector<32x16xf32> -> vector<32x16xf32>
    %26 = arith.addf %20, %25 : vector<32x16xf32>
    %c0_24 = arith.constant 0 : index
    %c0_25 = arith.constant 0 : index
    %c2 = arith.constant 2 : index
    %c0_26 = arith.constant 0 : index
    %27 = vector.load %arg9[%c0_24, %c0_25, %c2, %c0_26] : memref<2x6x6x8xf32, #tpu.memory_space<vmem>>, vector<2x4x4x8xf32>
    %28 = vector.shape_cast %27 : vector<2x4x4x8xf32> to vector<32x8xf32>
    %29 = vector.extract_strided_slice %13 {offsets = [2, 0, 0], sizes = [1, 8, 16], strides = [1, 1, 1]} : vector<9x8x16xf32> to vector<1x8x16xf32>
    %30 = vector.shape_cast %29 : vector<1x8x16xf32> to vector<8x16xf32>
    %cst_27 = arith.constant dense<0.000000e+00> : vector<32x16xf32>
    %31 = tpu.matmul %28, %30, %cst_27 {dimension_numbers = #tpu.dot_dimension_numbers<[1], [0], [0], [1], [0, 0, 1, 1], [], []>} : vector<32x8xf32>, vector<8x16xf32>, vector<32x16xf32> -> vector<32x16xf32>
    %32 = arith.addf %26, %31 : vector<32x16xf32>
    %c0_28 = arith.constant 0 : index
    %c1_29 = arith.constant 1 : index
    %c0_30 = arith.constant 0 : index
    %c0_31 = arith.constant 0 : index
    %33 = vector.load %arg9[%c0_28, %c1_29, %c0_30, %c0_31] : memref<2x6x6x8xf32, #tpu.memory_space<vmem>>, vector<2x4x4x8xf32>
    %34 = vector.shape_cast %33 : vector<2x4x4x8xf32> to vector<32x8xf32>
    %35 = vector.extract_strided_slice %13 {offsets = [3, 0, 0], sizes = [1, 8, 16], strides = [1, 1, 1]} : vector<9x8x16xf32> to vector<1x8x16xf32>
    %36 = vector.shape_cast %35 : vector<1x8x16xf32> to vector<8x16xf32>
    %cst_32 = arith.constant dense<0.000000e+00> : vector<32x16xf32>
    %37 = tpu.matmul %34, %36, %cst_32 {dimension_numbers = #tpu.dot_dimension_numbers<[1], [0], [0], [1], [0, 0, 1, 1], [], []>} : vector<32x8xf32>, vector<8x16xf32>, vector<32x16xf32> -> vector<32x16xf32>
    %38 = arith.addf %32, %37 : vector<32x16xf32>
    %c0_33 = arith.constant 0 : index
    %c1_34 = arith.constant 1 : index
    %c1_35 = arith.constant 1 : index
    %c0_36 = arith.constant 0 : index
    %39 = vector.load %arg9[%c0_33, %c1_34, %c1_35, %c0_36] : memref<2x6x6x8xf32, #tpu.memory_space<vmem>>, vector<2x4x4x8xf32>
    %40 = vector.shape_cast %39 : vector<2x4x4x8xf32> to vector<32x8xf32>
    %41 = vector.extract_strided_slice %13 {offsets = [4, 0, 0], sizes = [1, 8, 16], strides = [1, 1, 1]} : vector<9x8x16xf32> to vector<1x8x16xf32>
    %42 = vector.shape_cast %41 : vector<1x8x16xf32> to vector<8x16xf32>
    %cst_37 = arith.constant dense<0.000000e+00> : vector<32x16xf32>
    %43 = tpu.matmul %40, %42, %cst_37 {dimension_numbers = #tpu.dot_dimension_numbers<[1], [0], [0], [1], [0, 0, 1, 1], [], []>} : vector<32x8xf32>, vector<8x16xf32>, vector<32x16xf32> -> vector<32x16xf32>
    %44 = arith.addf %38, %43 : vector<32x16xf32>
    %c0_38 = arith.constant 0 : index
    %c1_39 = arith.constant 1 : index
    %c2_40 = arith.constant 2 : index
    %c0_41 = arith.constant 0 : index
    %45 = vector.load %arg9[%c0_38, %c1_39, %c2_40, %c0_41] : memref<2x6x6x8xf32, #tpu.memory_space<vmem>>, vector<2x4x4x8xf32>
    %46 = vector.shape_cast %45 : vector<2x4x4x8xf32> to vector<32x8xf32>
    %47 = vector.extract_strided_slice %13 {offsets = [5, 0, 0], sizes = [1, 8, 16], strides = [1, 1, 1]} : vector<9x8x16xf32> to vector<1x8x16xf32>
    %48 = vector.shape_cast %47 : vector<1x8x16xf32> to vector<8x16xf32>
    %cst_42 = arith.constant dense<0.000000e+00> : vector<32x16xf32>
    %49 = tpu.matmul %46, %48, %cst_42 {dimension_numbers = #tpu.dot_dimension_numbers<[1], [0], [0], [1], [0, 0, 1, 1], [], []>} : vector<32x8xf32>, vector<8x16xf32>, vector<32x16xf32> -> vector<32x16xf32>
    %50 = arith.addf %44, %49 : vector<32x16xf32>
    %c0_43 = arith.constant 0 : index
    %c2_44 = arith.constant 2 : index
    %c0_45 = arith.constant 0 : index
    %c0_46 = arith.constant 0 : index
    %51 = vector.load %arg9[%c0_43, %c2_44, %c0_45, %c0_46] : memref<2x6x6x8xf32, #tpu.memory_space<vmem>>, vector<2x4x4x8xf32>
    %52 = vector.shape_cast %51 : vector<2x4x4x8xf32> to vector<32x8xf32>
    %53 = vector.extract_strided_slice %13 {offsets = [6, 0, 0], sizes = [1, 8, 16], strides = [1, 1, 1]} : vector<9x8x16xf32> to vector<1x8x16xf32>
    %54 = vector.shape_cast %53 : vector<1x8x16xf32> to vector<8x16xf32>
    %cst_47 = arith.constant dense<0.000000e+00> : vector<32x16xf32>
    %55 = tpu.matmul %52, %54, %cst_47 {dimension_numbers = #tpu.dot_dimension_numbers<[1], [0], [0], [1], [0, 0, 1, 1], [], []>} : vector<32x8xf32>, vector<8x16xf32>, vector<32x16xf32> -> vector<32x16xf32>
    %56 = arith.addf %50, %55 : vector<32x16xf32>
    %c0_48 = arith.constant 0 : index
    %c2_49 = arith.constant 2 : index
    %c1_50 = arith.constant 1 : index
    %c0_51 = arith.constant 0 : index
    %57 = vector.load %arg9[%c0_48, %c2_49, %c1_50, %c0_51] : memref<2x6x6x8xf32, #tpu.memory_space<vmem>>, vector<2x4x4x8xf32>
    %58 = vector.shape_cast %57 : vector<2x4x4x8xf32> to vector<32x8xf32>
    %59 = vector.extract_strided_slice %13 {offsets = [7, 0, 0], sizes = [1, 8, 16], strides = [1, 1, 1]} : vector<9x8x16xf32> to vector<1x8x16xf32>
    %60 = vector.shape_cast %59 : vector<1x8x16xf32> to vector<8x16xf32>
    %cst_52 = arith.constant dense<0.000000e+00> : vector<32x16xf32>
    %61 = tpu.matmul %58, %60, %cst_52 {dimension_numbers = #tpu.dot_dimension_numbers<[1], [0], [0], [1], [0, 0, 1, 1], [], []>} : vector<32x8xf32>, vector<8x16xf32>, vector<32x16xf32> -> vector<32x16xf32>
    %62 = arith.addf %56, %61 : vector<32x16xf32>
    %c0_53 = arith.constant 0 : index
    %c2_54 = arith.constant 2 : index
    %c2_55 = arith.constant 2 : index
    %c0_56 = arith.constant 0 : index
    %63 = vector.load %arg9[%c0_53, %c2_54, %c2_55, %c0_56] : memref<2x6x6x8xf32, #tpu.memory_space<vmem>>, vector<2x4x4x8xf32>
    %64 = vector.shape_cast %63 : vector<2x4x4x8xf32> to vector<32x8xf32>
    %65 = vector.extract_strided_slice %13 {offsets = [8, 0, 0], sizes = [1, 8, 16], strides = [1, 1, 1]} : vector<9x8x16xf32> to vector<1x8x16xf32>
    %66 = vector.shape_cast %65 : vector<1x8x16xf32> to vector<8x16xf32>
    %cst_57 = arith.constant dense<0.000000e+00> : vector<32x16xf32>
    %67 = tpu.matmul %64, %66, %cst_57 {dimension_numbers = #tpu.dot_dimension_numbers<[1], [0], [0], [1], [0, 0, 1, 1], [], []>} : vector<32x8xf32>, vector<8x16xf32>, vector<32x16xf32> -> vector<32x16xf32>
    %68 = arith.addf %62, %67 : vector<32x16xf32>
    %c0_58 = arith.constant 0 : index
    %c0_59 = arith.constant 0 : index
    %69 = vector.load %arg3[%c0_58, %c0_59] : memref<1x16xf32, #tpu.memory_space<vmem>>, vector<1x16xf32>
    %c0_60 = arith.constant 0 : index
    %c0_61 = arith.constant 0 : index
    %70 = vector.load %arg4[%c0_60, %c0_61] : memref<1x16xf32, #tpu.memory_space<vmem>>, vector<1x16xf32>
    %cst_62 = arith.constant dense<0.000000e+00> : vector<16xf32>
    %71 = vector.multi_reduction <add>, %68, %cst_62 [0] : vector<32x16xf32> to vector<16xf32>
    %72 = vector.shape_cast %71 : vector<16xf32> to vector<1x16xf32>
    %cst_63 = arith.constant 3.125000e-02 : f32
    %73 = vector.broadcast %cst_63 : f32 to vector<1x16xf32>
    %74 = arith.mulf %72, %73 : vector<1x16xf32>
    %75 = arith.mulf %68, %68 : vector<32x16xf32>
    %cst_64 = arith.constant dense<0.000000e+00> : vector<16xf32>
    %76 = vector.multi_reduction <add>, %75, %cst_64 [0] : vector<32x16xf32> to vector<16xf32>
    %77 = vector.shape_cast %76 : vector<16xf32> to vector<1x16xf32>
    %cst_65 = arith.constant 3.125000e-02 : f32
    %78 = vector.broadcast %cst_65 : f32 to vector<1x16xf32>
    %79 = arith.mulf %77, %78 : vector<1x16xf32>
    %80 = arith.mulf %74, %74 : vector<1x16xf32>
    %81 = arith.subf %79, %80 : vector<1x16xf32>
    %cst_66 = arith.constant 0.000000e+00 : f32
    %82 = vector.broadcast %cst_66 : f32 to vector<1x16xf32>
    %83 = arith.maximumf %81, %82 : vector<1x16xf32>
    %cst_67 = arith.constant 9.99999974E-6 : f32
    %84 = vector.broadcast %cst_67 : f32 to vector<1x16xf32>
    %85 = arith.addf %83, %84 : vector<1x16xf32>
    %86 = math.rsqrt %85 : vector<1x16xf32>
    %87 = arith.mulf %69, %86 : vector<1x16xf32>
    %88 = arith.mulf %74, %87 : vector<1x16xf32>
    %89 = arith.subf %70, %88 : vector<1x16xf32>
    %90 = vector.broadcast %87 : vector<1x16xf32> to vector<32x16xf32>
    %91 = arith.mulf %68, %90 : vector<32x16xf32>
    %92 = vector.broadcast %89 : vector<1x16xf32> to vector<32x16xf32>
    %93 = arith.addf %91, %92 : vector<32x16xf32>
    %cst_68 = arith.constant 0.000000e+00 : f32
    %94 = vector.broadcast %cst_68 : f32 to vector<32x16xf32>
    %95 = arith.maximumf %93, %94 : vector<32x16xf32>
    %cst_69 = arith.constant 0.000000e+00 : f32
    %96 = vector.broadcast %cst_69 : f32 to vector<2x6x6x16xf32>
    %c0_70 = arith.constant 0 : index
    %c0_71 = arith.constant 0 : index
    %c0_72 = arith.constant 0 : index
    %c0_73 = arith.constant 0 : index
    %97 = vector.load %arg10[%c0_70, %c0_71, %c0_72, %c0_73] : memref<2x6x6x16xf32, #tpu.memory_space<vmem>>, vector<2x6x6x16xf32>
    tpu.vector_store %arg10[%c0_70, %c0_71, %c0_72, %c0_73], %96 {strides = array<i32>} : memref<2x6x6x16xf32, #tpu.memory_space<vmem>>, vector<2x6x6x16xf32>,
    %98 = vector.shape_cast %95 : vector<32x16xf32> to vector<2x4x4x16xf32>
    %c0_74 = arith.constant 0 : index
    %c1_75 = arith.constant 1 : index
    %c1_76 = arith.constant 1 : index
    %c0_77 = arith.constant 0 : index
    %99 = vector.load %arg10[%c0_74, %c1_75, %c1_76, %c0_77] : memref<2x6x6x16xf32, #tpu.memory_space<vmem>>, vector<2x4x4x16xf32>
    tpu.vector_store %arg10[%c0_74, %c1_75, %c1_76, %c0_77], %98 {strides = array<i32>} : memref<2x6x6x16xf32, #tpu.memory_space<vmem>>, vector<2x4x4x16xf32>,
    %c0_78 = arith.constant 0 : index
    %c0_79 = arith.constant 0 : index
    %c0_80 = arith.constant 0 : index
    %100 = vector.load %arg5[%c0_78, %c0_79, %c0_80] : memref<9x16x16xf32, #tpu.memory_space<vmem>>, vector<9x16x16xf32>
    %cst_81 = arith.constant 0.000000e+00 : f32
    %101 = vector.broadcast %cst_81 : f32 to vector<32x16xf32>
    %c0_82 = arith.constant 0 : index
    %c0_83 = arith.constant 0 : index
    %c0_84 = arith.constant 0 : index
    %c0_85 = arith.constant 0 : index
    %102 = vector.load %arg10[%c0_82, %c0_83, %c0_84, %c0_85] : memref<2x6x6x16xf32, #tpu.memory_space<vmem>>, vector<2x4x4x16xf32>
    %103 = vector.shape_cast %102 : vector<2x4x4x16xf32> to vector<32x16xf32>
    %104 = vector.extract_strided_slice %100 {offsets = [0, 0, 0], sizes = [1, 16, 16], strides = [1, 1, 1]} : vector<9x16x16xf32> to vector<1x16x16xf32>
    %105 = vector.shape_cast %104 : vector<1x16x16xf32> to vector<16x16xf32>
    %cst_86 = arith.constant dense<0.000000e+00> : vector<32x16xf32>
    %106 = tpu.matmul %103, %105, %cst_86 {dimension_numbers = #tpu.dot_dimension_numbers<[1], [0], [0], [1], [0, 0, 1, 1], [], []>} : vector<32x16xf32>, vector<16x16xf32>, vector<32x16xf32> -> vector<32x16xf32>
    %107 = arith.addf %101, %106 : vector<32x16xf32>
    %c0_87 = arith.constant 0 : index
    %c0_88 = arith.constant 0 : index
    %c1_89 = arith.constant 1 : index
    %c0_90 = arith.constant 0 : index
    %108 = vector.load %arg10[%c0_87, %c0_88, %c1_89, %c0_90] : memref<2x6x6x16xf32, #tpu.memory_space<vmem>>, vector<2x4x4x16xf32>
    %109 = vector.shape_cast %108 : vector<2x4x4x16xf32> to vector<32x16xf32>
    %110 = vector.extract_strided_slice %100 {offsets = [1, 0, 0], sizes = [1, 16, 16], strides = [1, 1, 1]} : vector<9x16x16xf32> to vector<1x16x16xf32>
    %111 = vector.shape_cast %110 : vector<1x16x16xf32> to vector<16x16xf32>
    %cst_91 = arith.constant dense<0.000000e+00> : vector<32x16xf32>
    %112 = tpu.matmul %109, %111, %cst_91 {dimension_numbers = #tpu.dot_dimension_numbers<[1], [0], [0], [1], [0, 0, 1, 1], [], []>} : vector<32x16xf32>, vector<16x16xf32>, vector<32x16xf32> -> vector<32x16xf32>
    %113 = arith.addf %107, %112 : vector<32x16xf32>
    %c0_92 = arith.constant 0 : index
    %c0_93 = arith.constant 0 : index
    %c2_94 = arith.constant 2 : index
    %c0_95 = arith.constant 0 : index
    %114 = vector.load %arg10[%c0_92, %c0_93, %c2_94, %c0_95] : memref<2x6x6x16xf32, #tpu.memory_space<vmem>>, vector<2x4x4x16xf32>
    %115 = vector.shape_cast %114 : vector<2x4x4x16xf32> to vector<32x16xf32>
    %116 = vector.extract_strided_slice %100 {offsets = [2, 0, 0], sizes = [1, 16, 16], strides = [1, 1, 1]} : vector<9x16x16xf32> to vector<1x16x16xf32>
    %117 = vector.shape_cast %116 : vector<1x16x16xf32> to vector<16x16xf32>
    %cst_96 = arith.constant dense<0.000000e+00> : vector<32x16xf32>
    %118 = tpu.matmul %115, %117, %cst_96 {dimension_numbers = #tpu.dot_dimension_numbers<[1], [0], [0], [1], [0, 0, 1, 1], [], []>} : vector<32x16xf32>, vector<16x16xf32>, vector<32x16xf32> -> vector<32x16xf32>
    %119 = arith.addf %113, %118 : vector<32x16xf32>
    %c0_97 = arith.constant 0 : index
    %c1_98 = arith.constant 1 : index
    %c0_99 = arith.constant 0 : index
    %c0_100 = arith.constant 0 : index
    %120 = vector.load %arg10[%c0_97, %c1_98, %c0_99, %c0_100] : memref<2x6x6x16xf32, #tpu.memory_space<vmem>>, vector<2x4x4x16xf32>
    %121 = vector.shape_cast %120 : vector<2x4x4x16xf32> to vector<32x16xf32>
    %122 = vector.extract_strided_slice %100 {offsets = [3, 0, 0], sizes = [1, 16, 16], strides = [1, 1, 1]} : vector<9x16x16xf32> to vector<1x16x16xf32>
    %123 = vector.shape_cast %122 : vector<1x16x16xf32> to vector<16x16xf32>
    %cst_101 = arith.constant dense<0.000000e+00> : vector<32x16xf32>
    %124 = tpu.matmul %121, %123, %cst_101 {dimension_numbers = #tpu.dot_dimension_numbers<[1], [0], [0], [1], [0, 0, 1, 1], [], []>} : vector<32x16xf32>, vector<16x16xf32>, vector<32x16xf32> -> vector<32x16xf32>
    %125 = arith.addf %119, %124 : vector<32x16xf32>
    %c0_102 = arith.constant 0 : index
    %c1_103 = arith.constant 1 : index
    %c1_104 = arith.constant 1 : index
    %c0_105 = arith.constant 0 : index
    %126 = vector.load %arg10[%c0_102, %c1_103, %c1_104, %c0_105] : memref<2x6x6x16xf32, #tpu.memory_space<vmem>>, vector<2x4x4x16xf32>
    %127 = vector.shape_cast %126 : vector<2x4x4x16xf32> to vector<32x16xf32>
    %128 = vector.extract_strided_slice %100 {offsets = [4, 0, 0], sizes = [1, 16, 16], strides = [1, 1, 1]} : vector<9x16x16xf32> to vector<1x16x16xf32>
    %129 = vector.shape_cast %128 : vector<1x16x16xf32> to vector<16x16xf32>
    %cst_106 = arith.constant dense<0.000000e+00> : vector<32x16xf32>
    %130 = tpu.matmul %127, %129, %cst_106 {dimension_numbers = #tpu.dot_dimension_numbers<[1], [0], [0], [1], [0, 0, 1, 1], [], []>} : vector<32x16xf32>, vector<16x16xf32>, vector<32x16xf32> -> vector<32x16xf32>
    %131 = arith.addf %125, %130 : vector<32x16xf32>
    %c0_107 = arith.constant 0 : index
    %c1_108 = arith.constant 1 : index
    %c2_109 = arith.constant 2 : index
    %c0_110 = arith.constant 0 : index
    %132 = vector.load %arg10[%c0_107, %c1_108, %c2_109, %c0_110] : memref<2x6x6x16xf32, #tpu.memory_space<vmem>>, vector<2x4x4x16xf32>
    %133 = vector.shape_cast %132 : vector<2x4x4x16xf32> to vector<32x16xf32>
    %134 = vector.extract_strided_slice %100 {offsets = [5, 0, 0], sizes = [1, 16, 16], strides = [1, 1, 1]} : vector<9x16x16xf32> to vector<1x16x16xf32>
    %135 = vector.shape_cast %134 : vector<1x16x16xf32> to vector<16x16xf32>
    %cst_111 = arith.constant dense<0.000000e+00> : vector<32x16xf32>
    %136 = tpu.matmul %133, %135, %cst_111 {dimension_numbers = #tpu.dot_dimension_numbers<[1], [0], [0], [1], [0, 0, 1, 1], [], []>} : vector<32x16xf32>, vector<16x16xf32>, vector<32x16xf32> -> vector<32x16xf32>
    %137 = arith.addf %131, %136 : vector<32x16xf32>
    %c0_112 = arith.constant 0 : index
    %c2_113 = arith.constant 2 : index
    %c0_114 = arith.constant 0 : index
    %c0_115 = arith.constant 0 : index
    %138 = vector.load %arg10[%c0_112, %c2_113, %c0_114, %c0_115] : memref<2x6x6x16xf32, #tpu.memory_space<vmem>>, vector<2x4x4x16xf32>
    %139 = vector.shape_cast %138 : vector<2x4x4x16xf32> to vector<32x16xf32>
    %140 = vector.extract_strided_slice %100 {offsets = [6, 0, 0], sizes = [1, 16, 16], strides = [1, 1, 1]} : vector<9x16x16xf32> to vector<1x16x16xf32>
    %141 = vector.shape_cast %140 : vector<1x16x16xf32> to vector<16x16xf32>
    %cst_116 = arith.constant dense<0.000000e+00> : vector<32x16xf32>
    %142 = tpu.matmul %139, %141, %cst_116 {dimension_numbers = #tpu.dot_dimension_numbers<[1], [0], [0], [1], [0, 0, 1, 1], [], []>} : vector<32x16xf32>, vector<16x16xf32>, vector<32x16xf32> -> vector<32x16xf32>
    %143 = arith.addf %137, %142 : vector<32x16xf32>
    %c0_117 = arith.constant 0 : index
    %c2_118 = arith.constant 2 : index
    %c1_119 = arith.constant 1 : index
    %c0_120 = arith.constant 0 : index
    %144 = vector.load %arg10[%c0_117, %c2_118, %c1_119, %c0_120] : memref<2x6x6x16xf32, #tpu.memory_space<vmem>>, vector<2x4x4x16xf32>
    %145 = vector.shape_cast %144 : vector<2x4x4x16xf32> to vector<32x16xf32>
    %146 = vector.extract_strided_slice %100 {offsets = [7, 0, 0], sizes = [1, 16, 16], strides = [1, 1, 1]} : vector<9x16x16xf32> to vector<1x16x16xf32>
    %147 = vector.shape_cast %146 : vector<1x16x16xf32> to vector<16x16xf32>
    %cst_121 = arith.constant dense<0.000000e+00> : vector<32x16xf32>
    %148 = tpu.matmul %145, %147, %cst_121 {dimension_numbers = #tpu.dot_dimension_numbers<[1], [0], [0], [1], [0, 0, 1, 1], [], []>} : vector<32x16xf32>, vector<16x16xf32>, vector<32x16xf32> -> vector<32x16xf32>
    %149 = arith.addf %143, %148 : vector<32x16xf32>
    %c0_122 = arith.constant 0 : index
    %c2_123 = arith.constant 2 : index
    %c2_124 = arith.constant 2 : index
    %c0_125 = arith.constant 0 : index
    %150 = vector.load %arg10[%c0_122, %c2_123, %c2_124, %c0_125] : memref<2x6x6x16xf32, #tpu.memory_space<vmem>>, vector<2x4x4x16xf32>
    %151 = vector.shape_cast %150 : vector<2x4x4x16xf32> to vector<32x16xf32>
    %152 = vector.extract_strided_slice %100 {offsets = [8, 0, 0], sizes = [1, 16, 16], strides = [1, 1, 1]} : vector<9x16x16xf32> to vector<1x16x16xf32>
    %153 = vector.shape_cast %152 : vector<1x16x16xf32> to vector<16x16xf32>
    %cst_126 = arith.constant dense<0.000000e+00> : vector<32x16xf32>
    %154 = tpu.matmul %151, %153, %cst_126 {dimension_numbers = #tpu.dot_dimension_numbers<[1], [0], [0], [1], [0, 0, 1, 1], [], []>} : vector<32x16xf32>, vector<16x16xf32>, vector<32x16xf32> -> vector<32x16xf32>
    %155 = arith.addf %149, %154 : vector<32x16xf32>
    %c0_127 = arith.constant 0 : index
    %c0_128 = arith.constant 0 : index
    %156 = vector.load %arg6[%c0_127, %c0_128] : memref<1x16xf32, #tpu.memory_space<vmem>>, vector<1x16xf32>
    %c0_129 = arith.constant 0 : index
    %c0_130 = arith.constant 0 : index
    %157 = vector.load %arg7[%c0_129, %c0_130] : memref<1x16xf32, #tpu.memory_space<vmem>>, vector<1x16xf32>
    %cst_131 = arith.constant dense<0.000000e+00> : vector<16xf32>
    %158 = vector.multi_reduction <add>, %155, %cst_131 [0] : vector<32x16xf32> to vector<16xf32>
    %159 = vector.shape_cast %158 : vector<16xf32> to vector<1x16xf32>
    %cst_132 = arith.constant 3.125000e-02 : f32
    %160 = vector.broadcast %cst_132 : f32 to vector<1x16xf32>
    %161 = arith.mulf %159, %160 : vector<1x16xf32>
    %162 = arith.mulf %155, %155 : vector<32x16xf32>
    %cst_133 = arith.constant dense<0.000000e+00> : vector<16xf32>
    %163 = vector.multi_reduction <add>, %162, %cst_133 [0] : vector<32x16xf32> to vector<16xf32>
    %164 = vector.shape_cast %163 : vector<16xf32> to vector<1x16xf32>
    %cst_134 = arith.constant 3.125000e-02 : f32
    %165 = vector.broadcast %cst_134 : f32 to vector<1x16xf32>
    %166 = arith.mulf %164, %165 : vector<1x16xf32>
    %167 = arith.mulf %161, %161 : vector<1x16xf32>
    %168 = arith.subf %166, %167 : vector<1x16xf32>
    %cst_135 = arith.constant 0.000000e+00 : f32
    %169 = vector.broadcast %cst_135 : f32 to vector<1x16xf32>
    %170 = arith.maximumf %168, %169 : vector<1x16xf32>
    %cst_136 = arith.constant 9.99999974E-6 : f32
    %171 = vector.broadcast %cst_136 : f32 to vector<1x16xf32>
    %172 = arith.addf %170, %171 : vector<1x16xf32>
    %173 = math.rsqrt %172 : vector<1x16xf32>
    %174 = arith.mulf %156, %173 : vector<1x16xf32>
    %175 = arith.mulf %161, %174 : vector<1x16xf32>
    %176 = arith.subf %157, %175 : vector<1x16xf32>
    %177 = vector.broadcast %174 : vector<1x16xf32> to vector<32x16xf32>
    %178 = arith.mulf %155, %177 : vector<32x16xf32>
    %179 = vector.broadcast %176 : vector<1x16xf32> to vector<32x16xf32>
    %180 = arith.addf %178, %179 : vector<32x16xf32>
    %cst_137 = arith.constant 0.000000e+00 : f32
    %181 = vector.broadcast %cst_137 : f32 to vector<32x16xf32>
    %182 = arith.maximumf %180, %181 : vector<32x16xf32>
    %183 = vector.shape_cast %182 : vector<32x16xf32> to vector<2x4x4x16xf32>
    %c0_138 = arith.constant 0 : index
    %c0_139 = arith.constant 0 : index
    %c0_140 = arith.constant 0 : index
    %c0_141 = arith.constant 0 : index
    %184 = vector.load %arg8[%c0_138, %c0_139, %c0_140, %c0_141] : memref<2x4x4x16xf32, #tpu.memory_space<vmem>>, vector<2x4x4x16xf32>
    tpu.vector_store %arg8[%c0_138, %c0_139, %c0_140, %c0_141], %183 {strides = array<i32>} : memref<2x4x4x16xf32, #tpu.memory_space<vmem>>, vector<2x4x4x16xf32>,
    return
  }
  func.func @transform_0(%arg0: i32) -> (i32, i32, i32, i32) {
    %c0_i32 = arith.constant 0 : i32
    %c0_i32_0 = arith.constant 0 : i32
    %c0_i32_1 = arith.constant 0 : i32
    %c0_i32_2 = arith.constant 0 : i32
    %c0_i32_3 = arith.constant 0 : i32
    return %c0_i32, %c0_i32_0, %c0_i32_1, %c0_i32_2 : i32, i32, i32, i32
  }
  func.func @transform_1(%arg0: i32) -> (i32, i32, i32) {
    %c0_i32 = arith.constant 0 : i32
    %c0_i32_0 = arith.constant 0 : i32
    %c0_i32_1 = arith.constant 0 : i32
    %c0_i32_2 = arith.constant 0 : i32
    return %c0_i32, %c0_i32_0, %c0_i32_1 : i32, i32, i32
  }
  func.func @transform_2(%arg0: i32) -> (i32, i32) {
    %c0_i32 = arith.constant 0 : i32
    %c0_i32_0 = arith.constant 0 : i32
    %c0_i32_1 = arith.constant 0 : i32
    return %c0_i32, %c0_i32_0 : i32, i32
  }
  func.func @transform_3(%arg0: i32) -> (i32, i32) {
    %c0_i32 = arith.constant 0 : i32
    %c0_i32_0 = arith.constant 0 : i32
    %c0_i32_1 = arith.constant 0 : i32
    return %c0_i32, %c0_i32_0 : i32, i32
  }
  func.func @transform_4(%arg0: i32) -> (i32, i32, i32) {
    %c0_i32 = arith.constant 0 : i32
    %c0_i32_0 = arith.constant 0 : i32
    %c0_i32_1 = arith.constant 0 : i32
    %c0_i32_2 = arith.constant 0 : i32
    return %c0_i32, %c0_i32_0, %c0_i32_1 : i32, i32, i32
  }
  func.func @transform_5(%arg0: i32) -> (i32, i32) {
    %c0_i32 = arith.constant 0 : i32
    %c0_i32_0 = arith.constant 0 : i32
    %c0_i32_1 = arith.constant 0 : i32
    return %c0_i32, %c0_i32_0 : i32, i32
  }
  func.func @transform_6(%arg0: i32) -> (i32, i32) {
    %c0_i32 = arith.constant 0 : i32
    %c0_i32_0 = arith.constant 0 : i32
    %c0_i32_1 = arith.constant 0 : i32
    return %c0_i32, %c0_i32_0 : i32, i32
  }
  func.func @transform_7(%arg0: i32) -> (i32, i32, i32, i32) {
    %c0_i32 = arith.constant 0 : i32
    %c0_i32_0 = arith.constant 0 : i32
    %c0_i32_1 = arith.constant 0 : i32
    %c0_i32_2 = arith.constant 0 : i32
    %c0_i32_3 = arith.constant 0 : i32
    return %c0_i32, %c0_i32_0, %c0_i32_1, %c0_i32_2 : i32, i32, i32, i32
  }
}

module attributes {stable_mosaic.version = 11 : i64} {
  func.func @_down_stage_kernel(%arg0: i32, %arg1: memref<2x16x8x8xf32, #tpu.memory_space<vmem>>, %arg2: memref<9x4x8xf32, #tpu.memory_space<vmem>>, %arg3: memref<1x8xf32, #tpu.memory_space<vmem>>, %arg4: memref<1x8xf32, #tpu.memory_space<vmem>>, %arg5: memref<9x8x8xf32, #tpu.memory_space<vmem>>, %arg6: memref<1x8xf32, #tpu.memory_space<vmem>>, %arg7: memref<1x8xf32, #tpu.memory_space<vmem>>, %arg8: memref<2x8x8x8xf32, #tpu.memory_space<vmem>>, %arg9: memref<2x10x10x4xf32, #tpu.memory_space<vmem>>, %arg10: memref<2x10x10x8xf32, #tpu.memory_space<vmem>>) attributes {dimension_semantics = [#tpu.dimension_semantics<arbitrary>], iteration_bounds = array<i64: 1>, scalar_prefetch = 0 : i64, scratch_operands = 2 : i64, tpu.core_type = #tpu.core_type<tc>, window_params = [{pipeline_mode = #tpu.pipeline_mode<synchronous>, transform_indices = @transform_0, window_bounds = array<i64: 2, 16, 8, 8>}, {pipeline_mode = #tpu.pipeline_mode<synchronous>, transform_indices = @transform_1, window_bounds = array<i64: 9, 4, 8>}, {pipeline_mode = #tpu.pipeline_mode<synchronous>, transform_indices = @transform_2, window_bounds = array<i64: 1, 8>}, {pipeline_mode = #tpu.pipeline_mode<synchronous>, transform_indices = @transform_3, window_bounds = array<i64: 1, 8>}, {pipeline_mode = #tpu.pipeline_mode<synchronous>, transform_indices = @transform_4, window_bounds = array<i64: 9, 8, 8>}, {pipeline_mode = #tpu.pipeline_mode<synchronous>, transform_indices = @transform_5, window_bounds = array<i64: 1, 8>}, {pipeline_mode = #tpu.pipeline_mode<synchronous>, transform_indices = @transform_6, window_bounds = array<i64: 1, 8>}, {pipeline_mode = #tpu.pipeline_mode<synchronous>, transform_indices = @transform_7, window_bounds = array<i64: 2, 8, 8, 8>}]} {
    %c0 = arith.constant 0 : index
    %c0_0 = arith.constant 0 : index
    %c0_1 = arith.constant 0 : index
    %c0_2 = arith.constant 0 : index
    %0 = vector.load %arg1[%c0, %c0_0, %c0_1, %c0_2] : memref<2x16x8x8xf32, #tpu.memory_space<vmem>>, vector<2x16x8x8xf32>
    %1 = vector.shape_cast %0 : vector<2x16x8x8xf32> to vector<2x8x2x8x8xf32>
    %2 = vector.extract_strided_slice %1 {offsets = [0, 0, 0, 0, 0], sizes = [2, 8, 1, 8, 8], strides = [1, 1, 1, 1, 1]} : vector<2x8x2x8x8xf32> to vector<2x8x1x8x8xf32>
    %3 = vector.shape_cast %2 : vector<2x8x1x8x8xf32> to vector<2x8x8x8xf32>
    %4 = vector.extract_strided_slice %1 {offsets = [0, 0, 1, 0, 0], sizes = [2, 8, 1, 8, 8], strides = [1, 1, 1, 1, 1]} : vector<2x8x2x8x8xf32> to vector<2x8x1x8x8xf32>
    %5 = vector.shape_cast %4 : vector<2x8x1x8x8xf32> to vector<2x8x8x8xf32>
    %6 = arith.maximumf %3, %5 : vector<2x8x8x8xf32>
    %7 = vector.extract_strided_slice %6 {offsets = [0, 0, 0, 0], sizes = [2, 8, 8, 4], strides = [1, 1, 1, 1]} : vector<2x8x8x8xf32> to vector<2x8x8x4xf32>
    %8 = vector.extract_strided_slice %6 {offsets = [0, 0, 0, 4], sizes = [2, 8, 8, 4], strides = [1, 1, 1, 1]} : vector<2x8x8x8xf32> to vector<2x8x8x4xf32>
    %9 = arith.maximumf %7, %8 : vector<2x8x8x4xf32>
    %cst = arith.constant 0.000000e+00 : f32
    %10 = vector.broadcast %cst : f32 to vector<2x10x10x4xf32>
    %c0_3 = arith.constant 0 : index
    %c0_4 = arith.constant 0 : index
    %c0_5 = arith.constant 0 : index
    %c0_6 = arith.constant 0 : index
    %11 = vector.load %arg9[%c0_3, %c0_4, %c0_5, %c0_6] : memref<2x10x10x4xf32, #tpu.memory_space<vmem>>, vector<2x10x10x4xf32>
    tpu.vector_store %arg9[%c0_3, %c0_4, %c0_5, %c0_6], %10 {strides = array<i32>} : memref<2x10x10x4xf32, #tpu.memory_space<vmem>>, vector<2x10x10x4xf32>,
    %c0_7 = arith.constant 0 : index
    %c1 = arith.constant 1 : index
    %c1_8 = arith.constant 1 : index
    %c0_9 = arith.constant 0 : index
    %12 = vector.load %arg9[%c0_7, %c1, %c1_8, %c0_9] : memref<2x10x10x4xf32, #tpu.memory_space<vmem>>, vector<2x8x8x4xf32>
    tpu.vector_store %arg9[%c0_7, %c1, %c1_8, %c0_9], %9 {strides = array<i32>} : memref<2x10x10x4xf32, #tpu.memory_space<vmem>>, vector<2x8x8x4xf32>,
    %c0_10 = arith.constant 0 : index
    %c0_11 = arith.constant 0 : index
    %c0_12 = arith.constant 0 : index
    %13 = vector.load %arg2[%c0_10, %c0_11, %c0_12] : memref<9x4x8xf32, #tpu.memory_space<vmem>>, vector<9x4x8xf32>
    %cst_13 = arith.constant 0.000000e+00 : f32
    %14 = vector.broadcast %cst_13 : f32 to vector<128x8xf32>
    %c0_14 = arith.constant 0 : index
    %c0_15 = arith.constant 0 : index
    %c0_16 = arith.constant 0 : index
    %c0_17 = arith.constant 0 : index
    %15 = vector.load %arg9[%c0_14, %c0_15, %c0_16, %c0_17] : memref<2x10x10x4xf32, #tpu.memory_space<vmem>>, vector<2x8x8x4xf32>
    %16 = vector.shape_cast %15 : vector<2x8x8x4xf32> to vector<128x4xf32>
    %17 = vector.extract_strided_slice %13 {offsets = [0, 0, 0], sizes = [1, 4, 8], strides = [1, 1, 1]} : vector<9x4x8xf32> to vector<1x4x8xf32>
    %18 = vector.shape_cast %17 : vector<1x4x8xf32> to vector<4x8xf32>
    %cst_18 = arith.constant dense<0.000000e+00> : vector<128x8xf32>
    %19 = tpu.matmul %16, %18, %cst_18 {dimension_numbers = #tpu.dot_dimension_numbers<[1], [0], [0], [1], [0, 0, 1, 1], [], []>} : vector<128x4xf32>, vector<4x8xf32>, vector<128x8xf32> -> vector<128x8xf32>
    %20 = arith.addf %14, %19 : vector<128x8xf32>
    %c0_19 = arith.constant 0 : index
    %c0_20 = arith.constant 0 : index
    %c1_21 = arith.constant 1 : index
    %c0_22 = arith.constant 0 : index
    %21 = vector.load %arg9[%c0_19, %c0_20, %c1_21, %c0_22] : memref<2x10x10x4xf32, #tpu.memory_space<vmem>>, vector<2x8x8x4xf32>
    %22 = vector.shape_cast %21 : vector<2x8x8x4xf32> to vector<128x4xf32>
    %23 = vector.extract_strided_slice %13 {offsets = [1, 0, 0], sizes = [1, 4, 8], strides = [1, 1, 1]} : vector<9x4x8xf32> to vector<1x4x8xf32>
    %24 = vector.shape_cast %23 : vector<1x4x8xf32> to vector<4x8xf32>
    %cst_23 = arith.constant dense<0.000000e+00> : vector<128x8xf32>
    %25 = tpu.matmul %22, %24, %cst_23 {dimension_numbers = #tpu.dot_dimension_numbers<[1], [0], [0], [1], [0, 0, 1, 1], [], []>} : vector<128x4xf32>, vector<4x8xf32>, vector<128x8xf32> -> vector<128x8xf32>
    %26 = arith.addf %20, %25 : vector<128x8xf32>
    %c0_24 = arith.constant 0 : index
    %c0_25 = arith.constant 0 : index
    %c2 = arith.constant 2 : index
    %c0_26 = arith.constant 0 : index
    %27 = vector.load %arg9[%c0_24, %c0_25, %c2, %c0_26] : memref<2x10x10x4xf32, #tpu.memory_space<vmem>>, vector<2x8x8x4xf32>
    %28 = vector.shape_cast %27 : vector<2x8x8x4xf32> to vector<128x4xf32>
    %29 = vector.extract_strided_slice %13 {offsets = [2, 0, 0], sizes = [1, 4, 8], strides = [1, 1, 1]} : vector<9x4x8xf32> to vector<1x4x8xf32>
    %30 = vector.shape_cast %29 : vector<1x4x8xf32> to vector<4x8xf32>
    %cst_27 = arith.constant dense<0.000000e+00> : vector<128x8xf32>
    %31 = tpu.matmul %28, %30, %cst_27 {dimension_numbers = #tpu.dot_dimension_numbers<[1], [0], [0], [1], [0, 0, 1, 1], [], []>} : vector<128x4xf32>, vector<4x8xf32>, vector<128x8xf32> -> vector<128x8xf32>
    %32 = arith.addf %26, %31 : vector<128x8xf32>
    %c0_28 = arith.constant 0 : index
    %c1_29 = arith.constant 1 : index
    %c0_30 = arith.constant 0 : index
    %c0_31 = arith.constant 0 : index
    %33 = vector.load %arg9[%c0_28, %c1_29, %c0_30, %c0_31] : memref<2x10x10x4xf32, #tpu.memory_space<vmem>>, vector<2x8x8x4xf32>
    %34 = vector.shape_cast %33 : vector<2x8x8x4xf32> to vector<128x4xf32>
    %35 = vector.extract_strided_slice %13 {offsets = [3, 0, 0], sizes = [1, 4, 8], strides = [1, 1, 1]} : vector<9x4x8xf32> to vector<1x4x8xf32>
    %36 = vector.shape_cast %35 : vector<1x4x8xf32> to vector<4x8xf32>
    %cst_32 = arith.constant dense<0.000000e+00> : vector<128x8xf32>
    %37 = tpu.matmul %34, %36, %cst_32 {dimension_numbers = #tpu.dot_dimension_numbers<[1], [0], [0], [1], [0, 0, 1, 1], [], []>} : vector<128x4xf32>, vector<4x8xf32>, vector<128x8xf32> -> vector<128x8xf32>
    %38 = arith.addf %32, %37 : vector<128x8xf32>
    %c0_33 = arith.constant 0 : index
    %c1_34 = arith.constant 1 : index
    %c1_35 = arith.constant 1 : index
    %c0_36 = arith.constant 0 : index
    %39 = vector.load %arg9[%c0_33, %c1_34, %c1_35, %c0_36] : memref<2x10x10x4xf32, #tpu.memory_space<vmem>>, vector<2x8x8x4xf32>
    %40 = vector.shape_cast %39 : vector<2x8x8x4xf32> to vector<128x4xf32>
    %41 = vector.extract_strided_slice %13 {offsets = [4, 0, 0], sizes = [1, 4, 8], strides = [1, 1, 1]} : vector<9x4x8xf32> to vector<1x4x8xf32>
    %42 = vector.shape_cast %41 : vector<1x4x8xf32> to vector<4x8xf32>
    %cst_37 = arith.constant dense<0.000000e+00> : vector<128x8xf32>
    %43 = tpu.matmul %40, %42, %cst_37 {dimension_numbers = #tpu.dot_dimension_numbers<[1], [0], [0], [1], [0, 0, 1, 1], [], []>} : vector<128x4xf32>, vector<4x8xf32>, vector<128x8xf32> -> vector<128x8xf32>
    %44 = arith.addf %38, %43 : vector<128x8xf32>
    %c0_38 = arith.constant 0 : index
    %c1_39 = arith.constant 1 : index
    %c2_40 = arith.constant 2 : index
    %c0_41 = arith.constant 0 : index
    %45 = vector.load %arg9[%c0_38, %c1_39, %c2_40, %c0_41] : memref<2x10x10x4xf32, #tpu.memory_space<vmem>>, vector<2x8x8x4xf32>
    %46 = vector.shape_cast %45 : vector<2x8x8x4xf32> to vector<128x4xf32>
    %47 = vector.extract_strided_slice %13 {offsets = [5, 0, 0], sizes = [1, 4, 8], strides = [1, 1, 1]} : vector<9x4x8xf32> to vector<1x4x8xf32>
    %48 = vector.shape_cast %47 : vector<1x4x8xf32> to vector<4x8xf32>
    %cst_42 = arith.constant dense<0.000000e+00> : vector<128x8xf32>
    %49 = tpu.matmul %46, %48, %cst_42 {dimension_numbers = #tpu.dot_dimension_numbers<[1], [0], [0], [1], [0, 0, 1, 1], [], []>} : vector<128x4xf32>, vector<4x8xf32>, vector<128x8xf32> -> vector<128x8xf32>
    %50 = arith.addf %44, %49 : vector<128x8xf32>
    %c0_43 = arith.constant 0 : index
    %c2_44 = arith.constant 2 : index
    %c0_45 = arith.constant 0 : index
    %c0_46 = arith.constant 0 : index
    %51 = vector.load %arg9[%c0_43, %c2_44, %c0_45, %c0_46] : memref<2x10x10x4xf32, #tpu.memory_space<vmem>>, vector<2x8x8x4xf32>
    %52 = vector.shape_cast %51 : vector<2x8x8x4xf32> to vector<128x4xf32>
    %53 = vector.extract_strided_slice %13 {offsets = [6, 0, 0], sizes = [1, 4, 8], strides = [1, 1, 1]} : vector<9x4x8xf32> to vector<1x4x8xf32>
    %54 = vector.shape_cast %53 : vector<1x4x8xf32> to vector<4x8xf32>
    %cst_47 = arith.constant dense<0.000000e+00> : vector<128x8xf32>
    %55 = tpu.matmul %52, %54, %cst_47 {dimension_numbers = #tpu.dot_dimension_numbers<[1], [0], [0], [1], [0, 0, 1, 1], [], []>} : vector<128x4xf32>, vector<4x8xf32>, vector<128x8xf32> -> vector<128x8xf32>
    %56 = arith.addf %50, %55 : vector<128x8xf32>
    %c0_48 = arith.constant 0 : index
    %c2_49 = arith.constant 2 : index
    %c1_50 = arith.constant 1 : index
    %c0_51 = arith.constant 0 : index
    %57 = vector.load %arg9[%c0_48, %c2_49, %c1_50, %c0_51] : memref<2x10x10x4xf32, #tpu.memory_space<vmem>>, vector<2x8x8x4xf32>
    %58 = vector.shape_cast %57 : vector<2x8x8x4xf32> to vector<128x4xf32>
    %59 = vector.extract_strided_slice %13 {offsets = [7, 0, 0], sizes = [1, 4, 8], strides = [1, 1, 1]} : vector<9x4x8xf32> to vector<1x4x8xf32>
    %60 = vector.shape_cast %59 : vector<1x4x8xf32> to vector<4x8xf32>
    %cst_52 = arith.constant dense<0.000000e+00> : vector<128x8xf32>
    %61 = tpu.matmul %58, %60, %cst_52 {dimension_numbers = #tpu.dot_dimension_numbers<[1], [0], [0], [1], [0, 0, 1, 1], [], []>} : vector<128x4xf32>, vector<4x8xf32>, vector<128x8xf32> -> vector<128x8xf32>
    %62 = arith.addf %56, %61 : vector<128x8xf32>
    %c0_53 = arith.constant 0 : index
    %c2_54 = arith.constant 2 : index
    %c2_55 = arith.constant 2 : index
    %c0_56 = arith.constant 0 : index
    %63 = vector.load %arg9[%c0_53, %c2_54, %c2_55, %c0_56] : memref<2x10x10x4xf32, #tpu.memory_space<vmem>>, vector<2x8x8x4xf32>
    %64 = vector.shape_cast %63 : vector<2x8x8x4xf32> to vector<128x4xf32>
    %65 = vector.extract_strided_slice %13 {offsets = [8, 0, 0], sizes = [1, 4, 8], strides = [1, 1, 1]} : vector<9x4x8xf32> to vector<1x4x8xf32>
    %66 = vector.shape_cast %65 : vector<1x4x8xf32> to vector<4x8xf32>
    %cst_57 = arith.constant dense<0.000000e+00> : vector<128x8xf32>
    %67 = tpu.matmul %64, %66, %cst_57 {dimension_numbers = #tpu.dot_dimension_numbers<[1], [0], [0], [1], [0, 0, 1, 1], [], []>} : vector<128x4xf32>, vector<4x8xf32>, vector<128x8xf32> -> vector<128x8xf32>
    %68 = arith.addf %62, %67 : vector<128x8xf32>
    %c0_58 = arith.constant 0 : index
    %c0_59 = arith.constant 0 : index
    %69 = vector.load %arg3[%c0_58, %c0_59] : memref<1x8xf32, #tpu.memory_space<vmem>>, vector<1x8xf32>
    %c0_60 = arith.constant 0 : index
    %c0_61 = arith.constant 0 : index
    %70 = vector.load %arg4[%c0_60, %c0_61] : memref<1x8xf32, #tpu.memory_space<vmem>>, vector<1x8xf32>
    %cst_62 = arith.constant dense<0.000000e+00> : vector<8xf32>
    %71 = vector.multi_reduction <add>, %68, %cst_62 [0] : vector<128x8xf32> to vector<8xf32>
    %72 = vector.shape_cast %71 : vector<8xf32> to vector<1x8xf32>
    %cst_63 = arith.constant 7.812500e-03 : f32
    %73 = vector.broadcast %cst_63 : f32 to vector<1x8xf32>
    %74 = arith.mulf %72, %73 : vector<1x8xf32>
    %75 = arith.mulf %68, %68 : vector<128x8xf32>
    %cst_64 = arith.constant dense<0.000000e+00> : vector<8xf32>
    %76 = vector.multi_reduction <add>, %75, %cst_64 [0] : vector<128x8xf32> to vector<8xf32>
    %77 = vector.shape_cast %76 : vector<8xf32> to vector<1x8xf32>
    %cst_65 = arith.constant 7.812500e-03 : f32
    %78 = vector.broadcast %cst_65 : f32 to vector<1x8xf32>
    %79 = arith.mulf %77, %78 : vector<1x8xf32>
    %80 = arith.mulf %74, %74 : vector<1x8xf32>
    %81 = arith.subf %79, %80 : vector<1x8xf32>
    %cst_66 = arith.constant 0.000000e+00 : f32
    %82 = vector.broadcast %cst_66 : f32 to vector<1x8xf32>
    %83 = arith.maximumf %81, %82 : vector<1x8xf32>
    %cst_67 = arith.constant 9.99999974E-6 : f32
    %84 = vector.broadcast %cst_67 : f32 to vector<1x8xf32>
    %85 = arith.addf %83, %84 : vector<1x8xf32>
    %86 = math.rsqrt %85 : vector<1x8xf32>
    %87 = arith.mulf %69, %86 : vector<1x8xf32>
    %88 = arith.mulf %74, %87 : vector<1x8xf32>
    %89 = arith.subf %70, %88 : vector<1x8xf32>
    %90 = vector.broadcast %87 : vector<1x8xf32> to vector<128x8xf32>
    %91 = arith.mulf %68, %90 : vector<128x8xf32>
    %92 = vector.broadcast %89 : vector<1x8xf32> to vector<128x8xf32>
    %93 = arith.addf %91, %92 : vector<128x8xf32>
    %cst_68 = arith.constant 0.000000e+00 : f32
    %94 = vector.broadcast %cst_68 : f32 to vector<128x8xf32>
    %95 = arith.maximumf %93, %94 : vector<128x8xf32>
    %cst_69 = arith.constant 0.000000e+00 : f32
    %96 = vector.broadcast %cst_69 : f32 to vector<2x10x10x8xf32>
    %c0_70 = arith.constant 0 : index
    %c0_71 = arith.constant 0 : index
    %c0_72 = arith.constant 0 : index
    %c0_73 = arith.constant 0 : index
    %97 = vector.load %arg10[%c0_70, %c0_71, %c0_72, %c0_73] : memref<2x10x10x8xf32, #tpu.memory_space<vmem>>, vector<2x10x10x8xf32>
    tpu.vector_store %arg10[%c0_70, %c0_71, %c0_72, %c0_73], %96 {strides = array<i32>} : memref<2x10x10x8xf32, #tpu.memory_space<vmem>>, vector<2x10x10x8xf32>,
    %98 = vector.shape_cast %95 : vector<128x8xf32> to vector<2x8x8x8xf32>
    %c0_74 = arith.constant 0 : index
    %c1_75 = arith.constant 1 : index
    %c1_76 = arith.constant 1 : index
    %c0_77 = arith.constant 0 : index
    %99 = vector.load %arg10[%c0_74, %c1_75, %c1_76, %c0_77] : memref<2x10x10x8xf32, #tpu.memory_space<vmem>>, vector<2x8x8x8xf32>
    tpu.vector_store %arg10[%c0_74, %c1_75, %c1_76, %c0_77], %98 {strides = array<i32>} : memref<2x10x10x8xf32, #tpu.memory_space<vmem>>, vector<2x8x8x8xf32>,
    %c0_78 = arith.constant 0 : index
    %c0_79 = arith.constant 0 : index
    %c0_80 = arith.constant 0 : index
    %100 = vector.load %arg5[%c0_78, %c0_79, %c0_80] : memref<9x8x8xf32, #tpu.memory_space<vmem>>, vector<9x8x8xf32>
    %cst_81 = arith.constant 0.000000e+00 : f32
    %101 = vector.broadcast %cst_81 : f32 to vector<128x8xf32>
    %c0_82 = arith.constant 0 : index
    %c0_83 = arith.constant 0 : index
    %c0_84 = arith.constant 0 : index
    %c0_85 = arith.constant 0 : index
    %102 = vector.load %arg10[%c0_82, %c0_83, %c0_84, %c0_85] : memref<2x10x10x8xf32, #tpu.memory_space<vmem>>, vector<2x8x8x8xf32>
    %103 = vector.shape_cast %102 : vector<2x8x8x8xf32> to vector<128x8xf32>
    %104 = vector.extract_strided_slice %100 {offsets = [0, 0, 0], sizes = [1, 8, 8], strides = [1, 1, 1]} : vector<9x8x8xf32> to vector<1x8x8xf32>
    %105 = vector.shape_cast %104 : vector<1x8x8xf32> to vector<8x8xf32>
    %cst_86 = arith.constant dense<0.000000e+00> : vector<128x8xf32>
    %106 = tpu.matmul %103, %105, %cst_86 {dimension_numbers = #tpu.dot_dimension_numbers<[1], [0], [0], [1], [0, 0, 1, 1], [], []>} : vector<128x8xf32>, vector<8x8xf32>, vector<128x8xf32> -> vector<128x8xf32>
    %107 = arith.addf %101, %106 : vector<128x8xf32>
    %c0_87 = arith.constant 0 : index
    %c0_88 = arith.constant 0 : index
    %c1_89 = arith.constant 1 : index
    %c0_90 = arith.constant 0 : index
    %108 = vector.load %arg10[%c0_87, %c0_88, %c1_89, %c0_90] : memref<2x10x10x8xf32, #tpu.memory_space<vmem>>, vector<2x8x8x8xf32>
    %109 = vector.shape_cast %108 : vector<2x8x8x8xf32> to vector<128x8xf32>
    %110 = vector.extract_strided_slice %100 {offsets = [1, 0, 0], sizes = [1, 8, 8], strides = [1, 1, 1]} : vector<9x8x8xf32> to vector<1x8x8xf32>
    %111 = vector.shape_cast %110 : vector<1x8x8xf32> to vector<8x8xf32>
    %cst_91 = arith.constant dense<0.000000e+00> : vector<128x8xf32>
    %112 = tpu.matmul %109, %111, %cst_91 {dimension_numbers = #tpu.dot_dimension_numbers<[1], [0], [0], [1], [0, 0, 1, 1], [], []>} : vector<128x8xf32>, vector<8x8xf32>, vector<128x8xf32> -> vector<128x8xf32>
    %113 = arith.addf %107, %112 : vector<128x8xf32>
    %c0_92 = arith.constant 0 : index
    %c0_93 = arith.constant 0 : index
    %c2_94 = arith.constant 2 : index
    %c0_95 = arith.constant 0 : index
    %114 = vector.load %arg10[%c0_92, %c0_93, %c2_94, %c0_95] : memref<2x10x10x8xf32, #tpu.memory_space<vmem>>, vector<2x8x8x8xf32>
    %115 = vector.shape_cast %114 : vector<2x8x8x8xf32> to vector<128x8xf32>
    %116 = vector.extract_strided_slice %100 {offsets = [2, 0, 0], sizes = [1, 8, 8], strides = [1, 1, 1]} : vector<9x8x8xf32> to vector<1x8x8xf32>
    %117 = vector.shape_cast %116 : vector<1x8x8xf32> to vector<8x8xf32>
    %cst_96 = arith.constant dense<0.000000e+00> : vector<128x8xf32>
    %118 = tpu.matmul %115, %117, %cst_96 {dimension_numbers = #tpu.dot_dimension_numbers<[1], [0], [0], [1], [0, 0, 1, 1], [], []>} : vector<128x8xf32>, vector<8x8xf32>, vector<128x8xf32> -> vector<128x8xf32>
    %119 = arith.addf %113, %118 : vector<128x8xf32>
    %c0_97 = arith.constant 0 : index
    %c1_98 = arith.constant 1 : index
    %c0_99 = arith.constant 0 : index
    %c0_100 = arith.constant 0 : index
    %120 = vector.load %arg10[%c0_97, %c1_98, %c0_99, %c0_100] : memref<2x10x10x8xf32, #tpu.memory_space<vmem>>, vector<2x8x8x8xf32>
    %121 = vector.shape_cast %120 : vector<2x8x8x8xf32> to vector<128x8xf32>
    %122 = vector.extract_strided_slice %100 {offsets = [3, 0, 0], sizes = [1, 8, 8], strides = [1, 1, 1]} : vector<9x8x8xf32> to vector<1x8x8xf32>
    %123 = vector.shape_cast %122 : vector<1x8x8xf32> to vector<8x8xf32>
    %cst_101 = arith.constant dense<0.000000e+00> : vector<128x8xf32>
    %124 = tpu.matmul %121, %123, %cst_101 {dimension_numbers = #tpu.dot_dimension_numbers<[1], [0], [0], [1], [0, 0, 1, 1], [], []>} : vector<128x8xf32>, vector<8x8xf32>, vector<128x8xf32> -> vector<128x8xf32>
    %125 = arith.addf %119, %124 : vector<128x8xf32>
    %c0_102 = arith.constant 0 : index
    %c1_103 = arith.constant 1 : index
    %c1_104 = arith.constant 1 : index
    %c0_105 = arith.constant 0 : index
    %126 = vector.load %arg10[%c0_102, %c1_103, %c1_104, %c0_105] : memref<2x10x10x8xf32, #tpu.memory_space<vmem>>, vector<2x8x8x8xf32>
    %127 = vector.shape_cast %126 : vector<2x8x8x8xf32> to vector<128x8xf32>
    %128 = vector.extract_strided_slice %100 {offsets = [4, 0, 0], sizes = [1, 8, 8], strides = [1, 1, 1]} : vector<9x8x8xf32> to vector<1x8x8xf32>
    %129 = vector.shape_cast %128 : vector<1x8x8xf32> to vector<8x8xf32>
    %cst_106 = arith.constant dense<0.000000e+00> : vector<128x8xf32>
    %130 = tpu.matmul %127, %129, %cst_106 {dimension_numbers = #tpu.dot_dimension_numbers<[1], [0], [0], [1], [0, 0, 1, 1], [], []>} : vector<128x8xf32>, vector<8x8xf32>, vector<128x8xf32> -> vector<128x8xf32>
    %131 = arith.addf %125, %130 : vector<128x8xf32>
    %c0_107 = arith.constant 0 : index
    %c1_108 = arith.constant 1 : index
    %c2_109 = arith.constant 2 : index
    %c0_110 = arith.constant 0 : index
    %132 = vector.load %arg10[%c0_107, %c1_108, %c2_109, %c0_110] : memref<2x10x10x8xf32, #tpu.memory_space<vmem>>, vector<2x8x8x8xf32>
    %133 = vector.shape_cast %132 : vector<2x8x8x8xf32> to vector<128x8xf32>
    %134 = vector.extract_strided_slice %100 {offsets = [5, 0, 0], sizes = [1, 8, 8], strides = [1, 1, 1]} : vector<9x8x8xf32> to vector<1x8x8xf32>
    %135 = vector.shape_cast %134 : vector<1x8x8xf32> to vector<8x8xf32>
    %cst_111 = arith.constant dense<0.000000e+00> : vector<128x8xf32>
    %136 = tpu.matmul %133, %135, %cst_111 {dimension_numbers = #tpu.dot_dimension_numbers<[1], [0], [0], [1], [0, 0, 1, 1], [], []>} : vector<128x8xf32>, vector<8x8xf32>, vector<128x8xf32> -> vector<128x8xf32>
    %137 = arith.addf %131, %136 : vector<128x8xf32>
    %c0_112 = arith.constant 0 : index
    %c2_113 = arith.constant 2 : index
    %c0_114 = arith.constant 0 : index
    %c0_115 = arith.constant 0 : index
    %138 = vector.load %arg10[%c0_112, %c2_113, %c0_114, %c0_115] : memref<2x10x10x8xf32, #tpu.memory_space<vmem>>, vector<2x8x8x8xf32>
    %139 = vector.shape_cast %138 : vector<2x8x8x8xf32> to vector<128x8xf32>
    %140 = vector.extract_strided_slice %100 {offsets = [6, 0, 0], sizes = [1, 8, 8], strides = [1, 1, 1]} : vector<9x8x8xf32> to vector<1x8x8xf32>
    %141 = vector.shape_cast %140 : vector<1x8x8xf32> to vector<8x8xf32>
    %cst_116 = arith.constant dense<0.000000e+00> : vector<128x8xf32>
    %142 = tpu.matmul %139, %141, %cst_116 {dimension_numbers = #tpu.dot_dimension_numbers<[1], [0], [0], [1], [0, 0, 1, 1], [], []>} : vector<128x8xf32>, vector<8x8xf32>, vector<128x8xf32> -> vector<128x8xf32>
    %143 = arith.addf %137, %142 : vector<128x8xf32>
    %c0_117 = arith.constant 0 : index
    %c2_118 = arith.constant 2 : index
    %c1_119 = arith.constant 1 : index
    %c0_120 = arith.constant 0 : index
    %144 = vector.load %arg10[%c0_117, %c2_118, %c1_119, %c0_120] : memref<2x10x10x8xf32, #tpu.memory_space<vmem>>, vector<2x8x8x8xf32>
    %145 = vector.shape_cast %144 : vector<2x8x8x8xf32> to vector<128x8xf32>
    %146 = vector.extract_strided_slice %100 {offsets = [7, 0, 0], sizes = [1, 8, 8], strides = [1, 1, 1]} : vector<9x8x8xf32> to vector<1x8x8xf32>
    %147 = vector.shape_cast %146 : vector<1x8x8xf32> to vector<8x8xf32>
    %cst_121 = arith.constant dense<0.000000e+00> : vector<128x8xf32>
    %148 = tpu.matmul %145, %147, %cst_121 {dimension_numbers = #tpu.dot_dimension_numbers<[1], [0], [0], [1], [0, 0, 1, 1], [], []>} : vector<128x8xf32>, vector<8x8xf32>, vector<128x8xf32> -> vector<128x8xf32>
    %149 = arith.addf %143, %148 : vector<128x8xf32>
    %c0_122 = arith.constant 0 : index
    %c2_123 = arith.constant 2 : index
    %c2_124 = arith.constant 2 : index
    %c0_125 = arith.constant 0 : index
    %150 = vector.load %arg10[%c0_122, %c2_123, %c2_124, %c0_125] : memref<2x10x10x8xf32, #tpu.memory_space<vmem>>, vector<2x8x8x8xf32>
    %151 = vector.shape_cast %150 : vector<2x8x8x8xf32> to vector<128x8xf32>
    %152 = vector.extract_strided_slice %100 {offsets = [8, 0, 0], sizes = [1, 8, 8], strides = [1, 1, 1]} : vector<9x8x8xf32> to vector<1x8x8xf32>
    %153 = vector.shape_cast %152 : vector<1x8x8xf32> to vector<8x8xf32>
    %cst_126 = arith.constant dense<0.000000e+00> : vector<128x8xf32>
    %154 = tpu.matmul %151, %153, %cst_126 {dimension_numbers = #tpu.dot_dimension_numbers<[1], [0], [0], [1], [0, 0, 1, 1], [], []>} : vector<128x8xf32>, vector<8x8xf32>, vector<128x8xf32> -> vector<128x8xf32>
    %155 = arith.addf %149, %154 : vector<128x8xf32>
    %c0_127 = arith.constant 0 : index
    %c0_128 = arith.constant 0 : index
    %156 = vector.load %arg6[%c0_127, %c0_128] : memref<1x8xf32, #tpu.memory_space<vmem>>, vector<1x8xf32>
    %c0_129 = arith.constant 0 : index
    %c0_130 = arith.constant 0 : index
    %157 = vector.load %arg7[%c0_129, %c0_130] : memref<1x8xf32, #tpu.memory_space<vmem>>, vector<1x8xf32>
    %cst_131 = arith.constant dense<0.000000e+00> : vector<8xf32>
    %158 = vector.multi_reduction <add>, %155, %cst_131 [0] : vector<128x8xf32> to vector<8xf32>
    %159 = vector.shape_cast %158 : vector<8xf32> to vector<1x8xf32>
    %cst_132 = arith.constant 7.812500e-03 : f32
    %160 = vector.broadcast %cst_132 : f32 to vector<1x8xf32>
    %161 = arith.mulf %159, %160 : vector<1x8xf32>
    %162 = arith.mulf %155, %155 : vector<128x8xf32>
    %cst_133 = arith.constant dense<0.000000e+00> : vector<8xf32>
    %163 = vector.multi_reduction <add>, %162, %cst_133 [0] : vector<128x8xf32> to vector<8xf32>
    %164 = vector.shape_cast %163 : vector<8xf32> to vector<1x8xf32>
    %cst_134 = arith.constant 7.812500e-03 : f32
    %165 = vector.broadcast %cst_134 : f32 to vector<1x8xf32>
    %166 = arith.mulf %164, %165 : vector<1x8xf32>
    %167 = arith.mulf %161, %161 : vector<1x8xf32>
    %168 = arith.subf %166, %167 : vector<1x8xf32>
    %cst_135 = arith.constant 0.000000e+00 : f32
    %169 = vector.broadcast %cst_135 : f32 to vector<1x8xf32>
    %170 = arith.maximumf %168, %169 : vector<1x8xf32>
    %cst_136 = arith.constant 9.99999974E-6 : f32
    %171 = vector.broadcast %cst_136 : f32 to vector<1x8xf32>
    %172 = arith.addf %170, %171 : vector<1x8xf32>
    %173 = math.rsqrt %172 : vector<1x8xf32>
    %174 = arith.mulf %156, %173 : vector<1x8xf32>
    %175 = arith.mulf %161, %174 : vector<1x8xf32>
    %176 = arith.subf %157, %175 : vector<1x8xf32>
    %177 = vector.broadcast %174 : vector<1x8xf32> to vector<128x8xf32>
    %178 = arith.mulf %155, %177 : vector<128x8xf32>
    %179 = vector.broadcast %176 : vector<1x8xf32> to vector<128x8xf32>
    %180 = arith.addf %178, %179 : vector<128x8xf32>
    %cst_137 = arith.constant 0.000000e+00 : f32
    %181 = vector.broadcast %cst_137 : f32 to vector<128x8xf32>
    %182 = arith.maximumf %180, %181 : vector<128x8xf32>
    %183 = vector.shape_cast %182 : vector<128x8xf32> to vector<2x8x8x8xf32>
    %c0_138 = arith.constant 0 : index
    %c0_139 = arith.constant 0 : index
    %c0_140 = arith.constant 0 : index
    %c0_141 = arith.constant 0 : index
    %184 = vector.load %arg8[%c0_138, %c0_139, %c0_140, %c0_141] : memref<2x8x8x8xf32, #tpu.memory_space<vmem>>, vector<2x8x8x8xf32>
    tpu.vector_store %arg8[%c0_138, %c0_139, %c0_140, %c0_141], %183 {strides = array<i32>} : memref<2x8x8x8xf32, #tpu.memory_space<vmem>>, vector<2x8x8x8xf32>,
    return
  }
  func.func @transform_0(%arg0: i32) -> (i32, i32, i32, i32) {
    %c0_i32 = arith.constant 0 : i32
    %c0_i32_0 = arith.constant 0 : i32
    %c0_i32_1 = arith.constant 0 : i32
    %c0_i32_2 = arith.constant 0 : i32
    %c0_i32_3 = arith.constant 0 : i32
    return %c0_i32, %c0_i32_0, %c0_i32_1, %c0_i32_2 : i32, i32, i32, i32
  }
  func.func @transform_1(%arg0: i32) -> (i32, i32, i32) {
    %c0_i32 = arith.constant 0 : i32
    %c0_i32_0 = arith.constant 0 : i32
    %c0_i32_1 = arith.constant 0 : i32
    %c0_i32_2 = arith.constant 0 : i32
    return %c0_i32, %c0_i32_0, %c0_i32_1 : i32, i32, i32
  }
  func.func @transform_2(%arg0: i32) -> (i32, i32) {
    %c0_i32 = arith.constant 0 : i32
    %c0_i32_0 = arith.constant 0 : i32
    %c0_i32_1 = arith.constant 0 : i32
    return %c0_i32, %c0_i32_0 : i32, i32
  }
  func.func @transform_3(%arg0: i32) -> (i32, i32) {
    %c0_i32 = arith.constant 0 : i32
    %c0_i32_0 = arith.constant 0 : i32
    %c0_i32_1 = arith.constant 0 : i32
    return %c0_i32, %c0_i32_0 : i32, i32
  }
  func.func @transform_4(%arg0: i32) -> (i32, i32, i32) {
    %c0_i32 = arith.constant 0 : i32
    %c0_i32_0 = arith.constant 0 : i32
    %c0_i32_1 = arith.constant 0 : i32
    %c0_i32_2 = arith.constant 0 : i32
    return %c0_i32, %c0_i32_0, %c0_i32_1 : i32, i32, i32
  }
  func.func @transform_5(%arg0: i32) -> (i32, i32) {
    %c0_i32 = arith.constant 0 : i32
    %c0_i32_0 = arith.constant 0 : i32
    %c0_i32_1 = arith.constant 0 : i32
    return %c0_i32, %c0_i32_0 : i32, i32
  }
  func.func @transform_6(%arg0: i32) -> (i32, i32) {
    %c0_i32 = arith.constant 0 : i32
    %c0_i32_0 = arith.constant 0 : i32
    %c0_i32_1 = arith.constant 0 : i32
    return %c0_i32, %c0_i32_0 : i32, i32
  }
  func.func @transform_7(%arg0: i32) -> (i32, i32, i32, i32) {
    %c0_i32 = arith.constant 0 : i32
    %c0_i32_0 = arith.constant 0 : i32
    %c0_i32_1 = arith.constant 0 : i32
    %c0_i32_2 = arith.constant 0 : i32
    %c0_i32_3 = arith.constant 0 : i32
    return %c0_i32, %c0_i32_0, %c0_i32_1, %c0_i32_2 : i32, i32, i32, i32
  }
}

</mosaic_0001>

<llo_original>
// kernel: encoder_forward.5
$region0: #{encoder_forward.5}
  #allocation0 [shape = 'u32[]', space=smem, size = 0x4, offset = 0x4, fixed_abs, tag = 'smem constant byte address 0x4 - core index']
  #allocation1 [shape = 'u32[144,128]{1,0:T(1,128)}', space=vmem, size = 0x12000, scoped, tag = 'internal scratch']
  #allocation2 [shape = 'f32[2,4,4,16]{3,2,1,0:T(4,128)}', space=vmem, size = 0x4000, scoped, tag = 'scratch operand']
  #allocation3 [shape = 'f32[2,4,4,16]{3,2,1,0:T(4,128)}', space=vmem, size = 0x4000, scoped, tag = 'scratch operand']
  %s0 = inlined_call_operand.vmem [shape: f32[2,4,2,32], index: 0, kind: input, shape index: {}]
  %s1 = inlined_call_operand.vmem [shape: f32[9,16,16], index: 1, kind: input, shape index: {}]
  %s2 = inlined_call_operand.vmem [shape: f32[1,16], index: 2, kind: input, shape index: {}]
  %s3 = inlined_call_operand.vmem [shape: f32[1,16], index: 3, kind: input, shape index: {}]
  %s4 = inlined_call_operand.vmem [shape: f32[9,16,16], index: 4, kind: input, shape index: {}]
  %s5 = inlined_call_operand.vmem [shape: f32[1,16], index: 5, kind: input, shape index: {}]
  %s6 = inlined_call_operand.vmem [shape: f32[1,16], index: 6, kind: input, shape index: {}]
  %s7 = inlined_call_operand.hbm [shape: f32[2,2,2,16], index: 7, kind: output, shape index: {}]
  %s8 = sld [smem:[#allocation0]]
  $region38: #{encoder_forward.5} parent=0
    _
  %s10 = ssub.s32 1, %s8
  %s11 = scalar_select 0, %s10, %s8
  $region1: #{encoder_forward.5} parent=0
    #allocation4 [shape = 'u8[4096]{0}', space=vmem, size = 0x1000, scoped, tag = 'output window, operand 0, single buffered']
    #allocation5 [shape = 's32[1]{0}', space=sflag, size = 0x4, scoped, tag = 'scoped memory for encoder_forward.5']
    %12 = vsyncpa [#allocation5], 0
    // Predicated region
    $region2: #{encoder_forward.5} parent=1 // pred_check
      _
    $region3: #{encoder_forward.5} parent=1 // pred_check_branch
      %14 = sbr.rel (0) target = $region5
    $region4: #{encoder_forward.5} parent=1 // pred_region
      _
    $region5: #{encoder_forward.5} parent=1 // pred_fallthru
      _
    // Predicated region
    $region6: #{encoder_forward.5} parent=1 // pred_check
      _
    $region7: #{encoder_forward.5} parent=1 // pred_check_branch
      %16 = sbr.rel (0) target = $region9
    $region8: #{encoder_forward.5} parent=1 // pred_region
      _
    $region9: #{encoder_forward.5} parent=1 // pred_fallthru
      _
    // Predicated region
    $region10: #{encoder_forward.5} parent=1 // pred_check
      _
    $region11: #{encoder_forward.5} parent=1 // pred_check_branch
      %18 = sbr.rel (0) target = $region13
    $region12: #{encoder_forward.5} parent=1 // pred_region
      _
    $region13: #{encoder_forward.5} parent=1 // pred_fallthru
      _
    // Predicated region
    $region14: #{encoder_forward.5} parent=1 // pred_check
      _
    $region15: #{encoder_forward.5} parent=1 // pred_check_branch
      %20 = sbr.rel (0) target = $region17
    $region16: #{encoder_forward.5} parent=1 // pred_region
      _
    $region17: #{encoder_forward.5} parent=1 // pred_fallthru
      _
    // Predicated region
    $region18: #{encoder_forward.5} parent=1 // pred_check
      _
    $region19: #{encoder_forward.5} parent=1 // pred_check_branch
      %22 = sbr.rel (0) target = $region21
    $region20: #{encoder_forward.5} parent=1 // pred_region
      _
    $region21: #{encoder_forward.5} parent=1 // pred_fallthru
      _
    // Predicated region
    $region22: #{encoder_forward.5} parent=1 // pred_check
      _
    $region23: #{encoder_forward.5} parent=1 // pred_check_branch
      %24 = sbr.rel (0) target = $region25
    $region24: #{encoder_forward.5} parent=1 // pred_region
      _
    $region25: #{encoder_forward.5} parent=1 // pred_fallthru
      _
    // Predicated region
    $region26: #{encoder_forward.5} parent=1 // pred_check
      _
    $region27: #{encoder_forward.5} parent=1 // pred_check_branch
      %26 = sbr.rel (0) target = $region29
    $region28: #{encoder_forward.5} parent=1 // pred_region
      _
    $region29: #{encoder_forward.5} parent=1 // pred_fallthru
      _
    %v27 = vld [vmem:[%s0] sm:$0x3]
    %v28 = vld [vmem:[%s0 + $0x2] sm:$0x3]
    %v29 = vld [vmem:[%s0 + $0x4] sm:$0x3]
    %v30 = vld [vmem:[%s0 + $0x6] sm:$0x3]
    %v31 = vld [vmem:[%s0 + $0x8] sm:$0x3]
    %v32 = vld [vmem:[%s0 + $0xa] sm:$0x3]
    %v33 = vld [vmem:[%s0 + $0xc] sm:$0x3]
    %v34 = vld [vmem:[%s0 + $0xe] sm:$0x3]
    %v35 = vmax.f32 %v27, %v28
    %v36 = vmax.f32 %v29, %v30
    %v37 = vmax.f32 %v31, %v32
    %v38 = vmax.f32 %v33, %v34
    %43 = vrot.lane.b32.xlu0 %v35, 112
    %v44 = vpop.permute.xlu0 %43
    %45 = vrot.lane.b32.xlu0 %v36, 112
    %v46 = vpop.permute.xlu0 %45
    %47 = vrot.lane.b32.xlu0 %v37, 112
    %v48 = vpop.permute.xlu0 %47
    %49 = vrot.lane.b32.xlu0 %v38, 112
    %v50 = vpop.permute.xlu0 %49
    %v55 = vmax.f32 %v35, %v44
    %v56 = vmax.f32 %v36, %v46
    %v57 = vmax.f32 %v37, %v48
    %v58 = vmax.f32 %v38, %v50
    %vm59 = vcmask 125952
    %60 = vst.msk [vmem:[#allocation2] sm:$0xf] %vm59, 0.0
    %61 = vst.msk [vmem:[#allocation2 + $0x4] sm:$0xf] %vm59, 0.0
    %62 = vst.msk [vmem:[#allocation2 + $0x8] sm:$0xf] %vm59, 0.0
    %63 = vst.msk [vmem:[#allocation2 + $0xc] sm:$0xf] %vm59, 0.0
    %64 = vst.msk [vmem:[#allocation2 + $0x10] sm:$0xf] %vm59, 0.0
    %65 = vst.msk [vmem:[#allocation2 + $0x14] sm:$0xf] %vm59, 0.0
    %66 = vst.msk [vmem:[#allocation2 + $0x18] sm:$0xf] %vm59, 0.0
    %67 = vst.msk [vmem:[#allocation2 + $0x1c] sm:$0xf] %vm59, 0.0
    %s68 = scalar_lea.vmem [#allocation2], 4
    %vm69 = vcmask 123904
    %70 = vst.msk [vmem:[%s68 + $0x1] sm:$0x3] %vm69, %v55
    %71 = vst.msk [vmem:[%s68 + $0x5] sm:$0x3] %vm69, %v56
    %72 = vst.msk [vmem:[%s68 + $0x11] sm:$0x3] %vm69, %v57
    %73 = vst.msk [vmem:[%s68 + $0x15] sm:$0x3] %vm69, %v58
    %v74 = vld [vmem:[%s1] sm:$0xff]
    %v75 = vld [vmem:[%s1 + $0x8] sm:$0xff]
    %v76 = vld [vmem:[%s1 + $0x10] sm:$0xff]
    %v77 = vld [vmem:[%s1 + $0x18] sm:$0xff]
    %v78 = vld [vmem:[%s1 + $0x20] sm:$0xff]
    %v79 = vld [vmem:[%s1 + $0x28] sm:$0xff]
    %v80 = vld [vmem:[%s1 + $0x30] sm:$0xff]
    %v81 = vld [vmem:[%s1 + $0x38] sm:$0xff]
    %v82 = vld [vmem:[%s1 + $0x40] sm:$0xff]
    %v83 = vld [vmem:[%s1 + $0x48] sm:$0xff]
    %v84 = vld [vmem:[%s1 + $0x50] sm:$0xff]
    %v85 = vld [vmem:[%s1 + $0x58] sm:$0xff]
    %v86 = vld [vmem:[%s1 + $0x60] sm:$0xff]
    %v87 = vld [vmem:[%s1 + $0x68] sm:$0xff]
    %v88 = vld [vmem:[%s1 + $0x70] sm:$0xff]
    %v89 = vld [vmem:[%s1 + $0x78] sm:$0xff]
    %v90 = vld [vmem:[%s1 + $0x80] sm:$0xff]
    %v91 = vld [vmem:[%s1 + $0x88] sm:$0xff]
    %v92 = vld [vmem:[#allocation2] sm:$0x3]
    %v93 = vld [vmem:[#allocation2 + $0x4] sm:$0x3]
    %v94 = vld [vmem:[#allocation2 + $0x10] sm:$0x3]
    %v95 = vld [vmem:[#allocation2 + $0x14] sm:$0x3]
    %v96 = vld [vmem:[#allocation2 + $0x1] sm:$0x3]
    %v97 = vld [vmem:[#allocation2 + $0x5] sm:$0x3]
    %v98 = vld [vmem:[#allocation2 + $0x11] sm:$0x3]
    %v99 = vld [vmem:[#allocation2 + $0x15] sm:$0x3]
    %v104 = vcombine.low %v96, %v97
    %v105 = vcombine.low %v98, %v99
    %v107 = vunpack.c.l.s4 1983009808
    %v108 = vunpack.c.0.s8 %v107
    %v109 = vlaneseq
    %v110 = vshrl.u32 %v109, 7
    %v111 = vsub.s32 %v108, %v110
    %v112 = vrot.slane %v104, %v111
    %v114 = vunpack.c.l.s4 1983009808
    %v115 = vunpack.c.0.s8 %v114
    %v116 = vlaneseq
    %v117 = vshrl.u32 %v116, 7
    %v118 = vsub.s32 %v115, %v117
    %v119 = vrot.slane %v105, %v118
    %v120 = vcombine.low %v112, %v119
    %vm121 = vcmask 130048
    %v122 = vsel %vm121, %v120, 0
    %124 = vmatprep.subr.mxu0 0.0
    %125 = vmatpush1.msra.mxu0 0.0
    %126 = vmatprep.subr.mxu0 0.0
    %127 = vmatpush1.msra.mxu0 0.0
    %128 = vmatprep.subr.mxu0 0.0
    %129 = vmatpush1.msra.mxu0 0.0
    %130 = vmatprep.subr.mxu0 0.0
    %131 = vmatpush1.msra.mxu0 0.0
    %132 = vmatprep.subr.mxu0 0.0
    %133 = vmatpush1.msra.mxu0 0.0
    %134 = vmatprep.subr.mxu0 0.0
    %135 = vmatpush1.msra.mxu0 0.0
    %136 = vmatprep.subr.mxu0 0.0
    %137 = vmatpush1.msra.mxu0 0.0
    %138 = vmatprep.subr.mxu0 0.0
    %139 = vmatpush1.msra.mxu0 0.0
    %140 = vmatprep.subr.mxu0 0.0
    %141 = vmatpush1.msra.mxu0 0.0
    %142 = vmatprep.subr.mxu0 0.0
    %143 = vmatpush1.msra.mxu0 0.0
    %144 = vmatprep.subr.mxu0 0.0
    %145 = vmatpush1.msra.mxu0 0.0
    %146 = vmatprep.subr.mxu0 0.0
    %147 = vmatpush1.msra.mxu0 0.0
    %148 = vmatprep.subr.mxu0 0.0
    %149 = vmatpush1.msra.mxu0 0.0
    %150 = vmatprep.subr.mxu0 0.0
    %151 = vmatpush1.msra.mxu0 0.0
    %152 = vmatprep.subr.mxu0 0.0
    %153 = vmatpush1.msra.mxu0 %v77
    %154 = vmatprep.subr.mxu0 0.0
    %155 = vmatpush1.msra.mxu0 %v76
    %156 = vmatprep.subr.mxu0 0.0
    %157 = vmatpush2.msra.mxu0 0.0
    %158 = vmatprep.subr.mxu0 0.0
    %159 = vmatpush2.msra.mxu0 0.0
    %160 = vmatprep.subr.mxu0 0.0
    %161 = vmatpush2.msra.mxu0 0.0
    %162 = vmatprep.subr.mxu0 0.0
    %163 = vmatpush2.msra.mxu0 0.0
    %164 = vmatprep.subr.mxu0 0.0
    %165 = vmatpush2.msra.mxu0 0.0
    %166 = vmatprep.subr.mxu0 0.0
    %167 = vmatpush2.msra.mxu0 0.0
    %168 = vmatprep.subr.mxu0 0.0
    %169 = vmatpush2.msra.mxu0 0.0
    %170 = vmatprep.subr.mxu0 0.0
    %171 = vmatpush2.msra.mxu0 0.0
    %172 = vmatprep.subr.mxu0 0.0
    %173 = vmatpush2.msra.mxu0 0.0
    %174 = vmatprep.subr.mxu0 0.0
    %175 = vmatpush2.msra.mxu0 0.0
    %176 = vmatprep.subr.mxu0 0.0
    %177 = vmatpush2.msra.mxu0 0.0
    %178 = vmatprep.subr.mxu0 0.0
    %179 = vmatpush2.msra.mxu0 0.0
    %180 = vmatprep.subr.mxu0 0.0
    %181 = vmatpush2.msra.mxu0 0.0
    %182 = vmatprep.subr.mxu0 0.0
    %183 = vmatpush2.msra.mxu0 0.0
    %184 = vmatprep.subr.mxu0 0.0
    %185 = vmatpush2.msra.mxu0 0.0
    %186 = vmatprep.subr.mxu0 0.0
    %187 = vmatpush2.msra.mxu0 0.0
    %188 = vmatprep.mubr.f32.mxu0 0.0
    %189 = vmatmul.mubr.f32.gmra.mxu0 %v122
    %v190 = vpop.f32.mrf.mxu0
    %v191 = vadd.f32 0.0, %v190
    %v192 = vpop.f32.mrf.mxu0
    %193 = vdwg.mxu0
    %v198 = vcombine.low %v92, %v93
    %v199 = vcombine.low %v94, %v95
    %v201 = vunpack.c.l.s4 1983009808
    %v202 = vunpack.c.0.s8 %v201
    %v203 = vlaneseq
    %v204 = vshrl.u32 %v203, 7
    %v205 = vsub.s32 %v202, %v204
    %v206 = vrot.slane %v198, %v205
    %v208 = vunpack.c.l.s4 1983009808
    %v209 = vunpack.c.0.s8 %v208
    %v210 = vlaneseq
    %v211 = vshrl.u32 %v210, 7
    %v212 = vsub.s32 %v209, %v211
    %v213 = vrot.slane %v199, %v212
    %v214 = vcombine.low %v206, %v213
    %v215 = vsel %vm121, %v214, 0
    %217 = vmatprep.subr.mxu0 0.0
    %218 = vmatpush1.msra.mxu0 0.0
    %219 = vmatprep.subr.mxu0 0.0
    %220 = vmatpush1.msra.mxu0 0.0
    %221 = vmatprep.subr.mxu0 0.0
    %222 = vmatpush1.msra.mxu0 0.0
    %223 = vmatprep.subr.mxu0 0.0
    %224 = vmatpush1.msra.mxu0 0.0
    %225 = vmatprep.subr.mxu0 0.0
    %226 = vmatpush1.msra.mxu0 0.0
    %227 = vmatprep.subr.mxu0 0.0
    %228 = vmatpush1.msra.mxu0 0.0
    %229 = vmatprep.subr.mxu0 0.0
    %230 = vmatpush1.msra.mxu0 0.0
    %231 = vmatprep.subr.mxu0 0.0
    %232 = vmatpush1.msra.mxu0 0.0
    %233 = vmatprep.subr.mxu0 0.0
    %234 = vmatpush1.msra.mxu0 0.0
    %235 = vmatprep.subr.mxu0 0.0
    %236 = vmatpush1.msra.mxu0 0.0
    %237 = vmatprep.subr.mxu0 0.0
    %238 = vmatpush1.msra.mxu0 0.0
    %239 = vmatprep.subr.mxu0 0.0
    %240 = vmatpush1.msra.mxu0 0.0
    %241 = vmatprep.subr.mxu0 0.0
    %242 = vmatpush1.msra.mxu0 0.0
    %243 = vmatprep.subr.mxu0 0.0
    %244 = vmatpush1.msra.mxu0 0.0
    %245 = vmatprep.subr.mxu0 0.0
    %246 = vmatpush1.msra.mxu0 %v75
    %247 = vmatprep.subr.mxu0 0.0
    %248 = vmatpush1.msra.mxu0 %v74
    %249 = vmatprep.subr.mxu0 0.0
    %250 = vmatpush2.msra.mxu0 0.0
    %251 = vmatprep.subr.mxu0 0.0
    %252 = vmatpush2.msra.mxu0 0.0
    %253 = vmatprep.subr.mxu0 0.0
    %254 = vmatpush2.msra.mxu0 0.0
    %255 = vmatprep.subr.mxu0 0.0
    %256 = vmatpush2.msra.mxu0 0.0
    %257 = vmatprep.subr.mxu0 0.0
    %258 = vmatpush2.msra.mxu0 0.0
    %259 = vmatprep.subr.mxu0 0.0
    %260 = vmatpush2.msra.mxu0 0.0
    %261 = vmatprep.subr.mxu0 0.0
    %262 = vmatpush2.msra.mxu0 0.0
    %263 = vmatprep.subr.mxu0 0.0
    %264 = vmatpush2.msra.mxu0 0.0
    %265 = vmatprep.subr.mxu0 0.0
    %266 = vmatpush2.msra.mxu0 0.0
    %267 = vmatprep.subr.mxu0 0.0
    %268 = vmatpush2.msra.mxu0 0.0
    %269 = vmatprep.subr.mxu0 0.0
    %270 = vmatpush2.msra.mxu0 0.0
    %271 = vmatprep.subr.mxu0 0.0
    %272 = vmatpush2.msra.mxu0 0.0
    %273 = vmatprep.subr.mxu0 0.0
    %274 = vmatpush2.msra.mxu0 0.0
    %275 = vmatprep.subr.mxu0 0.0
    %276 = vmatpush2.msra.mxu0 0.0
    %277 = vmatprep.subr.mxu0 0.0
    %278 = vmatpush2.msra.mxu0 0.0
    %279 = vmatprep.subr.mxu0 0.0
    %280 = vmatpush2.msra.mxu0 0.0
    %281 = vmatprep.mubr.f32.mxu0 0.0
    %282 = vmatmul.mubr.f32.gmra.mxu0 %v215
    %v283 = vpop.f32.mrf.mxu0
    %v284 = vadd.f32 %v191, %v283
    %v285 = vpop.f32.mrf.mxu0
    %286 = vdwg.mxu0
    %v287 = vld [vmem:[#allocation2 + $0x2] sm:$0x3]
    %v288 = vld [vmem:[#allocation2 + $0x6] sm:$0x3]
    %v289 = vld [vmem:[#allocation2 + $0x12] sm:$0x3]
    %v290 = vld [vmem:[#allocation2 + $0x16] sm:$0x3]
    %v295 = vcombine.low %v287, %v288
    %v296 = vcombine.low %v289, %v290
    %v298 = vunpack.c.l.s4 1983009808
    %v299 = vunpack.c.0.s8 %v298
    %v300 = vlaneseq
    %v301 = vshrl.u32 %v300, 7
    %v302 = vsub.s32 %v299, %v301
    %v303 = vrot.slane %v295, %v302
    %v305 = vunpack.c.l.s4 1983009808
    %v306 = vunpack.c.0.s8 %v305
    %v307 = vlaneseq
    %v308 = vshrl.u32 %v307, 7
    %v309 = vsub.s32 %v306, %v308
    %v310 = vrot.slane %v296, %v309
    %v311 = vcombine.low %v303, %v310
    %v312 = vsel %vm121, %v311, 0
    %314 = vmatprep.subr.mxu0 0.0
    %315 = vmatpush1.msra.mxu0 0.0
    %316 = vmatprep.subr.mxu0 0.0
    %317 = vmatpush1.msra.mxu0 0.0
    %318 = vmatprep.subr.mxu0 0.0
    %319 = vmatpush1.msra.mxu0 0.0
    %320 = vmatprep.subr.mxu0 0.0
    %321 = vmatpush1.msra.mxu0 0.0
    %322 = vmatprep.subr.mxu0 0.0
    %323 = vmatpush1.msra.mxu0 0.0
    %324 = vmatprep.subr.mxu0 0.0
    %325 = vmatpush1.msra.mxu0 0.0
    %326 = vmatprep.subr.mxu0 0.0
    %327 = vmatpush1.msra.mxu0 0.0
    %328 = vmatprep.subr.mxu0 0.0
    %329 = vmatpush1.msra.mxu0 0.0
    %330 = vmatprep.subr.mxu0 0.0
    %331 = vmatpush1.msra.mxu0 0.0
    %332 = vmatprep.subr.mxu0 0.0
    %333 = vmatpush1.msra.mxu0 0.0
    %334 = vmatprep.subr.mxu0 0.0
    %335 = vmatpush1.msra.mxu0 0.0
    %336 = vmatprep.subr.mxu0 0.0
    %337 = vmatpush1.msra.mxu0 0.0
    %338 = vmatprep.subr.mxu0 0.0
    %339 = vmatpush1.msra.mxu0 0.0
    %340 = vmatprep.subr.mxu0 0.0
    %341 = vmatpush1.msra.mxu0 0.0
    %342 = vmatprep.subr.mxu0 0.0
    %343 = vmatpush1.msra.mxu0 %v79
    %344 = vmatprep.subr.mxu0 0.0
    %345 = vmatpush1.msra.mxu0 %v78
    %346 = vmatprep.subr.mxu0 0.0
    %347 = vmatpush2.msra.mxu0 0.0
    %348 = vmatprep.subr.mxu0 0.0
    %349 = vmatpush2.msra.mxu0 0.0
    %350 = vmatprep.subr.mxu0 0.0
    %351 = vmatpush2.msra.mxu0 0.0
    %352 = vmatprep.subr.mxu0 0.0
    %353 = vmatpush2.msra.mxu0 0.0
    %354 = vmatprep.subr.mxu0 0.0
    %355 = vmatpush2.msra.mxu0 0.0
    %356 = vmatprep.subr.mxu0 0.0
    %357 = vmatpush2.msra.mxu0 0.0
    %358 = vmatprep.subr.mxu0 0.0
    %359 = vmatpush2.msra.mxu0 0.0
    %360 = vmatprep.subr.mxu0 0.0
    %361 = vmatpush2.msra.mxu0 0.0
    %362 = vmatprep.subr.mxu0 0.0
    %363 = vmatpush2.msra.mxu0 0.0
    %364 = vmatprep.subr.mxu0 0.0
    %365 = vmatpush2.msra.mxu0 0.0
    %366 = vmatprep.subr.mxu0 0.0
    %367 = vmatpush2.msra.mxu0 0.0
    %368 = vmatprep.subr.mxu0 0.0
    %369 = vmatpush2.msra.mxu0 0.0
    %370 = vmatprep.subr.mxu0 0.0
    %371 = vmatpush2.msra.mxu0 0.0
    %372 = vmatprep.subr.mxu0 0.0
    %373 = vmatpush2.msra.mxu0 0.0
    %374 = vmatprep.subr.mxu0 0.0
    %375 = vmatpush2.msra.mxu0 0.0
    %376 = vmatprep.subr.mxu0 0.0
    %377 = vmatpush2.msra.mxu0 0.0
    %378 = vmatprep.mubr.f32.mxu0 0.0
    %379 = vmatmul.mubr.f32.gmra.mxu0 %v312
    %v380 = vpop.f32.mrf.mxu0
    %v381 = vadd.f32 0.0, %v380
    %v382 = vpop.f32.mrf.mxu0
    %383 = vdwg.mxu0
    %v384 = vadd.f32 %v284, %v381
    %v385 = vld [vmem:[%s68] sm:$0x3]
    %v386 = vld [vmem:[%s68 + $0x4] sm:$0x3]
    %v387 = vld [vmem:[%s68 + $0x10] sm:$0x3]
    %v388 = vld [vmem:[%s68 + $0x14] sm:$0x3]
    %v393 = vcombine.low %v385, %v386
    %v394 = vcombine.low %v387, %v388
    %v396 = vunpack.c.l.s4 1983009808
    %v397 = vunpack.c.0.s8 %v396
    %v398 = vlaneseq
    %v399 = vshrl.u32 %v398, 7
    %v400 = vsub.s32 %v397, %v399
    %v401 = vrot.slane %v393, %v400
    %v403 = vunpack.c.l.s4 1983009808
    %v404 = vunpack.c.0.s8 %v403
    %v405 = vlaneseq
    %v406 = vshrl.u32 %v405, 7
    %v407 = vsub.s32 %v404, %v406
    %v408 = vrot.slane %v394, %v407
    %v409 = vcombine.low %v401, %v408
    %v410 = vsel %vm121, %v409, 0
    %412 = vmatprep.subr.mxu0 0.0
    %413 = vmatpush1.msra.mxu0 0.0
    %414 = vmatprep.subr.mxu0 0.0
    %415 = vmatpush1.msra.mxu0 0.0
    %416 = vmatprep.subr.mxu0 0.0
    %417 = vmatpush1.msra.mxu0 0.0
    %418 = vmatprep.subr.mxu0 0.0
    %419 = vmatpush1.msra.mxu0 0.0
    %420 = vmatprep.subr.mxu0 0.0
    %421 = vmatpush1.msra.mxu0 0.0
    %422 = vmatprep.subr.mxu0 0.0
    %423 = vmatpush1.msra.mxu0 0.0
    %424 = vmatprep.subr.mxu0 0.0
    %425 = vmatpush1.msra.mxu0 0.0
    %426 = vmatprep.subr.mxu0 0.0
    %427 = vmatpush1.msra.mxu0 0.0
    %428 = vmatprep.subr.mxu0 0.0
    %429 = vmatpush1.msra.mxu0 0.0
    %430 = vmatprep.subr.mxu0 0.0
    %431 = vmatpush1.msra.mxu0 0.0
    %432 = vmatprep.subr.mxu0 0.0
    %433 = vmatpush1.msra.mxu0 0.0
    %434 = vmatprep.subr.mxu0 0.0
    %435 = vmatpush1.msra.mxu0 0.0
    %436 = vmatprep.subr.mxu0 0.0
    %437 = vmatpush1.msra.mxu0 0.0
    %438 = vmatprep.subr.mxu0 0.0
    %439 = vmatpush1.msra.mxu0 0.0
    %440 = vmatprep.subr.mxu0 0.0
    %441 = vmatpush1.msra.mxu0 %v81
    %442 = vmatprep.subr.mxu0 0.0
    %443 = vmatpush1.msra.mxu0 %v80
    %444 = vmatprep.subr.mxu0 0.0
    %445 = vmatpush2.msra.mxu0 0.0
    %446 = vmatprep.subr.mxu0 0.0
    %447 = vmatpush2.msra.mxu0 0.0
    %448 = vmatprep.subr.mxu0 0.0
    %449 = vmatpush2.msra.mxu0 0.0
    %450 = vmatprep.subr.mxu0 0.0
    %451 = vmatpush2.msra.mxu0 0.0
    %452 = vmatprep.subr.mxu0 0.0
    %453 = vmatpush2.msra.mxu0 0.0
    %454 = vmatprep.subr.mxu0 0.0
    %455 = vmatpush2.msra.mxu0 0.0
    %456 = vmatprep.subr.mxu0 0.0
    %457 = vmatpush2.msra.mxu0 0.0
    %458 = vmatprep.subr.mxu0 0.0
    %459 = vmatpush2.msra.mxu0 0.0
    %460 = vmatprep.subr.mxu0 0.0
    %461 = vmatpush2.msra.mxu0 0.0
    %462 = vmatprep.subr.mxu0 0.0
    %463 = vmatpush2.msra.mxu0 0.0
    %464 = vmatprep.subr.mxu0 0.0
    %465 = vmatpush2.msra.mxu0 0.0
    %466 = vmatprep.subr.mxu0 0.0
    %467 = vmatpush2.msra.mxu0 0.0
    %468 = vmatprep.subr.mxu0 0.0
    %469 = vmatpush2.msra.mxu0 0.0
    %470 = vmatprep.subr.mxu0 0.0
    %471 = vmatpush2.msra.mxu0 0.0
    %472 = vmatprep.subr.mxu0 0.0
    %473 = vmatpush2.msra.mxu0 0.0
    %474 = vmatprep.subr.mxu0 0.0
    %475 = vmatpush2.msra.mxu0 0.0
    %476 = vmatprep.mubr.f32.mxu0 0.0
    %477 = vmatmul.mubr.f32.gmra.mxu0 %v410
    %v478 = vpop.f32.mrf.mxu0
    %v479 = vadd.f32 0.0, %v478
    %v480 = vpop.f32.mrf.mxu0
    %481 = vdwg.mxu0
    %v482 = vadd.f32 %v384, %v479
    %v483 = vld [vmem:[%s68 + $0x1] sm:$0x3]
    %v484 = vld [vmem:[%s68 + $0x5] sm:$0x3]
    %v485 = vld [vmem:[%s68 + $0x11] sm:$0x3]
    %v486 = vld [vmem:[%s68 + $0x15] sm:$0x3]
    %v491 = vcombine.low %v483, %v484
    %v492 = vcombine.low %v485, %v486
    %v494 = vunpack.c.l.s4 1983009808
    %v495 = vunpack.c.0.s8 %v494
    %v496 = vlaneseq
    %v497 = vshrl.u32 %v496, 7
    %v498 = vsub.s32 %v495, %v497
    %v499 = vrot.slane %v491, %v498
    %v501 = vunpack.c.l.s4 1983009808
    %v502 = vunpack.c.0.s8 %v501
    %v503 = vlaneseq
    %v504 = vshrl.u32 %v503, 7
    %v505 = vsub.s32 %v502, %v504
    %v506 = vrot.slane %v492, %v505
    %v507 = vcombine.low %v499, %v506
    %v508 = vsel %vm121, %v507, 0
    %510 = vmatprep.subr.mxu0 0.0
    %511 = vmatpush1.msra.mxu0 0.0
    %512 = vmatprep.subr.mxu0 0.0
    %513 = vmatpush1.msra.mxu0 0.0
    %514 = vmatprep.subr.mxu0 0.0
    %515 = vmatpush1.msra.mxu0 0.0
    %516 = vmatprep.subr.mxu0 0.0
    %517 = vmatpush1.msra.mxu0 0.0
    %518 = vmatprep.subr.mxu0 0.0
    %519 = vmatpush1.msra.mxu0 0.0
    %520 = vmatprep.subr.mxu0 0.0
    %521 = vmatpush1.msra.mxu0 0.0
    %522 = vmatprep.subr.mxu0 0.0
    %523 = vmatpush1.msra.mxu0 0.0
    %524 = vmatprep.subr.mxu0 0.0
    %525 = vmatpush1.msra.mxu0 0.0
    %526 = vmatprep.subr.mxu0 0.0
    %527 = vmatpush1.msra.mxu0 0.0
    %528 = vmatprep.subr.mxu0 0.0
    %529 = vmatpush1.msra.mxu0 0.0
    %530 = vmatprep.subr.mxu0 0.0
    %531 = vmatpush1.msra.mxu0 0.0
    %532 = vmatprep.subr.mxu0 0.0
    %533 = vmatpush1.msra.mxu0 0.0
    %534 = vmatprep.subr.mxu0 0.0
    %535 = vmatpush1.msra.mxu0 0.0
    %536 = vmatprep.subr.mxu0 0.0
    %537 = vmatpush1.msra.mxu0 0.0
    %538 = vmatprep.subr.mxu0 0.0
    %539 = vmatpush1.msra.mxu0 %v83
    %540 = vmatprep.subr.mxu0 0.0
    %541 = vmatpush1.msra.mxu0 %v82
    %542 = vmatprep.subr.mxu0 0.0
    %543 = vmatpush2.msra.mxu0 0.0
    %544 = vmatprep.subr.mxu0 0.0
    %545 = vmatpush2.msra.mxu0 0.0
    %546 = vmatprep.subr.mxu0 0.0
    %547 = vmatpush2.msra.mxu0 0.0
    %548 = vmatprep.subr.mxu0 0.0
    %549 = vmatpush2.msra.mxu0 0.0
    %550 = vmatprep.subr.mxu0 0.0
    %551 = vmatpush2.msra.mxu0 0.0
    %552 = vmatprep.subr.mxu0 0.0
    %553 = vmatpush2.msra.mxu0 0.0
    %554 = vmatprep.subr.mxu0 0.0
    %555 = vmatpush2.msra.mxu0 0.0
    %556 = vmatprep.subr.mxu0 0.0
    %557 = vmatpush2.msra.mxu0 0.0
    %558 = vmatprep.subr.mxu0 0.0
    %559 = vmatpush2.msra.mxu0 0.0
    %560 = vmatprep.subr.mxu0 0.0
    %561 = vmatpush2.msra.mxu0 0.0
    %562 = vmatprep.subr.mxu0 0.0
    %563 = vmatpush2.msra.mxu0 0.0
    %564 = vmatprep.subr.mxu0 0.0
    %565 = vmatpush2.msra.mxu0 0.0
    %566 = vmatprep.subr.mxu0 0.0
    %567 = vmatpush2.msra.mxu0 0.0
    %568 = vmatprep.subr.mxu0 0.0
    %569 = vmatpush2.msra.mxu0 0.0
    %570 = vmatprep.subr.mxu0 0.0
    %571 = vmatpush2.msra.mxu0 0.0
    %572 = vmatprep.subr.mxu0 0.0
    %573 = vmatpush2.msra.mxu0 0.0
    %574 = vmatprep.mubr.f32.mxu0 0.0
    %575 = vmatmul.mubr.f32.gmra.mxu0 %v508
    %v576 = vpop.f32.mrf.mxu0
    %v577 = vadd.f32 0.0, %v576
    %v578 = vpop.f32.mrf.mxu0
    %579 = vdwg.mxu0
    %v580 = vadd.f32 %v482, %v577
    %v581 = vld [vmem:[%s68 + $0x2] sm:$0x3]
    %v582 = vld [vmem:[%s68 + $0x6] sm:$0x3]
    %v583 = vld [vmem:[%s68 + $0x12] sm:$0x3]
    %v584 = vld [vmem:[%s68 + $0x16] sm:$0x3]
    %v589 = vcombine.low %v581, %v582
    %v590 = vcombine.low %v583, %v584
    %v592 = vunpack.c.l.s4 1983009808
    %v593 = vunpack.c.0.s8 %v592
    %v594 = vlaneseq
    %v595 = vshrl.u32 %v594, 7
    %v596 = vsub.s32 %v593, %v595
    %v597 = vrot.slane %v589, %v596
    %v599 = vunpack.c.l.s4 1983009808
    %v600 = vunpack.c.0.s8 %v599
    %v601 = vlaneseq
    %v602 = vshrl.u32 %v601, 7
    %v603 = vsub.s32 %v600, %v602
    %v604 = vrot.slane %v590, %v603
    %v605 = vcombine.low %v597, %v604
    %v606 = vsel %vm121, %v605, 0
    %608 = vmatprep.subr.mxu0 0.0
    %609 = vmatpush1.msra.mxu0 0.0
    %610 = vmatprep.subr.mxu0 0.0
    %611 = vmatpush1.msra.mxu0 0.0
    %612 = vmatprep.subr.mxu0 0.0
    %613 = vmatpush1.msra.mxu0 0.0
    %614 = vmatprep.subr.mxu0 0.0
    %615 = vmatpush1.msra.mxu0 0.0
    %616 = vmatprep.subr.mxu0 0.0
    %617 = vmatpush1.msra.mxu0 0.0
    %618 = vmatprep.subr.mxu0 0.0
    %619 = vmatpush1.msra.mxu0 0.0
    %620 = vmatprep.subr.mxu0 0.0
    %621 = vmatpush1.msra.mxu0 0.0
    %622 = vmatprep.subr.mxu0 0.0
    %623 = vmatpush1.msra.mxu0 0.0
    %624 = vmatprep.subr.mxu0 0.0
    %625 = vmatpush1.msra.mxu0 0.0
    %626 = vmatprep.subr.mxu0 0.0
    %627 = vmatpush1.msra.mxu0 0.0
    %628 = vmatprep.subr.mxu0 0.0
    %629 = vmatpush1.msra.mxu0 0.0
    %630 = vmatprep.subr.mxu0 0.0
    %631 = vmatpush1.msra.mxu0 0.0
    %632 = vmatprep.subr.mxu0 0.0
    %633 = vmatpush1.msra.mxu0 0.0
    %634 = vmatprep.subr.mxu0 0.0
    %635 = vmatpush1.msra.mxu0 0.0
    %636 = vmatprep.subr.mxu0 0.0
    %637 = vmatpush1.msra.mxu0 %v85
    %638 = vmatprep.subr.mxu0 0.0
    %639 = vmatpush1.msra.mxu0 %v84
    %640 = vmatprep.subr.mxu0 0.0
    %641 = vmatpush2.msra.mxu0 0.0
    %642 = vmatprep.subr.mxu0 0.0
    %643 = vmatpush2.msra.mxu0 0.0
    %644 = vmatprep.subr.mxu0 0.0
    %645 = vmatpush2.msra.mxu0 0.0
    %646 = vmatprep.subr.mxu0 0.0
    %647 = vmatpush2.msra.mxu0 0.0
    %648 = vmatprep.subr.mxu0 0.0
    %649 = vmatpush2.msra.mxu0 0.0
    %650 = vmatprep.subr.mxu0 0.0
    %651 = vmatpush2.msra.mxu0 0.0
    %652 = vmatprep.subr.mxu0 0.0
    %653 = vmatpush2.msra.mxu0 0.0
    %654 = vmatprep.subr.mxu0 0.0
    %655 = vmatpush2.msra.mxu0 0.0
    %656 = vmatprep.subr.mxu0 0.0
    %657 = vmatpush2.msra.mxu0 0.0
    %658 = vmatprep.subr.mxu0 0.0
    %659 = vmatpush2.msra.mxu0 0.0
    %660 = vmatprep.subr.mxu0 0.0
    %661 = vmatpush2.msra.mxu0 0.0
    %662 = vmatprep.subr.mxu0 0.0
    %663 = vmatpush2.msra.mxu0 0.0
    %664 = vmatprep.subr.mxu0 0.0
    %665 = vmatpush2.msra.mxu0 0.0
    %666 = vmatprep.subr.mxu0 0.0
    %667 = vmatpush2.msra.mxu0 0.0
    %668 = vmatprep.subr.mxu0 0.0
    %669 = vmatpush2.msra.mxu0 0.0
    %670 = vmatprep.subr.mxu0 0.0
    %671 = vmatpush2.msra.mxu0 0.0
    %672 = vmatprep.mubr.f32.mxu0 0.0
    %673 = vmatmul.mubr.f32.gmra.mxu0 %v606
    %v674 = vpop.f32.mrf.mxu0
    %v675 = vadd.f32 0.0, %v674
    %v676 = vpop.f32.mrf.mxu0
    %677 = vdwg.mxu0
    %v678 = vadd.f32 %v580, %v675
    %s679 = scalar_lea.vmem [#allocation2], 8
    %v680 = vld [vmem:[%s679] sm:$0x3]
    %v681 = vld [vmem:[%s679 + $0x4] sm:$0x3]
    %v682 = vld [vmem:[%s679 + $0x10] sm:$0x3]
    %v683 = vld [vmem:[%s679 + $0x14] sm:$0x3]
    %v688 = vcombine.low %v680, %v681
    %v689 = vcombine.low %v682, %v683
    %v691 = vunpack.c.l.s4 1983009808
    %v692 = vunpack.c.0.s8 %v691
    %v693 = vlaneseq
    %v694 = vshrl.u32 %v693, 7
    %v695 = vsub.s32 %v692, %v694
    %v696 = vrot.slane %v688, %v695
    %v698 = vunpack.c.l.s4 1983009808
    %v699 = vunpack.c.0.s8 %v698
    %v700 = vlaneseq
    %v701 = vshrl.u32 %v700, 7
    %v702 = vsub.s32 %v699, %v701
    %v703 = vrot.slane %v689, %v702
    %v704 = vcombine.low %v696, %v703
    %v705 = vsel %vm121, %v704, 0
    %707 = vmatprep.subr.mxu0 0.0
    %708 = vmatpush1.msra.mxu0 0.0
    %709 = vmatprep.subr.mxu0 0.0
    %710 = vmatpush1.msra.mxu0 0.0
    %711 = vmatprep.subr.mxu0 0.0
    %712 = vmatpush1.msra.mxu0 0.0
    %713 = vmatprep.subr.mxu0 0.0
    %714 = vmatpush1.msra.mxu0 0.0
    %715 = vmatprep.subr.mxu0 0.0
    %716 = vmatpush1.msra.mxu0 0.0
    %717 = vmatprep.subr.mxu0 0.0
    %718 = vmatpush1.msra.mxu0 0.0
    %719 = vmatprep.subr.mxu0 0.0
    %720 = vmatpush1.msra.mxu0 0.0
    %721 = vmatprep.subr.mxu0 0.0
    %722 = vmatpush1.msra.mxu0 0.0
    %723 = vmatprep.subr.mxu0 0.0
    %724 = vmatpush1.msra.mxu0 0.0
    %725 = vmatprep.subr.mxu0 0.0
    %726 = vmatpush1.msra.mxu0 0.0
    %727 = vmatprep.subr.mxu0 0.0
    %728 = vmatpush1.msra.mxu0 0.0
    %729 = vmatprep.subr.mxu0 0.0
    %730 = vmatpush1.msra.mxu0 0.0
    %731 = vmatprep.subr.mxu0 0.0
    %732 = vmatpush1.msra.mxu0 0.0
    %733 = vmatprep.subr.mxu0 0.0
    %734 = vmatpush1.msra.mxu0 0.0
    %735 = vmatprep.subr.mxu0 0.0
    %736 = vmatpush1.msra.mxu0 %v87
    %737 = vmatprep.subr.mxu0 0.0
    %738 = vmatpush1.msra.mxu0 %v86
    %739 = vmatprep.subr.mxu0 0.0
    %740 = vmatpush2.msra.mxu0 0.0
    %741 = vmatprep.subr.mxu0 0.0
    %742 = vmatpush2.msra.mxu0 0.0
    %743 = vmatprep.subr.mxu0 0.0
    %744 = vmatpush2.msra.mxu0 0.0
    %745 = vmatprep.subr.mxu0 0.0
    %746 = vmatpush2.msra.mxu0 0.0
    %747 = vmatprep.subr.mxu0 0.0
    %748 = vmatpush2.msra.mxu0 0.0
    %749 = vmatprep.subr.mxu0 0.0
    %750 = vmatpush2.msra.mxu0 0.0
    %751 = vmatprep.subr.mxu0 0.0
    %752 = vmatpush2.msra.mxu0 0.0
    %753 = vmatprep.subr.mxu0 0.0
    %754 = vmatpush2.msra.mxu0 0.0
    %755 = vmatprep.subr.mxu0 0.0
    %756 = vmatpush2.msra.mxu0 0.0
    %757 = vmatprep.subr.mxu0 0.0
    %758 = vmatpush2.msra.mxu0 0.0
    %759 = vmatprep.subr.mxu0 0.0
    %760 = vmatpush2.msra.mxu0 0.0
    %761 = vmatprep.subr.mxu0 0.0
    %762 = vmatpush2.msra.mxu0 0.0
    %763 = vmatprep.subr.mxu0 0.0
    %764 = vmatpush2.msra.mxu0 0.0
    %765 = vmatprep.subr.mxu0 0.0
    %766 = vmatpush2.msra.mxu0 0.0
    %767 = vmatprep.subr.mxu0 0.0
    %768 = vmatpush2.msra.mxu0 0.0
    %769 = vmatprep.subr.mxu0 0.0
    %770 = vmatpush2.msra.mxu0 0.0
    %771 = vmatprep.mubr.f32.mxu0 0.0
    %772 = vmatmul.mubr.f32.gmra.mxu0 %v705
    %v773 = vpop.f32.mrf.mxu0
    %v774 = vadd.f32 0.0, %v773
    %v775 = vpop.f32.mrf.mxu0
    %776 = vdwg.mxu0
    %v777 = vadd.f32 %v678, %v774
    %v778 = vld [vmem:[%s679 + $0x1] sm:$0x3]
    %v779 = vld [vmem:[%s679 + $0x5] sm:$0x3]
    %v780 = vld [vmem:[%s679 + $0x11] sm:$0x3]
    %v781 = vld [vmem:[%s679 + $0x15] sm:$0x3]
    %v786 = vcombine.low %v778, %v779
    %v787 = vcombine.low %v780, %v781
    %v789 = vunpack.c.l.s4 1983009808
    %v790 = vunpack.c.0.s8 %v789
    %v791 = vlaneseq
    %v792 = vshrl.u32 %v791, 7
    %v793 = vsub.s32 %v790, %v792
    %v794 = vrot.slane %v786, %v793
    %v796 = vunpack.c.l.s4 1983009808
    %v797 = vunpack.c.0.s8 %v796
    %v798 = vlaneseq
    %v799 = vshrl.u32 %v798, 7
    %v800 = vsub.s32 %v797, %v799
    %v801 = vrot.slane %v787, %v800
    %v802 = vcombine.low %v794, %v801
    %v803 = vsel %vm121, %v802, 0
    %805 = vmatprep.subr.mxu0 0.0
    %806 = vmatpush1.msra.mxu0 0.0
    %807 = vmatprep.subr.mxu0 0.0
    %808 = vmatpush1.msra.mxu0 0.0
    %809 = vmatprep.subr.mxu0 0.0
    %810 = vmatpush1.msra.mxu0 0.0
    %811 = vmatprep.subr.mxu0 0.0
    %812 = vmatpush1.msra.mxu0 0.0
    %813 = vmatprep.subr.mxu0 0.0
    %814 = vmatpush1.msra.mxu0 0.0
    %815 = vmatprep.subr.mxu0 0.0
    %816 = vmatpush1.msra.mxu0 0.0
    %817 = vmatprep.subr.mxu0 0.0
    %818 = vmatpush1.msra.mxu0 0.0
    %819 = vmatprep.subr.mxu0 0.0
    %820 = vmatpush1.msra.mxu0 0.0
    %821 = vmatprep.subr.mxu0 0.0
    %822 = vmatpush1.msra.mxu0 0.0
    %823 = vmatprep.subr.mxu0 0.0
    %824 = vmatpush1.msra.mxu0 0.0
    %825 = vmatprep.subr.mxu0 0.0
    %826 = vmatpush1.msra.mxu0 0.0
    %827 = vmatprep.subr.mxu0 0.0
    %828 = vmatpush1.msra.mxu0 0.0
    %829 = vmatprep.subr.mxu0 0.0
    %830 = vmatpush1.msra.mxu0 0.0
    %831 = vmatprep.subr.mxu0 0.0
    %832 = vmatpush1.msra.mxu0 0.0
    %833 = vmatprep.subr.mxu0 0.0
    %834 = vmatpush1.msra.mxu0 %v89
    %835 = vmatprep.subr.mxu0 0.0
    %836 = vmatpush1.msra.mxu0 %v88
    %837 = vmatprep.subr.mxu0 0.0
    %838 = vmatpush2.msra.mxu0 0.0
    %839 = vmatprep.subr.mxu0 0.0
    %840 = vmatpush2.msra.mxu0 0.0
    %841 = vmatprep.subr.mxu0 0.0
    %842 = vmatpush2.msra.mxu0 0.0
    %843 = vmatprep.subr.mxu0 0.0
    %844 = vmatpush2.msra.mxu0 0.0
    %845 = vmatprep.subr.mxu0 0.0
    %846 = vmatpush2.msra.mxu0 0.0
    %847 = vmatprep.subr.mxu0 0.0
    %848 = vmatpush2.msra.mxu0 0.0
    %849 = vmatprep.subr.mxu0 0.0
    %850 = vmatpush2.msra.mxu0 0.0
    %851 = vmatprep.subr.mxu0 0.0
    %852 = vmatpush2.msra.mxu0 0.0
    %853 = vmatprep.subr.mxu0 0.0
    %854 = vmatpush2.msra.mxu0 0.0
    %855 = vmatprep.subr.mxu0 0.0
    %856 = vmatpush2.msra.mxu0 0.0
    %857 = vmatprep.subr.mxu0 0.0
    %858 = vmatpush2.msra.mxu0 0.0
    %859 = vmatprep.subr.mxu0 0.0
    %860 = vmatpush2.msra.mxu0 0.0
    %861 = vmatprep.subr.mxu0 0.0
    %862 = vmatpush2.msra.mxu0 0.0
    %863 = vmatprep.subr.mxu0 0.0
    %864 = vmatpush2.msra.mxu0 0.0
    %865 = vmatprep.subr.mxu0 0.0
    %866 = vmatpush2.msra.mxu0 0.0
    %867 = vmatprep.subr.mxu0 0.0
    %868 = vmatpush2.msra.mxu0 0.0
    %869 = vmatprep.mubr.f32.mxu0 0.0
    %870 = vmatmul.mubr.f32.gmra.mxu0 %v803
    %v871 = vpop.f32.mrf.mxu0
    %v872 = vadd.f32 0.0, %v871
    %v873 = vpop.f32.mrf.mxu0
    %874 = vdwg.mxu0
    %v875 = vadd.f32 %v777, %v872
    %v876 = vld [vmem:[%s679 + $0x2] sm:$0x3]
    %v877 = vld [vmem:[%s679 + $0x6] sm:$0x3]
    %v878 = vld [vmem:[%s679 + $0x12] sm:$0x3]
    %v879 = vld [vmem:[%s679 + $0x16] sm:$0x3]
    %v884 = vcombine.low %v876, %v877
    %v885 = vcombine.low %v878, %v879
    %v887 = vunpack.c.l.s4 1983009808
    %v888 = vunpack.c.0.s8 %v887
    %v889 = vlaneseq
    %v890 = vshrl.u32 %v889, 7
    %v891 = vsub.s32 %v888, %v890
    %v892 = vrot.slane %v884, %v891
    %v894 = vunpack.c.l.s4 1983009808
    %v895 = vunpack.c.0.s8 %v894
    %v896 = vlaneseq
    %v897 = vshrl.u32 %v896, 7
    %v898 = vsub.s32 %v895, %v897
    %v899 = vrot.slane %v885, %v898
    %v900 = vcombine.low %v892, %v899
    %v901 = vsel %vm121, %v900, 0
    %903 = vmatprep.subr.mxu0 0.0
    %904 = vmatpush1.msra.mxu0 0.0
    %905 = vmatprep.subr.mxu0 0.0
    %906 = vmatpush1.msra.mxu0 0.0
    %907 = vmatprep.subr.mxu0 0.0
    %908 = vmatpush1.msra.mxu0 0.0
    %909 = vmatprep.subr.mxu0 0.0
    %910 = vmatpush1.msra.mxu0 0.0
    %911 = vmatprep.subr.mxu0 0.0
    %912 = vmatpush1.msra.mxu0 0.0
    %913 = vmatprep.subr.mxu0 0.0
    %914 = vmatpush1.msra.mxu0 0.0
    %915 = vmatprep.subr.mxu0 0.0
    %916 = vmatpush1.msra.mxu0 0.0
    %917 = vmatprep.subr.mxu0 0.0
    %918 = vmatpush1.msra.mxu0 0.0
    %919 = vmatprep.subr.mxu0 0.0
    %920 = vmatpush1.msra.mxu0 0.0
    %921 = vmatprep.subr.mxu0 0.0
    %922 = vmatpush1.msra.mxu0 0.0
    %923 = vmatprep.subr.mxu0 0.0
    %924 = vmatpush1.msra.mxu0 0.0
    %925 = vmatprep.subr.mxu0 0.0
    %926 = vmatpush1.msra.mxu0 0.0
    %927 = vmatprep.subr.mxu0 0.0
    %928 = vmatpush1.msra.mxu0 0.0
    %929 = vmatprep.subr.mxu0 0.0
    %930 = vmatpush1.msra.mxu0 0.0
    %931 = vmatprep.subr.mxu0 0.0
    %932 = vmatpush1.msra.mxu0 %v91
    %933 = vmatprep.subr.mxu0 0.0
    %934 = vmatpush1.msra.mxu0 %v90
    %935 = vmatprep.subr.mxu0 0.0
    %936 = vmatpush2.msra.mxu0 0.0
    %937 = vmatprep.subr.mxu0 0.0
    %938 = vmatpush2.msra.mxu0 0.0
    %939 = vmatprep.subr.mxu0 0.0
    %940 = vmatpush2.msra.mxu0 0.0
    %941 = vmatprep.subr.mxu0 0.0
    %942 = vmatpush2.msra.mxu0 0.0
    %943 = vmatprep.subr.mxu0 0.0
    %944 = vmatpush2.msra.mxu0 0.0
    %945 = vmatprep.subr.mxu0 0.0
    %946 = vmatpush2.msra.mxu0 0.0
    %947 = vmatprep.subr.mxu0 0.0
    %948 = vmatpush2.msra.mxu0 0.0
    %949 = vmatprep.subr.mxu0 0.0
    %950 = vmatpush2.msra.mxu0 0.0
    %951 = vmatprep.subr.mxu0 0.0
    %952 = vmatpush2.msra.mxu0 0.0
    %953 = vmatprep.subr.mxu0 0.0
    %954 = vmatpush2.msra.mxu0 0.0
    %955 = vmatprep.subr.mxu0 0.0
    %956 = vmatpush2.msra.mxu0 0.0
    %957 = vmatprep.subr.mxu0 0.0
    %958 = vmatpush2.msra.mxu0 0.0
    %959 = vmatprep.subr.mxu0 0.0
    %960 = vmatpush2.msra.mxu0 0.0
    %961 = vmatprep.subr.mxu0 0.0
    %962 = vmatpush2.msra.mxu0 0.0
    %963 = vmatprep.subr.mxu0 0.0
    %964 = vmatpush2.msra.mxu0 0.0
    %965 = vmatprep.subr.mxu0 0.0
    %966 = vmatpush2.msra.mxu0 0.0
    %967 = vmatprep.mubr.f32.mxu0 0.0
    %968 = vmatmul.mubr.f32.gmra.mxu0 %v901
    %v969 = vpop.f32.mrf.mxu0
    %v970 = vadd.f32 0.0, %v969
    %v971 = vpop.f32.mrf.mxu0
    %972 = vdwg.mxu0
    %v973 = vadd.f32 %v875, %v970
    %v974 = vld [vmem:[%s2] sm:$0x1]
    %v975 = vld [vmem:[%s3] sm:$0x1]
    %v976 = vsel %vm121, %v973, 0.0
    %v977 = vrot.slane %v976, 4
    %v978 = vadd.f32 %v976, %v977
    %v979 = vrot.slane %v978, 2
    %v980 = vadd.f32 %v978, %v979
    %v981 = vrot.slane %v980, 1
    %v982 = vadd.f32 %v980, %v981
    %v983 = vmul.f32 %v982, 0.125
    %v984 = vmul.f32 %v973, %v973
    %v985 = vsel %vm121, %v984, 0.0
    %v986 = vrot.slane %v985, 4
    %v987 = vadd.f32 %v985, %v986
    %v988 = vrot.slane %v987, 2
    %v989 = vadd.f32 %v987, %v988
    %v990 = vrot.slane %v989, 1
    %v991 = vadd.f32 %v989, %v990
    %v992 = vmul.f32 %v991, 0.125
    %v993 = vmul.f32 %v983, %v983
    %v994 = vsub.f32 %v992, %v993
    %v995 = vmax.f32 %v994, 0.0
    %v996 = vadd.f32 %v995, 1e-05
    %v997 = vrsqrt.pop %v996
    %v998 = vmul.f32 %v974, %v997
    %v999 = vmul.f32 %v983, %v998
    %v1000 = vsub.f32 %v975, %v999
    %v1002 = vlaneseq
    %v1003 = vshrl.u32 %v1002, 7
    %v1004 = vsub.s32 0, %v1003
    %v1005 = vrot.slane %v998, %v1004
    %v1007 = vmul.f32 %v973, %v1005
    %v1009 = vlaneseq
    %v1010 = vshrl.u32 %v1009, 7
    %v1011 = vsub.s32 0, %v1010
    %v1012 = vrot.slane %v1000, %v1011
    %v1014 = vadd.f32 %v1007, %v1012
    %v1015 = vmax.f32 %v1014, 0.0
    %1016 = vst.msk [vmem:[#allocation3] sm:$0xf] %vm59, 0.0
    %1017 = vst.msk [vmem:[#allocation3 + $0x4] sm:$0xf] %vm59, 0.0
    %1018 = vst.msk [vmem:[#allocation3 + $0x8] sm:$0xf] %vm59, 0.0
    %1019 = vst.msk [vmem:[#allocation3 + $0xc] sm:$0xf] %vm59, 0.0
    %1020 = vst.msk [vmem:[#allocation3 + $0x10] sm:$0xf] %vm59, 0.0
    %1021 = vst.msk [vmem:[#allocation3 + $0x14] sm:$0xf] %vm59, 0.0
    %1022 = vst.msk [vmem:[#allocation3 + $0x18] sm:$0xf] %vm59, 0.0
    %1023 = vst.msk [vmem:[#allocation3 + $0x1c] sm:$0xf] %vm59, 0.0
    %v1025 = vcombine.high %v1015, %v1015
    %v1027 = vunpack.c.l.s4 1983009808
    %v1028 = vunpack.c.0.s8 %v1027
    %v1029 = vlaneseq
    %v1030 = vshrl.u32 %v1029, 7
    %v1031 = vsub.s32 %v1028, %v1030
    %v1032 = vrot.slane %v1015, %v1031
    %v1034 = vunpack.c.l.s4 1983009808
    %v1035 = vunpack.c.0.s8 %v1034
    %v1036 = vlaneseq
    %v1037 = vshrl.u32 %v1036, 7
    %v1038 = vsub.s32 %v1035, %v1037
    %v1039 = vrot.slane %v1025, %v1038
    %v1040 = vcombine.high %v1032, %v1032
    %v1041 = vcombine.high %v1039, %v1039
    %s1046 = scalar_lea.vmem [#allocation3], 4
    %1047 = vst.msk [vmem:[%s1046 + $0x1] sm:$0x3] %vm69, %v1032
    %1048 = vst.msk [vmem:[%s1046 + $0x5] sm:$0x3] %vm69, %v1040
    %1049 = vst.msk [vmem:[%s1046 + $0x11] sm:$0x3] %vm69, %v1039
    %1050 = vst.msk [vmem:[%s1046 + $0x15] sm:$0x3] %vm69, %v1041
    %v1051 = vld [vmem:[%s4] sm:$0xff]
    %v1052 = vld [vmem:[%s4 + $0x8] sm:$0xff]
    %v1053 = vld [vmem:[%s4 + $0x10] sm:$0xff]
    %v1054 = vld [vmem:[%s4 + $0x18] sm:$0xff]
    %v1055 = vld [vmem:[%s4 + $0x20] sm:$0xff]
    %v1056 = vld [vmem:[%s4 + $0x28] sm:$0xff]
    %v1057 = vld [vmem:[%s4 + $0x30] sm:$0xff]
    %v1058 = vld [vmem:[%s4 + $0x38] sm:$0xff]
    %v1059 = vld [vmem:[%s4 + $0x40] sm:$0xff]
    %v1060 = vld [vmem:[%s4 + $0x48] sm:$0xff]
    %v1061 = vld [vmem:[%s4 + $0x50] sm:$0xff]
    %v1062 = vld [vmem:[%s4 + $0x58] sm:$0xff]
    %v1063 = vld [vmem:[%s4 + $0x60] sm:$0xff]
    %v1064 = vld [vmem:[%s4 + $0x68] sm:$0xff]
    %v1065 = vld [vmem:[%s4 + $0x70] sm:$0xff]
    %v1066 = vld [vmem:[%s4 + $0x78] sm:$0xff]
    %v1067 = vld [vmem:[%s4 + $0x80] sm:$0xff]
    %v1068 = vld [vmem:[%s4 + $0x88] sm:$0xff]
    %v1069 = vld [vmem:[#allocation3] sm:$0x3]
    %v1070 = vld [vmem:[#allocation3 + $0x4] sm:$0x3]
    %v1071 = vld [vmem:[#allocation3 + $0x10] sm:$0x3]
    %v1072 = vld [vmem:[#allocation3 + $0x14] sm:$0x3]
    %v1073 = vld [vmem:[#allocation3 + $0x1] sm:$0x3]
    %v1074 = vld [vmem:[#allocation3 + $0x5] sm:$0x3]
    %v1075 = vld [vmem:[#allocation3 + $0x11] sm:$0x3]
    %v1076 = vld [vmem:[#allocation3 + $0x15] sm:$0x3]
    %v1081 = vcombine.low %v1073, %v1074
    %v1082 = vcombine.low %v1075, %v1076
    %v1084 = vunpack.c.l.s4 1983009808
    %v1085 = vunpack.c.0.s8 %v1084
    %v1086 = vlaneseq
    %v1087 = vshrl.u32 %v1086, 7
    %v1088 = vsub.s32 %v1085, %v1087
    %v1089 = vrot.slane %v1081, %v1088
    %v1091 = vunpack.c.l.s4 1983009808
    %v1092 = vunpack.c.0.s8 %v1091
    %v1093 = vlaneseq
    %v1094 = vshrl.u32 %v1093, 7
    %v1095 = vsub.s32 %v1092, %v1094
    %v1096 = vrot.slane %v1082, %v1095
    %v1097 = vcombine.low %v1089, %v1096
    %v1098 = vsel %vm121, %v1097, 0
    %1100 = vmatprep.subr.mxu0 0.0
    %1101 = vmatpush1.msra.mxu0 0.0
    %1102 = vmatprep.subr.mxu0 0.0
    %1103 = vmatpush1.msra.mxu0 0.0
    %1104 = vmatprep.subr.mxu0 0.0
    %1105 = vmatpush1.msra.mxu0 0.0
    %1106 = vmatprep.subr.mxu0 0.0
    %1107 = vmatpush1.msra.mxu0 0.0
    %1108 = vmatprep.subr.mxu0 0.0
    %1109 = vmatpush1.msra.mxu0 0.0
    %1110 = vmatprep.subr.mxu0 0.0
    %1111 = vmatpush1.msra.mxu0 0.0
    %1112 = vmatprep.subr.mxu0 0.0
    %1113 = vmatpush1.msra.mxu0 0.0
    %1114 = vmatprep.subr.mxu0 0.0
    %1115 = vmatpush1.msra.mxu0 0.0
    %1116 = vmatprep.subr.mxu0 0.0
    %1117 = vmatpush1.msra.mxu0 0.0
    %1118 = vmatprep.subr.mxu0 0.0
    %1119 = vmatpush1.msra.mxu0 0.0
    %1120 = vmatprep.subr.mxu0 0.0
    %1121 = vmatpush1.msra.mxu0 0.0
    %1122 = vmatprep.subr.mxu0 0.0
    %1123 = vmatpush1.msra.mxu0 0.0
    %1124 = vmatprep.subr.mxu0 0.0
    %1125 = vmatpush1.msra.mxu0 0.0
    %1126 = vmatprep.subr.mxu0 0.0
    %1127 = vmatpush1.msra.mxu0 0.0
    %1128 = vmatprep.subr.mxu0 0.0
    %1129 = vmatpush1.msra.mxu0 %v1054
    %1130 = vmatprep.subr.mxu0 0.0
    %1131 = vmatpush1.msra.mxu0 %v1053
    %1132 = vmatprep.subr.mxu0 0.0
    %1133 = vmatpush2.msra.mxu0 0.0
    %1134 = vmatprep.subr.mxu0 0.0
    %1135 = vmatpush2.msra.mxu0 0.0
    %1136 = vmatprep.subr.mxu0 0.0
    %1137 = vmatpush2.msra.mxu0 0.0
    %1138 = vmatprep.subr.mxu0 0.0
    %1139 = vmatpush2.msra.mxu0 0.0
    %1140 = vmatprep.subr.mxu0 0.0
    %1141 = vmatpush2.msra.mxu0 0.0
    %1142 = vmatprep.subr.mxu0 0.0
    %1143 = vmatpush2.msra.mxu0 0.0
    %1144 = vmatprep.subr.mxu0 0.0
    %1145 = vmatpush2.msra.mxu0 0.0
    %1146 = vmatprep.subr.mxu0 0.0
    %1147 = vmatpush2.msra.mxu0 0.0
    %1148 = vmatprep.subr.mxu0 0.0
    %1149 = vmatpush2.msra.mxu0 0.0
    %1150 = vmatprep.subr.mxu0 0.0
    %1151 = vmatpush2.msra.mxu0 0.0
    %1152 = vmatprep.subr.mxu0 0.0
    %1153 = vmatpush2.msra.mxu0 0.0
    %1154 = vmatprep.subr.mxu0 0.0
    %1155 = vmatpush2.msra.mxu0 0.0
    %1156 = vmatprep.subr.mxu0 0.0
    %1157 = vmatpush2.msra.mxu0 0.0
    %1158 = vmatprep.subr.mxu0 0.0
    %1159 = vmatpush2.msra.mxu0 0.0
    %1160 = vmatprep.subr.mxu0 0.0
    %1161 = vmatpush2.msra.mxu0 0.0
    %1162 = vmatprep.subr.mxu0 0.0
    %1163 = vmatpush2.msra.mxu0 0.0
    %1164 = vmatprep.mubr.f32.mxu0 0.0
    %1165 = vmatmul.mubr.f32.gmra.mxu0 %v1098
    %v1166 = vpop.f32.mrf.mxu0
    %v1167 = vadd.f32 0.0, %v1166
    %v1168 = vpop.f32.mrf.mxu0
    %1169 = vdwg.mxu0
    %v1174 = vcombine.low %v1069, %v1070
    %v1175 = vcombine.low %v1071, %v1072
    %v1177 = vunpack.c.l.s4 1983009808
    %v1178 = vunpack.c.0.s8 %v1177
    %v1179 = vlaneseq
    %v1180 = vshrl.u32 %v1179, 7
    %v1181 = vsub.s32 %v1178, %v1180
    %v1182 = vrot.slane %v1174, %v1181
    %v1184 = vunpack.c.l.s4 1983009808
    %v1185 = vunpack.c.0.s8 %v1184
    %v1186 = vlaneseq
    %v1187 = vshrl.u32 %v1186, 7
    %v1188 = vsub.s32 %v1185, %v1187
    %v1189 = vrot.slane %v1175, %v1188
    %v1190 = vcombine.low %v1182, %v1189
    %v1191 = vsel %vm121, %v1190, 0
    %1193 = vmatprep.subr.mxu0 0.0
    %1194 = vmatpush1.msra.mxu0 0.0
    %1195 = vmatprep.subr.mxu0 0.0
    %1196 = vmatpush1.msra.mxu0 0.0
    %1197 = vmatprep.subr.mxu0 0.0
    %1198 = vmatpush1.msra.mxu0 0.0
    %1199 = vmatprep.subr.mxu0 0.0
    %1200 = vmatpush1.msra.mxu0 0.0
    %1201 = vmatprep.subr.mxu0 0.0
    %1202 = vmatpush1.msra.mxu0 0.0
    %1203 = vmatprep.subr.mxu0 0.0
    %1204 = vmatpush1.msra.mxu0 0.0
    %1205 = vmatprep.subr.mxu0 0.0
    %1206 = vmatpush1.msra.mxu0 0.0
    %1207 = vmatprep.subr.mxu0 0.0
    %1208 = vmatpush1.msra.mxu0 0.0
    %1209 = vmatprep.subr.mxu0 0.0
    %1210 = vmatpush1.msra.mxu0 0.0
    %1211 = vmatprep.subr.mxu0 0.0
    %1212 = vmatpush1.msra.mxu0 0.0
    %1213 = vmatprep.subr.mxu0 0.0
    %1214 = vmatpush1.msra.mxu0 0.0
    %1215 = vmatprep.subr.mxu0 0.0
    %1216 = vmatpush1.msra.mxu0 0.0
    %1217 = vmatprep.subr.mxu0 0.0
    %1218 = vmatpush1.msra.mxu0 0.0
    %1219 = vmatprep.subr.mxu0 0.0
    %1220 = vmatpush1.msra.mxu0 0.0
    %1221 = vmatprep.subr.mxu0 0.0
    %1222 = vmatpush1.msra.mxu0 %v1052
    %1223 = vmatprep.subr.mxu0 0.0
    %1224 = vmatpush1.msra.mxu0 %v1051
    %1225 = vmatprep.subr.mxu0 0.0
    %1226 = vmatpush2.msra.mxu0 0.0
    %1227 = vmatprep.subr.mxu0 0.0
    %1228 = vmatpush2.msra.mxu0 0.0
    %1229 = vmatprep.subr.mxu0 0.0
    %1230 = vmatpush2.msra.mxu0 0.0
    %1231 = vmatprep.subr.mxu0 0.0
    %1232 = vmatpush2.msra.mxu0 0.0
    %1233 = vmatprep.subr.mxu0 0.0
    %1234 = vmatpush2.msra.mxu0 0.0
    %1235 = vmatprep.subr.mxu0 0.0
    %1236 = vmatpush2.msra.mxu0 0.0
    %1237 = vmatprep.subr.mxu0 0.0
    %1238 = vmatpush2.msra.mxu0 0.0
    %1239 = vmatprep.subr.mxu0 0.0
    %1240 = vmatpush2.msra.mxu0 0.0
    %1241 = vmatprep.subr.mxu0 0.0
    %1242 = vmatpush2.msra.mxu0 0.0
    %1243 = vmatprep.subr.mxu0 0.0
    %1244 = vmatpush2.msra.mxu0 0.0
    %1245 = vmatprep.subr.mxu0 0.0
    %1246 = vmatpush2.msra.mxu0 0.0
    %1247 = vmatprep.subr.mxu0 0.0
    %1248 = vmatpush2.msra.mxu0 0.0
    %1249 = vmatprep.subr.mxu0 0.0
    %1250 = vmatpush2.msra.mxu0 0.0
    %1251 = vmatprep.subr.mxu0 0.0
    %1252 = vmatpush2.msra.mxu0 0.0
    %1253 = vmatprep.subr.mxu0 0.0
    %1254 = vmatpush2.msra.mxu0 0.0
    %1255 = vmatprep.subr.mxu0 0.0
    %1256 = vmatpush2.msra.mxu0 0.0
    %1257 = vmatprep.mubr.f32.mxu0 0.0
    %1258 = vmatmul.mubr.f32.gmra.mxu0 %v1191
    %v1259 = vpop.f32.mrf.mxu0
    %v1260 = vadd.f32 %v1167, %v1259
    %v1261 = vpop.f32.mrf.mxu0
    %1262 = vdwg.mxu0
    %v1263 = vld [vmem:[#allocation3 + $0x2] sm:$0x3]
    %v1264 = vld [vmem:[#allocation3 + $0x6] sm:$0x3]
    %v1265 = vld [vmem:[#allocation3 + $0x12] sm:$0x3]
    %v1266 = vld [vmem:[#allocation3 + $0x16] sm:$0x3]
    %v1271 = vcombine.low %v1263, %v1264
    %v1272 = vcombine.low %v1265, %v1266
    %v1274 = vunpack.c.l.s4 1983009808
    %v1275 = vunpack.c.0.s8 %v1274
    %v1276 = vlaneseq
    %v1277 = vshrl.u32 %v1276, 7
    %v1278 = vsub.s32 %v1275, %v1277
    %v1279 = vrot.slane %v1271, %v1278
    %v1281 = vunpack.c.l.s4 1983009808
    %v1282 = vunpack.c.0.s8 %v1281
    %v1283 = vlaneseq
    %v1284 = vshrl.u32 %v1283, 7
    %v1285 = vsub.s32 %v1282, %v1284
    %v1286 = vrot.slane %v1272, %v1285
    %v1287 = vcombine.low %v1279, %v1286
    %v1288 = vsel %vm121, %v1287, 0
    %1290 = vmatprep.subr.mxu0 0.0
    %1291 = vmatpush1.msra.mxu0 0.0
    %1292 = vmatprep.subr.mxu0 0.0
    %1293 = vmatpush1.msra.mxu0 0.0
    %1294 = vmatprep.subr.mxu0 0.0
    %1295 = vmatpush1.msra.mxu0 0.0
    %1296 = vmatprep.subr.mxu0 0.0
    %1297 = vmatpush1.msra.mxu0 0.0
    %1298 = vmatprep.subr.mxu0 0.0
    %1299 = vmatpush1.msra.mxu0 0.0
    %1300 = vmatprep.subr.mxu0 0.0
    %1301 = vmatpush1.msra.mxu0 0.0
    %1302 = vmatprep.subr.mxu0 0.0
    %1303 = vmatpush1.msra.mxu0 0.0
    %1304 = vmatprep.subr.mxu0 0.0
    %1305 = vmatpush1.msra.mxu0 0.0
    %1306 = vmatprep.subr.mxu0 0.0
    %1307 = vmatpush1.msra.mxu0 0.0
    %1308 = vmatprep.subr.mxu0 0.0
    %1309 = vmatpush1.msra.mxu0 0.0
    %1310 = vmatprep.subr.mxu0 0.0
    %1311 = vmatpush1.msra.mxu0 0.0
    %1312 = vmatprep.subr.mxu0 0.0
    %1313 = vmatpush1.msra.mxu0 0.0
    %1314 = vmatprep.subr.mxu0 0.0
    %1315 = vmatpush1.msra.mxu0 0.0
    %1316 = vmatprep.subr.mxu0 0.0
    %1317 = vmatpush1.msra.mxu0 0.0
    %1318 = vmatprep.subr.mxu0 0.0
    %1319 = vmatpush1.msra.mxu0 %v1056
    %1320 = vmatprep.subr.mxu0 0.0
    %1321 = vmatpush1.msra.mxu0 %v1055
    %1322 = vmatprep.subr.mxu0 0.0
    %1323 = vmatpush2.msra.mxu0 0.0
    %1324 = vmatprep.subr.mxu0 0.0
    %1325 = vmatpush2.msra.mxu0 0.0
    %1326 = vmatprep.subr.mxu0 0.0
    %1327 = vmatpush2.msra.mxu0 0.0
    %1328 = vmatprep.subr.mxu0 0.0
    %1329 = vmatpush2.msra.mxu0 0.0
    %1330 = vmatprep.subr.mxu0 0.0
    %1331 = vmatpush2.msra.mxu0 0.0
    %1332 = vmatprep.subr.mxu0 0.0
    %1333 = vmatpush2.msra.mxu0 0.0
    %1334 = vmatprep.subr.mxu0 0.0
    %1335 = vmatpush2.msra.mxu0 0.0
    %1336 = vmatprep.subr.mxu0 0.0
    %1337 = vmatpush2.msra.mxu0 0.0
    %1338 = vmatprep.subr.mxu0 0.0
    %1339 = vmatpush2.msra.mxu0 0.0
    %1340 = vmatprep.subr.mxu0 0.0
    %1341 = vmatpush2.msra.mxu0 0.0
    %1342 = vmatprep.subr.mxu0 0.0
    %1343 = vmatpush2.msra.mxu0 0.0
    %1344 = vmatprep.subr.mxu0 0.0
    %1345 = vmatpush2.msra.mxu0 0.0
    %1346 = vmatprep.subr.mxu0 0.0
    %1347 = vmatpush2.msra.mxu0 0.0
    %1348 = vmatprep.subr.mxu0 0.0
    %1349 = vmatpush2.msra.mxu0 0.0
    %1350 = vmatprep.subr.mxu0 0.0
    %1351 = vmatpush2.msra.mxu0 0.0
    %1352 = vmatprep.subr.mxu0 0.0
    %1353 = vmatpush2.msra.mxu0 0.0
    %1354 = vmatprep.mubr.f32.mxu0 0.0
    %1355 = vmatmul.mubr.f32.gmra.mxu0 %v1288
    %v1356 = vpop.f32.mrf.mxu0
    %v1357 = vadd.f32 0.0, %v1356
    %v1358 = vpop.f32.mrf.mxu0
    %1359 = vdwg.mxu0
    %v1360 = vadd.f32 %v1260, %v1357
    %v1361 = vld [vmem:[%s1046] sm:$0x3]
    %v1362 = vld [vmem:[%s1046 + $0x4] sm:$0x3]
    %v1363 = vld [vmem:[%s1046 + $0x10] sm:$0x3]
    %v1364 = vld [vmem:[%s1046 + $0x14] sm:$0x3]
    %v1369 = vcombine.low %v1361, %v1362
    %v1370 = vcombine.low %v1363, %v1364
    %v1372 = vunpack.c.l.s4 1983009808
    %v1373 = vunpack.c.0.s8 %v1372
    %v1374 = vlaneseq
    %v1375 = vshrl.u32 %v1374, 7
    %v1376 = vsub.s32 %v1373, %v1375
    %v1377 = vrot.slane %v1369, %v1376
    %v1379 = vunpack.c.l.s4 1983009808
    %v1380 = vunpack.c.0.s8 %v1379
    %v1381 = vlaneseq
    %v1382 = vshrl.u32 %v1381, 7
    %v1383 = vsub.s32 %v1380, %v1382
    %v1384 = vrot.slane %v1370, %v1383
    %v1385 = vcombine.low %v1377, %v1384
    %v1386 = vsel %vm121, %v1385, 0
    %1388 = vmatprep.subr.mxu0 0.0
    %1389 = vmatpush1.msra.mxu0 0.0
    %1390 = vmatprep.subr.mxu0 0.0
    %1391 = vmatpush1.msra.mxu0 0.0
    %1392 = vmatprep.subr.mxu0 0.0
    %1393 = vmatpush1.msra.mxu0 0.0
    %1394 = vmatprep.subr.mxu0 0.0
    %1395 = vmatpush1.msra.mxu0 0.0
    %1396 = vmatprep.subr.mxu0 0.0
    %1397 = vmatpush1.msra.mxu0 0.0
    %1398 = vmatprep.subr.mxu0 0.0
    %1399 = vmatpush1.msra.mxu0 0.0
    %1400 = vmatprep.subr.mxu0 0.0
    %1401 = vmatpush1.msra.mxu0 0.0
    %1402 = vmatprep.subr.mxu0 0.0
    %1403 = vmatpush1.msra.mxu0 0.0
    %1404 = vmatprep.subr.mxu0 0.0
    %1405 = vmatpush1.msra.mxu0 0.0
    %1406 = vmatprep.subr.mxu0 0.0
    %1407 = vmatpush1.msra.mxu0 0.0
    %1408 = vmatprep.subr.mxu0 0.0
    %1409 = vmatpush1.msra.mxu0 0.0
    %1410 = vmatprep.subr.mxu0 0.0
    %1411 = vmatpush1.msra.mxu0 0.0
    %1412 = vmatprep.subr.mxu0 0.0
    %1413 = vmatpush1.msra.mxu0 0.0
    %1414 = vmatprep.subr.mxu0 0.0
    %1415 = vmatpush1.msra.mxu0 0.0
    %1416 = vmatprep.subr.mxu0 0.0
    %1417 = vmatpush1.msra.mxu0 %v1058
    %1418 = vmatprep.subr.mxu0 0.0
    %1419 = vmatpush1.msra.mxu0 %v1057
    %1420 = vmatprep.subr.mxu0 0.0
    %1421 = vmatpush2.msra.mxu0 0.0
    %1422 = vmatprep.subr.mxu0 0.0
    %1423 = vmatpush2.msra.mxu0 0.0
    %1424 = vmatprep.subr.mxu0 0.0
    %1425 = vmatpush2.msra.mxu0 0.0
    %1426 = vmatprep.subr.mxu0 0.0
    %1427 = vmatpush2.msra.mxu0 0.0
    %1428 = vmatprep.subr.mxu0 0.0
    %1429 = vmatpush2.msra.mxu0 0.0
    %1430 = vmatprep.subr.mxu0 0.0
    %1431 = vmatpush2.msra.mxu0 0.0
    %1432 = vmatprep.subr.mxu0 0.0
    %1433 = vmatpush2.msra.mxu0 0.0
    %1434 = vmatprep.subr.mxu0 0.0
    %1435 = vmatpush2.msra.mxu0 0.0
    %1436 = vmatprep.subr.mxu0 0.0
    %1437 = vmatpush2.msra.mxu0 0.0
    %1438 = vmatprep.subr.mxu0 0.0
    %1439 = vmatpush2.msra.mxu0 0.0
    %1440 = vmatprep.subr.mxu0 0.0
    %1441 = vmatpush2.msra.mxu0 0.0
    %1442 = vmatprep.subr.mxu0 0.0
    %1443 = vmatpush2.msra.mxu0 0.0
    %1444 = vmatprep.subr.mxu0 0.0
    %1445 = vmatpush2.msra.mxu0 0.0
    %1446 = vmatprep.subr.mxu0 0.0
    %1447 = vmatpush2.msra.mxu0 0.0
    %1448 = vmatprep.subr.mxu0 0.0
    %1449 = vmatpush2.msra.mxu0 0.0
    %1450 = vmatprep.subr.mxu0 0.0
    %1451 = vmatpush2.msra.mxu0 0.0
    %1452 = vmatprep.mubr.f32.mxu0 0.0
    %1453 = vmatmul.mubr.f32.gmra.mxu0 %v1386
    %v1454 = vpop.f32.mrf.mxu0
    %v1455 = vadd.f32 0.0, %v1454
    %v1456 = vpop.f32.mrf.mxu0
    %1457 = vdwg.mxu0
    %v1458 = vadd.f32 %v1360, %v1455
    %v1459 = vld [vmem:[%s1046 + $0x1] sm:$0x3]
    %v1460 = vld [vmem:[%s1046 + $0x5] sm:$0x3]
    %v1461 = vld [vmem:[%s1046 + $0x11] sm:$0x3]
    %v1462 = vld [vmem:[%s1046 + $0x15] sm:$0x3]
    %v1467 = vcombine.low %v1459, %v1460
    %v1468 = vcombine.low %v1461, %v1462
    %v1470 = vunpack.c.l.s4 1983009808
    %v1471 = vunpack.c.0.s8 %v1470
    %v1472 = vlaneseq
    %v1473 = vshrl.u32 %v1472, 7
    %v1474 = vsub.s32 %v1471, %v1473
    %v1475 = vrot.slane %v1467, %v1474
    %v1477 = vunpack.c.l.s4 1983009808
    %v1478 = vunpack.c.0.s8 %v1477
    %v1479 = vlaneseq
    %v1480 = vshrl.u32 %v1479, 7
    %v1481 = vsub.s32 %v1478, %v1480
    %v1482 = vrot.slane %v1468, %v1481
    %v1483 = vcombine.low %v1475, %v1482
    %v1484 = vsel %vm121, %v1483, 0
    %1486 = vmatprep.subr.mxu0 0.0
    %1487 = vmatpush1.msra.mxu0 0.0
    %1488 = vmatprep.subr.mxu0 0.0
    %1489 = vmatpush1.msra.mxu0 0.0
    %1490 = vmatprep.subr.mxu0 0.0
    %1491 = vmatpush1.msra.mxu0 0.0
    %1492 = vmatprep.subr.mxu0 0.0
    %1493 = vmatpush1.msra.mxu0 0.0
    %1494 = vmatprep.subr.mxu0 0.0
    %1495 = vmatpush1.msra.mxu0 0.0
    %1496 = vmatprep.subr.mxu0 0.0
    %1497 = vmatpush1.msra.mxu0 0.0
    %1498 = vmatprep.subr.mxu0 0.0
    %1499 = vmatpush1.msra.mxu0 0.0
    %1500 = vmatprep.subr.mxu0 0.0
    %1501 = vmatpush1.msra.mxu0 0.0
    %1502 = vmatprep.subr.mxu0 0.0
    %1503 = vmatpush1.msra.mxu0 0.0
    %1504 = vmatprep.subr.mxu0 0.0
    %1505 = vmatpush1.msra.mxu0 0.0
    %1506 = vmatprep.subr.mxu0 0.0
    %1507 = vmatpush1.msra.mxu0 0.0
    %1508 = vmatprep.subr.mxu0 0.0
    %1509 = vmatpush1.msra.mxu0 0.0
    %1510 = vmatprep.subr.mxu0 0.0
    %1511 = vmatpush1.msra.mxu0 0.0
    %1512 = vmatprep.subr.mxu0 0.0
    %1513 = vmatpush1.msra.mxu0 0.0
    %1514 = vmatprep.subr.mxu0 0.0
    %1515 = vmatpush1.msra.mxu0 %v1060
    %1516 = vmatprep.subr.mxu0 0.0
    %1517 = vmatpush1.msra.mxu0 %v1059
    %1518 = vmatprep.subr.mxu0 0.0
    %1519 = vmatpush2.msra.mxu0 0.0
    %1520 = vmatprep.subr.mxu0 0.0
    %1521 = vmatpush2.msra.mxu0 0.0
    %1522 = vmatprep.subr.mxu0 0.0
    %1523 = vmatpush2.msra.mxu0 0.0
    %1524 = vmatprep.subr.mxu0 0.0
    %1525 = vmatpush2.msra.mxu0 0.0
    %1526 = vmatprep.subr.mxu0 0.0
    %1527 = vmatpush2.msra.mxu0 0.0
    %1528 = vmatprep.subr.mxu0 0.0
    %1529 = vmatpush2.msra.mxu0 0.0
    %1530 = vmatprep.subr.mxu0 0.0
    %1531 = vmatpush2.msra.mxu0 0.0
    %1532 = vmatprep.subr.mxu0 0.0
    %1533 = vmatpush2.msra.mxu0 0.0
    %1534 = vmatprep.subr.mxu0 0.0
    %1535 = vmatpush2.msra.mxu0 0.0
    %1536 = vmatprep.subr.mxu0 0.0
    %1537 = vmatpush2.msra.mxu0 0.0
    %1538 = vmatprep.subr.mxu0 0.0
    %1539 = vmatpush2.msra.mxu0 0.0
    %1540 = vmatprep.subr.mxu0 0.0
    %1541 = vmatpush2.msra.mxu0 0.0
    %1542 = vmatprep.subr.mxu0 0.0
    %1543 = vmatpush2.msra.mxu0 0.0
    %1544 = vmatprep.subr.mxu0 0.0
    %1545 = vmatpush2.msra.mxu0 0.0
    %1546 = vmatprep.subr.mxu0 0.0
    %1547 = vmatpush2.msra.mxu0 0.0
    %1548 = vmatprep.subr.mxu0 0.0
    %1549 = vmatpush2.msra.mxu0 0.0
    %1550 = vmatprep.mubr.f32.mxu0 0.0
    %1551 = vmatmul.mubr.f32.gmra.mxu0 %v1484
    %v1552 = vpop.f32.mrf.mxu0
    %v1553 = vadd.f32 0.0, %v1552
    %v1554 = vpop.f32.mrf.mxu0
    %1555 = vdwg.mxu0
    %v1556 = vadd.f32 %v1458, %v1553
    %v1557 = vld [vmem:[%s1046 + $0x2] sm:$0x3]
    %v1558 = vld [vmem:[%s1046 + $0x6] sm:$0x3]
    %v1559 = vld [vmem:[%s1046 + $0x12] sm:$0x3]
    %v1560 = vld [vmem:[%s1046 + $0x16] sm:$0x3]
    %v1565 = vcombine.low %v1557, %v1558
    %v1566 = vcombine.low %v1559, %v1560
    %v1568 = vunpack.c.l.s4 1983009808
    %v1569 = vunpack.c.0.s8 %v1568
    %v1570 = vlaneseq
    %v1571 = vshrl.u32 %v1570, 7
    %v1572 = vsub.s32 %v1569, %v1571
    %v1573 = vrot.slane %v1565, %v1572
    %v1575 = vunpack.c.l.s4 1983009808
    %v1576 = vunpack.c.0.s8 %v1575
    %v1577 = vlaneseq
    %v1578 = vshrl.u32 %v1577, 7
    %v1579 = vsub.s32 %v1576, %v1578
    %v1580 = vrot.slane %v1566, %v1579
    %v1581 = vcombine.low %v1573, %v1580
    %v1582 = vsel %vm121, %v1581, 0
    %1584 = vmatprep.subr.mxu0 0.0
    %1585 = vmatpush1.msra.mxu0 0.0
    %1586 = vmatprep.subr.mxu0 0.0
    %1587 = vmatpush1.msra.mxu0 0.0
    %1588 = vmatprep.subr.mxu0 0.0
    %1589 = vmatpush1.msra.mxu0 0.0
    %1590 = vmatprep.subr.mxu0 0.0
    %1591 = vmatpush1.msra.mxu0 0.0
    %1592 = vmatprep.subr.mxu0 0.0
    %1593 = vmatpush1.msra.mxu0 0.0
    %1594 = vmatprep.subr.mxu0 0.0
    %1595 = vmatpush1.msra.mxu0 0.0
    %1596 = vmatprep.subr.mxu0 0.0
    %1597 = vmatpush1.msra.mxu0 0.0
    %1598 = vmatprep.subr.mxu0 0.0
    %1599 = vmatpush1.msra.mxu0 0.0
    %1600 = vmatprep.subr.mxu0 0.0
    %1601 = vmatpush1.msra.mxu0 0.0
    %1602 = vmatprep.subr.mxu0 0.0
    %1603 = vmatpush1.msra.mxu0 0.0
    %1604 = vmatprep.subr.mxu0 0.0
    %1605 = vmatpush1.msra.mxu0 0.0
    %1606 = vmatprep.subr.mxu0 0.0
    %1607 = vmatpush1.msra.mxu0 0.0
    %1608 = vmatprep.subr.mxu0 0.0
    %1609 = vmatpush1.msra.mxu0 0.0
    %1610 = vmatprep.subr.mxu0 0.0
    %1611 = vmatpush1.msra.mxu0 0.0
    %1612 = vmatprep.subr.mxu0 0.0
    %1613 = vmatpush1.msra.mxu0 %v1062
    %1614 = vmatprep.subr.mxu0 0.0
    %1615 = vmatpush1.msra.mxu0 %v1061
    %1616 = vmatprep.subr.mxu0 0.0
    %1617 = vmatpush2.msra.mxu0 0.0
    %1618 = vmatprep.subr.mxu0 0.0
    %1619 = vmatpush2.msra.mxu0 0.0
    %1620 = vmatprep.subr.mxu0 0.0
    %1621 = vmatpush2.msra.mxu0 0.0
    %1622 = vmatprep.subr.mxu0 0.0
    %1623 = vmatpush2.msra.mxu0 0.0
    %1624 = vmatprep.subr.mxu0 0.0
    %1625 = vmatpush2.msra.mxu0 0.0
    %1626 = vmatprep.subr.mxu0 0.0
    %1627 = vmatpush2.msra.mxu0 0.0
    %1628 = vmatprep.subr.mxu0 0.0
    %1629 = vmatpush2.msra.mxu0 0.0
    %1630 = vmatprep.subr.mxu0 0.0
    %1631 = vmatpush2.msra.mxu0 0.0
    %1632 = vmatprep.subr.mxu0 0.0
    %1633 = vmatpush2.msra.mxu0 0.0
    %1634 = vmatprep.subr.mxu0 0.0
    %1635 = vmatpush2.msra.mxu0 0.0
    %1636 = vmatprep.subr.mxu0 0.0
    %1637 = vmatpush2.msra.mxu0 0.0
    %1638 = vmatprep.subr.mxu0 0.0
    %1639 = vmatpush2.msra.mxu0 0.0
    %1640 = vmatprep.subr.mxu0 0.0
    %1641 = vmatpush2.msra.mxu0 0.0
    %1642 = vmatprep.subr.mxu0 0.0
    %1643 = vmatpush2.msra.mxu0 0.0
    %1644 = vmatprep.subr.mxu0 0.0
    %1645 = vmatpush2.msra.mxu0 0.0
    %1646 = vmatprep.subr.mxu0 0.0
    %1647 = vmatpush2.msra.mxu0 0.0
    %1648 = vmatprep.mubr.f32.mxu0 0.0
    %1649 = vmatmul.mubr.f32.gmra.mxu0 %v1582
    %v1650 = vpop.f32.mrf.mxu0
    %v1651 = vadd.f32 0.0, %v1650
    %v1652 = vpop.f32.mrf.mxu0
    %1653 = vdwg.mxu0
    %v1654 = vadd.f32 %v1556, %v1651
    %s1655 = scalar_lea.vmem [#allocation3], 8
    %v1656 = vld [vmem:[%s1655] sm:$0x3]
    %v1657 = vld [vmem:[%s1655 + $0x4] sm:$0x3]
    %v1658 = vld [vmem:[%s1655 + $0x10] sm:$0x3]
    %v1659 = vld [vmem:[%s1655 + $0x14] sm:$0x3]
    %v1664 = vcombine.low %v1656, %v1657
    %v1665 = vcombine.low %v1658, %v1659
    %v1667 = vunpack.c.l.s4 1983009808
    %v1668 = vunpack.c.0.s8 %v1667
    %v1669 = vlaneseq
    %v1670 = vshrl.u32 %v1669, 7
    %v1671 = vsub.s32 %v1668, %v1670
    %v1672 = vrot.slane %v1664, %v1671
    %v1674 = vunpack.c.l.s4 1983009808
    %v1675 = vunpack.c.0.s8 %v1674
    %v1676 = vlaneseq
    %v1677 = vshrl.u32 %v1676, 7
    %v1678 = vsub.s32 %v1675, %v1677
    %v1679 = vrot.slane %v1665, %v1678
    %v1680 = vcombine.low %v1672, %v1679
    %v1681 = vsel %vm121, %v1680, 0
    %1683 = vmatprep.subr.mxu0 0.0
    %1684 = vmatpush1.msra.mxu0 0.0
    %1685 = vmatprep.subr.mxu0 0.0
    %1686 = vmatpush1.msra.mxu0 0.0
    %1687 = vmatprep.subr.mxu0 0.0
    %1688 = vmatpush1.msra.mxu0 0.0
    %1689 = vmatprep.subr.mxu0 0.0
    %1690 = vmatpush1.msra.mxu0 0.0
    %1691 = vmatprep.subr.mxu0 0.0
    %1692 = vmatpush1.msra.mxu0 0.0
    %1693 = vmatprep.subr.mxu0 0.0
    %1694 = vmatpush1.msra.mxu0 0.0
    %1695 = vmatprep.subr.mxu0 0.0
    %1696 = vmatpush1.msra.mxu0 0.0
    %1697 = vmatprep.subr.mxu0 0.0
    %1698 = vmatpush1.msra.mxu0 0.0
    %1699 = vmatprep.subr.mxu0 0.0
    %1700 = vmatpush1.msra.mxu0 0.0
    %1701 = vmatprep.subr.mxu0 0.0
    %1702 = vmatpush1.msra.mxu0 0.0
    %1703 = vmatprep.subr.mxu0 0.0
    %1704 = vmatpush1.msra.mxu0 0.0
    %1705 = vmatprep.subr.mxu0 0.0
    %1706 = vmatpush1.msra.mxu0 0.0
    %1707 = vmatprep.subr.mxu0 0.0
    %1708 = vmatpush1.msra.mxu0 0.0
    %1709 = vmatprep.subr.mxu0 0.0
    %1710 = vmatpush1.msra.mxu0 0.0
    %1711 = vmatprep.subr.mxu0 0.0
    %1712 = vmatpush1.msra.mxu0 %v1064
    %1713 = vmatprep.subr.mxu0 0.0
    %1714 = vmatpush1.msra.mxu0 %v1063
    %1715 = vmatprep.subr.mxu0 0.0
    %1716 = vmatpush2.msra.mxu0 0.0
    %1717 = vmatprep.subr.mxu0 0.0
    %1718 = vmatpush2.msra.mxu0 0.0
    %1719 = vmatprep.subr.mxu0 0.0
    %1720 = vmatpush2.msra.mxu0 0.0
    %1721 = vmatprep.subr.mxu0 0.0
    %1722 = vmatpush2.msra.mxu0 0.0
    %1723 = vmatprep.subr.mxu0 0.0
    %1724 = vmatpush2.msra.mxu0 0.0
    %1725 = vmatprep.subr.mxu0 0.0
    %1726 = vmatpush2.msra.mxu0 0.0
    %1727 = vmatprep.subr.mxu0 0.0
    %1728 = vmatpush2.msra.mxu0 0.0
    %1729 = vmatprep.subr.mxu0 0.0
    %1730 = vmatpush2.msra.mxu0 0.0
    %1731 = vmatprep.subr.mxu0 0.0
    %1732 = vmatpush2.msra.mxu0 0.0
    %1733 = vmatprep.subr.mxu0 0.0
    %1734 = vmatpush2.msra.mxu0 0.0
    %1735 = vmatprep.subr.mxu0 0.0
    %1736 = vmatpush2.msra.mxu0 0.0
    %1737 = vmatprep.subr.mxu0 0.0
    %1738 = vmatpush2.msra.mxu0 0.0
    %1739 = vmatprep.subr.mxu0 0.0
    %1740 = vmatpush2.msra.mxu0 0.0
    %1741 = vmatprep.subr.mxu0 0.0
    %1742 = vmatpush2.msra.mxu0 0.0
    %1743 = vmatprep.subr.mxu0 0.0
    %1744 = vmatpush2.msra.mxu0 0.0
    %1745 = vmatprep.subr.mxu0 0.0
    %1746 = vmatpush2.msra.mxu0 0.0
    %1747 = vmatprep.mubr.f32.mxu0 0.0
    %1748 = vmatmul.mubr.f32.gmra.mxu0 %v1681
    %v1749 = vpop.f32.mrf.mxu0
    %v1750 = vadd.f32 0.0, %v1749
    %v1751 = vpop.f32.mrf.mxu0
    %1752 = vdwg.mxu0
    %v1753 = vadd.f32 %v1654, %v1750
    %v1754 = vld [vmem:[%s1655 + $0x1] sm:$0x3]
    %v1755 = vld [vmem:[%s1655 + $0x5] sm:$0x3]
    %v1756 = vld [vmem:[%s1655 + $0x11] sm:$0x3]
    %v1757 = vld [vmem:[%s1655 + $0x15] sm:$0x3]
    %v1762 = vcombine.low %v1754, %v1755
    %v1763 = vcombine.low %v1756, %v1757
    %v1765 = vunpack.c.l.s4 1983009808
    %v1766 = vunpack.c.0.s8 %v1765
    %v1767 = vlaneseq
    %v1768 = vshrl.u32 %v1767, 7
    %v1769 = vsub.s32 %v1766, %v1768
    %v1770 = vrot.slane %v1762, %v1769
    %v1772 = vunpack.c.l.s4 1983009808
    %v1773 = vunpack.c.0.s8 %v1772
    %v1774 = vlaneseq
    %v1775 = vshrl.u32 %v1774, 7
    %v1776 = vsub.s32 %v1773, %v1775
    %v1777 = vrot.slane %v1763, %v1776
    %v1778 = vcombine.low %v1770, %v1777
    %v1779 = vsel %vm121, %v1778, 0
    %1781 = vmatprep.subr.mxu0 0.0
    %1782 = vmatpush1.msra.mxu0 0.0
    %1783 = vmatprep.subr.mxu0 0.0
    %1784 = vmatpush1.msra.mxu0 0.0
    %1785 = vmatprep.subr.mxu0 0.0
    %1786 = vmatpush1.msra.mxu0 0.0
    %1787 = vmatprep.subr.mxu0 0.0
    %1788 = vmatpush1.msra.mxu0 0.0
    %1789 = vmatprep.subr.mxu0 0.0
    %1790 = vmatpush1.msra.mxu0 0.0
    %1791 = vmatprep.subr.mxu0 0.0
    %1792 = vmatpush1.msra.mxu0 0.0
    %1793 = vmatprep.subr.mxu0 0.0
    %1794 = vmatpush1.msra.mxu0 0.0
    %1795 = vmatprep.subr.mxu0 0.0
    %1796 = vmatpush1.msra.mxu0 0.0
    %1797 = vmatprep.subr.mxu0 0.0
    %1798 = vmatpush1.msra.mxu0 0.0
    %1799 = vmatprep.subr.mxu0 0.0
    %1800 = vmatpush1.msra.mxu0 0.0
    %1801 = vmatprep.subr.mxu0 0.0
    %1802 = vmatpush1.msra.mxu0 0.0
    %1803 = vmatprep.subr.mxu0 0.0
    %1804 = vmatpush1.msra.mxu0 0.0
    %1805 = vmatprep.subr.mxu0 0.0
    %1806 = vmatpush1.msra.mxu0 0.0
    %1807 = vmatprep.subr.mxu0 0.0
    %1808 = vmatpush1.msra.mxu0 0.0
    %1809 = vmatprep.subr.mxu0 0.0
    %1810 = vmatpush1.msra.mxu0 %v1066
    %1811 = vmatprep.subr.mxu0 0.0
    %1812 = vmatpush1.msra.mxu0 %v1065
    %1813 = vmatprep.subr.mxu0 0.0
    %1814 = vmatpush2.msra.mxu0 0.0
    %1815 = vmatprep.subr.mxu0 0.0
    %1816 = vmatpush2.msra.mxu0 0.0
    %1817 = vmatprep.subr.mxu0 0.0
    %1818 = vmatpush2.msra.mxu0 0.0
    %1819 = vmatprep.subr.mxu0 0.0
    %1820 = vmatpush2.msra.mxu0 0.0
    %1821 = vmatprep.subr.mxu0 0.0
    %1822 = vmatpush2.msra.mxu0 0.0
    %1823 = vmatprep.subr.mxu0 0.0
    %1824 = vmatpush2.msra.mxu0 0.0
    %1825 = vmatprep.subr.mxu0 0.0
    %1826 = vmatpush2.msra.mxu0 0.0
    %1827 = vmatprep.subr.mxu0 0.0
    %1828 = vmatpush2.msra.mxu0 0.0
    %1829 = vmatprep.subr.mxu0 0.0
    %1830 = vmatpush2.msra.mxu0 0.0
    %1831 = vmatprep.subr.mxu0 0.0
    %1832 = vmatpush2.msra.mxu0 0.0
    %1833 = vmatprep.subr.mxu0 0.0
    %1834 = vmatpush2.msra.mxu0 0.0
    %1835 = vmatprep.subr.mxu0 0.0
    %1836 = vmatpush2.msra.mxu0 0.0
    %1837 = vmatprep.subr.mxu0 0.0
    %1838 = vmatpush2.msra.mxu0 0.0
    %1839 = vmatprep.subr.mxu0 0.0
    %1840 = vmatpush2.msra.mxu0 0.0
    %1841 = vmatprep.subr.mxu0 0.0
    %1842 = vmatpush2.msra.mxu0 0.0
    %1843 = vmatprep.subr.mxu0 0.0
    %1844 = vmatpush2.msra.mxu0 0.0
    %1845 = vmatprep.mubr.f32.mxu0 0.0
    %1846 = vmatmul.mubr.f32.gmra.mxu0 %v1779
    %v1847 = vpop.f32.mrf.mxu0
    %v1848 = vadd.f32 0.0, %v1847
    %v1849 = vpop.f32.mrf.mxu0
    %1850 = vdwg.mxu0
    %v1851 = vadd.f32 %v1753, %v1848
    %v1852 = vld [vmem:[%s1655 + $0x2] sm:$0x3]
    %v1853 = vld [vmem:[%s1655 + $0x6] sm:$0x3]
    %v1854 = vld [vmem:[%s1655 + $0x12] sm:$0x3]
    %v1855 = vld [vmem:[%s1655 + $0x16] sm:$0x3]
    %v1860 = vcombine.low %v1852, %v1853
    %v1861 = vcombine.low %v1854, %v1855
    %v1863 = vunpack.c.l.s4 1983009808
    %v1864 = vunpack.c.0.s8 %v1863
    %v1865 = vlaneseq
    %v1866 = vshrl.u32 %v1865, 7
    %v1867 = vsub.s32 %v1864, %v1866
    %v1868 = vrot.slane %v1860, %v1867
    %v1870 = vunpack.c.l.s4 1983009808
    %v1871 = vunpack.c.0.s8 %v1870
    %v1872 = vlaneseq
    %v1873 = vshrl.u32 %v1872, 7
    %v1874 = vsub.s32 %v1871, %v1873
    %v1875 = vrot.slane %v1861, %v1874
    %v1876 = vcombine.low %v1868, %v1875
    %v1877 = vsel %vm121, %v1876, 0
    %1879 = vmatprep.subr.mxu0 0.0
    %1880 = vmatpush1.msra.mxu0 0.0
    %1881 = vmatprep.subr.mxu0 0.0
    %1882 = vmatpush1.msra.mxu0 0.0
    %1883 = vmatprep.subr.mxu0 0.0
    %1884 = vmatpush1.msra.mxu0 0.0
    %1885 = vmatprep.subr.mxu0 0.0
    %1886 = vmatpush1.msra.mxu0 0.0
    %1887 = vmatprep.subr.mxu0 0.0
    %1888 = vmatpush1.msra.mxu0 0.0
    %1889 = vmatprep.subr.mxu0 0.0
    %1890 = vmatpush1.msra.mxu0 0.0
    %1891 = vmatprep.subr.mxu0 0.0
    %1892 = vmatpush1.msra.mxu0 0.0
    %1893 = vmatprep.subr.mxu0 0.0
    %1894 = vmatpush1.msra.mxu0 0.0
    %1895 = vmatprep.subr.mxu0 0.0
    %1896 = vmatpush1.msra.mxu0 0.0
    %1897 = vmatprep.subr.mxu0 0.0
    %1898 = vmatpush1.msra.mxu0 0.0
    %1899 = vmatprep.subr.mxu0 0.0
    %1900 = vmatpush1.msra.mxu0 0.0
    %1901 = vmatprep.subr.mxu0 0.0
    %1902 = vmatpush1.msra.mxu0 0.0
    %1903 = vmatprep.subr.mxu0 0.0
    %1904 = vmatpush1.msra.mxu0 0.0
    %1905 = vmatprep.subr.mxu0 0.0
    %1906 = vmatpush1.msra.mxu0 0.0
    %1907 = vmatprep.subr.mxu0 0.0
    %1908 = vmatpush1.msra.mxu0 %v1068
    %1909 = vmatprep.subr.mxu0 0.0
    %1910 = vmatpush1.msra.mxu0 %v1067
    %1911 = vmatprep.subr.mxu0 0.0
    %1912 = vmatpush2.msra.mxu0 0.0
    %1913 = vmatprep.subr.mxu0 0.0
    %1914 = vmatpush2.msra.mxu0 0.0
    %1915 = vmatprep.subr.mxu0 0.0
    %1916 = vmatpush2.msra.mxu0 0.0
    %1917 = vmatprep.subr.mxu0 0.0
    %1918 = vmatpush2.msra.mxu0 0.0
    %1919 = vmatprep.subr.mxu0 0.0
    %1920 = vmatpush2.msra.mxu0 0.0
    %1921 = vmatprep.subr.mxu0 0.0
    %1922 = vmatpush2.msra.mxu0 0.0
    %1923 = vmatprep.subr.mxu0 0.0
    %1924 = vmatpush2.msra.mxu0 0.0
    %1925 = vmatprep.subr.mxu0 0.0
    %1926 = vmatpush2.msra.mxu0 0.0
    %1927 = vmatprep.subr.mxu0 0.0
    %1928 = vmatpush2.msra.mxu0 0.0
    %1929 = vmatprep.subr.mxu0 0.0
    %1930 = vmatpush2.msra.mxu0 0.0
    %1931 = vmatprep.subr.mxu0 0.0
    %1932 = vmatpush2.msra.mxu0 0.0
    %1933 = vmatprep.subr.mxu0 0.0
    %1934 = vmatpush2.msra.mxu0 0.0
    %1935 = vmatprep.subr.mxu0 0.0
    %1936 = vmatpush2.msra.mxu0 0.0
    %1937 = vmatprep.subr.mxu0 0.0
    %1938 = vmatpush2.msra.mxu0 0.0
    %1939 = vmatprep.subr.mxu0 0.0
    %1940 = vmatpush2.msra.mxu0 0.0
    %1941 = vmatprep.subr.mxu0 0.0
    %1942 = vmatpush2.msra.mxu0 0.0
    %1943 = vmatprep.mubr.f32.mxu0 0.0
    %1944 = vmatmul.mubr.f32.gmra.mxu0 %v1877
    %v1945 = vpop.f32.mrf.mxu0
    %v1946 = vadd.f32 0.0, %v1945
    %v1947 = vpop.f32.mrf.mxu0
    %1948 = vdwg.mxu0
    %v1949 = vadd.f32 %v1851, %v1946
    %v1950 = vld [vmem:[%s5] sm:$0x1]
    %v1951 = vld [vmem:[%s6] sm:$0x1]
    %v1952 = vsel %vm121, %v1949, 0.0
    %v1953 = vrot.slane %v1952, 4
    %v1954 = vadd.f32 %v1952, %v1953
    %v1955 = vrot.slane %v1954, 2
    %v1956 = vadd.f32 %v1954, %v1955
    %v1957 = vrot.slane %v1956, 1
    %v1958 = vadd.f32 %v1956, %v1957
    %v1959 = vmul.f32 %v1958, 0.125
    %v1960 = vmul.f32 %v1949, %v1949
    %v1961 = vsel %vm121, %v1960, 0.0
    %v1962 = vrot.slane %v1961, 4
    %v1963 = vadd.f32 %v1961, %v1962
    %v1964 = vrot.slane %v1963, 2
    %v1965 = vadd.f32 %v1963, %v1964
    %v1966 = vrot.slane %v1965, 1
    %v1967 = vadd.f32 %v1965, %v1966
    %v1968 = vmul.f32 %v1967, 0.125
    %v1969 = vmul.f32 %v1959, %v1959
    %v1970 = vsub.f32 %v1968, %v1969
    %v1971 = vmax.f32 %v1970, 0.0
    %v1972 = vadd.f32 %v1971, 1e-05
    %v1973 = vrsqrt.pop %v1972
    %v1974 = vmul.f32 %v1950, %v1973
    %v1975 = vmul.f32 %v1959, %v1974
    %v1976 = vsub.f32 %v1951, %v1975
    %v1978 = vlaneseq
    %v1979 = vshrl.u32 %v1978, 7
    %v1980 = vsub.s32 0, %v1979
    %v1981 = vrot.slane %v1974, %v1980
    %v1983 = vmul.f32 %v1949, %v1981
    %v1985 = vlaneseq
    %v1986 = vshrl.u32 %v1985, 7
    %v1987 = vsub.s32 0, %v1986
    %v1988 = vrot.slane %v1976, %v1987
    %v1990 = vadd.f32 %v1983, %v1988
    %v1991 = vmax.f32 %v1990, 0.0
    %v1993 = vcombine.high %v1991, %v1991
    %v1995 = vunpack.c.l.s4 1983009808
    %v1996 = vunpack.c.0.s8 %v1995
    %v1997 = vlaneseq
    %v1998 = vshrl.u32 %v1997, 7
    %v1999 = vsub.s32 %v1996, %v1998
    %v2000 = vrot.slane %v1991, %v1999
    %v2002 = vunpack.c.l.s4 1983009808
    %v2003 = vunpack.c.0.s8 %v2002
    %v2004 = vlaneseq
    %v2005 = vshrl.u32 %v2004, 7
    %v2006 = vsub.s32 %v2003, %v2005
    %v2007 = vrot.slane %v1993, %v2006
    %v2008 = vcombine.high %v2000, %v2000
    %v2009 = vcombine.high %v2007, %v2007
    %2014 = vst.msk [vmem:[#allocation4] sm:$0x3] %vm69, %v2000
    %2015 = vst.msk [vmem:[#allocation4 + $0x2] sm:$0x3] %vm69, %v2008
    %2016 = vst.msk [vmem:[#allocation4 + $0x4] sm:$0x3] %vm69, %v2007
    %2017 = vst.msk [vmem:[#allocation4 + $0x6] sm:$0x3] %vm69, %v2009
    // Predicated region
    $region30: #{encoder_forward.5} parent=1 // pred_check
      _
    $region31: #{encoder_forward.5} parent=1 // pred_check_branch
      %2019 = sbr.rel (0) target = $region33
    $region32: #{encoder_forward.5} parent=1 // pred_region
      %s2021 = ssub.s32 128, 128
      %2022 = vsyncadd [#allocation5], %s2021
      %s2023 = sshll.u32 [#allocation4], 4
      %s2024 = int_to_ptr.vmem [resolvable:$true] %s2023
      %2029 = dma.vmem_to_hbm [thread:$0]  %s2024, 128, %s7, [#allocation5], 32, 32, 2
    $region33: #{encoder_forward.5} parent=1 // pred_fallthru
      _
    // Predicated region
    $region34: #{encoder_forward.5} parent=1 // pred_check
      _
    $region35: #{encoder_forward.5} parent=1 // pred_check_branch
      %2031 = sbr.rel (0) target = $region37
    $region36: #{encoder_forward.5} parent=1 // pred_region
      %2032 = dma.done [#allocation5], 128
    $region37: #{encoder_forward.5} parent=1 // pred_fallthru
      _
    %2033 = vsyncpa [#allocation5], 1

// kernel: encoder_forward.4
$region0: #{encoder_forward.4}
  #allocation0 [shape = 'u32[]', space=smem, size = 0x4, offset = 0x4, fixed_abs, tag = 'smem constant byte address 0x4 - core index']
  #allocation1 [shape = 'u32[144,128]{1,0:T(1,128)}', space=vmem, size = 0x12000, scoped, tag = 'internal scratch']
  #allocation2 [shape = 'f32[2,6,6,8]{3,2,1,0:T(8,128)}', space=vmem, size = 0xc000, scoped, tag = 'scratch operand']
  #allocation3 [shape = 'f32[2,6,6,16]{3,2,1,0:T(8,128)}', space=vmem, size = 0xc000, scoped, tag = 'scratch operand']
  %s0 = inlined_call_operand.vmem [shape: f32[2,8,4,16], index: 0, kind: input, shape index: {}]
  %s1 = inlined_call_operand.vmem [shape: f32[9,8,16], index: 1, kind: input, shape index: {}]
  %s2 = inlined_call_operand.vmem [shape: f32[1,16], index: 2, kind: input, shape index: {}]
  %s3 = inlined_call_operand.vmem [shape: f32[1,16], index: 3, kind: input, shape index: {}]
  %s4 = inlined_call_operand.vmem [shape: f32[9,16,16], index: 4, kind: input, shape index: {}]
  %s5 = inlined_call_operand.vmem [shape: f32[1,16], index: 5, kind: input, shape index: {}]
  %s6 = inlined_call_operand.vmem [shape: f32[1,16], index: 6, kind: input, shape index: {}]
  %s7 = inlined_call_operand.vmem [shape: f32[2,4,4,16], index: 7, kind: output, shape index: {}]
  %s8 = sld [smem:[#allocation0]]
  $region38: #{encoder_forward.4} parent=0
    _
  %s10 = ssub.s32 1, %s8
  %s11 = scalar_select 0, %s10, %s8
  // Predicated region
  $region2: #{encoder_forward.4} parent=0 // pred_check
    _
  $region3: #{encoder_forward.4} parent=0 // pred_check_branch
    %13 = sbr.rel (0) target = $region5
  $region4: #{encoder_forward.4} parent=0 // pred_region
    _
  $region5: #{encoder_forward.4} parent=0 // pred_fallthru
    _
  // Predicated region
  $region6: #{encoder_forward.4} parent=0 // pred_check
    _
  $region7: #{encoder_forward.4} parent=0 // pred_check_branch
    %15 = sbr.rel (0) target = $region9
  $region8: #{encoder_forward.4} parent=0 // pred_region
    _
  $region9: #{encoder_forward.4} parent=0 // pred_fallthru
    _
  // Predicated region
  $region10: #{encoder_forward.4} parent=0 // pred_check
    _
  $region11: #{encoder_forward.4} parent=0 // pred_check_branch
    %17 = sbr.rel (0) target = $region13
  $region12: #{encoder_forward.4} parent=0 // pred_region
    _
  $region13: #{encoder_forward.4} parent=0 // pred_fallthru
    _
  // Predicated region
  $region14: #{encoder_forward.4} parent=0 // pred_check
    _
  $region15: #{encoder_forward.4} parent=0 // pred_check_branch
    %19 = sbr.rel (0) target = $region17
  $region16: #{encoder_forward.4} parent=0 // pred_region
    _
  $region17: #{encoder_forward.4} parent=0 // pred_fallthru
    _
  // Predicated region
  $region18: #{encoder_forward.4} parent=0 // pred_check
    _
  $region19: #{encoder_forward.4} parent=0 // pred_check_branch
    %21 = sbr.rel (0) target = $region21
  $region20: #{encoder_forward.4} parent=0 // pred_region
    _
  $region21: #{encoder_forward.4} parent=0 // pred_fallthru
    _
  // Predicated region
  $region22: #{encoder_forward.4} parent=0 // pred_check
    _
  $region23: #{encoder_forward.4} parent=0 // pred_check_branch
    %23 = sbr.rel (0) target = $region25
  $region24: #{encoder_forward.4} parent=0 // pred_region
    _
  $region25: #{encoder_forward.4} parent=0 // pred_fallthru
    _
  // Predicated region
  $region26: #{encoder_forward.4} parent=0 // pred_check
    _
  $region27: #{encoder_forward.4} parent=0 // pred_check_branch
    %25 = sbr.rel (0) target = $region29
  $region28: #{encoder_forward.4} parent=0 // pred_region
    _
  $region29: #{encoder_forward.4} parent=0 // pred_fallthru
    _
  %v26 = vld [vmem:[%s0] sm:$0xf]
  %v27 = vld [vmem:[%s0 + $0x4] sm:$0xf]
  %v28 = vld [vmem:[%s0 + $0x8] sm:$0xf]
  %v29 = vld [vmem:[%s0 + $0xc] sm:$0xf]
  %v30 = vld [vmem:[%s0 + $0x10] sm:$0xf]
  %v31 = vld [vmem:[%s0 + $0x14] sm:$0xf]
  %v32 = vld [vmem:[%s0 + $0x18] sm:$0xf]
  %v33 = vld [vmem:[%s0 + $0x1c] sm:$0xf]
  %v34 = vld [vmem:[%s0 + $0x20] sm:$0xf]
  %v35 = vld [vmem:[%s0 + $0x24] sm:$0xf]
  %v36 = vld [vmem:[%s0 + $0x28] sm:$0xf]
  %v37 = vld [vmem:[%s0 + $0x2c] sm:$0xf]
  %v38 = vld [vmem:[%s0 + $0x30] sm:$0xf]
  %v39 = vld [vmem:[%s0 + $0x34] sm:$0xf]
  %v40 = vld [vmem:[%s0 + $0x38] sm:$0xf]
  %v41 = vld [vmem:[%s0 + $0x3c] sm:$0xf]
  %v42 = vmax.f32 %v26, %v27
  %v43 = vmax.f32 %v28, %v29
  %v44 = vmax.f32 %v30, %v31
  %v45 = vmax.f32 %v32, %v33
  %v46 = vmax.f32 %v34, %v35
  %v47 = vmax.f32 %v36, %v37
  %v48 = vmax.f32 %v38, %v39
  %v49 = vmax.f32 %v40, %v41
  %58 = vrot.lane.b32.xlu0 %v42, 120
  %v59 = vpop.permute.xlu0 %58
  %60 = vrot.lane.b32.xlu0 %v43, 120
  %v61 = vpop.permute.xlu0 %60
  %62 = vrot.lane.b32.xlu0 %v44, 120
  %v63 = vpop.permute.xlu0 %62
  %64 = vrot.lane.b32.xlu0 %v45, 120
  %v65 = vpop.permute.xlu0 %64
  %66 = vrot.lane.b32.xlu0 %v46, 120
  %v67 = vpop.permute.xlu0 %66
  %68 = vrot.lane.b32.xlu0 %v47, 120
  %v69 = vpop.permute.xlu0 %68
  %70 = vrot.lane.b32.xlu0 %v48, 120
  %v71 = vpop.permute.xlu0 %70
  %72 = vrot.lane.b32.xlu0 %v49, 120
  %v73 = vpop.permute.xlu0 %72
  %v82 = vmax.f32 %v42, %v59
  %v83 = vmax.f32 %v43, %v61
  %v84 = vmax.f32 %v44, %v63
  %v85 = vmax.f32 %v45, %v65
  %v86 = vmax.f32 %v46, %v67
  %v87 = vmax.f32 %v47, %v69
  %v88 = vmax.f32 %v48, %v71
  %v89 = vmax.f32 %v49, %v73
  %vm90 = vcmask 62464
  %91 = vst.msk [vmem:[#allocation2] sm:$0x3f] %vm90, 0.0
  %92 = vst.msk [vmem:[#allocation2 + $0x8] sm:$0x3f] %vm90, 0.0
  %93 = vst.msk [vmem:[#allocation2 + $0x10] sm:$0x3f] %vm90, 0.0
  %94 = vst.msk [vmem:[#allocation2 + $0x18] sm:$0x3f] %vm90, 0.0
  %95 = vst.msk [vmem:[#allocation2 + $0x20] sm:$0x3f] %vm90, 0.0
  %96 = vst.msk [vmem:[#allocation2 + $0x28] sm:$0x3f] %vm90, 0.0
  %97 = vst.msk [vmem:[#allocation2 + $0x30] sm:$0x3f] %vm90, 0.0
  %98 = vst.msk [vmem:[#allocation2 + $0x38] sm:$0x3f] %vm90, 0.0
  %99 = vst.msk [vmem:[#allocation2 + $0x40] sm:$0x3f] %vm90, 0.0
  %100 = vst.msk [vmem:[#allocation2 + $0x48] sm:$0x3f] %vm90, 0.0
  %101 = vst.msk [vmem:[#allocation2 + $0x50] sm:$0x3f] %vm90, 0.0
  %102 = vst.msk [vmem:[#allocation2 + $0x58] sm:$0x3f] %vm90, 0.0
  %s103 = scalar_lea.vmem [#allocation2], 8
  %vm104 = vcmask 60416
  %105 = vst.msk [vmem:[%s103 + $0x1] sm:$0xf] %vm104, %v82
  %106 = vst.msk [vmem:[%s103 + $0x9] sm:$0xf] %vm104, %v83
  %107 = vst.msk [vmem:[%s103 + $0x11] sm:$0xf] %vm104, %v84
  %108 = vst.msk [vmem:[%s103 + $0x19] sm:$0xf] %vm104, %v85
  %109 = vst.msk [vmem:[%s103 + $0x31] sm:$0xf] %vm104, %v86
  %110 = vst.msk [vmem:[%s103 + $0x39] sm:$0xf] %vm104, %v87
  %111 = vst.msk [vmem:[%s103 + $0x41] sm:$0xf] %vm104, %v88
  %112 = vst.msk [vmem:[%s103 + $0x49] sm:$0xf] %vm104, %v89
  %v113 = vld [vmem:[%s1] sm:$0xff]
  %v114 = vld [vmem:[%s1 + $0x8] sm:$0xff]
  %v115 = vld [vmem:[%s1 + $0x10] sm:$0xff]
  %v116 = vld [vmem:[%s1 + $0x18] sm:$0xff]
  %v117 = vld [vmem:[%s1 + $0x20] sm:$0xff]
  %v118 = vld [vmem:[%s1 + $0x28] sm:$0xff]
  %v119 = vld [vmem:[%s1 + $0x30] sm:$0xff]
  %v120 = vld [vmem:[%s1 + $0x38] sm:$0xff]
  %v121 = vld [vmem:[%s1 + $0x40] sm:$0xff]
  %v122 = vld [vmem:[#allocation2] sm:$0xf]
  %v123 = vld [vmem:[#allocation2 + $0x8] sm:$0xf]
  %v124 = vld [vmem:[#allocation2 + $0x10] sm:$0xf]
  %v125 = vld [vmem:[#allocation2 + $0x18] sm:$0xf]
  %v126 = vld [vmem:[#allocation2 + $0x30] sm:$0xf]
  %v127 = vld [vmem:[#allocation2 + $0x38] sm:$0xf]
  %v128 = vld [vmem:[#allocation2 + $0x40] sm:$0xf]
  %v129 = vld [vmem:[#allocation2 + $0x48] sm:$0xf]
  %v130 = vld [vmem:[#allocation2 + $0x1] sm:$0xf]
  %v131 = vld [vmem:[#allocation2 + $0x9] sm:$0xf]
  %v132 = vld [vmem:[#allocation2 + $0x11] sm:$0xf]
  %v133 = vld [vmem:[#allocation2 + $0x19] sm:$0xf]
  %v134 = vld [vmem:[#allocation2 + $0x31] sm:$0xf]
  %v135 = vld [vmem:[#allocation2 + $0x39] sm:$0xf]
  %v136 = vld [vmem:[#allocation2 + $0x41] sm:$0xf]
  %v137 = vld [vmem:[#allocation2 + $0x49] sm:$0xf]
  %v146 = vcombine.low %v130, %v131
  %v147 = vcombine.low %v132, %v133
  %v148 = vcombine.low %v134, %v135
  %v149 = vcombine.low %v136, %v137
  %vm150 = vcmask 64512
  %v151 = vsel %vm150, %v146, 0
  %v153 = vsel %vm150, %v147, 0
  %v155 = vsel %vm150, %v148, 0
  %v157 = vsel %vm150, %v149, 0
  %159 = vmatprep.subr.mxu0 0.0
  %160 = vmatpush1.msra.mxu0 0.0
  %161 = vmatprep.subr.mxu0 0.0
  %162 = vmatpush1.msra.mxu0 0.0
  %163 = vmatprep.subr.mxu0 0.0
  %164 = vmatpush1.msra.mxu0 0.0
  %165 = vmatprep.subr.mxu0 0.0
  %166 = vmatpush1.msra.mxu0 0.0
  %167 = vmatprep.subr.mxu0 0.0
  %168 = vmatpush1.msra.mxu0 0.0
  %169 = vmatprep.subr.mxu0 0.0
  %170 = vmatpush1.msra.mxu0 0.0
  %171 = vmatprep.subr.mxu0 0.0
  %172 = vmatpush1.msra.mxu0 0.0
  %173 = vmatprep.subr.mxu0 0.0
  %174 = vmatpush1.msra.mxu0 0.0
  %175 = vmatprep.subr.mxu0 0.0
  %176 = vmatpush1.msra.mxu0 0.0
  %177 = vmatprep.subr.mxu0 0.0
  %178 = vmatpush1.msra.mxu0 0.0
  %179 = vmatprep.subr.mxu0 0.0
  %180 = vmatpush1.msra.mxu0 0.0
  %181 = vmatprep.subr.mxu0 0.0
  %182 = vmatpush1.msra.mxu0 0.0
  %183 = vmatprep.subr.mxu0 0.0
  %184 = vmatpush1.msra.mxu0 0.0
  %185 = vmatprep.subr.mxu0 0.0
  %186 = vmatpush1.msra.mxu0 0.0
  %187 = vmatprep.subr.mxu0 0.0
  %188 = vmatpush1.msra.mxu0 0.0
  %189 = vmatprep.subr.mxu0 0.0
  %190 = vmatpush1.msra.mxu0 %v114
  %191 = vmatprep.subr.mxu0 0.0
  %192 = vmatpush2.msra.mxu0 0.0
  %193 = vmatprep.subr.mxu0 0.0
  %194 = vmatpush2.msra.mxu0 0.0
  %195 = vmatprep.subr.mxu0 0.0
  %196 = vmatpush2.msra.mxu0 0.0
  %197 = vmatprep.subr.mxu0 0.0
  %198 = vmatpush2.msra.mxu0 0.0
  %199 = vmatprep.subr.mxu0 0.0
  %200 = vmatpush2.msra.mxu0 0.0
  %201 = vmatprep.subr.mxu0 0.0
  %202 = vmatpush2.msra.mxu0 0.0
  %203 = vmatprep.subr.mxu0 0.0
  %204 = vmatpush2.msra.mxu0 0.0
  %205 = vmatprep.subr.mxu0 0.0
  %206 = vmatpush2.msra.mxu0 0.0
  %207 = vmatprep.subr.mxu0 0.0
  %208 = vmatpush2.msra.mxu0 0.0
  %209 = vmatprep.subr.mxu0 0.0
  %210 = vmatpush2.msra.mxu0 0.0
  %211 = vmatprep.subr.mxu0 0.0
  %212 = vmatpush2.msra.mxu0 0.0
  %213 = vmatprep.subr.mxu0 0.0
  %214 = vmatpush2.msra.mxu0 0.0
  %215 = vmatprep.subr.mxu0 0.0
  %216 = vmatpush2.msra.mxu0 0.0
  %217 = vmatprep.subr.mxu0 0.0
  %218 = vmatpush2.msra.mxu0 0.0
  %219 = vmatprep.subr.mxu0 0.0
  %220 = vmatpush2.msra.mxu0 0.0
  %221 = vmatprep.subr.mxu0 0.0
  %222 = vmatpush2.msra.mxu0 0.0
  %223 = vmatprep.mubr.f32.mxu0 0.0
  %224 = vmatmul.mubr.f32.gmra.mxu0 %v151
  %v225 = vpop.f32.mrf.mxu0
  %v226 = vadd.f32 0.0, %v225
  %v227 = vpop.f32.mrf.mxu0
  %228 = vmatprep.mubr.f32.mxu0 0.0
  %229 = vmatmul.mubr.f32.gmra.mxu0 %v153
  %v230 = vpop.f32.mrf.mxu0
  %v231 = vadd.f32 0.0, %v230
  %v232 = vpop.f32.mrf.mxu0
  %233 = vmatprep.mubr.f32.mxu0 0.0
  %234 = vmatmul.mubr.f32.gmra.mxu0 %v155
  %v235 = vpop.f32.mrf.mxu0
  %v236 = vadd.f32 0.0, %v235
  %v237 = vpop.f32.mrf.mxu0
  %238 = vmatprep.mubr.f32.mxu0 0.0
  %239 = vmatmul.mubr.f32.gmra.mxu0 %v157
  %v240 = vpop.f32.mrf.mxu0
  %v241 = vadd.f32 0.0, %v240
  %v242 = vpop.f32.mrf.mxu0
  %243 = vdwg.mxu0
  %v252 = vcombine.low %v122, %v123
  %v253 = vcombine.low %v124, %v125
  %v254 = vcombine.low %v126, %v127
  %v255 = vcombine.low %v128, %v129
  %v256 = vsel %vm150, %v252, 0
  %v258 = vsel %vm150, %v253, 0
  %v260 = vsel %vm150, %v254, 0
  %v262 = vsel %vm150, %v255, 0
  %264 = vmatprep.subr.mxu0 0.0
  %265 = vmatpush1.msra.mxu0 0.0
  %266 = vmatprep.subr.mxu0 0.0
  %267 = vmatpush1.msra.mxu0 0.0
  %268 = vmatprep.subr.mxu0 0.0
  %269 = vmatpush1.msra.mxu0 0.0
  %270 = vmatprep.subr.mxu0 0.0
  %271 = vmatpush1.msra.mxu0 0.0
  %272 = vmatprep.subr.mxu0 0.0
  %273 = vmatpush1.msra.mxu0 0.0
  %274 = vmatprep.subr.mxu0 0.0
  %275 = vmatpush1.msra.mxu0 0.0
  %276 = vmatprep.subr.mxu0 0.0
  %277 = vmatpush1.msra.mxu0 0.0
  %278 = vmatprep.subr.mxu0 0.0
  %279 = vmatpush1.msra.mxu0 0.0
  %280 = vmatprep.subr.mxu0 0.0
  %281 = vmatpush1.msra.mxu0 0.0
  %282 = vmatprep.subr.mxu0 0.0
  %283 = vmatpush1.msra.mxu0 0.0
  %284 = vmatprep.subr.mxu0 0.0
  %285 = vmatpush1.msra.mxu0 0.0
  %286 = vmatprep.subr.mxu0 0.0
  %287 = vmatpush1.msra.mxu0 0.0
  %288 = vmatprep.subr.mxu0 0.0
  %289 = vmatpush1.msra.mxu0 0.0
  %290 = vmatprep.subr.mxu0 0.0
  %291 = vmatpush1.msra.mxu0 0.0
  %292 = vmatprep.subr.mxu0 0.0
  %293 = vmatpush1.msra.mxu0 0.0
  %294 = vmatprep.subr.mxu0 0.0
  %295 = vmatpush1.msra.mxu0 %v113
  %296 = vmatprep.subr.mxu0 0.0
  %297 = vmatpush2.msra.mxu0 0.0
  %298 = vmatprep.subr.mxu0 0.0
  %299 = vmatpush2.msra.mxu0 0.0
  %300 = vmatprep.subr.mxu0 0.0
  %301 = vmatpush2.msra.mxu0 0.0
  %302 = vmatprep.subr.mxu0 0.0
  %303 = vmatpush2.msra.mxu0 0.0
  %304 = vmatprep.subr.mxu0 0.0
  %305 = vmatpush2.msra.mxu0 0.0
  %306 = vmatprep.subr.mxu0 0.0
  %307 = vmatpush2.msra.mxu0 0.0
  %308 = vmatprep.subr.mxu0 0.0
  %309 = vmatpush2.msra.mxu0 0.0
  %310 = vmatprep.subr.mxu0 0.0
  %311 = vmatpush2.msra.mxu0 0.0
  %312 = vmatprep.subr.mxu0 0.0
  %313 = vmatpush2.msra.mxu0 0.0
  %314 = vmatprep.subr.mxu0 0.0
  %315 = vmatpush2.msra.mxu0 0.0
  %316 = vmatprep.subr.mxu0 0.0
  %317 = vmatpush2.msra.mxu0 0.0
  %318 = vmatprep.subr.mxu0 0.0
  %319 = vmatpush2.msra.mxu0 0.0
  %320 = vmatprep.subr.mxu0 0.0
  %321 = vmatpush2.msra.mxu0 0.0
  %322 = vmatprep.subr.mxu0 0.0
  %323 = vmatpush2.msra.mxu0 0.0
  %324 = vmatprep.subr.mxu0 0.0
  %325 = vmatpush2.msra.mxu0 0.0
  %326 = vmatprep.subr.mxu0 0.0
  %327 = vmatpush2.msra.mxu0 0.0
  %328 = vmatprep.mubr.f32.mxu0 0.0
  %329 = vmatmul.mubr.f32.gmra.mxu0 %v256
  %v330 = vpop.f32.mrf.mxu0
  %v331 = vadd.f32 %v226, %v330
  %v332 = vpop.f32.mrf.mxu0
  %333 = vmatprep.mubr.f32.mxu0 0.0
  %334 = vmatmul.mubr.f32.gmra.mxu0 %v258
  %v335 = vpop.f32.mrf.mxu0
  %v336 = vadd.f32 %v231, %v335
  %v337 = vpop.f32.mrf.mxu0
  %338 = vmatprep.mubr.f32.mxu0 0.0
  %339 = vmatmul.mubr.f32.gmra.mxu0 %v260
  %v340 = vpop.f32.mrf.mxu0
  %v341 = vadd.f32 %v236, %v340
  %v342 = vpop.f32.mrf.mxu0
  %343 = vmatprep.mubr.f32.mxu0 0.0
  %344 = vmatmul.mubr.f32.gmra.mxu0 %v262
  %v345 = vpop.f32.mrf.mxu0
  %v346 = vadd.f32 %v241, %v345
  %v347 = vpop.f32.mrf.mxu0
  %348 = vdwg.mxu0
  %v349 = vld [vmem:[#allocation2 + $0x2] sm:$0xf]
  %v350 = vld [vmem:[#allocation2 + $0xa] sm:$0xf]
  %v351 = vld [vmem:[#allocation2 + $0x12] sm:$0xf]
  %v352 = vld [vmem:[#allocation2 + $0x1a] sm:$0xf]
  %v353 = vld [vmem:[#allocation2 + $0x32] sm:$0xf]
  %v354 = vld [vmem:[#allocation2 + $0x3a] sm:$0xf]
  %v355 = vld [vmem:[#allocation2 + $0x42] sm:$0xf]
  %v356 = vld [vmem:[#allocation2 + $0x4a] sm:$0xf]
  %v365 = vcombine.low %v349, %v350
  %v366 = vcombine.low %v351, %v352
  %v367 = vcombine.low %v353, %v354
  %v368 = vcombine.low %v355, %v356
  %v369 = vsel %vm150, %v365, 0
  %v371 = vsel %vm150, %v366, 0
  %v373 = vsel %vm150, %v367, 0
  %v375 = vsel %vm150, %v368, 0
  %377 = vmatprep.subr.mxu0 0.0
  %378 = vmatpush1.msra.mxu0 0.0
  %379 = vmatprep.subr.mxu0 0.0
  %380 = vmatpush1.msra.mxu0 0.0
  %381 = vmatprep.subr.mxu0 0.0
  %382 = vmatpush1.msra.mxu0 0.0
  %383 = vmatprep.subr.mxu0 0.0
  %384 = vmatpush1.msra.mxu0 0.0
  %385 = vmatprep.subr.mxu0 0.0
  %386 = vmatpush1.msra.mxu0 0.0
  %387 = vmatprep.subr.mxu0 0.0
  %388 = vmatpush1.msra.mxu0 0.0
  %389 = vmatprep.subr.mxu0 0.0
  %390 = vmatpush1.msra.mxu0 0.0
  %391 = vmatprep.subr.mxu0 0.0
  %392 = vmatpush1.msra.mxu0 0.0
  %393 = vmatprep.subr.mxu0 0.0
  %394 = vmatpush1.msra.mxu0 0.0
  %395 = vmatprep.subr.mxu0 0.0
  %396 = vmatpush1.msra.mxu0 0.0
  %397 = vmatprep.subr.mxu0 0.0
  %398 = vmatpush1.msra.mxu0 0.0
  %399 = vmatprep.subr.mxu0 0.0
  %400 = vmatpush1.msra.mxu0 0.0
  %401 = vmatprep.subr.mxu0 0.0
  %402 = vmatpush1.msra.mxu0 0.0
  %403 = vmatprep.subr.mxu0 0.0
  %404 = vmatpush1.msra.mxu0 0.0
  %405 = vmatprep.subr.mxu0 0.0
  %406 = vmatpush1.msra.mxu0 0.0
  %407 = vmatprep.subr.mxu0 0.0
  %408 = vmatpush1.msra.mxu0 %v115
  %409 = vmatprep.subr.mxu0 0.0
  %410 = vmatpush2.msra.mxu0 0.0
  %411 = vmatprep.subr.mxu0 0.0
  %412 = vmatpush2.msra.mxu0 0.0
  %413 = vmatprep.subr.mxu0 0.0
  %414 = vmatpush2.msra.mxu0 0.0
  %415 = vmatprep.subr.mxu0 0.0
  %416 = vmatpush2.msra.mxu0 0.0
  %417 = vmatprep.subr.mxu0 0.0
  %418 = vmatpush2.msra.mxu0 0.0
  %419 = vmatprep.subr.mxu0 0.0
  %420 = vmatpush2.msra.mxu0 0.0
  %421 = vmatprep.subr.mxu0 0.0
  %422 = vmatpush2.msra.mxu0 0.0
  %423 = vmatprep.subr.mxu0 0.0
  %424 = vmatpush2.msra.mxu0 0.0
  %425 = vmatprep.subr.mxu0 0.0
  %426 = vmatpush2.msra.mxu0 0.0
  %427 = vmatprep.subr.mxu0 0.0
  %428 = vmatpush2.msra.mxu0 0.0
  %429 = vmatprep.subr.mxu0 0.0
  %430 = vmatpush2.msra.mxu0 0.0
  %431 = vmatprep.subr.mxu0 0.0
  %432 = vmatpush2.msra.mxu0 0.0
  %433 = vmatprep.subr.mxu0 0.0
  %434 = vmatpush2.msra.mxu0 0.0
  %435 = vmatprep.subr.mxu0 0.0
  %436 = vmatpush2.msra.mxu0 0.0
  %437 = vmatprep.subr.mxu0 0.0
  %438 = vmatpush2.msra.mxu0 0.0
  %439 = vmatprep.subr.mxu0 0.0
  %440 = vmatpush2.msra.mxu0 0.0
  %441 = vmatprep.mubr.f32.mxu0 0.0
  %442 = vmatmul.mubr.f32.gmra.mxu0 %v369
  %v443 = vpop.f32.mrf.mxu0
  %v444 = vadd.f32 0.0, %v443
  %v445 = vpop.f32.mrf.mxu0
  %446 = vmatprep.mubr.f32.mxu0 0.0
  %447 = vmatmul.mubr.f32.gmra.mxu0 %v371
  %v448 = vpop.f32.mrf.mxu0
  %v449 = vadd.f32 0.0, %v448
  %v450 = vpop.f32.mrf.mxu0
  %451 = vmatprep.mubr.f32.mxu0 0.0
  %452 = vmatmul.mubr.f32.gmra.mxu0 %v373
  %v453 = vpop.f32.mrf.mxu0
  %v454 = vadd.f32 0.0, %v453
  %v455 = vpop.f32.mrf.mxu0
  %456 = vmatprep.mubr.f32.mxu0 0.0
  %457 = vmatmul.mubr.f32.gmra.mxu0 %v375
  %v458 = vpop.f32.mrf.mxu0
  %v459 = vadd.f32 0.0, %v458
  %v460 = vpop.f32.mrf.mxu0
  %461 = vdwg.mxu0
  %v462 = vadd.f32 %v331, %v444
  %v463 = vadd.f32 %v336, %v449
  %v464 = vadd.f32 %v341, %v454
  %v465 = vadd.f32 %v346, %v459
  %v466 = vld [vmem:[%s103] sm:$0xf]
  %v467 = vld [vmem:[%s103 + $0x8] sm:$0xf]
  %v468 = vld [vmem:[%s103 + $0x10] sm:$0xf]
  %v469 = vld [vmem:[%s103 + $0x18] sm:$0xf]
  %v470 = vld [vmem:[%s103 + $0x30] sm:$0xf]
  %v471 = vld [vmem:[%s103 + $0x38] sm:$0xf]
  %v472 = vld [vmem:[%s103 + $0x40] sm:$0xf]
  %v473 = vld [vmem:[%s103 + $0x48] sm:$0xf]
  %v482 = vcombine.low %v466, %v467
  %v483 = vcombine.low %v468, %v469
  %v484 = vcombine.low %v470, %v471
  %v485 = vcombine.low %v472, %v473
  %v486 = vsel %vm150, %v482, 0
  %v488 = vsel %vm150, %v483, 0
  %v490 = vsel %vm150, %v484, 0
  %v492 = vsel %vm150, %v485, 0
  %494 = vmatprep.subr.mxu0 0.0
  %495 = vmatpush1.msra.mxu0 0.0
  %496 = vmatprep.subr.mxu0 0.0
  %497 = vmatpush1.msra.mxu0 0.0
  %498 = vmatprep.subr.mxu0 0.0
  %499 = vmatpush1.msra.mxu0 0.0
  %500 = vmatprep.subr.mxu0 0.0
  %501 = vmatpush1.msra.mxu0 0.0
  %502 = vmatprep.subr.mxu0 0.0
  %503 = vmatpush1.msra.mxu0 0.0
  %504 = vmatprep.subr.mxu0 0.0
  %505 = vmatpush1.msra.mxu0 0.0
  %506 = vmatprep.subr.mxu0 0.0
  %507 = vmatpush1.msra.mxu0 0.0
  %508 = vmatprep.subr.mxu0 0.0
  %509 = vmatpush1.msra.mxu0 0.0
  %510 = vmatprep.subr.mxu0 0.0
  %511 = vmatpush1.msra.mxu0 0.0
  %512 = vmatprep.subr.mxu0 0.0
  %513 = vmatpush1.msra.mxu0 0.0
  %514 = vmatprep.subr.mxu0 0.0
  %515 = vmatpush1.msra.mxu0 0.0
  %516 = vmatprep.subr.mxu0 0.0
  %517 = vmatpush1.msra.mxu0 0.0
  %518 = vmatprep.subr.mxu0 0.0
  %519 = vmatpush1.msra.mxu0 0.0
  %520 = vmatprep.subr.mxu0 0.0
  %521 = vmatpush1.msra.mxu0 0.0
  %522 = vmatprep.subr.mxu0 0.0
  %523 = vmatpush1.msra.mxu0 0.0
  %524 = vmatprep.subr.mxu0 0.0
  %525 = vmatpush1.msra.mxu0 %v116
  %526 = vmatprep.subr.mxu0 0.0
  %527 = vmatpush2.msra.mxu0 0.0
  %528 = vmatprep.subr.mxu0 0.0
  %529 = vmatpush2.msra.mxu0 0.0
  %530 = vmatprep.subr.mxu0 0.0
  %531 = vmatpush2.msra.mxu0 0.0
  %532 = vmatprep.subr.mxu0 0.0
  %533 = vmatpush2.msra.mxu0 0.0
  %534 = vmatprep.subr.mxu0 0.0
  %535 = vmatpush2.msra.mxu0 0.0
  %536 = vmatprep.subr.mxu0 0.0
  %537 = vmatpush2.msra.mxu0 0.0
  %538 = vmatprep.subr.mxu0 0.0
  %539 = vmatpush2.msra.mxu0 0.0
  %540 = vmatprep.subr.mxu0 0.0
  %541 = vmatpush2.msra.mxu0 0.0
  %542 = vmatprep.subr.mxu0 0.0
  %543 = vmatpush2.msra.mxu0 0.0
  %544 = vmatprep.subr.mxu0 0.0
  %545 = vmatpush2.msra.mxu0 0.0
  %546 = vmatprep.subr.mxu0 0.0
  %547 = vmatpush2.msra.mxu0 0.0
  %548 = vmatprep.subr.mxu0 0.0
  %549 = vmatpush2.msra.mxu0 0.0
  %550 = vmatprep.subr.mxu0 0.0
  %551 = vmatpush2.msra.mxu0 0.0
  %552 = vmatprep.subr.mxu0 0.0
  %553 = vmatpush2.msra.mxu0 0.0
  %554 = vmatprep.subr.mxu0 0.0
  %555 = vmatpush2.msra.mxu0 0.0
  %556 = vmatprep.subr.mxu0 0.0
  %557 = vmatpush2.msra.mxu0 0.0
  %558 = vmatprep.mubr.f32.mxu0 0.0
  %559 = vmatmul.mubr.f32.gmra.mxu0 %v486
  %v560 = vpop.f32.mrf.mxu0
  %v561 = vadd.f32 0.0, %v560
  %v562 = vpop.f32.mrf.mxu0
  %563 = vmatprep.mubr.f32.mxu0 0.0
  %564 = vmatmul.mubr.f32.gmra.mxu0 %v488
  %v565 = vpop.f32.mrf.mxu0
  %v566 = vadd.f32 0.0, %v565
  %v567 = vpop.f32.mrf.mxu0
  %568 = vmatprep.mubr.f32.mxu0 0.0
  %569 = vmatmul.mubr.f32.gmra.mxu0 %v490
  %v570 = vpop.f32.mrf.mxu0
  %v571 = vadd.f32 0.0, %v570
  %v572 = vpop.f32.mrf.mxu0
  %573 = vmatprep.mubr.f32.mxu0 0.0
  %574 = vmatmul.mubr.f32.gmra.mxu0 %v492
  %v575 = vpop.f32.mrf.mxu0
  %v576 = vadd.f32 0.0, %v575
  %v577 = vpop.f32.mrf.mxu0
  %578 = vdwg.mxu0
  %v579 = vadd.f32 %v462, %v561
  %v580 = vadd.f32 %v463, %v566
  %v581 = vadd.f32 %v464, %v571
  %v582 = vadd.f32 %v465, %v576
  %v583 = vld [vmem:[%s103 + $0x1] sm:$0xf]
  %v584 = vld [vmem:[%s103 + $0x9] sm:$0xf]
  %v585 = vld [vmem:[%s103 + $0x11] sm:$0xf]
  %v586 = vld [vmem:[%s103 + $0x19] sm:$0xf]
  %v587 = vld [vmem:[%s103 + $0x31] sm:$0xf]
  %v588 = vld [vmem:[%s103 + $0x39] sm:$0xf]
  %v589 = vld [vmem:[%s103 + $0x41] sm:$0xf]
  %v590 = vld [vmem:[%s103 + $0x49] sm:$0xf]
  %v599 = vcombine.low %v583, %v584
  %v600 = vcombine.low %v585, %v586
  %v601 = vcombine.low %v587, %v588
  %v602 = vcombine.low %v589, %v590
  %v603 = vsel %vm150, %v599, 0
  %v605 = vsel %vm150, %v600, 0
  %v607 = vsel %vm150, %v601, 0
  %v609 = vsel %vm150, %v602, 0
  %611 = vmatprep.subr.mxu0 0.0
  %612 = vmatpush1.msra.mxu0 0.0
  %613 = vmatprep.subr.mxu0 0.0
  %614 = vmatpush1.msra.mxu0 0.0
  %615 = vmatprep.subr.mxu0 0.0
  %616 = vmatpush1.msra.mxu0 0.0
  %617 = vmatprep.subr.mxu0 0.0
  %618 = vmatpush1.msra.mxu0 0.0
  %619 = vmatprep.subr.mxu0 0.0
  %620 = vmatpush1.msra.mxu0 0.0
  %621 = vmatprep.subr.mxu0 0.0
  %622 = vmatpush1.msra.mxu0 0.0
  %623 = vmatprep.subr.mxu0 0.0
  %624 = vmatpush1.msra.mxu0 0.0
  %625 = vmatprep.subr.mxu0 0.0
  %626 = vmatpush1.msra.mxu0 0.0
  %627 = vmatprep.subr.mxu0 0.0
  %628 = vmatpush1.msra.mxu0 0.0
  %629 = vmatprep.subr.mxu0 0.0
  %630 = vmatpush1.msra.mxu0 0.0
  %631 = vmatprep.subr.mxu0 0.0
  %632 = vmatpush1.msra.mxu0 0.0
  %633 = vmatprep.subr.mxu0 0.0
  %634 = vmatpush1.msra.mxu0 0.0
  %635 = vmatprep.subr.mxu0 0.0
  %636 = vmatpush1.msra.mxu0 0.0
  %637 = vmatprep.subr.mxu0 0.0
  %638 = vmatpush1.msra.mxu0 0.0
  %639 = vmatprep.subr.mxu0 0.0
  %640 = vmatpush1.msra.mxu0 0.0
  %641 = vmatprep.subr.mxu0 0.0
  %642 = vmatpush1.msra.mxu0 %v117
  %643 = vmatprep.subr.mxu0 0.0
  %644 = vmatpush2.msra.mxu0 0.0
  %645 = vmatprep.subr.mxu0 0.0
  %646 = vmatpush2.msra.mxu0 0.0
  %647 = vmatprep.subr.mxu0 0.0
  %648 = vmatpush2.msra.mxu0 0.0
  %649 = vmatprep.subr.mxu0 0.0
  %650 = vmatpush2.msra.mxu0 0.0
  %651 = vmatprep.subr.mxu0 0.0
  %652 = vmatpush2.msra.mxu0 0.0
  %653 = vmatprep.subr.mxu0 0.0
  %654 = vmatpush2.msra.mxu0 0.0
  %655 = vmatprep.subr.mxu0 0.0
  %656 = vmatpush2.msra.mxu0 0.0
  %657 = vmatprep.subr.mxu0 0.0
  %658 = vmatpush2.msra.mxu0 0.0
  %659 = vmatprep.subr.mxu0 0.0
  %660 = vmatpush2.msra.mxu0 0.0
  %661 = vmatprep.subr.mxu0 0.0
  %662 = vmatpush2.msra.mxu0 0.0
  %663 = vmatprep.subr.mxu0 0.0
  %664 = vmatpush2.msra.mxu0 0.0
  %665 = vmatprep.subr.mxu0 0.0
  %666 = vmatpush2.msra.mxu0 0.0
  %667 = vmatprep.subr.mxu0 0.0
  %668 = vmatpush2.msra.mxu0 0.0
  %669 = vmatprep.subr.mxu0 0.0
  %670 = vmatpush2.msra.mxu0 0.0
  %671 = vmatprep.subr.mxu0 0.0
  %672 = vmatpush2.msra.mxu0 0.0
  %673 = vmatprep.subr.mxu0 0.0
  %674 = vmatpush2.msra.mxu0 0.0
  %675 = vmatprep.mubr.f32.mxu0 0.0
  %676 = vmatmul.mubr.f32.gmra.mxu0 %v603
  %v677 = vpop.f32.mrf.mxu0
  %v678 = vadd.f32 0.0, %v677
  %v679 = vpop.f32.mrf.mxu0
  %680 = vmatprep.mubr.f32.mxu0 0.0
  %681 = vmatmul.mubr.f32.gmra.mxu0 %v605
  %v682 = vpop.f32.mrf.mxu0
  %v683 = vadd.f32 0.0, %v682
  %v684 = vpop.f32.mrf.mxu0
  %685 = vmatprep.mubr.f32.mxu0 0.0
  %686 = vmatmul.mubr.f32.gmra.mxu0 %v607
  %v687 = vpop.f32.mrf.mxu0
  %v688 = vadd.f32 0.0, %v687
  %v689 = vpop.f32.mrf.mxu0
  %690 = vmatprep.mubr.f32.mxu0 0.0
  %691 = vmatmul.mubr.f32.gmra.mxu0 %v609
  %v692 = vpop.f32.mrf.mxu0
  %v693 = vadd.f32 0.0, %v692
  %v694 = vpop.f32.mrf.mxu0
  %695 = vdwg.mxu0
  %v696 = vadd.f32 %v579, %v678
  %v697 = vadd.f32 %v580, %v683
  %v698 = vadd.f32 %v581, %v688
  %v699 = vadd.f32 %v582, %v693
  %v700 = vld [vmem:[%s103 + $0x2] sm:$0xf]
  %v701 = vld [vmem:[%s103 + $0xa] sm:$0xf]
  %v702 = vld [vmem:[%s103 + $0x12] sm:$0xf]
  %v703 = vld [vmem:[%s103 + $0x1a] sm:$0xf]
  %v704 = vld [vmem:[%s103 + $0x32] sm:$0xf]
  %v705 = vld [vmem:[%s103 + $0x3a] sm:$0xf]
  %v706 = vld [vmem:[%s103 + $0x42] sm:$0xf]
  %v707 = vld [vmem:[%s103 + $0x4a] sm:$0xf]
  %v716 = vcombine.low %v700, %v701
  %v717 = vcombine.low %v702, %v703
  %v718 = vcombine.low %v704, %v705
  %v719 = vcombine.low %v706, %v707
  %v720 = vsel %vm150, %v716, 0
  %v722 = vsel %vm150, %v717, 0
  %v724 = vsel %vm150, %v718, 0
  %v726 = vsel %vm150, %v719, 0
  %728 = vmatprep.subr.mxu0 0.0
  %729 = vmatpush1.msra.mxu0 0.0
  %730 = vmatprep.subr.mxu0 0.0
  %731 = vmatpush1.msra.mxu0 0.0
  %732 = vmatprep.subr.mxu0 0.0
  %733 = vmatpush1.msra.mxu0 0.0
  %734 = vmatprep.subr.mxu0 0.0
  %735 = vmatpush1.msra.mxu0 0.0
  %736 = vmatprep.subr.mxu0 0.0
  %737 = vmatpush1.msra.mxu0 0.0
  %738 = vmatprep.subr.mxu0 0.0
  %739 = vmatpush1.msra.mxu0 0.0
  %740 = vmatprep.subr.mxu0 0.0
  %741 = vmatpush1.msra.mxu0 0.0
  %742 = vmatprep.subr.mxu0 0.0
  %743 = vmatpush1.msra.mxu0 0.0
  %744 = vmatprep.subr.mxu0 0.0
  %745 = vmatpush1.msra.mxu0 0.0
  %746 = vmatprep.subr.mxu0 0.0
  %747 = vmatpush1.msra.mxu0 0.0
  %748 = vmatprep.subr.mxu0 0.0
  %749 = vmatpush1.msra.mxu0 0.0
  %750 = vmatprep.subr.mxu0 0.0
  %751 = vmatpush1.msra.mxu0 0.0
  %752 = vmatprep.subr.mxu0 0.0
  %753 = vmatpush1.msra.mxu0 0.0
  %754 = vmatprep.subr.mxu0 0.0
  %755 = vmatpush1.msra.mxu0 0.0
  %756 = vmatprep.subr.mxu0 0.0
  %757 = vmatpush1.msra.mxu0 0.0
  %758 = vmatprep.subr.mxu0 0.0
  %759 = vmatpush1.msra.mxu0 %v118
  %760 = vmatprep.subr.mxu0 0.0
  %761 = vmatpush2.msra.mxu0 0.0
  %762 = vmatprep.subr.mxu0 0.0
  %763 = vmatpush2.msra.mxu0 0.0
  %764 = vmatprep.subr.mxu0 0.0
  %765 = vmatpush2.msra.mxu0 0.0
  %766 = vmatprep.subr.mxu0 0.0
  %767 = vmatpush2.msra.mxu0 0.0
  %768 = vmatprep.subr.mxu0 0.0
  %769 = vmatpush2.msra.mxu0 0.0
  %770 = vmatprep.subr.mxu0 0.0
  %771 = vmatpush2.msra.mxu0 0.0
  %772 = vmatprep.subr.mxu0 0.0
  %773 = vmatpush2.msra.mxu0 0.0
  %774 = vmatprep.subr.mxu0 0.0
  %775 = vmatpush2.msra.mxu0 0.0
  %776 = vmatprep.subr.mxu0 0.0
  %777 = vmatpush2.msra.mxu0 0.0
  %778 = vmatprep.subr.mxu0 0.0
  %779 = vmatpush2.msra.mxu0 0.0
  %780 = vmatprep.subr.mxu0 0.0
  %781 = vmatpush2.msra.mxu0 0.0
  %782 = vmatprep.subr.mxu0 0.0
  %783 = vmatpush2.msra.mxu0 0.0
  %784 = vmatprep.subr.mxu0 0.0
  %785 = vmatpush2.msra.mxu0 0.0
  %786 = vmatprep.subr.mxu0 0.0
  %787 = vmatpush2.msra.mxu0 0.0
  %788 = vmatprep.subr.mxu0 0.0
  %789 = vmatpush2.msra.mxu0 0.0
  %790 = vmatprep.subr.mxu0 0.0
  %791 = vmatpush2.msra.mxu0 0.0
  %792 = vmatprep.mubr.f32.mxu0 0.0
  %793 = vmatmul.mubr.f32.gmra.mxu0 %v720
  %v794 = vpop.f32.mrf.mxu0
  %v795 = vadd.f32 0.0, %v794
  %v796 = vpop.f32.mrf.mxu0
  %797 = vmatprep.mubr.f32.mxu0 0.0
  %798 = vmatmul.mubr.f32.gmra.mxu0 %v722
  %v799 = vpop.f32.mrf.mxu0
  %v800 = vadd.f32 0.0, %v799
  %v801 = vpop.f32.mrf.mxu0
  %802 = vmatprep.mubr.f32.mxu0 0.0
  %803 = vmatmul.mubr.f32.gmra.mxu0 %v724
  %v804 = vpop.f32.mrf.mxu0
  %v805 = vadd.f32 0.0, %v804
  %v806 = vpop.f32.mrf.mxu0
  %807 = vmatprep.mubr.f32.mxu0 0.0
  %808 = vmatmul.mubr.f32.gmra.mxu0 %v726
  %v809 = vpop.f32.mrf.mxu0
  %v810 = vadd.f32 0.0, %v809
  %v811 = vpop.f32.mrf.mxu0
  %812 = vdwg.mxu0
  %v813 = vadd.f32 %v696, %v795
  %v814 = vadd.f32 %v697, %v800
  %v815 = vadd.f32 %v698, %v805
  %v816 = vadd.f32 %v699, %v810
  %s817 = scalar_lea.vmem [#allocation2], 16
  %v818 = vld [vmem:[%s817] sm:$0xf]
  %v819 = vld [vmem:[%s817 + $0x8] sm:$0xf]
  %v820 = vld [vmem:[%s817 + $0x10] sm:$0xf]
  %v821 = vld [vmem:[%s817 + $0x18] sm:$0xf]
  %v822 = vld [vmem:[%s817 + $0x30] sm:$0xf]
  %v823 = vld [vmem:[%s817 + $0x38] sm:$0xf]
  %v824 = vld [vmem:[%s817 + $0x40] sm:$0xf]
  %v825 = vld [vmem:[%s817 + $0x48] sm:$0xf]
  %v834 = vcombine.low %v818, %v819
  %v835 = vcombine.low %v820, %v821
  %v836 = vcombine.low %v822, %v823
  %v837 = vcombine.low %v824, %v825
  %v838 = vsel %vm150, %v834, 0
  %v840 = vsel %vm150, %v835, 0
  %v842 = vsel %vm150, %v836, 0
  %v844 = vsel %vm150, %v837, 0
  %846 = vmatprep.subr.mxu0 0.0
  %847 = vmatpush1.msra.mxu0 0.0
  %848 = vmatprep.subr.mxu0 0.0
  %849 = vmatpush1.msra.mxu0 0.0
  %850 = vmatprep.subr.mxu0 0.0
  %851 = vmatpush1.msra.mxu0 0.0
  %852 = vmatprep.subr.mxu0 0.0
  %853 = vmatpush1.msra.mxu0 0.0
  %854 = vmatprep.subr.mxu0 0.0
  %855 = vmatpush1.msra.mxu0 0.0
  %856 = vmatprep.subr.mxu0 0.0
  %857 = vmatpush1.msra.mxu0 0.0
  %858 = vmatprep.subr.mxu0 0.0
  %859 = vmatpush1.msra.mxu0 0.0
  %860 = vmatprep.subr.mxu0 0.0
  %861 = vmatpush1.msra.mxu0 0.0
  %862 = vmatprep.subr.mxu0 0.0
  %863 = vmatpush1.msra.mxu0 0.0
  %864 = vmatprep.subr.mxu0 0.0
  %865 = vmatpush1.msra.mxu0 0.0
  %866 = vmatprep.subr.mxu0 0.0
  %867 = vmatpush1.msra.mxu0 0.0
  %868 = vmatprep.subr.mxu0 0.0
  %869 = vmatpush1.msra.mxu0 0.0
  %870 = vmatprep.subr.mxu0 0.0
  %871 = vmatpush1.msra.mxu0 0.0
  %872 = vmatprep.subr.mxu0 0.0
  %873 = vmatpush1.msra.mxu0 0.0
  %874 = vmatprep.subr.mxu0 0.0
  %875 = vmatpush1.msra.mxu0 0.0
  %876 = vmatprep.subr.mxu0 0.0
  %877 = vmatpush1.msra.mxu0 %v119
  %878 = vmatprep.subr.mxu0 0.0
  %879 = vmatpush2.msra.mxu0 0.0
  %880 = vmatprep.subr.mxu0 0.0
  %881 = vmatpush2.msra.mxu0 0.0
  %882 = vmatprep.subr.mxu0 0.0
  %883 = vmatpush2.msra.mxu0 0.0
  %884 = vmatprep.subr.mxu0 0.0
  %885 = vmatpush2.msra.mxu0 0.0
  %886 = vmatprep.subr.mxu0 0.0
  %887 = vmatpush2.msra.mxu0 0.0
  %888 = vmatprep.subr.mxu0 0.0
  %889 = vmatpush2.msra.mxu0 0.0
  %890 = vmatprep.subr.mxu0 0.0
  %891 = vmatpush2.msra.mxu0 0.0
  %892 = vmatprep.subr.mxu0 0.0
  %893 = vmatpush2.msra.mxu0 0.0
  %894 = vmatprep.subr.mxu0 0.0
  %895 = vmatpush2.msra.mxu0 0.0
  %896 = vmatprep.subr.mxu0 0.0
  %897 = vmatpush2.msra.mxu0 0.0
  %898 = vmatprep.subr.mxu0 0.0
  %899 = vmatpush2.msra.mxu0 0.0
  %900 = vmatprep.subr.mxu0 0.0
  %901 = vmatpush2.msra.mxu0 0.0
  %902 = vmatprep.subr.mxu0 0.0
  %903 = vmatpush2.msra.mxu0 0.0
  %904 = vmatprep.subr.mxu0 0.0
  %905 = vmatpush2.msra.mxu0 0.0
  %906 = vmatprep.subr.mxu0 0.0
  %907 = vmatpush2.msra.mxu0 0.0
  %908 = vmatprep.subr.mxu0 0.0
  %909 = vmatpush2.msra.mxu0 0.0
  %910 = vmatprep.mubr.f32.mxu0 0.0
  %911 = vmatmul.mubr.f32.gmra.mxu0 %v838
  %v912 = vpop.f32.mrf.mxu0
  %v913 = vadd.f32 0.0, %v912
  %v914 = vpop.f32.mrf.mxu0
  %915 = vmatprep.mubr.f32.mxu0 0.0
  %916 = vmatmul.mubr.f32.gmra.mxu0 %v840
  %v917 = vpop.f32.mrf.mxu0
  %v918 = vadd.f32 0.0, %v917
  %v919 = vpop.f32.mrf.mxu0
  %920 = vmatprep.mubr.f32.mxu0 0.0
  %921 = vmatmul.mubr.f32.gmra.mxu0 %v842
  %v922 = vpop.f32.mrf.mxu0
  %v923 = vadd.f32 0.0, %v922
  %v924 = vpop.f32.mrf.mxu0
  %925 = vmatprep.mubr.f32.mxu0 0.0
  %926 = vmatmul.mubr.f32.gmra.mxu0 %v844
  %v927 = vpop.f32.mrf.mxu0
  %v928 = vadd.f32 0.0, %v927
  %v929 = vpop.f32.mrf.mxu0
  %930 = vdwg.mxu0
  %v931 = vadd.f32 %v813, %v913
  %v932 = vadd.f32 %v814, %v918
  %v933 = vadd.f32 %v815, %v923
  %v934 = vadd.f32 %v816, %v928
  %v935 = vld [vmem:[%s817 + $0x1] sm:$0xf]
  %v936 = vld [vmem:[%s817 + $0x9] sm:$0xf]
  %v937 = vld [vmem:[%s817 + $0x11] sm:$0xf]
  %v938 = vld [vmem:[%s817 + $0x19] sm:$0xf]
  %v939 = vld [vmem:[%s817 + $0x31] sm:$0xf]
  %v940 = vld [vmem:[%s817 + $0x39] sm:$0xf]
  %v941 = vld [vmem:[%s817 + $0x41] sm:$0xf]
  %v942 = vld [vmem:[%s817 + $0x49] sm:$0xf]
  %v951 = vcombine.low %v935, %v936
  %v952 = vcombine.low %v937, %v938
  %v953 = vcombine.low %v939, %v940
  %v954 = vcombine.low %v941, %v942
  %v955 = vsel %vm150, %v951, 0
  %v957 = vsel %vm150, %v952, 0
  %v959 = vsel %vm150, %v953, 0
  %v961 = vsel %vm150, %v954, 0
  %963 = vmatprep.subr.mxu0 0.0
  %964 = vmatpush1.msra.mxu0 0.0
  %965 = vmatprep.subr.mxu0 0.0
  %966 = vmatpush1.msra.mxu0 0.0
  %967 = vmatprep.subr.mxu0 0.0
  %968 = vmatpush1.msra.mxu0 0.0
  %969 = vmatprep.subr.mxu0 0.0
  %970 = vmatpush1.msra.mxu0 0.0
  %971 = vmatprep.subr.mxu0 0.0
  %972 = vmatpush1.msra.mxu0 0.0
  %973 = vmatprep.subr.mxu0 0.0
  %974 = vmatpush1.msra.mxu0 0.0
  %975 = vmatprep.subr.mxu0 0.0
  %976 = vmatpush1.msra.mxu0 0.0
  %977 = vmatprep.subr.mxu0 0.0
  %978 = vmatpush1.msra.mxu0 0.0
  %979 = vmatprep.subr.mxu0 0.0
  %980 = vmatpush1.msra.mxu0 0.0
  %981 = vmatprep.subr.mxu0 0.0
  %982 = vmatpush1.msra.mxu0 0.0
  %983 = vmatprep.subr.mxu0 0.0
  %984 = vmatpush1.msra.mxu0 0.0
  %985 = vmatprep.subr.mxu0 0.0
  %986 = vmatpush1.msra.mxu0 0.0
  %987 = vmatprep.subr.mxu0 0.0
  %988 = vmatpush1.msra.mxu0 0.0
  %989 = vmatprep.subr.mxu0 0.0
  %990 = vmatpush1.msra.mxu0 0.0
  %991 = vmatprep.subr.mxu0 0.0
  %992 = vmatpush1.msra.mxu0 0.0
  %993 = vmatprep.subr.mxu0 0.0
  %994 = vmatpush1.msra.mxu0 %v120
  %995 = vmatprep.subr.mxu0 0.0
  %996 = vmatpush2.msra.mxu0 0.0
  %997 = vmatprep.subr.mxu0 0.0
  %998 = vmatpush2.msra.mxu0 0.0
  %999 = vmatprep.subr.mxu0 0.0
  %1000 = vmatpush2.msra.mxu0 0.0
  %1001 = vmatprep.subr.mxu0 0.0
  %1002 = vmatpush2.msra.mxu0 0.0
  %1003 = vmatprep.subr.mxu0 0.0
  %1004 = vmatpush2.msra.mxu0 0.0
  %1005 = vmatprep.subr.mxu0 0.0
  %1006 = vmatpush2.msra.mxu0 0.0
  %1007 = vmatprep.subr.mxu0 0.0
  %1008 = vmatpush2.msra.mxu0 0.0
  %1009 = vmatprep.subr.mxu0 0.0
  %1010 = vmatpush2.msra.mxu0 0.0
  %1011 = vmatprep.subr.mxu0 0.0
  %1012 = vmatpush2.msra.mxu0 0.0
  %1013 = vmatprep.subr.mxu0 0.0
  %1014 = vmatpush2.msra.mxu0 0.0
  %1015 = vmatprep.subr.mxu0 0.0
  %1016 = vmatpush2.msra.mxu0 0.0
  %1017 = vmatprep.subr.mxu0 0.0
  %1018 = vmatpush2.msra.mxu0 0.0
  %1019 = vmatprep.subr.mxu0 0.0
  %1020 = vmatpush2.msra.mxu0 0.0
  %1021 = vmatprep.subr.mxu0 0.0
  %1022 = vmatpush2.msra.mxu0 0.0
  %1023 = vmatprep.subr.mxu0 0.0
  %1024 = vmatpush2.msra.mxu0 0.0
  %1025 = vmatprep.subr.mxu0 0.0
  %1026 = vmatpush2.msra.mxu0 0.0
  %1027 = vmatprep.mubr.f32.mxu0 0.0
  %1028 = vmatmul.mubr.f32.gmra.mxu0 %v955
  %v1029 = vpop.f32.mrf.mxu0
  %v1030 = vadd.f32 0.0, %v1029
  %v1031 = vpop.f32.mrf.mxu0
  %1032 = vmatprep.mubr.f32.mxu0 0.0
  %1033 = vmatmul.mubr.f32.gmra.mxu0 %v957
  %v1034 = vpop.f32.mrf.mxu0
  %v1035 = vadd.f32 0.0, %v1034
  %v1036 = vpop.f32.mrf.mxu0
  %1037 = vmatprep.mubr.f32.mxu0 0.0
  %1038 = vmatmul.mubr.f32.gmra.mxu0 %v959
  %v1039 = vpop.f32.mrf.mxu0
  %v1040 = vadd.f32 0.0, %v1039
  %v1041 = vpop.f32.mrf.mxu0
  %1042 = vmatprep.mubr.f32.mxu0 0.0
  %1043 = vmatmul.mubr.f32.gmra.mxu0 %v961
  %v1044 = vpop.f32.mrf.mxu0
  %v1045 = vadd.f32 0.0, %v1044
  %v1046 = vpop.f32.mrf.mxu0
  %1047 = vdwg.mxu0
  %v1048 = vadd.f32 %v931, %v1030
  %v1049 = vadd.f32 %v932, %v1035
  %v1050 = vadd.f32 %v933, %v1040
  %v1051 = vadd.f32 %v934, %v1045
  %v1052 = vld [vmem:[%s817 + $0x2] sm:$0xf]
  %v1053 = vld [vmem:[%s817 + $0xa] sm:$0xf]
  %v1054 = vld [vmem:[%s817 + $0x12] sm:$0xf]
  %v1055 = vld [vmem:[%s817 + $0x1a] sm:$0xf]
  %v1056 = vld [vmem:[%s817 + $0x32] sm:$0xf]
  %v1057 = vld [vmem:[%s817 + $0x3a] sm:$0xf]
  %v1058 = vld [vmem:[%s817 + $0x42] sm:$0xf]
  %v1059 = vld [vmem:[%s817 + $0x4a] sm:$0xf]
  %v1068 = vcombine.low %v1052, %v1053
  %v1069 = vcombine.low %v1054, %v1055
  %v1070 = vcombine.low %v1056, %v1057
  %v1071 = vcombine.low %v1058, %v1059
  %v1072 = vsel %vm150, %v1068, 0
  %v1074 = vsel %vm150, %v1069, 0
  %v1076 = vsel %vm150, %v1070, 0
  %v1078 = vsel %vm150, %v1071, 0
  %1080 = vmatprep.subr.mxu0 0.0
  %1081 = vmatpush1.msra.mxu0 0.0
  %1082 = vmatprep.subr.mxu0 0.0
  %1083 = vmatpush1.msra.mxu0 0.0
  %1084 = vmatprep.subr.mxu0 0.0
  %1085 = vmatpush1.msra.mxu0 0.0
  %1086 = vmatprep.subr.mxu0 0.0
  %1087 = vmatpush1.msra.mxu0 0.0
  %1088 = vmatprep.subr.mxu0 0.0
  %1089 = vmatpush1.msra.mxu0 0.0
  %1090 = vmatprep.subr.mxu0 0.0
  %1091 = vmatpush1.msra.mxu0 0.0
  %1092 = vmatprep.subr.mxu0 0.0
  %1093 = vmatpush1.msra.mxu0 0.0
  %1094 = vmatprep.subr.mxu0 0.0
  %1095 = vmatpush1.msra.mxu0 0.0
  %1096 = vmatprep.subr.mxu0 0.0
  %1097 = vmatpush1.msra.mxu0 0.0
  %1098 = vmatprep.subr.mxu0 0.0
  %1099 = vmatpush1.msra.mxu0 0.0
  %1100 = vmatprep.subr.mxu0 0.0
  %1101 = vmatpush1.msra.mxu0 0.0
  %1102 = vmatprep.subr.mxu0 0.0
  %1103 = vmatpush1.msra.mxu0 0.0
  %1104 = vmatprep.subr.mxu0 0.0
  %1105 = vmatpush1.msra.mxu0 0.0
  %1106 = vmatprep.subr.mxu0 0.0
  %1107 = vmatpush1.msra.mxu0 0.0
  %1108 = vmatprep.subr.mxu0 0.0
  %1109 = vmatpush1.msra.mxu0 0.0
  %1110 = vmatprep.subr.mxu0 0.0
  %1111 = vmatpush1.msra.mxu0 %v121
  %1112 = vmatprep.subr.mxu0 0.0
  %1113 = vmatpush2.msra.mxu0 0.0
  %1114 = vmatprep.subr.mxu0 0.0
  %1115 = vmatpush2.msra.mxu0 0.0
  %1116 = vmatprep.subr.mxu0 0.0
  %1117 = vmatpush2.msra.mxu0 0.0
  %1118 = vmatprep.subr.mxu0 0.0
  %1119 = vmatpush2.msra.mxu0 0.0
  %1120 = vmatprep.subr.mxu0 0.0
  %1121 = vmatpush2.msra.mxu0 0.0
  %1122 = vmatprep.subr.mxu0 0.0
  %1123 = vmatpush2.msra.mxu0 0.0
  %1124 = vmatprep.subr.mxu0 0.0
  %1125 = vmatpush2.msra.mxu0 0.0
  %1126 = vmatprep.subr.mxu0 0.0
  %1127 = vmatpush2.msra.mxu0 0.0
  %1128 = vmatprep.subr.mxu0 0.0
  %1129 = vmatpush2.msra.mxu0 0.0
  %1130 = vmatprep.subr.mxu0 0.0
  %1131 = vmatpush2.msra.mxu0 0.0
  %1132 = vmatprep.subr.mxu0 0.0
  %1133 = vmatpush2.msra.mxu0 0.0
  %1134 = vmatprep.subr.mxu0 0.0
  %1135 = vmatpush2.msra.mxu0 0.0
  %1136 = vmatprep.subr.mxu0 0.0
  %1137 = vmatpush2.msra.mxu0 0.0
  %1138 = vmatprep.subr.mxu0 0.0
  %1139 = vmatpush2.msra.mxu0 0.0
  %1140 = vmatprep.subr.mxu0 0.0
  %1141 = vmatpush2.msra.mxu0 0.0
  %1142 = vmatprep.subr.mxu0 0.0
  %1143 = vmatpush2.msra.mxu0 0.0
  %1144 = vmatprep.mubr.f32.mxu0 0.0
  %1145 = vmatmul.mubr.f32.gmra.mxu0 %v1072
  %v1146 = vpop.f32.mrf.mxu0
  %v1147 = vadd.f32 0.0, %v1146
  %v1148 = vpop.f32.mrf.mxu0
  %1149 = vmatprep.mubr.f32.mxu0 0.0
  %1150 = vmatmul.mubr.f32.gmra.mxu0 %v1074
  %v1151 = vpop.f32.mrf.mxu0
  %v1152 = vadd.f32 0.0, %v1151
  %v1153 = vpop.f32.mrf.mxu0
  %1154 = vmatprep.mubr.f32.mxu0 0.0
  %1155 = vmatmul.mubr.f32.gmra.mxu0 %v1076
  %v1156 = vpop.f32.mrf.mxu0
  %v1157 = vadd.f32 0.0, %v1156
  %v1158 = vpop.f32.mrf.mxu0
  %1159 = vmatprep.mubr.f32.mxu0 0.0
  %1160 = vmatmul.mubr.f32.gmra.mxu0 %v1078
  %v1161 = vpop.f32.mrf.mxu0
  %v1162 = vadd.f32 0.0, %v1161
  %v1163 = vpop.f32.mrf.mxu0
  %1164 = vdwg.mxu0
  %v1165 = vadd.f32 %v1048, %v1147
  %v1166 = vadd.f32 %v1049, %v1152
  %v1167 = vadd.f32 %v1050, %v1157
  %v1168 = vadd.f32 %v1051, %v1162
  %v1169 = vld [vmem:[%s2] sm:$0x1]
  %v1170 = vld [vmem:[%s3] sm:$0x1]
  %vm1171 = vcmask 130048
  %v1172 = vsel %vm1171, %v1165, 0.0
  %v1173 = vsel %vm1171, %v1166, 0.0
  %v1174 = vadd.f32 %v1172, %v1173
  %v1175 = vsel %vm1171, %v1167, 0.0
  %v1176 = vadd.f32 %v1174, %v1175
  %v1177 = vsel %vm1171, %v1168, 0.0
  %v1178 = vadd.f32 %v1176, %v1177
  %v1179 = vrot.slane %v1178, 4
  %v1180 = vadd.f32 %v1178, %v1179
  %v1181 = vrot.slane %v1180, 2
  %v1182 = vadd.f32 %v1180, %v1181
  %v1183 = vrot.slane %v1182, 1
  %v1184 = vadd.f32 %v1182, %v1183
  %v1185 = vmul.f32 %v1184, 0.03125
  %v1186 = vmul.f32 %v1165, %v1165
  %v1187 = vmul.f32 %v1166, %v1166
  %v1188 = vmul.f32 %v1167, %v1167
  %v1189 = vmul.f32 %v1168, %v1168
  %v1190 = vsel %vm1171, %v1186, 0.0
  %v1191 = vsel %vm1171, %v1187, 0.0
  %v1192 = vadd.f32 %v1190, %v1191
  %v1193 = vsel %vm1171, %v1188, 0.0
  %v1194 = vadd.f32 %v1192, %v1193
  %v1195 = vsel %vm1171, %v1189, 0.0
  %v1196 = vadd.f32 %v1194, %v1195
  %v1197 = vrot.slane %v1196, 4
  %v1198 = vadd.f32 %v1196, %v1197
  %v1199 = vrot.slane %v1198, 2
  %v1200 = vadd.f32 %v1198, %v1199
  %v1201 = vrot.slane %v1200, 1
  %v1202 = vadd.f32 %v1200, %v1201
  %v1203 = vmul.f32 %v1202, 0.03125
  %v1204 = vmul.f32 %v1185, %v1185
  %v1205 = vsub.f32 %v1203, %v1204
  %v1206 = vmax.f32 %v1205, 0.0
  %v1207 = vadd.f32 %v1206, 1e-05
  %v1208 = vrsqrt.pop %v1207
  %v1209 = vmul.f32 %v1169, %v1208
  %v1210 = vmul.f32 %v1185, %v1209
  %v1211 = vsub.f32 %v1170, %v1210
  %v1213 = vlaneseq
  %v1214 = vshrl.u32 %v1213, 7
  %v1215 = vsub.s32 0, %v1214
  %v1216 = vrot.slane %v1209, %v1215
  %v1218 = vmul.f32 %v1165, %v1216
  %v1219 = vmul.f32 %v1166, %v1216
  %v1220 = vmul.f32 %v1167, %v1216
  %v1221 = vmul.f32 %v1168, %v1216
  %v1223 = vlaneseq
  %v1224 = vshrl.u32 %v1223, 7
  %v1225 = vsub.s32 0, %v1224
  %v1226 = vrot.slane %v1211, %v1225
  %v1228 = vadd.f32 %v1218, %v1226
  %v1229 = vadd.f32 %v1219, %v1226
  %v1230 = vadd.f32 %v1220, %v1226
  %v1231 = vadd.f32 %v1221, %v1226
  %v1232 = vmax.f32 %v1228, 0.0
  %v1233 = vmax.f32 %v1229, 0.0
  %v1234 = vmax.f32 %v1230, 0.0
  %v1235 = vmax.f32 %v1231, 0.0
  %vm1236 = vcmask 128000
  %1237 = vst.msk [vmem:[#allocation3] sm:$0x3f] %vm1236, 0.0
  %1238 = vst.msk [vmem:[#allocation3 + $0x8] sm:$0x3f] %vm1236, 0.0
  %1239 = vst.msk [vmem:[#allocation3 + $0x10] sm:$0x3f] %vm1236, 0.0
  %1240 = vst.msk [vmem:[#allocation3 + $0x18] sm:$0x3f] %vm1236, 0.0
  %1241 = vst.msk [vmem:[#allocation3 + $0x20] sm:$0x3f] %vm1236, 0.0
  %1242 = vst.msk [vmem:[#allocation3 + $0x28] sm:$0x3f] %vm1236, 0.0
  %1243 = vst.msk [vmem:[#allocation3 + $0x30] sm:$0x3f] %vm1236, 0.0
  %1244 = vst.msk [vmem:[#allocation3 + $0x38] sm:$0x3f] %vm1236, 0.0
  %1245 = vst.msk [vmem:[#allocation3 + $0x40] sm:$0x3f] %vm1236, 0.0
  %1246 = vst.msk [vmem:[#allocation3 + $0x48] sm:$0x3f] %vm1236, 0.0
  %1247 = vst.msk [vmem:[#allocation3 + $0x50] sm:$0x3f] %vm1236, 0.0
  %1248 = vst.msk [vmem:[#allocation3 + $0x58] sm:$0x3f] %vm1236, 0.0
  %v1253 = vcombine.high %v1232, %v1232
  %v1254 = vcombine.high %v1233, %v1233
  %v1255 = vcombine.high %v1234, %v1234
  %v1256 = vcombine.high %v1235, %v1235
  %s1261 = scalar_lea.vmem [#allocation3], 8
  %vm1262 = vcmask 125952
  %1263 = vst.msk [vmem:[%s1261 + $0x1] sm:$0xf] %vm1262, %v1232
  %1264 = vst.msk [vmem:[%s1261 + $0x9] sm:$0xf] %vm1262, %v1253
  %1265 = vst.msk [vmem:[%s1261 + $0x11] sm:$0xf] %vm1262, %v1233
  %1266 = vst.msk [vmem:[%s1261 + $0x19] sm:$0xf] %vm1262, %v1254
  %1267 = vst.msk [vmem:[%s1261 + $0x31] sm:$0xf] %vm1262, %v1234
  %1268 = vst.msk [vmem:[%s1261 + $0x39] sm:$0xf] %vm1262, %v1255
  %1269 = vst.msk [vmem:[%s1261 + $0x41] sm:$0xf] %vm1262, %v1235
  %1270 = vst.msk [vmem:[%s1261 + $0x49] sm:$0xf] %vm1262, %v1256
  %v1271 = vld [vmem:[%s4] sm:$0xff]
  %v1272 = vld [vmem:[%s4 + $0x8] sm:$0xff]
  %v1273 = vld [vmem:[%s4 + $0x10] sm:$0xff]
  %v1274 = vld [vmem:[%s4 + $0x18] sm:$0xff]
  %v1275 = vld [vmem:[%s4 + $0x20] sm:$0xff]
  %v1276 = vld [vmem:[%s4 + $0x28] sm:$0xff]
  %v1277 = vld [vmem:[%s4 + $0x30] sm:$0xff]
  %v1278 = vld [vmem:[%s4 + $0x38] sm:$0xff]
  %v1279 = vld [vmem:[%s4 + $0x40] sm:$0xff]
  %v1280 = vld [vmem:[%s4 + $0x48] sm:$0xff]
  %v1281 = vld [vmem:[%s4 + $0x50] sm:$0xff]
  %v1282 = vld [vmem:[%s4 + $0x58] sm:$0xff]
  %v1283 = vld [vmem:[%s4 + $0x60] sm:$0xff]
  %v1284 = vld [vmem:[%s4 + $0x68] sm:$0xff]
  %v1285 = vld [vmem:[%s4 + $0x70] sm:$0xff]
  %v1286 = vld [vmem:[%s4 + $0x78] sm:$0xff]
  %v1287 = vld [vmem:[%s4 + $0x80] sm:$0xff]
  %v1288 = vld [vmem:[%s4 + $0x88] sm:$0xff]
  %v1289 = vld [vmem:[#allocation3] sm:$0xf]
  %v1290 = vld [vmem:[#allocation3 + $0x8] sm:$0xf]
  %v1291 = vld [vmem:[#allocation3 + $0x10] sm:$0xf]
  %v1292 = vld [vmem:[#allocation3 + $0x18] sm:$0xf]
  %v1293 = vld [vmem:[#allocation3 + $0x30] sm:$0xf]
  %v1294 = vld [vmem:[#allocation3 + $0x38] sm:$0xf]
  %v1295 = vld [vmem:[#allocation3 + $0x40] sm:$0xf]
  %v1296 = vld [vmem:[#allocation3 + $0x48] sm:$0xf]
  %v1297 = vld [vmem:[#allocation3 + $0x1] sm:$0xf]
  %v1298 = vld [vmem:[#allocation3 + $0x9] sm:$0xf]
  %v1299 = vld [vmem:[#allocation3 + $0x11] sm:$0xf]
  %v1300 = vld [vmem:[#allocation3 + $0x19] sm:$0xf]
  %v1301 = vld [vmem:[#allocation3 + $0x31] sm:$0xf]
  %v1302 = vld [vmem:[#allocation3 + $0x39] sm:$0xf]
  %v1303 = vld [vmem:[#allocation3 + $0x41] sm:$0xf]
  %v1304 = vld [vmem:[#allocation3 + $0x49] sm:$0xf]
  %v1313 = vcombine.low %v1297, %v1298
  %v1314 = vcombine.low %v1299, %v1300
  %v1315 = vcombine.low %v1301, %v1302
  %v1316 = vcombine.low %v1303, %v1304
  %v1317 = vsel %vm1171, %v1313, 0
  %v1319 = vsel %vm1171, %v1314, 0
  %v1321 = vsel %vm1171, %v1315, 0
  %v1323 = vsel %vm1171, %v1316, 0
  %1325 = vmatprep.subr.mxu0 0.0
  %1326 = vmatpush1.msra.mxu0 0.0
  %1327 = vmatprep.subr.mxu0 0.0
  %1328 = vmatpush1.msra.mxu0 0.0
  %1329 = vmatprep.subr.mxu0 0.0
  %1330 = vmatpush1.msra.mxu0 0.0
  %1331 = vmatprep.subr.mxu0 0.0
  %1332 = vmatpush1.msra.mxu0 0.0
  %1333 = vmatprep.subr.mxu0 0.0
  %1334 = vmatpush1.msra.mxu0 0.0
  %1335 = vmatprep.subr.mxu0 0.0
  %1336 = vmatpush1.msra.mxu0 0.0
  %1337 = vmatprep.subr.mxu0 0.0
  %1338 = vmatpush1.msra.mxu0 0.0
  %1339 = vmatprep.subr.mxu0 0.0
  %1340 = vmatpush1.msra.mxu0 0.0
  %1341 = vmatprep.subr.mxu0 0.0
  %1342 = vmatpush1.msra.mxu0 0.0
  %1343 = vmatprep.subr.mxu0 0.0
  %1344 = vmatpush1.msra.mxu0 0.0
  %1345 = vmatprep.subr.mxu0 0.0
  %1346 = vmatpush1.msra.mxu0 0.0
  %1347 = vmatprep.subr.mxu0 0.0
  %1348 = vmatpush1.msra.mxu0 0.0
  %1349 = vmatprep.subr.mxu0 0.0
  %1350 = vmatpush1.msra.mxu0 0.0
  %1351 = vmatprep.subr.mxu0 0.0
  %1352 = vmatpush1.msra.mxu0 0.0
  %1353 = vmatprep.subr.mxu0 0.0
  %1354 = vmatpush1.msra.mxu0 %v1274
  %1355 = vmatprep.subr.mxu0 0.0
  %1356 = vmatpush1.msra.mxu0 %v1273
  %1357 = vmatprep.subr.mxu0 0.0
  %1358 = vmatpush2.msra.mxu0 0.0
  %1359 = vmatprep.subr.mxu0 0.0
  %1360 = vmatpush2.msra.mxu0 0.0
  %1361 = vmatprep.subr.mxu0 0.0
  %1362 = vmatpush2.msra.mxu0 0.0
  %1363 = vmatprep.subr.mxu0 0.0
  %1364 = vmatpush2.msra.mxu0 0.0
  %1365 = vmatprep.subr.mxu0 0.0
  %1366 = vmatpush2.msra.mxu0 0.0
  %1367 = vmatprep.subr.mxu0 0.0
  %1368 = vmatpush2.msra.mxu0 0.0
  %1369 = vmatprep.subr.mxu0 0.0
  %1370 = vmatpush2.msra.mxu0 0.0
  %1371 = vmatprep.subr.mxu0 0.0
  %1372 = vmatpush2.msra.mxu0 0.0
  %1373 = vmatprep.subr.mxu0 0.0
  %1374 = vmatpush2.msra.mxu0 0.0
  %1375 = vmatprep.subr.mxu0 0.0
  %1376 = vmatpush2.msra.mxu0 0.0
  %1377 = vmatprep.subr.mxu0 0.0
  %1378 = vmatpush2.msra.mxu0 0.0
  %1379 = vmatprep.subr.mxu0 0.0
  %1380 = vmatpush2.msra.mxu0 0.0
  %1381 = vmatprep.subr.mxu0 0.0
  %1382 = vmatpush2.msra.mxu0 0.0
  %1383 = vmatprep.subr.mxu0 0.0
  %1384 = vmatpush2.msra.mxu0 0.0
  %1385 = vmatprep.subr.mxu0 0.0
  %1386 = vmatpush2.msra.mxu0 0.0
  %1387 = vmatprep.subr.mxu0 0.0
  %1388 = vmatpush2.msra.mxu0 0.0
  %1389 = vmatprep.mubr.f32.mxu0 0.0
  %1390 = vmatmul.mubr.f32.gmra.mxu0 %v1317
  %v1391 = vpop.f32.mrf.mxu0
  %v1392 = vadd.f32 0.0, %v1391
  %v1393 = vpop.f32.mrf.mxu0
  %1394 = vmatprep.mubr.f32.mxu0 0.0
  %1395 = vmatmul.mubr.f32.gmra.mxu0 %v1319
  %v1396 = vpop.f32.mrf.mxu0
  %v1397 = vadd.f32 0.0, %v1396
  %v1398 = vpop.f32.mrf.mxu0
  %1399 = vmatprep.mubr.f32.mxu0 0.0
  %1400 = vmatmul.mubr.f32.gmra.mxu0 %v1321
  %v1401 = vpop.f32.mrf.mxu0
  %v1402 = vadd.f32 0.0, %v1401
  %v1403 = vpop.f32.mrf.mxu0
  %1404 = vmatprep.mubr.f32.mxu0 0.0
  %1405 = vmatmul.mubr.f32.gmra.mxu0 %v1323
  %v1406 = vpop.f32.mrf.mxu0
  %v1407 = vadd.f32 0.0, %v1406
  %v1408 = vpop.f32.mrf.mxu0
  %1409 = vdwg.mxu0
  %v1418 = vcombine.low %v1289, %v1290
  %v1419 = vcombine.low %v1291, %v1292
  %v1420 = vcombine.low %v1293, %v1294
  %v1421 = vcombine.low %v1295, %v1296
  %v1422 = vsel %vm1171, %v1418, 0
  %v1424 = vsel %vm1171, %v1419, 0
  %v1426 = vsel %vm1171, %v1420, 0
  %v1428 = vsel %vm1171, %v1421, 0
  %1430 = vmatprep.subr.mxu0 0.0
  %1431 = vmatpush1.msra.mxu0 0.0
  %1432 = vmatprep.subr.mxu0 0.0
  %1433 = vmatpush1.msra.mxu0 0.0
  %1434 = vmatprep.subr.mxu0 0.0
  %1435 = vmatpush1.msra.mxu0 0.0
  %1436 = vmatprep.subr.mxu0 0.0
  %1437 = vmatpush1.msra.mxu0 0.0
  %1438 = vmatprep.subr.mxu0 0.0
  %1439 = vmatpush1.msra.mxu0 0.0
  %1440 = vmatprep.subr.mxu0 0.0
  %1441 = vmatpush1.msra.mxu0 0.0
  %1442 = vmatprep.subr.mxu0 0.0
  %1443 = vmatpush1.msra.mxu0 0.0
  %1444 = vmatprep.subr.mxu0 0.0
  %1445 = vmatpush1.msra.mxu0 0.0
  %1446 = vmatprep.subr.mxu0 0.0
  %1447 = vmatpush1.msra.mxu0 0.0
  %1448 = vmatprep.subr.mxu0 0.0
  %1449 = vmatpush1.msra.mxu0 0.0
  %1450 = vmatprep.subr.mxu0 0.0
  %1451 = vmatpush1.msra.mxu0 0.0
  %1452 = vmatprep.subr.mxu0 0.0
  %1453 = vmatpush1.msra.mxu0 0.0
  %1454 = vmatprep.subr.mxu0 0.0
  %1455 = vmatpush1.msra.mxu0 0.0
  %1456 = vmatprep.subr.mxu0 0.0
  %1457 = vmatpush1.msra.mxu0 0.0
  %1458 = vmatprep.subr.mxu0 0.0
  %1459 = vmatpush1.msra.mxu0 %v1272
  %1460 = vmatprep.subr.mxu0 0.0
  %1461 = vmatpush1.msra.mxu0 %v1271
  %1462 = vmatprep.subr.mxu0 0.0
  %1463 = vmatpush2.msra.mxu0 0.0
  %1464 = vmatprep.subr.mxu0 0.0
  %1465 = vmatpush2.msra.mxu0 0.0
  %1466 = vmatprep.subr.mxu0 0.0
  %1467 = vmatpush2.msra.mxu0 0.0
  %1468 = vmatprep.subr.mxu0 0.0
  %1469 = vmatpush2.msra.mxu0 0.0
  %1470 = vmatprep.subr.mxu0 0.0
  %1471 = vmatpush2.msra.mxu0 0.0
  %1472 = vmatprep.subr.mxu0 0.0
  %1473 = vmatpush2.msra.mxu0 0.0
  %1474 = vmatprep.subr.mxu0 0.0
  %1475 = vmatpush2.msra.mxu0 0.0
  %1476 = vmatprep.subr.mxu0 0.0
  %1477 = vmatpush2.msra.mxu0 0.0
  %1478 = vmatprep.subr.mxu0 0.0
  %1479 = vmatpush2.msra.mxu0 0.0
  %1480 = vmatprep.subr.mxu0 0.0
  %1481 = vmatpush2.msra.mxu0 0.0
  %1482 = vmatprep.subr.mxu0 0.0
  %1483 = vmatpush2.msra.mxu0 0.0
  %1484 = vmatprep.subr.mxu0 0.0
  %1485 = vmatpush2.msra.mxu0 0.0
  %1486 = vmatprep.subr.mxu0 0.0
  %1487 = vmatpush2.msra.mxu0 0.0
  %1488 = vmatprep.subr.mxu0 0.0
  %1489 = vmatpush2.msra.mxu0 0.0
  %1490 = vmatprep.subr.mxu0 0.0
  %1491 = vmatpush2.msra.mxu0 0.0
  %1492 = vmatprep.subr.mxu0 0.0
  %1493 = vmatpush2.msra.mxu0 0.0
  %1494 = vmatprep.mubr.f32.mxu0 0.0
  %1495 = vmatmul.mubr.f32.gmra.mxu0 %v1422
  %v1496 = vpop.f32.mrf.mxu0
  %v1497 = vadd.f32 %v1392, %v1496
  %v1498 = vpop.f32.mrf.mxu0
  %1499 = vmatprep.mubr.f32.mxu0 0.0
  %1500 = vmatmul.mubr.f32.gmra.mxu0 %v1424
  %v1501 = vpop.f32.mrf.mxu0
  %v1502 = vadd.f32 %v1397, %v1501
  %v1503 = vpop.f32.mrf.mxu0
  %1504 = vmatprep.mubr.f32.mxu0 0.0
  %1505 = vmatmul.mubr.f32.gmra.mxu0 %v1426
  %v1506 = vpop.f32.mrf.mxu0
  %v1507 = vadd.f32 %v1402, %v1506
  %v1508 = vpop.f32.mrf.mxu0
  %1509 = vmatprep.mubr.f32.mxu0 0.0
  %1510 = vmatmul.mubr.f32.gmra.mxu0 %v1428
  %v1511 = vpop.f32.mrf.mxu0
  %v1512 = vadd.f32 %v1407, %v1511
  %v1513 = vpop.f32.mrf.mxu0
  %1514 = vdwg.mxu0
  %v1515 = vld [vmem:[#allocation3 + $0x2] sm:$0xf]
  %v1516 = vld [vmem:[#allocation3 + $0xa] sm:$0xf]
  %v1517 = vld [vmem:[#allocation3 + $0x12] sm:$0xf]
  %v1518 = vld [vmem:[#allocation3 + $0x1a] sm:$0xf]
  %v1519 = vld [vmem:[#allocation3 + $0x32] sm:$0xf]
  %v1520 = vld [vmem:[#allocation3 + $0x3a] sm:$0xf]
  %v1521 = vld [vmem:[#allocation3 + $0x42] sm:$0xf]
  %v1522 = vld [vmem:[#allocation3 + $0x4a] sm:$0xf]
  %v1531 = vcombine.low %v1515, %v1516
  %v1532 = vcombine.low %v1517, %v1518
  %v1533 = vcombine.low %v1519, %v1520
  %v1534 = vcombine.low %v1521, %v1522
  %v1535 = vsel %vm1171, %v1531, 0
  %v1537 = vsel %vm1171, %v1532, 0
  %v1539 = vsel %vm1171, %v1533, 0
  %v1541 = vsel %vm1171, %v1534, 0
  %1543 = vmatprep.subr.mxu0 0.0
  %1544 = vmatpush1.msra.mxu0 0.0
  %1545 = vmatprep.subr.mxu0 0.0
  %1546 = vmatpush1.msra.mxu0 0.0
  %1547 = vmatprep.subr.mxu0 0.0
  %1548 = vmatpush1.msra.mxu0 0.0
  %1549 = vmatprep.subr.mxu0 0.0
  %1550 = vmatpush1.msra.mxu0 0.0
  %1551 = vmatprep.subr.mxu0 0.0
  %1552 = vmatpush1.msra.mxu0 0.0
  %1553 = vmatprep.subr.mxu0 0.0
  %1554 = vmatpush1.msra.mxu0 0.0
  %1555 = vmatprep.subr.mxu0 0.0
  %1556 = vmatpush1.msra.mxu0 0.0
  %1557 = vmatprep.subr.mxu0 0.0
  %1558 = vmatpush1.msra.mxu0 0.0
  %1559 = vmatprep.subr.mxu0 0.0
  %1560 = vmatpush1.msra.mxu0 0.0
  %1561 = vmatprep.subr.mxu0 0.0
  %1562 = vmatpush1.msra.mxu0 0.0
  %1563 = vmatprep.subr.mxu0 0.0
  %1564 = vmatpush1.msra.mxu0 0.0
  %1565 = vmatprep.subr.mxu0 0.0
  %1566 = vmatpush1.msra.mxu0 0.0
  %1567 = vmatprep.subr.mxu0 0.0
  %1568 = vmatpush1.msra.mxu0 0.0
  %1569 = vmatprep.subr.mxu0 0.0
  %1570 = vmatpush1.msra.mxu0 0.0
  %1571 = vmatprep.subr.mxu0 0.0
  %1572 = vmatpush1.msra.mxu0 %v1276
  %1573 = vmatprep.subr.mxu0 0.0
  %1574 = vmatpush1.msra.mxu0 %v1275
  %1575 = vmatprep.subr.mxu0 0.0
  %1576 = vmatpush2.msra.mxu0 0.0
  %1577 = vmatprep.subr.mxu0 0.0
  %1578 = vmatpush2.msra.mxu0 0.0
  %1579 = vmatprep.subr.mxu0 0.0
  %1580 = vmatpush2.msra.mxu0 0.0
  %1581 = vmatprep.subr.mxu0 0.0
  %1582 = vmatpush2.msra.mxu0 0.0
  %1583 = vmatprep.subr.mxu0 0.0
  %1584 = vmatpush2.msra.mxu0 0.0
  %1585 = vmatprep.subr.mxu0 0.0
  %1586 = vmatpush2.msra.mxu0 0.0
  %1587 = vmatprep.subr.mxu0 0.0
  %1588 = vmatpush2.msra.mxu0 0.0
  %1589 = vmatprep.subr.mxu0 0.0
  %1590 = vmatpush2.msra.mxu0 0.0
  %1591 = vmatprep.subr.mxu0 0.0
  %1592 = vmatpush2.msra.mxu0 0.0
  %1593 = vmatprep.subr.mxu0 0.0
  %1594 = vmatpush2.msra.mxu0 0.0
  %1595 = vmatprep.subr.mxu0 0.0
  %1596 = vmatpush2.msra.mxu0 0.0
  %1597 = vmatprep.subr.mxu0 0.0
  %1598 = vmatpush2.msra.mxu0 0.0
  %1599 = vmatprep.subr.mxu0 0.0
  %1600 = vmatpush2.msra.mxu0 0.0
  %1601 = vmatprep.subr.mxu0 0.0
  %1602 = vmatpush2.msra.mxu0 0.0
  %1603 = vmatprep.subr.mxu0 0.0
  %1604 = vmatpush2.msra.mxu0 0.0
  %1605 = vmatprep.subr.mxu0 0.0
  %1606 = vmatpush2.msra.mxu0 0.0
  %1607 = vmatprep.mubr.f32.mxu0 0.0
  %1608 = vmatmul.mubr.f32.gmra.mxu0 %v1535
  %v1609 = vpop.f32.mrf.mxu0
  %v1610 = vadd.f32 0.0, %v1609
  %v1611 = vpop.f32.mrf.mxu0
  %1612 = vmatprep.mubr.f32.mxu0 0.0
  %1613 = vmatmul.mubr.f32.gmra.mxu0 %v1537
  %v1614 = vpop.f32.mrf.mxu0
  %v1615 = vadd.f32 0.0, %v1614
  %v1616 = vpop.f32.mrf.mxu0
  %1617 = vmatprep.mubr.f32.mxu0 0.0
  %1618 = vmatmul.mubr.f32.gmra.mxu0 %v1539
  %v1619 = vpop.f32.mrf.mxu0
  %v1620 = vadd.f32 0.0, %v1619
  %v1621 = vpop.f32.mrf.mxu0
  %1622 = vmatprep.mubr.f32.mxu0 0.0
  %1623 = vmatmul.mubr.f32.gmra.mxu0 %v1541
  %v1624 = vpop.f32.mrf.mxu0
  %v1625 = vadd.f32 0.0, %v1624
  %v1626 = vpop.f32.mrf.mxu0
  %1627 = vdwg.mxu0
  %v1628 = vadd.f32 %v1497, %v1610
  %v1629 = vadd.f32 %v1502, %v1615
  %v1630 = vadd.f32 %v1507, %v1620
  %v1631 = vadd.f32 %v1512, %v1625
  %v1632 = vld [vmem:[%s1261] sm:$0xf]
  %v1633 = vld [vmem:[%s1261 + $0x8] sm:$0xf]
  %v1634 = vld [vmem:[%s1261 + $0x10] sm:$0xf]
  %v1635 = vld [vmem:[%s1261 + $0x18] sm:$0xf]
  %v1636 = vld [vmem:[%s1261 + $0x30] sm:$0xf]
  %v1637 = vld [vmem:[%s1261 + $0x38] sm:$0xf]
  %v1638 = vld [vmem:[%s1261 + $0x40] sm:$0xf]
  %v1639 = vld [vmem:[%s1261 + $0x48] sm:$0xf]
  %v1648 = vcombine.low %v1632, %v1633
  %v1649 = vcombine.low %v1634, %v1635
  %v1650 = vcombine.low %v1636, %v1637
  %v1651 = vcombine.low %v1638, %v1639
  %v1652 = vsel %vm1171, %v1648, 0
  %v1654 = vsel %vm1171, %v1649, 0
  %v1656 = vsel %vm1171, %v1650, 0
  %v1658 = vsel %vm1171, %v1651, 0
  %1660 = vmatprep.subr.mxu0 0.0
  %1661 = vmatpush1.msra.mxu0 0.0
  %1662 = vmatprep.subr.mxu0 0.0
  %1663 = vmatpush1.msra.mxu0 0.0
  %1664 = vmatprep.subr.mxu0 0.0
  %1665 = vmatpush1.msra.mxu0 0.0
  %1666 = vmatprep.subr.mxu0 0.0
  %1667 = vmatpush1.msra.mxu0 0.0
  %1668 = vmatprep.subr.mxu0 0.0
  %1669 = vmatpush1.msra.mxu0 0.0
  %1670 = vmatprep.subr.mxu0 0.0
  %1671 = vmatpush1.msra.mxu0 0.0
  %1672 = vmatprep.subr.mxu0 0.0
  %1673 = vmatpush1.msra.mxu0 0.0
  %1674 = vmatprep.subr.mxu0 0.0
  %1675 = vmatpush1.msra.mxu0 0.0
  %1676 = vmatprep.subr.mxu0 0.0
  %1677 = vmatpush1.msra.mxu0 0.0
  %1678 = vmatprep.subr.mxu0 0.0
  %1679 = vmatpush1.msra.mxu0 0.0
  %1680 = vmatprep.subr.mxu0 0.0
  %1681 = vmatpush1.msra.mxu0 0.0
  %1682 = vmatprep.subr.mxu0 0.0
  %1683 = vmatpush1.msra.mxu0 0.0
  %1684 = vmatprep.subr.mxu0 0.0
  %1685 = vmatpush1.msra.mxu0 0.0
  %1686 = vmatprep.subr.mxu0 0.0
  %1687 = vmatpush1.msra.mxu0 0.0
  %1688 = vmatprep.subr.mxu0 0.0
  %1689 = vmatpush1.msra.mxu0 %v1278
  %1690 = vmatprep.subr.mxu0 0.0
  %1691 = vmatpush1.msra.mxu0 %v1277
  %1692 = vmatprep.subr.mxu0 0.0
  %1693 = vmatpush2.msra.mxu0 0.0
  %1694 = vmatprep.subr.mxu0 0.0
  %1695 = vmatpush2.msra.mxu0 0.0
  %1696 = vmatprep.subr.mxu0 0.0
  %1697 = vmatpush2.msra.mxu0 0.0
  %1698 = vmatprep.subr.mxu0 0.0
  %1699 = vmatpush2.msra.mxu0 0.0
  %1700 = vmatprep.subr.mxu0 0.0
  %1701 = vmatpush2.msra.mxu0 0.0
  %1702 = vmatprep.subr.mxu0 0.0
  %1703 = vmatpush2.msra.mxu0 0.0
  %1704 = vmatprep.subr.mxu0 0.0
  %1705 = vmatpush2.msra.mxu0 0.0
  %1706 = vmatprep.subr.mxu0 0.0
  %1707 = vmatpush2.msra.mxu0 0.0
  %1708 = vmatprep.subr.mxu0 0.0
  %1709 = vmatpush2.msra.mxu0 0.0
  %1710 = vmatprep.subr.mxu0 0.0
  %1711 = vmatpush2.msra.mxu0 0.0
  %1712 = vmatprep.subr.mxu0 0.0
  %1713 = vmatpush2.msra.mxu0 0.0
  %1714 = vmatprep.subr.mxu0 0.0
  %1715 = vmatpush2.msra.mxu0 0.0
  %1716 = vmatprep.subr.mxu0 0.0
  %1717 = vmatpush2.msra.mxu0 0.0
  %1718 = vmatprep.subr.mxu0 0.0
  %1719 = vmatpush2.msra.mxu0 0.0
  %1720 = vmatprep.subr.mxu0 0.0
  %1721 = vmatpush2.msra.mxu0 0.0
  %1722 = vmatprep.subr.mxu0 0.0
  %1723 = vmatpush2.msra.mxu0 0.0
  %1724 = vmatprep.mubr.f32.mxu0 0.0
  %1725 = vmatmul.mubr.f32.gmra.mxu0 %v1652
  %v1726 = vpop.f32.mrf.mxu0
  %v1727 = vadd.f32 0.0, %v1726
  %v1728 = vpop.f32.mrf.mxu0
  %1729 = vmatprep.mubr.f32.mxu0 0.0
  %1730 = vmatmul.mubr.f32.gmra.mxu0 %v1654
  %v1731 = vpop.f32.mrf.mxu0
  %v1732 = vadd.f32 0.0, %v1731
  %v1733 = vpop.f32.mrf.mxu0
  %1734 = vmatprep.mubr.f32.mxu0 0.0
  %1735 = vmatmul.mubr.f32.gmra.mxu0 %v1656
  %v1736 = vpop.f32.mrf.mxu0
  %v1737 = vadd.f32 0.0, %v1736
  %v1738 = vpop.f32.mrf.mxu0
  %1739 = vmatprep.mubr.f32.mxu0 0.0
  %1740 = vmatmul.mubr.f32.gmra.mxu0 %v1658
  %v1741 = vpop.f32.mrf.mxu0
  %v1742 = vadd.f32 0.0, %v1741
  %v1743 = vpop.f32.mrf.mxu0
  %1744 = vdwg.mxu0
  %v1745 = vadd.f32 %v1628, %v1727
  %v1746 = vadd.f32 %v1629, %v1732
  %v1747 = vadd.f32 %v1630, %v1737
  %v1748 = vadd.f32 %v1631, %v1742
  %v1749 = vld [vmem:[%s1261 + $0x1] sm:$0xf]
  %v1750 = vld [vmem:[%s1261 + $0x9] sm:$0xf]
  %v1751 = vld [vmem:[%s1261 + $0x11] sm:$0xf]
  %v1752 = vld [vmem:[%s1261 + $0x19] sm:$0xf]
  %v1753 = vld [vmem:[%s1261 + $0x31] sm:$0xf]
  %v1754 = vld [vmem:[%s1261 + $0x39] sm:$0xf]
  %v1755 = vld [vmem:[%s1261 + $0x41] sm:$0xf]
  %v1756 = vld [vmem:[%s1261 + $0x49] sm:$0xf]
  %v1765 = vcombine.low %v1749, %v1750
  %v1766 = vcombine.low %v1751, %v1752
  %v1767 = vcombine.low %v1753, %v1754
  %v1768 = vcombine.low %v1755, %v1756
  %v1769 = vsel %vm1171, %v1765, 0
  %v1771 = vsel %vm1171, %v1766, 0
  %v1773 = vsel %vm1171, %v1767, 0
  %v1775 = vsel %vm1171, %v1768, 0
  %1777 = vmatprep.subr.mxu0 0.0
  %1778 = vmatpush1.msra.mxu0 0.0
  %1779 = vmatprep.subr.mxu0 0.0
  %1780 = vmatpush1.msra.mxu0 0.0
  %1781 = vmatprep.subr.mxu0 0.0
  %1782 = vmatpush1.msra.mxu0 0.0
  %1783 = vmatprep.subr.mxu0 0.0
  %1784 = vmatpush1.msra.mxu0 0.0
  %1785 = vmatprep.subr.mxu0 0.0
  %1786 = vmatpush1.msra.mxu0 0.0
  %1787 = vmatprep.subr.mxu0 0.0
  %1788 = vmatpush1.msra.mxu0 0.0
  %1789 = vmatprep.subr.mxu0 0.0
  %1790 = vmatpush1.msra.mxu0 0.0
  %1791 = vmatprep.subr.mxu0 0.0
  %1792 = vmatpush1.msra.mxu0 0.0
  %1793 = vmatprep.subr.mxu0 0.0
  %1794 = vmatpush1.msra.mxu0 0.0
  %1795 = vmatprep.subr.mxu0 0.0
  %1796 = vmatpush1.msra.mxu0 0.0
  %1797 = vmatprep.subr.mxu0 0.0
  %1798 = vmatpush1.msra.mxu0 0.0
  %1799 = vmatprep.subr.mxu0 0.0
  %1800 = vmatpush1.msra.mxu0 0.0
  %1801 = vmatprep.subr.mxu0 0.0
  %1802 = vmatpush1.msra.mxu0 0.0
  %1803 = vmatprep.subr.mxu0 0.0
  %1804 = vmatpush1.msra.mxu0 0.0
  %1805 = vmatprep.subr.mxu0 0.0
  %1806 = vmatpush1.msra.mxu0 %v1280
  %1807 = vmatprep.subr.mxu0 0.0
  %1808 = vmatpush1.msra.mxu0 %v1279
  %1809 = vmatprep.subr.mxu0 0.0
  %1810 = vmatpush2.msra.mxu0 0.0
  %1811 = vmatprep.subr.mxu0 0.0
  %1812 = vmatpush2.msra.mxu0 0.0
  %1813 = vmatprep.subr.mxu0 0.0
  %1814 = vmatpush2.msra.mxu0 0.0
  %1815 = vmatprep.subr.mxu0 0.0
  %1816 = vmatpush2.msra.mxu0 0.0
  %1817 = vmatprep.subr.mxu0 0.0
  %1818 = vmatpush2.msra.mxu0 0.0
  %1819 = vmatprep.subr.mxu0 0.0
  %1820 = vmatpush2.msra.mxu0 0.0
  %1821 = vmatprep.subr.mxu0 0.0
  %1822 = vmatpush2.msra.mxu0 0.0
  %1823 = vmatprep.subr.mxu0 0.0
  %1824 = vmatpush2.msra.mxu0 0.0
  %1825 = vmatprep.subr.mxu0 0.0
  %1826 = vmatpush2.msra.mxu0 0.0
  %1827 = vmatprep.subr.mxu0 0.0
  %1828 = vmatpush2.msra.mxu0 0.0
  %1829 = vmatprep.subr.mxu0 0.0
  %1830 = vmatpush2.msra.mxu0 0.0
  %1831 = vmatprep.subr.mxu0 0.0
  %1832 = vmatpush2.msra.mxu0 0.0
  %1833 = vmatprep.subr.mxu0 0.0
  %1834 = vmatpush2.msra.mxu0 0.0
  %1835 = vmatprep.subr.mxu0 0.0
  %1836 = vmatpush2.msra.mxu0 0.0
  %1837 = vmatprep.subr.mxu0 0.0
  %1838 = vmatpush2.msra.mxu0 0.0
  %1839 = vmatprep.subr.mxu0 0.0
  %1840 = vmatpush2.msra.mxu0 0.0
  %1841 = vmatprep.mubr.f32.mxu0 0.0
  %1842 = vmatmul.mubr.f32.gmra.mxu0 %v1769
  %v1843 = vpop.f32.mrf.mxu0
  %v1844 = vadd.f32 0.0, %v1843
  %v1845 = vpop.f32.mrf.mxu0
  %1846 = vmatprep.mubr.f32.mxu0 0.0
  %1847 = vmatmul.mubr.f32.gmra.mxu0 %v1771
  %v1848 = vpop.f32.mrf.mxu0
  %v1849 = vadd.f32 0.0, %v1848
  %v1850 = vpop.f32.mrf.mxu0
  %1851 = vmatprep.mubr.f32.mxu0 0.0
  %1852 = vmatmul.mubr.f32.gmra.mxu0 %v1773
  %v1853 = vpop.f32.mrf.mxu0
  %v1854 = vadd.f32 0.0, %v1853
  %v1855 = vpop.f32.mrf.mxu0
  %1856 = vmatprep.mubr.f32.mxu0 0.0
  %1857 = vmatmul.mubr.f32.gmra.mxu0 %v1775
  %v1858 = vpop.f32.mrf.mxu0
  %v1859 = vadd.f32 0.0, %v1858
  %v1860 = vpop.f32.mrf.mxu0
  %1861 = vdwg.mxu0
  %v1862 = vadd.f32 %v1745, %v1844
  %v1863 = vadd.f32 %v1746, %v1849
  %v1864 = vadd.f32 %v1747, %v1854
  %v1865 = vadd.f32 %v1748, %v1859
  %v1866 = vld [vmem:[%s1261 + $0x2] sm:$0xf]
  %v1867 = vld [vmem:[%s1261 + $0xa] sm:$0xf]
  %v1868 = vld [vmem:[%s1261 + $0x12] sm:$0xf]
  %v1869 = vld [vmem:[%s1261 + $0x1a] sm:$0xf]
  %v1870 = vld [vmem:[%s1261 + $0x32] sm:$0xf]
  %v1871 = vld [vmem:[%s1261 + $0x3a] sm:$0xf]
  %v1872 = vld [vmem:[%s1261 + $0x42] sm:$0xf]
  %v1873 = vld [vmem:[%s1261 + $0x4a] sm:$0xf]
  %v1882 = vcombine.low %v1866, %v1867
  %v1883 = vcombine.low %v1868, %v1869
  %v1884 = vcombine.low %v1870, %v1871
  %v1885 = vcombine.low %v1872, %v1873
  %v1886 = vsel %vm1171, %v1882, 0
  %v1888 = vsel %vm1171, %v1883, 0
  %v1890 = vsel %vm1171, %v1884, 0
  %v1892 = vsel %vm1171, %v1885, 0
  %1894 = vmatprep.subr.mxu0 0.0
  %1895 = vmatpush1.msra.mxu0 0.0
  %1896 = vmatprep.subr.mxu0 0.0
  %1897 = vmatpush1.msra.mxu0 0.0
  %1898 = vmatprep.subr.mxu0 0.0
  %1899 = vmatpush1.msra.mxu0 0.0
  %1900 = vmatprep.subr.mxu0 0.0
  %1901 = vmatpush1.msra.mxu0 0.0
  %1902 = vmatprep.subr.mxu0 0.0
  %1903 = vmatpush1.msra.mxu0 0.0
  %1904 = vmatprep.subr.mxu0 0.0
  %1905 = vmatpush1.msra.mxu0 0.0
  %1906 = vmatprep.subr.mxu0 0.0
  %1907 = vmatpush1.msra.mxu0 0.0
  %1908 = vmatprep.subr.mxu0 0.0
  %1909 = vmatpush1.msra.mxu0 0.0
  %1910 = vmatprep.subr.mxu0 0.0
  %1911 = vmatpush1.msra.mxu0 0.0
  %1912 = vmatprep.subr.mxu0 0.0
  %1913 = vmatpush1.msra.mxu0 0.0
  %1914 = vmatprep.subr.mxu0 0.0
  %1915 = vmatpush1.msra.mxu0 0.0
  %1916 = vmatprep.subr.mxu0 0.0
  %1917 = vmatpush1.msra.mxu0 0.0
  %1918 = vmatprep.subr.mxu0 0.0
  %1919 = vmatpush1.msra.mxu0 0.0
  %1920 = vmatprep.subr.mxu0 0.0
  %1921 = vmatpush1.msra.mxu0 0.0
  %1922 = vmatprep.subr.mxu0 0.0
  %1923 = vmatpush1.msra.mxu0 %v1282
  %1924 = vmatprep.subr.mxu0 0.0
  %1925 = vmatpush1.msra.mxu0 %v1281
  %1926 = vmatprep.subr.mxu0 0.0
  %1927 = vmatpush2.msra.mxu0 0.0
  %1928 = vmatprep.subr.mxu0 0.0
  %1929 = vmatpush2.msra.mxu0 0.0
  %1930 = vmatprep.subr.mxu0 0.0
  %1931 = vmatpush2.msra.mxu0 0.0
  %1932 = vmatprep.subr.mxu0 0.0
  %1933 = vmatpush2.msra.mxu0 0.0
  %1934 = vmatprep.subr.mxu0 0.0
  %1935 = vmatpush2.msra.mxu0 0.0
  %1936 = vmatprep.subr.mxu0 0.0
  %1937 = vmatpush2.msra.mxu0 0.0
  %1938 = vmatprep.subr.mxu0 0.0
  %1939 = vmatpush2.msra.mxu0 0.0
  %1940 = vmatprep.subr.mxu0 0.0
  %1941 = vmatpush2.msra.mxu0 0.0
  %1942 = vmatprep.subr.mxu0 0.0
  %1943 = vmatpush2.msra.mxu0 0.0
  %1944 = vmatprep.subr.mxu0 0.0
  %1945 = vmatpush2.msra.mxu0 0.0
  %1946 = vmatprep.subr.mxu0 0.0
  %1947 = vmatpush2.msra.mxu0 0.0
  %1948 = vmatprep.subr.mxu0 0.0
  %1949 = vmatpush2.msra.mxu0 0.0
  %1950 = vmatprep.subr.mxu0 0.0
  %1951 = vmatpush2.msra.mxu0 0.0
  %1952 = vmatprep.subr.mxu0 0.0
  %1953 = vmatpush2.msra.mxu0 0.0
  %1954 = vmatprep.subr.mxu0 0.0
  %1955 = vmatpush2.msra.mxu0 0.0
  %1956 = vmatprep.subr.mxu0 0.0
  %1957 = vmatpush2.msra.mxu0 0.0
  %1958 = vmatprep.mubr.f32.mxu0 0.0
  %1959 = vmatmul.mubr.f32.gmra.mxu0 %v1886
  %v1960 = vpop.f32.mrf.mxu0
  %v1961 = vadd.f32 0.0, %v1960
  %v1962 = vpop.f32.mrf.mxu0
  %1963 = vmatprep.mubr.f32.mxu0 0.0
  %1964 = vmatmul.mubr.f32.gmra.mxu0 %v1888
  %v1965 = vpop.f32.mrf.mxu0
  %v1966 = vadd.f32 0.0, %v1965
  %v1967 = vpop.f32.mrf.mxu0
  %1968 = vmatprep.mubr.f32.mxu0 0.0
  %1969 = vmatmul.mubr.f32.gmra.mxu0 %v1890
  %v1970 = vpop.f32.mrf.mxu0
  %v1971 = vadd.f32 0.0, %v1970
  %v1972 = vpop.f32.mrf.mxu0
  %1973 = vmatprep.mubr.f32.mxu0 0.0
  %1974 = vmatmul.mubr.f32.gmra.mxu0 %v1892
  %v1975 = vpop.f32.mrf.mxu0
  %v1976 = vadd.f32 0.0, %v1975
  %v1977 = vpop.f32.mrf.mxu0
  %1978 = vdwg.mxu0
  %v1979 = vadd.f32 %v1862, %v1961
  %v1980 = vadd.f32 %v1863, %v1966
  %v1981 = vadd.f32 %v1864, %v1971
  %v1982 = vadd.f32 %v1865, %v1976
  %s1983 = scalar_lea.vmem [#allocation3], 16
  %v1984 = vld [vmem:[%s1983] sm:$0xf]
  %v1985 = vld [vmem:[%s1983 + $0x8] sm:$0xf]
  %v1986 = vld [vmem:[%s1983 + $0x10] sm:$0xf]
  %v1987 = vld [vmem:[%s1983 + $0x18] sm:$0xf]
  %v1988 = vld [vmem:[%s1983 + $0x30] sm:$0xf]
  %v1989 = vld [vmem:[%s1983 + $0x38] sm:$0xf]
  %v1990 = vld [vmem:[%s1983 + $0x40] sm:$0xf]
  %v1991 = vld [vmem:[%s1983 + $0x48] sm:$0xf]
  %v2000 = vcombine.low %v1984, %v1985
  %v2001 = vcombine.low %v1986, %v1987
  %v2002 = vcombine.low %v1988, %v1989
  %v2003 = vcombine.low %v1990, %v1991
  %v2004 = vsel %vm1171, %v2000, 0
  %v2006 = vsel %vm1171, %v2001, 0
  %v2008 = vsel %vm1171, %v2002, 0
  %v2010 = vsel %vm1171, %v2003, 0
  %2012 = vmatprep.subr.mxu0 0.0
  %2013 = vmatpush1.msra.mxu0 0.0
  %2014 = vmatprep.subr.mxu0 0.0
  %2015 = vmatpush1.msra.mxu0 0.0
  %2016 = vmatprep.subr.mxu0 0.0
  %2017 = vmatpush1.msra.mxu0 0.0
  %2018 = vmatprep.subr.mxu0 0.0
  %2019 = vmatpush1.msra.mxu0 0.0
  %2020 = vmatprep.subr.mxu0 0.0
  %2021 = vmatpush1.msra.mxu0 0.0
  %2022 = vmatprep.subr.mxu0 0.0
  %2023 = vmatpush1.msra.mxu0 0.0
  %2024 = vmatprep.subr.mxu0 0.0
  %2025 = vmatpush1.msra.mxu0 0.0
  %2026 = vmatprep.subr.mxu0 0.0
  %2027 = vmatpush1.msra.mxu0 0.0
  %2028 = vmatprep.subr.mxu0 0.0
  %2029 = vmatpush1.msra.mxu0 0.0
  %2030 = vmatprep.subr.mxu0 0.0
  %2031 = vmatpush1.msra.mxu0 0.0
  %2032 = vmatprep.subr.mxu0 0.0
  %2033 = vmatpush1.msra.mxu0 0.0
  %2034 = vmatprep.subr.mxu0 0.0
  %2035 = vmatpush1.msra.mxu0 0.0
  %2036 = vmatprep.subr.mxu0 0.0
  %2037 = vmatpush1.msra.mxu0 0.0
  %2038 = vmatprep.subr.mxu0 0.0
  %2039 = vmatpush1.msra.mxu0 0.0
  %2040 = vmatprep.subr.mxu0 0.0
  %2041 = vmatpush1.msra.mxu0 %v1284
  %2042 = vmatprep.subr.mxu0 0.0
  %2043 = vmatpush1.msra.mxu0 %v1283
  %2044 = vmatprep.subr.mxu0 0.0
  %2045 = vmatpush2.msra.mxu0 0.0
  %2046 = vmatprep.subr.mxu0 0.0
  %2047 = vmatpush2.msra.mxu0 0.0
  %2048 = vmatprep.subr.mxu0 0.0
  %2049 = vmatpush2.msra.mxu0 0.0
  %2050 = vmatprep.subr.mxu0 0.0
  %2051 = vmatpush2.msra.mxu0 0.0
  %2052 = vmatprep.subr.mxu0 0.0
  %2053 = vmatpush2.msra.mxu0 0.0
  %2054 = vmatprep.subr.mxu0 0.0
  %2055 = vmatpush2.msra.mxu0 0.0
  %2056 = vmatprep.subr.mxu0 0.0
  %2057 = vmatpush2.msra.mxu0 0.0
  %2058 = vmatprep.subr.mxu0 0.0
  %2059 = vmatpush2.msra.mxu0 0.0
  %2060 = vmatprep.subr.mxu0 0.0
  %2061 = vmatpush2.msra.mxu0 0.0
  %2062 = vmatprep.subr.mxu0 0.0
  %2063 = vmatpush2.msra.mxu0 0.0
  %2064 = vmatprep.subr.mxu0 0.0
  %2065 = vmatpush2.msra.mxu0 0.0
  %2066 = vmatprep.subr.mxu0 0.0
  %2067 = vmatpush2.msra.mxu0 0.0
  %2068 = vmatprep.subr.mxu0 0.0
  %2069 = vmatpush2.msra.mxu0 0.0
  %2070 = vmatprep.subr.mxu0 0.0
  %2071 = vmatpush2.msra.mxu0 0.0
  %2072 = vmatprep.subr.mxu0 0.0
  %2073 = vmatpush2.msra.mxu0 0.0
  %2074 = vmatprep.subr.mxu0 0.0
  %2075 = vmatpush2.msra.mxu0 0.0
  %2076 = vmatprep.mubr.f32.mxu0 0.0
  %2077 = vmatmul.mubr.f32.gmra.mxu0 %v2004
  %v2078 = vpop.f32.mrf.mxu0
  %v2079 = vadd.f32 0.0, %v2078
  %v2080 = vpop.f32.mrf.mxu0
  %2081 = vmatprep.mubr.f32.mxu0 0.0
  %2082 = vmatmul.mubr.f32.gmra.mxu0 %v2006
  %v2083 = vpop.f32.mrf.mxu0
  %v2084 = vadd.f32 0.0, %v2083
  %v2085 = vpop.f32.mrf.mxu0
  %2086 = vmatprep.mubr.f32.mxu0 0.0
  %2087 = vmatmul.mubr.f32.gmra.mxu0 %v2008
  %v2088 = vpop.f32.mrf.mxu0
  %v2089 = vadd.f32 0.0, %v2088
  %v2090 = vpop.f32.mrf.mxu0
  %2091 = vmatprep.mubr.f32.mxu0 0.0
  %2092 = vmatmul.mubr.f32.gmra.mxu0 %v2010
  %v2093 = vpop.f32.mrf.mxu0
  %v2094 = vadd.f32 0.0, %v2093
  %v2095 = vpop.f32.mrf.mxu0
  %2096 = vdwg.mxu0
  %v2097 = vadd.f32 %v1979, %v2079
  %v2098 = vadd.f32 %v1980, %v2084
  %v2099 = vadd.f32 %v1981, %v2089
  %v2100 = vadd.f32 %v1982, %v2094
  %v2101 = vld [vmem:[%s1983 + $0x1] sm:$0xf]
  %v2102 = vld [vmem:[%s1983 + $0x9] sm:$0xf]
  %v2103 = vld [vmem:[%s1983 + $0x11] sm:$0xf]
  %v2104 = vld [vmem:[%s1983 + $0x19] sm:$0xf]
  %v2105 = vld [vmem:[%s1983 + $0x31] sm:$0xf]
  %v2106 = vld [vmem:[%s1983 + $0x39] sm:$0xf]
  %v2107 = vld [vmem:[%s1983 + $0x41] sm:$0xf]
  %v2108 = vld [vmem:[%s1983 + $0x49] sm:$0xf]
  %v2117 = vcombine.low %v2101, %v2102
  %v2118 = vcombine.low %v2103, %v2104
  %v2119 = vcombine.low %v2105, %v2106
  %v2120 = vcombine.low %v2107, %v2108
  %v2121 = vsel %vm1171, %v2117, 0
  %v2123 = vsel %vm1171, %v2118, 0
  %v2125 = vsel %vm1171, %v2119, 0
  %v2127 = vsel %vm1171, %v2120, 0
  %2129 = vmatprep.subr.mxu0 0.0
  %2130 = vmatpush1.msra.mxu0 0.0
  %2131 = vmatprep.subr.mxu0 0.0
  %2132 = vmatpush1.msra.mxu0 0.0
  %2133 = vmatprep.subr.mxu0 0.0
  %2134 = vmatpush1.msra.mxu0 0.0
  %2135 = vmatprep.subr.mxu0 0.0
  %2136 = vmatpush1.msra.mxu0 0.0
  %2137 = vmatprep.subr.mxu0 0.0
  %2138 = vmatpush1.msra.mxu0 0.0
  %2139 = vmatprep.subr.mxu0 0.0
  %2140 = vmatpush1.msra.mxu0 0.0
  %2141 = vmatprep.subr.mxu0 0.0
  %2142 = vmatpush1.msra.mxu0 0.0
  %2143 = vmatprep.subr.mxu0 0.0
  %2144 = vmatpush1.msra.mxu0 0.0
  %2145 = vmatprep.subr.mxu0 0.0
  %2146 = vmatpush1.msra.mxu0 0.0
  %2147 = vmatprep.subr.mxu0 0.0
  %2148 = vmatpush1.msra.mxu0 0.0
  %2149 = vmatprep.subr.mxu0 0.0
  %2150 = vmatpush1.msra.mxu0 0.0
  %2151 = vmatprep.subr.mxu0 0.0
  %2152 = vmatpush1.msra.mxu0 0.0
  %2153 = vmatprep.subr.mxu0 0.0
  %2154 = vmatpush1.msra.mxu0 0.0
  %2155 = vmatprep.subr.mxu0 0.0
  %2156 = vmatpush1.msra.mxu0 0.0
  %2157 = vmatprep.subr.mxu0 0.0
  %2158 = vmatpush1.msra.mxu0 %v1286
  %2159 = vmatprep.subr.mxu0 0.0
  %2160 = vmatpush1.msra.mxu0 %v1285
  %2161 = vmatprep.subr.mxu0 0.0
  %2162 = vmatpush2.msra.mxu0 0.0
  %2163 = vmatprep.subr.mxu0 0.0
  %2164 = vmatpush2.msra.mxu0 0.0
  %2165 = vmatprep.subr.mxu0 0.0
  %2166 = vmatpush2.msra.mxu0 0.0
  %2167 = vmatprep.subr.mxu0 0.0
  %2168 = vmatpush2.msra.mxu0 0.0
  %2169 = vmatprep.subr.mxu0 0.0
  %2170 = vmatpush2.msra.mxu0 0.0
  %2171 = vmatprep.subr.mxu0 0.0
  %2172 = vmatpush2.msra.mxu0 0.0
  %2173 = vmatprep.subr.mxu0 0.0
  %2174 = vmatpush2.msra.mxu0 0.0
  %2175 = vmatprep.subr.mxu0 0.0
  %2176 = vmatpush2.msra.mxu0 0.0
  %2177 = vmatprep.subr.mxu0 0.0
  %2178 = vmatpush2.msra.mxu0 0.0
  %2179 = vmatprep.subr.mxu0 0.0
  %2180 = vmatpush2.msra.mxu0 0.0
  %2181 = vmatprep.subr.mxu0 0.0
  %2182 = vmatpush2.msra.mxu0 0.0
  %2183 = vmatprep.subr.mxu0 0.0
  %2184 = vmatpush2.msra.mxu0 0.0
  %2185 = vmatprep.subr.mxu0 0.0
  %2186 = vmatpush2.msra.mxu0 0.0
  %2187 = vmatprep.subr.mxu0 0.0
  %2188 = vmatpush2.msra.mxu0 0.0
  %2189 = vmatprep.subr.mxu0 0.0
  %2190 = vmatpush2.msra.mxu0 0.0
  %2191 = vmatprep.subr.mxu0 0.0
  %2192 = vmatpush2.msra.mxu0 0.0
  %2193 = vmatprep.mubr.f32.mxu0 0.0
  %2194 = vmatmul.mubr.f32.gmra.mxu0 %v2121
  %v2195 = vpop.f32.mrf.mxu0
  %v2196 = vadd.f32 0.0, %v2195
  %v2197 = vpop.f32.mrf.mxu0
  %2198 = vmatprep.mubr.f32.mxu0 0.0
  %2199 = vmatmul.mubr.f32.gmra.mxu0 %v2123
  %v2200 = vpop.f32.mrf.mxu0
  %v2201 = vadd.f32 0.0, %v2200
  %v2202 = vpop.f32.mrf.mxu0
  %2203 = vmatprep.mubr.f32.mxu0 0.0
  %2204 = vmatmul.mubr.f32.gmra.mxu0 %v2125
  %v2205 = vpop.f32.mrf.mxu0
  %v2206 = vadd.f32 0.0, %v2205
  %v2207 = vpop.f32.mrf.mxu0
  %2208 = vmatprep.mubr.f32.mxu0 0.0
  %2209 = vmatmul.mubr.f32.gmra.mxu0 %v2127
  %v2210 = vpop.f32.mrf.mxu0
  %v2211 = vadd.f32 0.0, %v2210
  %v2212 = vpop.f32.mrf.mxu0
  %2213 = vdwg.mxu0
  %v2214 = vadd.f32 %v2097, %v2196
  %v2215 = vadd.f32 %v2098, %v2201
  %v2216 = vadd.f32 %v2099, %v2206
  %v2217 = vadd.f32 %v2100, %v2211
  %v2218 = vld [vmem:[%s1983 + $0x2] sm:$0xf]
  %v2219 = vld [vmem:[%s1983 + $0xa] sm:$0xf]
  %v2220 = vld [vmem:[%s1983 + $0x12] sm:$0xf]
  %v2221 = vld [vmem:[%s1983 + $0x1a] sm:$0xf]
  %v2222 = vld [vmem:[%s1983 + $0x32] sm:$0xf]
  %v2223 = vld [vmem:[%s1983 + $0x3a] sm:$0xf]
  %v2224 = vld [vmem:[%s1983 + $0x42] sm:$0xf]
  %v2225 = vld [vmem:[%s1983 + $0x4a] sm:$0xf]
  %v2234 = vcombine.low %v2218, %v2219
  %v2235 = vcombine.low %v2220, %v2221
  %v2236 = vcombine.low %v2222, %v2223
  %v2237 = vcombine.low %v2224, %v2225
  %v2238 = vsel %vm1171, %v2234, 0
  %v2240 = vsel %vm1171, %v2235, 0
  %v2242 = vsel %vm1171, %v2236, 0
  %v2244 = vsel %vm1171, %v2237, 0
  %2246 = vmatprep.subr.mxu0 0.0
  %2247 = vmatpush1.msra.mxu0 0.0
  %2248 = vmatprep.subr.mxu0 0.0
  %2249 = vmatpush1.msra.mxu0 0.0
  %2250 = vmatprep.subr.mxu0 0.0
  %2251 = vmatpush1.msra.mxu0 0.0
  %2252 = vmatprep.subr.mxu0 0.0
  %2253 = vmatpush1.msra.mxu0 0.0
  %2254 = vmatprep.subr.mxu0 0.0
  %2255 = vmatpush1.msra.mxu0 0.0
  %2256 = vmatprep.subr.mxu0 0.0
  %2257 = vmatpush1.msra.mxu0 0.0
  %2258 = vmatprep.subr.mxu0 0.0
  %2259 = vmatpush1.msra.mxu0 0.0
  %2260 = vmatprep.subr.mxu0 0.0
  %2261 = vmatpush1.msra.mxu0 0.0
  %2262 = vmatprep.subr.mxu0 0.0
  %2263 = vmatpush1.msra.mxu0 0.0
  %2264 = vmatprep.subr.mxu0 0.0
  %2265 = vmatpush1.msra.mxu0 0.0
  %2266 = vmatprep.subr.mxu0 0.0
  %2267 = vmatpush1.msra.mxu0 0.0
  %2268 = vmatprep.subr.mxu0 0.0
  %2269 = vmatpush1.msra.mxu0 0.0
  %2270 = vmatprep.subr.mxu0 0.0
  %2271 = vmatpush1.msra.mxu0 0.0
  %2272 = vmatprep.subr.mxu0 0.0
  %2273 = vmatpush1.msra.mxu0 0.0
  %2274 = vmatprep.subr.mxu0 0.0
  %2275 = vmatpush1.msra.mxu0 %v1288
  %2276 = vmatprep.subr.mxu0 0.0
  %2277 = vmatpush1.msra.mxu0 %v1287
  %2278 = vmatprep.subr.mxu0 0.0
  %2279 = vmatpush2.msra.mxu0 0.0
  %2280 = vmatprep.subr.mxu0 0.0
  %2281 = vmatpush2.msra.mxu0 0.0
  %2282 = vmatprep.subr.mxu0 0.0
  %2283 = vmatpush2.msra.mxu0 0.0
  %2284 = vmatprep.subr.mxu0 0.0
  %2285 = vmatpush2.msra.mxu0 0.0
  %2286 = vmatprep.subr.mxu0 0.0
  %2287 = vmatpush2.msra.mxu0 0.0
  %2288 = vmatprep.subr.mxu0 0.0
  %2289 = vmatpush2.msra.mxu0 0.0
  %2290 = vmatprep.subr.mxu0 0.0
  %2291 = vmatpush2.msra.mxu0 0.0
  %2292 = vmatprep.subr.mxu0 0.0
  %2293 = vmatpush2.msra.mxu0 0.0
  %2294 = vmatprep.subr.mxu0 0.0
  %2295 = vmatpush2.msra.mxu0 0.0
  %2296 = vmatprep.subr.mxu0 0.0
  %2297 = vmatpush2.msra.mxu0 0.0
  %2298 = vmatprep.subr.mxu0 0.0
  %2299 = vmatpush2.msra.mxu0 0.0
  %2300 = vmatprep.subr.mxu0 0.0
  %2301 = vmatpush2.msra.mxu0 0.0
  %2302 = vmatprep.subr.mxu0 0.0
  %2303 = vmatpush2.msra.mxu0 0.0
  %2304 = vmatprep.subr.mxu0 0.0
  %2305 = vmatpush2.msra.mxu0 0.0
  %2306 = vmatprep.subr.mxu0 0.0
  %2307 = vmatpush2.msra.mxu0 0.0
  %2308 = vmatprep.subr.mxu0 0.0
  %2309 = vmatpush2.msra.mxu0 0.0
  %2310 = vmatprep.mubr.f32.mxu0 0.0
  %2311 = vmatmul.mubr.f32.gmra.mxu0 %v2238
  %v2312 = vpop.f32.mrf.mxu0
  %v2313 = vadd.f32 0.0, %v2312
  %v2314 = vpop.f32.mrf.mxu0
  %2315 = vmatprep.mubr.f32.mxu0 0.0
  %2316 = vmatmul.mubr.f32.gmra.mxu0 %v2240
  %v2317 = vpop.f32.mrf.mxu0
  %v2318 = vadd.f32 0.0, %v2317
  %v2319 = vpop.f32.mrf.mxu0
  %2320 = vmatprep.mubr.f32.mxu0 0.0
  %2321 = vmatmul.mubr.f32.gmra.mxu0 %v2242
  %v2322 = vpop.f32.mrf.mxu0
  %v2323 = vadd.f32 0.0, %v2322
  %v2324 = vpop.f32.mrf.mxu0
  %2325 = vmatprep.mubr.f32.mxu0 0.0
  %2326 = vmatmul.mubr.f32.gmra.mxu0 %v2244
  %v2327 = vpop.f32.mrf.mxu0
  %v2328 = vadd.f32 0.0, %v2327
  %v2329 = vpop.f32.mrf.mxu0
  %2330 = vdwg.mxu0
  %v2331 = vadd.f32 %v2214, %v2313
  %v2332 = vadd.f32 %v2215, %v2318
  %v2333 = vadd.f32 %v2216, %v2323
  %v2334 = vadd.f32 %v2217, %v2328
  %v2335 = vld [vmem:[%s5] sm:$0x1]
  %v2336 = vld [vmem:[%s6] sm:$0x1]
  %v2337 = vsel %vm1171, %v2331, 0.0
  %v2338 = vsel %vm1171, %v2332, 0.0
  %v2339 = vadd.f32 %v2337, %v2338
  %v2340 = vsel %vm1171, %v2333, 0.0
  %v2341 = vadd.f32 %v2339, %v2340
  %v2342 = vsel %vm1171, %v2334, 0.0
  %v2343 = vadd.f32 %v2341, %v2342
  %v2344 = vrot.slane %v2343, 4
  %v2345 = vadd.f32 %v2343, %v2344
  %v2346 = vrot.slane %v2345, 2
  %v2347 = vadd.f32 %v2345, %v2346
  %v2348 = vrot.slane %v2347, 1
  %v2349 = vadd.f32 %v2347, %v2348
  %v2350 = vmul.f32 %v2349, 0.03125
  %v2351 = vmul.f32 %v2331, %v2331
  %v2352 = vmul.f32 %v2332, %v2332
  %v2353 = vmul.f32 %v2333, %v2333
  %v2354 = vmul.f32 %v2334, %v2334
  %v2355 = vsel %vm1171, %v2351, 0.0
  %v2356 = vsel %vm1171, %v2352, 0.0
  %v2357 = vadd.f32 %v2355, %v2356
  %v2358 = vsel %vm1171, %v2353, 0.0
  %v2359 = vadd.f32 %v2357, %v2358
  %v2360 = vsel %vm1171, %v2354, 0.0
  %v2361 = vadd.f32 %v2359, %v2360
  %v2362 = vrot.slane %v2361, 4
  %v2363 = vadd.f32 %v2361, %v2362
  %v2364 = vrot.slane %v2363, 2
  %v2365 = vadd.f32 %v2363, %v2364
  %v2366 = vrot.slane %v2365, 1
  %v2367 = vadd.f32 %v2365, %v2366
  %v2368 = vmul.f32 %v2367, 0.03125
  %v2369 = vmul.f32 %v2350, %v2350
  %v2370 = vsub.f32 %v2368, %v2369
  %v2371 = vmax.f32 %v2370, 0.0
  %v2372 = vadd.f32 %v2371, 1e-05
  %v2373 = vrsqrt.pop %v2372
  %v2374 = vmul.f32 %v2335, %v2373
  %v2375 = vmul.f32 %v2350, %v2374
  %v2376 = vsub.f32 %v2336, %v2375
  %v2378 = vlaneseq
  %v2379 = vshrl.u32 %v2378, 7
  %v2380 = vsub.s32 0, %v2379
  %v2381 = vrot.slane %v2374, %v2380
  %v2383 = vmul.f32 %v2331, %v2381
  %v2384 = vmul.f32 %v2332, %v2381
  %v2385 = vmul.f32 %v2333, %v2381
  %v2386 = vmul.f32 %v2334, %v2381
  %v2388 = vlaneseq
  %v2389 = vshrl.u32 %v2388, 7
  %v2390 = vsub.s32 0, %v2389
  %v2391 = vrot.slane %v2376, %v2390
  %v2393 = vadd.f32 %v2383, %v2391
  %v2394 = vadd.f32 %v2384, %v2391
  %v2395 = vadd.f32 %v2385, %v2391
  %v2396 = vadd.f32 %v2386, %v2391
  %v2397 = vmax.f32 %v2393, 0.0
  %v2398 = vmax.f32 %v2394, 0.0
  %v2399 = vmax.f32 %v2395, 0.0
  %v2400 = vmax.f32 %v2396, 0.0
  %v2405 = vcombine.high %v2397, %v2397
  %v2406 = vcombine.high %v2398, %v2398
  %v2407 = vcombine.high %v2399, %v2399
  %v2408 = vcombine.high %v2400, %v2400
  %2413 = vst.msk [vmem:[%s7] sm:$0xf] %vm1262, %v2397
  %2414 = vst.msk [vmem:[%s7 + $0x4] sm:$0xf] %vm1262, %v2405
  %2415 = vst.msk [vmem:[%s7 + $0x8] sm:$0xf] %vm1262, %v2398
  %2416 = vst.msk [vmem:[%s7 + $0xc] sm:$0xf] %vm1262, %v2406
  %2417 = vst.msk [vmem:[%s7 + $0x10] sm:$0xf] %vm1262, %v2399
  %2418 = vst.msk [vmem:[%s7 + $0x14] sm:$0xf] %vm1262, %v2407
  %2419 = vst.msk [vmem:[%s7 + $0x18] sm:$0xf] %vm1262, %v2400
  %2420 = vst.msk [vmem:[%s7 + $0x1c] sm:$0xf] %vm1262, %v2408
  // Predicated region
  $region30: #{encoder_forward.4} parent=0 // pred_check
    _
  $region31: #{encoder_forward.4} parent=0 // pred_check_branch
    %2422 = sbr.rel (0) target = $region33
  $region32: #{encoder_forward.4} parent=0 // pred_region
    _
  $region33: #{encoder_forward.4} parent=0 // pred_fallthru
    _
  // Predicated region
  $region34: #{encoder_forward.4} parent=0 // pred_check
    _
  $region35: #{encoder_forward.4} parent=0 // pred_check_branch
    %2424 = sbr.rel (0) target = $region37
  $region36: #{encoder_forward.4} parent=0 // pred_region
    _
  $region37: #{encoder_forward.4} parent=0 // pred_fallthru
    _

// kernel: encoder_forward.3
$region0: #{encoder_forward.3}
  #allocation0 [shape = 'u32[]', space=smem, size = 0x4, offset = 0x4, fixed_abs, tag = 'smem constant byte address 0x4 - core index']
  #allocation1 [shape = 'u32[144,128]{1,0:T(1,128)}', space=vmem, size = 0x12000, scoped, tag = 'internal scratch']
  #allocation2 [shape = 'f32[2,10,10,4]{3,2,1,0:T(8,128)}', space=vmem, size = 0x28000, scoped, tag = 'scratch operand']
  #allocation3 [shape = 'f32[2,10,10,8]{3,2,1,0:T(8,128)}', space=vmem, size = 0x28000, scoped, tag = 'scratch operand']
  %s0 = inlined_call_operand.vmem [shape: f32[2,16,8,8], index: 0, kind: input, shape index: {}]
  %s1 = inlined_call_operand.vmem [shape: f32[9,4,8], index: 1, kind: input, shape index: {}]
  %s2 = inlined_call_operand.vmem [shape: f32[1,8], index: 2, kind: input, shape index: {}]
  %s3 = inlined_call_operand.vmem [shape: f32[1,8], index: 3, kind: input, shape index: {}]
  %s4 = inlined_call_operand.vmem [shape: f32[9,8,8], index: 4, kind: input, shape index: {}]
  %s5 = inlined_call_operand.vmem [shape: f32[1,8], index: 5, kind: input, shape index: {}]
  %s6 = inlined_call_operand.vmem [shape: f32[1,8], index: 6, kind: input, shape index: {}]
  %s7 = inlined_call_operand.vmem [shape: f32[2,8,8,8], index: 7, kind: output, shape index: {}]
  %s8 = sld [smem:[#allocation0]]
  $region38: #{encoder_forward.3} parent=0
    _
  %s10 = ssub.s32 1, %s8
  %s11 = scalar_select 0, %s10, %s8
  // Predicated region
  $region2: #{encoder_forward.3} parent=0 // pred_check
    _
  $region3: #{encoder_forward.3} parent=0 // pred_check_branch
    %13 = sbr.rel (0) target = $region5
  $region4: #{encoder_forward.3} parent=0 // pred_region
    _
  $region5: #{encoder_forward.3} parent=0 // pred_fallthru
    _
  // Predicated region
  $region6: #{encoder_forward.3} parent=0 // pred_check
    _
  $region7: #{encoder_forward.3} parent=0 // pred_check_branch
    %15 = sbr.rel (0) target = $region9
  $region8: #{encoder_forward.3} parent=0 // pred_region
    _
  $region9: #{encoder_forward.3} parent=0 // pred_fallthru
    _
  // Predicated region
  $region10: #{encoder_forward.3} parent=0 // pred_check
    _
  $region11: #{encoder_forward.3} parent=0 // pred_check_branch
    %17 = sbr.rel (0) target = $region13
  $region12: #{encoder_forward.3} parent=0 // pred_region
    _
  $region13: #{encoder_forward.3} parent=0 // pred_fallthru
    _
  // Predicated region
  $region14: #{encoder_forward.3} parent=0 // pred_check
    _
  $region15: #{encoder_forward.3} parent=0 // pred_check_branch
    %19 = sbr.rel (0) target = $region17
  $region16: #{encoder_forward.3} parent=0 // pred_region
    _
  $region17: #{encoder_forward.3} parent=0 // pred_fallthru
    _
  // Predicated region
  $region18: #{encoder_forward.3} parent=0 // pred_check
    _
  $region19: #{encoder_forward.3} parent=0 // pred_check_branch
    %21 = sbr.rel (0) target = $region21
  $region20: #{encoder_forward.3} parent=0 // pred_region
    _
  $region21: #{encoder_forward.3} parent=0 // pred_fallthru
    _
  // Predicated region
  $region22: #{encoder_forward.3} parent=0 // pred_check
    _
  $region23: #{encoder_forward.3} parent=0 // pred_check_branch
    %23 = sbr.rel (0) target = $region25
  $region24: #{encoder_forward.3} parent=0 // pred_region
    _
  $region25: #{encoder_forward.3} parent=0 // pred_fallthru
    _
  // Predicated region
  $region26: #{encoder_forward.3} parent=0 // pred_check
    _
  $region27: #{encoder_forward.3} parent=0 // pred_check_branch
    %25 = sbr.rel (0) target = $region29
  $region28: #{encoder_forward.3} parent=0 // pred_region
    _
  $region29: #{encoder_forward.3} parent=0 // pred_fallthru
    _
  %v26 = vld [vmem:[%s0] sm:$0xff]
  %v27 = vld [vmem:[%s0 + $0x8] sm:$0xff]
  %v28 = vld [vmem:[%s0 + $0x10] sm:$0xff]
  %v29 = vld [vmem:[%s0 + $0x18] sm:$0xff]
  %v30 = vld [vmem:[%s0 + $0x20] sm:$0xff]
  %v31 = vld [vmem:[%s0 + $0x28] sm:$0xff]
  %v32 = vld [vmem:[%s0 + $0x30] sm:$0xff]
  %v33 = vld [vmem:[%s0 + $0x38] sm:$0xff]
  %v34 = vld [vmem:[%s0 + $0x40] sm:$0xff]
  %v35 = vld [vmem:[%s0 + $0x48] sm:$0xff]
  %v36 = vld [vmem:[%s0 + $0x50] sm:$0xff]
  %v37 = vld [vmem:[%s0 + $0x58] sm:$0xff]
  %v38 = vld [vmem:[%s0 + $0x60] sm:$0xff]
  %v39 = vld [vmem:[%s0 + $0x68] sm:$0xff]
  %v40 = vld [vmem:[%s0 + $0x70] sm:$0xff]
  %v41 = vld [vmem:[%s0 + $0x78] sm:$0xff]
  %v42 = vld [vmem:[%s0 + $0x80] sm:$0xff]
  %v43 = vld [vmem:[%s0 + $0x88] sm:$0xff]
  %v44 = vld [vmem:[%s0 + $0x90] sm:$0xff]
  %v45 = vld [vmem:[%s0 + $0x98] sm:$0xff]
  %v46 = vld [vmem:[%s0 + $0xa0] sm:$0xff]
  %v47 = vld [vmem:[%s0 + $0xa8] sm:$0xff]
  %v48 = vld [vmem:[%s0 + $0xb0] sm:$0xff]
  %v49 = vld [vmem:[%s0 + $0xb8] sm:$0xff]
  %v50 = vld [vmem:[%s0 + $0xc0] sm:$0xff]
  %v51 = vld [vmem:[%s0 + $0xc8] sm:$0xff]
  %v52 = vld [vmem:[%s0 + $0xd0] sm:$0xff]
  %v53 = vld [vmem:[%s0 + $0xd8] sm:$0xff]
  %v54 = vld [vmem:[%s0 + $0xe0] sm:$0xff]
  %v55 = vld [vmem:[%s0 + $0xe8] sm:$0xff]
  %v56 = vld [vmem:[%s0 + $0xf0] sm:$0xff]
  %v57 = vld [vmem:[%s0 + $0xf8] sm:$0xff]
  %v58 = vmax.f32 %v26, %v27
  %v59 = vmax.f32 %v28, %v29
  %v60 = vmax.f32 %v30, %v31
  %v61 = vmax.f32 %v32, %v33
  %v62 = vmax.f32 %v34, %v35
  %v63 = vmax.f32 %v36, %v37
  %v64 = vmax.f32 %v38, %v39
  %v65 = vmax.f32 %v40, %v41
  %v66 = vmax.f32 %v42, %v43
  %v67 = vmax.f32 %v44, %v45
  %v68 = vmax.f32 %v46, %v47
  %v69 = vmax.f32 %v48, %v49
  %v70 = vmax.f32 %v50, %v51
  %v71 = vmax.f32 %v52, %v53
  %v72 = vmax.f32 %v54, %v55
  %v73 = vmax.f32 %v56, %v57
  %90 = vrot.lane.b32.xlu0 %v58, 124
  %v91 = vpop.permute.xlu0 %90
  %92 = vrot.lane.b32.xlu0 %v59, 124
  %v93 = vpop.permute.xlu0 %92
  %94 = vrot.lane.b32.xlu0 %v60, 124
  %v95 = vpop.permute.xlu0 %94
  %96 = vrot.lane.b32.xlu0 %v61, 124
  %v97 = vpop.permute.xlu0 %96
  %98 = vrot.lane.b32.xlu0 %v62, 124
  %v99 = vpop.permute.xlu0 %98
  %100 = vrot.lane.b32.xlu0 %v63, 124
  %v101 = vpop.permute.xlu0 %100
  %102 = vrot.lane.b32.xlu0 %v64, 124
  %v103 = vpop.permute.xlu0 %102
  %104 = vrot.lane.b32.xlu0 %v65, 124
  %v105 = vpop.permute.xlu0 %104
  %106 = vrot.lane.b32.xlu0 %v66, 124
  %v107 = vpop.permute.xlu0 %106
  %108 = vrot.lane.b32.xlu0 %v67, 124
  %v109 = vpop.permute.xlu0 %108
  %110 = vrot.lane.b32.xlu0 %v68, 124
  %v111 = vpop.permute.xlu0 %110
  %112 = vrot.lane.b32.xlu0 %v69, 124
  %v113 = vpop.permute.xlu0 %112
  %114 = vrot.lane.b32.xlu0 %v70, 124
  %v115 = vpop.permute.xlu0 %114
  %116 = vrot.lane.b32.xlu0 %v71, 124
  %v117 = vpop.permute.xlu0 %116
  %118 = vrot.lane.b32.xlu0 %v72, 124
  %v119 = vpop.permute.xlu0 %118
  %120 = vrot.lane.b32.xlu0 %v73, 124
  %v121 = vpop.permute.xlu0 %120
  %v138 = vmax.f32 %v58, %v91
  %v139 = vmax.f32 %v59, %v93
  %v140 = vmax.f32 %v60, %v95
  %v141 = vmax.f32 %v61, %v97
  %v142 = vmax.f32 %v62, %v99
  %v143 = vmax.f32 %v63, %v101
  %v144 = vmax.f32 %v64, %v103
  %v145 = vmax.f32 %v65, %v105
  %v146 = vmax.f32 %v66, %v107
  %v147 = vmax.f32 %v67, %v109
  %v148 = vmax.f32 %v68, %v111
  %v149 = vmax.f32 %v69, %v113
  %v150 = vmax.f32 %v70, %v115
  %v151 = vmax.f32 %v71, %v117
  %v152 = vmax.f32 %v72, %v119
  %v153 = vmax.f32 %v73, %v121
  %vm154 = vcmask 31744
  %155 = vst.msk [vmem:[#allocation2] sm:$0xff] %vm154, 0.0
  %vm156 = vcmask 25600
  %157 = vst.msk [vmem:[#allocation2 + $0x8] sm:$0x3] %vm156, 0.0
  %158 = vst.msk [vmem:[#allocation2 + $0x10] sm:$0xff] %vm154, 0.0
  %159 = vst.msk [vmem:[#allocation2 + $0x18] sm:$0x3] %vm156, 0.0
  %160 = vst.msk [vmem:[#allocation2 + $0x20] sm:$0xff] %vm154, 0.0
  %161 = vst.msk [vmem:[#allocation2 + $0x28] sm:$0x3] %vm156, 0.0
  %162 = vst.msk [vmem:[#allocation2 + $0x30] sm:$0xff] %vm154, 0.0
  %163 = vst.msk [vmem:[#allocation2 + $0x38] sm:$0x3] %vm156, 0.0
  %164 = vst.msk [vmem:[#allocation2 + $0x40] sm:$0xff] %vm154, 0.0
  %165 = vst.msk [vmem:[#allocation2 + $0x48] sm:$0x3] %vm156, 0.0
  %166 = vst.msk [vmem:[#allocation2 + $0x50] sm:$0xff] %vm154, 0.0
  %167 = vst.msk [vmem:[#allocation2 + $0x58] sm:$0x3] %vm156, 0.0
  %168 = vst.msk [vmem:[#allocation2 + $0x60] sm:$0xff] %vm154, 0.0
  %169 = vst.msk [vmem:[#allocation2 + $0x68] sm:$0x3] %vm156, 0.0
  %170 = vst.msk [vmem:[#allocation2 + $0x70] sm:$0xff] %vm154, 0.0
  %171 = vst.msk [vmem:[#allocation2 + $0x78] sm:$0x3] %vm156, 0.0
  %172 = vst.msk [vmem:[#allocation2 + $0x80] sm:$0xff] %vm154, 0.0
  %173 = vst.msk [vmem:[#allocation2 + $0x88] sm:$0x3] %vm156, 0.0
  %174 = vst.msk [vmem:[#allocation2 + $0x90] sm:$0xff] %vm154, 0.0
  %175 = vst.msk [vmem:[#allocation2 + $0x98] sm:$0x3] %vm156, 0.0
  %176 = vst.msk [vmem:[#allocation2 + $0xa0] sm:$0xff] %vm154, 0.0
  %177 = vst.msk [vmem:[#allocation2 + $0xa8] sm:$0x3] %vm156, 0.0
  %178 = vst.msk [vmem:[#allocation2 + $0xb0] sm:$0xff] %vm154, 0.0
  %179 = vst.msk [vmem:[#allocation2 + $0xb8] sm:$0x3] %vm156, 0.0
  %180 = vst.msk [vmem:[#allocation2 + $0xc0] sm:$0xff] %vm154, 0.0
  %181 = vst.msk [vmem:[#allocation2 + $0xc8] sm:$0x3] %vm156, 0.0
  %182 = vst.msk [vmem:[#allocation2 + $0xd0] sm:$0xff] %vm154, 0.0
  %183 = vst.msk [vmem:[#allocation2 + $0xd8] sm:$0x3] %vm156, 0.0
  %184 = vst.msk [vmem:[#allocation2 + $0xe0] sm:$0xff] %vm154, 0.0
  %185 = vst.msk [vmem:[#allocation2 + $0xe8] sm:$0x3] %vm156, 0.0
  %186 = vst.msk [vmem:[#allocation2 + $0xf0] sm:$0xff] %vm154, 0.0
  %187 = vst.msk [vmem:[#allocation2 + $0xf8] sm:$0x3] %vm156, 0.0
  %188 = vst.msk [vmem:[#allocation2 + $0x100] sm:$0xff] %vm154, 0.0
  %189 = vst.msk [vmem:[#allocation2 + $0x108] sm:$0x3] %vm156, 0.0
  %190 = vst.msk [vmem:[#allocation2 + $0x110] sm:$0xff] %vm154, 0.0
  %191 = vst.msk [vmem:[#allocation2 + $0x118] sm:$0x3] %vm156, 0.0
  %192 = vst.msk [vmem:[#allocation2 + $0x120] sm:$0xff] %vm154, 0.0
  %193 = vst.msk [vmem:[#allocation2 + $0x128] sm:$0x3] %vm156, 0.0
  %194 = vst.msk [vmem:[#allocation2 + $0x130] sm:$0xff] %vm154, 0.0
  %195 = vst.msk [vmem:[#allocation2 + $0x138] sm:$0x3] %vm156, 0.0
  %s196 = scalar_lea.vmem [#allocation2], 16
  %197 = vst.msk [vmem:[%s196 + $0x1] sm:$0xff] %vm154, %v138
  %198 = vst.msk [vmem:[%s196 + $0x11] sm:$0xff] %vm154, %v139
  %199 = vst.msk [vmem:[%s196 + $0x21] sm:$0xff] %vm154, %v140
  %200 = vst.msk [vmem:[%s196 + $0x31] sm:$0xff] %vm154, %v141
  %201 = vst.msk [vmem:[%s196 + $0x41] sm:$0xff] %vm154, %v142
  %202 = vst.msk [vmem:[%s196 + $0x51] sm:$0xff] %vm154, %v143
  %203 = vst.msk [vmem:[%s196 + $0x61] sm:$0xff] %vm154, %v144
  %204 = vst.msk [vmem:[%s196 + $0x71] sm:$0xff] %vm154, %v145
  %205 = vst.msk [vmem:[%s196 + $0xa1] sm:$0xff] %vm154, %v146
  %206 = vst.msk [vmem:[%s196 + $0xb1] sm:$0xff] %vm154, %v147
  %207 = vst.msk [vmem:[%s196 + $0xc1] sm:$0xff] %vm154, %v148
  %208 = vst.msk [vmem:[%s196 + $0xd1] sm:$0xff] %vm154, %v149
  %209 = vst.msk [vmem:[%s196 + $0xe1] sm:$0xff] %vm154, %v150
  %210 = vst.msk [vmem:[%s196 + $0xf1] sm:$0xff] %vm154, %v151
  %211 = vst.msk [vmem:[%s196 + $0x101] sm:$0xff] %vm154, %v152
  %212 = vst.msk [vmem:[%s196 + $0x111] sm:$0xff] %vm154, %v153
  %v213 = vld [vmem:[%s1] sm:$0xf]
  %v214 = vld [vmem:[%s1 + $0x4] sm:$0xf]
  %v215 = vld [vmem:[%s1 + $0x8] sm:$0xf]
  %v216 = vld [vmem:[%s1 + $0xc] sm:$0xf]
  %v217 = vld [vmem:[%s1 + $0x10] sm:$0xf]
  %v218 = vld [vmem:[%s1 + $0x14] sm:$0xf]
  %v219 = vld [vmem:[%s1 + $0x18] sm:$0xf]
  %v220 = vld [vmem:[%s1 + $0x1c] sm:$0xf]
  %v221 = vld [vmem:[%s1 + $0x20] sm:$0xf]
  %v222 = vld [vmem:[#allocation2] sm:$0xff]
  %v223 = vld [vmem:[#allocation2 + $0x10] sm:$0xff]
  %v224 = vld [vmem:[#allocation2 + $0x20] sm:$0xff]
  %v225 = vld [vmem:[#allocation2 + $0x30] sm:$0xff]
  %v226 = vld [vmem:[#allocation2 + $0x40] sm:$0xff]
  %v227 = vld [vmem:[#allocation2 + $0x50] sm:$0xff]
  %v228 = vld [vmem:[#allocation2 + $0x60] sm:$0xff]
  %v229 = vld [vmem:[#allocation2 + $0x70] sm:$0xff]
  %v230 = vld [vmem:[#allocation2 + $0xa0] sm:$0xff]
  %v231 = vld [vmem:[#allocation2 + $0xb0] sm:$0xff]
  %v232 = vld [vmem:[#allocation2 + $0xc0] sm:$0xff]
  %v233 = vld [vmem:[#allocation2 + $0xd0] sm:$0xff]
  %v234 = vld [vmem:[#allocation2 + $0xe0] sm:$0xff]
  %v235 = vld [vmem:[#allocation2 + $0xf0] sm:$0xff]
  %v236 = vld [vmem:[#allocation2 + $0x100] sm:$0xff]
  %v237 = vld [vmem:[#allocation2 + $0x110] sm:$0xff]
  %v238 = vld [vmem:[#allocation2 + $0x1] sm:$0xff]
  %v239 = vld [vmem:[#allocation2 + $0x11] sm:$0xff]
  %v240 = vld [vmem:[#allocation2 + $0x21] sm:$0xff]
  %v241 = vld [vmem:[#allocation2 + $0x31] sm:$0xff]
  %v242 = vld [vmem:[#allocation2 + $0x41] sm:$0xff]
  %v243 = vld [vmem:[#allocation2 + $0x51] sm:$0xff]
  %v244 = vld [vmem:[#allocation2 + $0x61] sm:$0xff]
  %v245 = vld [vmem:[#allocation2 + $0x71] sm:$0xff]
  %v246 = vld [vmem:[#allocation2 + $0xa1] sm:$0xff]
  %v247 = vld [vmem:[#allocation2 + $0xb1] sm:$0xff]
  %v248 = vld [vmem:[#allocation2 + $0xc1] sm:$0xff]
  %v249 = vld [vmem:[#allocation2 + $0xd1] sm:$0xff]
  %v250 = vld [vmem:[#allocation2 + $0xe1] sm:$0xff]
  %v251 = vld [vmem:[#allocation2 + $0xf1] sm:$0xff]
  %v252 = vld [vmem:[#allocation2 + $0x101] sm:$0xff]
  %v253 = vld [vmem:[#allocation2 + $0x111] sm:$0xff]
  %v255 = vsel %vm154, %v238, 0
  %v258 = vsel %vm154, %v239, 0
  %v261 = vsel %vm154, %v240, 0
  %v264 = vsel %vm154, %v241, 0
  %v267 = vsel %vm154, %v242, 0
  %v270 = vsel %vm154, %v243, 0
  %v273 = vsel %vm154, %v244, 0
  %v276 = vsel %vm154, %v245, 0
  %v279 = vsel %vm154, %v246, 0
  %v282 = vsel %vm154, %v247, 0
  %v285 = vsel %vm154, %v248, 0
  %v288 = vsel %vm154, %v249, 0
  %v291 = vsel %vm154, %v250, 0
  %v294 = vsel %vm154, %v251, 0
  %v297 = vsel %vm154, %v252, 0
  %v300 = vsel %vm154, %v253, 0
  %vm302 = vcmask 1043456
  %v304 = vsel %vm302, %v214, 0
  %306 = vmatprep.subr.mxu0 0.0
  %307 = vmatpush1.msra.mxu0 0.0
  %308 = vmatprep.subr.mxu0 0.0
  %309 = vmatpush1.msra.mxu0 0.0
  %310 = vmatprep.subr.mxu0 0.0
  %311 = vmatpush1.msra.mxu0 0.0
  %312 = vmatprep.subr.mxu0 0.0
  %313 = vmatpush1.msra.mxu0 0.0
  %314 = vmatprep.subr.mxu0 0.0
  %315 = vmatpush1.msra.mxu0 0.0
  %316 = vmatprep.subr.mxu0 0.0
  %317 = vmatpush1.msra.mxu0 0.0
  %318 = vmatprep.subr.mxu0 0.0
  %319 = vmatpush1.msra.mxu0 0.0
  %320 = vmatprep.subr.mxu0 0.0
  %321 = vmatpush1.msra.mxu0 0.0
  %322 = vmatprep.subr.mxu0 0.0
  %323 = vmatpush1.msra.mxu0 0.0
  %324 = vmatprep.subr.mxu0 0.0
  %325 = vmatpush1.msra.mxu0 0.0
  %326 = vmatprep.subr.mxu0 0.0
  %327 = vmatpush1.msra.mxu0 0.0
  %328 = vmatprep.subr.mxu0 0.0
  %329 = vmatpush1.msra.mxu0 0.0
  %330 = vmatprep.subr.mxu0 0.0
  %331 = vmatpush1.msra.mxu0 0.0
  %332 = vmatprep.subr.mxu0 0.0
  %333 = vmatpush1.msra.mxu0 0.0
  %334 = vmatprep.subr.mxu0 0.0
  %335 = vmatpush1.msra.mxu0 0.0
  %336 = vmatprep.subr.mxu0 0.0
  %337 = vmatpush1.msra.mxu0 %v304
  %338 = vmatprep.subr.mxu0 0.0
  %339 = vmatpush2.msra.mxu0 0.0
  %340 = vmatprep.subr.mxu0 0.0
  %341 = vmatpush2.msra.mxu0 0.0
  %342 = vmatprep.subr.mxu0 0.0
  %343 = vmatpush2.msra.mxu0 0.0
  %344 = vmatprep.subr.mxu0 0.0
  %345 = vmatpush2.msra.mxu0 0.0
  %346 = vmatprep.subr.mxu0 0.0
  %347 = vmatpush2.msra.mxu0 0.0
  %348 = vmatprep.subr.mxu0 0.0
  %349 = vmatpush2.msra.mxu0 0.0
  %350 = vmatprep.subr.mxu0 0.0
  %351 = vmatpush2.msra.mxu0 0.0
  %352 = vmatprep.subr.mxu0 0.0
  %353 = vmatpush2.msra.mxu0 0.0
  %354 = vmatprep.subr.mxu0 0.0
  %355 = vmatpush2.msra.mxu0 0.0
  %356 = vmatprep.subr.mxu0 0.0
  %357 = vmatpush2.msra.mxu0 0.0
  %358 = vmatprep.subr.mxu0 0.0
  %359 = vmatpush2.msra.mxu0 0.0
  %360 = vmatprep.subr.mxu0 0.0
  %361 = vmatpush2.msra.mxu0 0.0
  %362 = vmatprep.subr.mxu0 0.0
  %363 = vmatpush2.msra.mxu0 0.0
  %364 = vmatprep.subr.mxu0 0.0
  %365 = vmatpush2.msra.mxu0 0.0
  %366 = vmatprep.subr.mxu0 0.0
  %367 = vmatpush2.msra.mxu0 0.0
  %368 = vmatprep.subr.mxu0 0.0
  %369 = vmatpush2.msra.mxu0 0.0
  %370 = vmatprep.mubr.f32.mxu0 0.0
  %371 = vmatmul.mubr.f32.gmra.mxu0 %v255
  %v372 = vpop.f32.mrf.mxu0
  %v373 = vadd.f32 0.0, %v372
  %v374 = vpop.f32.mrf.mxu0
  %375 = vmatprep.mubr.f32.mxu0 0.0
  %376 = vmatmul.mubr.f32.gmra.mxu0 %v258
  %v377 = vpop.f32.mrf.mxu0
  %v378 = vadd.f32 0.0, %v377
  %v379 = vpop.f32.mrf.mxu0
  %380 = vmatprep.mubr.f32.mxu0 0.0
  %381 = vmatmul.mubr.f32.gmra.mxu0 %v261
  %v382 = vpop.f32.mrf.mxu0
  %v383 = vadd.f32 0.0, %v382
  %v384 = vpop.f32.mrf.mxu0
  %385 = vmatprep.mubr.f32.mxu0 0.0
  %386 = vmatmul.mubr.f32.gmra.mxu0 %v264
  %v387 = vpop.f32.mrf.mxu0
  %v388 = vadd.f32 0.0, %v387
  %v389 = vpop.f32.mrf.mxu0
  %390 = vmatprep.mubr.f32.mxu0 0.0
  %391 = vmatmul.mubr.f32.gmra.mxu0 %v267
  %v392 = vpop.f32.mrf.mxu0
  %v393 = vadd.f32 0.0, %v392
  %v394 = vpop.f32.mrf.mxu0
  %395 = vmatprep.mubr.f32.mxu0 0.0
  %396 = vmatmul.mubr.f32.gmra.mxu0 %v270
  %v397 = vpop.f32.mrf.mxu0
  %v398 = vadd.f32 0.0, %v397
  %v399 = vpop.f32.mrf.mxu0
  %400 = vmatprep.mubr.f32.mxu0 0.0
  %401 = vmatmul.mubr.f32.gmra.mxu0 %v273
  %v402 = vpop.f32.mrf.mxu0
  %v403 = vadd.f32 0.0, %v402
  %v404 = vpop.f32.mrf.mxu0
  %405 = vmatprep.mubr.f32.mxu0 0.0
  %406 = vmatmul.mubr.f32.gmra.mxu0 %v276
  %v407 = vpop.f32.mrf.mxu0
  %v408 = vadd.f32 0.0, %v407
  %v409 = vpop.f32.mrf.mxu0
  %410 = vmatprep.mubr.f32.mxu0 0.0
  %411 = vmatmul.mubr.f32.gmra.mxu0 %v279
  %v412 = vpop.f32.mrf.mxu0
  %v413 = vadd.f32 0.0, %v412
  %v414 = vpop.f32.mrf.mxu0
  %415 = vmatprep.mubr.f32.mxu0 0.0
  %416 = vmatmul.mubr.f32.gmra.mxu0 %v282
  %v417 = vpop.f32.mrf.mxu0
  %v418 = vadd.f32 0.0, %v417
  %v419 = vpop.f32.mrf.mxu0
  %420 = vmatprep.mubr.f32.mxu0 0.0
  %421 = vmatmul.mubr.f32.gmra.mxu0 %v285
  %v422 = vpop.f32.mrf.mxu0
  %v423 = vadd.f32 0.0, %v422
  %v424 = vpop.f32.mrf.mxu0
  %425 = vmatprep.mubr.f32.mxu0 0.0
  %426 = vmatmul.mubr.f32.gmra.mxu0 %v288
  %v427 = vpop.f32.mrf.mxu0
  %v428 = vadd.f32 0.0, %v427
  %v429 = vpop.f32.mrf.mxu0
  %430 = vmatprep.mubr.f32.mxu0 0.0
  %431 = vmatmul.mubr.f32.gmra.mxu0 %v291
  %v432 = vpop.f32.mrf.mxu0
  %v433 = vadd.f32 0.0, %v432
  %v434 = vpop.f32.mrf.mxu0
  %435 = vmatprep.mubr.f32.mxu0 0.0
  %436 = vmatmul.mubr.f32.gmra.mxu0 %v294
  %v437 = vpop.f32.mrf.mxu0
  %v438 = vadd.f32 0.0, %v437
  %v439 = vpop.f32.mrf.mxu0
  %440 = vmatprep.mubr.f32.mxu0 0.0
  %441 = vmatmul.mubr.f32.gmra.mxu0 %v297
  %v442 = vpop.f32.mrf.mxu0
  %v443 = vadd.f32 0.0, %v442
  %v444 = vpop.f32.mrf.mxu0
  %445 = vmatprep.mubr.f32.mxu0 0.0
  %446 = vmatmul.mubr.f32.gmra.mxu0 %v300
  %v447 = vpop.f32.mrf.mxu0
  %v448 = vadd.f32 0.0, %v447
  %v449 = vpop.f32.mrf.mxu0
  %450 = vdwg.mxu0
  %v452 = vsel %vm154, %v222, 0
  %v455 = vsel %vm154, %v223, 0
  %v458 = vsel %vm154, %v224, 0
  %v461 = vsel %vm154, %v225, 0
  %v464 = vsel %vm154, %v226, 0
  %v467 = vsel %vm154, %v227, 0
  %v470 = vsel %vm154, %v228, 0
  %v473 = vsel %vm154, %v229, 0
  %v476 = vsel %vm154, %v230, 0
  %v479 = vsel %vm154, %v231, 0
  %v482 = vsel %vm154, %v232, 0
  %v485 = vsel %vm154, %v233, 0
  %v488 = vsel %vm154, %v234, 0
  %v491 = vsel %vm154, %v235, 0
  %v494 = vsel %vm154, %v236, 0
  %v497 = vsel %vm154, %v237, 0
  %v500 = vsel %vm302, %v213, 0
  %502 = vmatprep.subr.mxu0 0.0
  %503 = vmatpush1.msra.mxu0 0.0
  %504 = vmatprep.subr.mxu0 0.0
  %505 = vmatpush1.msra.mxu0 0.0
  %506 = vmatprep.subr.mxu0 0.0
  %507 = vmatpush1.msra.mxu0 0.0
  %508 = vmatprep.subr.mxu0 0.0
  %509 = vmatpush1.msra.mxu0 0.0
  %510 = vmatprep.subr.mxu0 0.0
  %511 = vmatpush1.msra.mxu0 0.0
  %512 = vmatprep.subr.mxu0 0.0
  %513 = vmatpush1.msra.mxu0 0.0
  %514 = vmatprep.subr.mxu0 0.0
  %515 = vmatpush1.msra.mxu0 0.0
  %516 = vmatprep.subr.mxu0 0.0
  %517 = vmatpush1.msra.mxu0 0.0
  %518 = vmatprep.subr.mxu0 0.0
  %519 = vmatpush1.msra.mxu0 0.0
  %520 = vmatprep.subr.mxu0 0.0
  %521 = vmatpush1.msra.mxu0 0.0
  %522 = vmatprep.subr.mxu0 0.0
  %523 = vmatpush1.msra.mxu0 0.0
  %524 = vmatprep.subr.mxu0 0.0
  %525 = vmatpush1.msra.mxu0 0.0
  %526 = vmatprep.subr.mxu0 0.0
  %527 = vmatpush1.msra.mxu0 0.0
  %528 = vmatprep.subr.mxu0 0.0
  %529 = vmatpush1.msra.mxu0 0.0
  %530 = vmatprep.subr.mxu0 0.0
  %531 = vmatpush1.msra.mxu0 0.0
  %532 = vmatprep.subr.mxu0 0.0
  %533 = vmatpush1.msra.mxu0 %v500
  %534 = vmatprep.subr.mxu0 0.0
  %535 = vmatpush2.msra.mxu0 0.0
  %536 = vmatprep.subr.mxu0 0.0
  %537 = vmatpush2.msra.mxu0 0.0
  %538 = vmatprep.subr.mxu0 0.0
  %539 = vmatpush2.msra.mxu0 0.0
  %540 = vmatprep.subr.mxu0 0.0
  %541 = vmatpush2.msra.mxu0 0.0
  %542 = vmatprep.subr.mxu0 0.0
  %543 = vmatpush2.msra.mxu0 0.0
  %544 = vmatprep.subr.mxu0 0.0
  %545 = vmatpush2.msra.mxu0 0.0
  %546 = vmatprep.subr.mxu0 0.0
  %547 = vmatpush2.msra.mxu0 0.0
  %548 = vmatprep.subr.mxu0 0.0
  %549 = vmatpush2.msra.mxu0 0.0
  %550 = vmatprep.subr.mxu0 0.0
  %551 = vmatpush2.msra.mxu0 0.0
  %552 = vmatprep.subr.mxu0 0.0
  %553 = vmatpush2.msra.mxu0 0.0
  %554 = vmatprep.subr.mxu0 0.0
  %555 = vmatpush2.msra.mxu0 0.0
  %556 = vmatprep.subr.mxu0 0.0
  %557 = vmatpush2.msra.mxu0 0.0
  %558 = vmatprep.subr.mxu0 0.0
  %559 = vmatpush2.msra.mxu0 0.0
  %560 = vmatprep.subr.mxu0 0.0
  %561 = vmatpush2.msra.mxu0 0.0
  %562 = vmatprep.subr.mxu0 0.0
  %563 = vmatpush2.msra.mxu0 0.0
  %564 = vmatprep.subr.mxu0 0.0
  %565 = vmatpush2.msra.mxu0 0.0
  %566 = vmatprep.mubr.f32.mxu0 0.0
  %567 = vmatmul.mubr.f32.gmra.mxu0 %v452
  %v568 = vpop.f32.mrf.mxu0
  %v569 = vadd.f32 %v373, %v568
  %v570 = vpop.f32.mrf.mxu0
  %571 = vmatprep.mubr.f32.mxu0 0.0
  %572 = vmatmul.mubr.f32.gmra.mxu0 %v455
  %v573 = vpop.f32.mrf.mxu0
  %v574 = vadd.f32 %v378, %v573
  %v575 = vpop.f32.mrf.mxu0
  %576 = vmatprep.mubr.f32.mxu0 0.0
  %577 = vmatmul.mubr.f32.gmra.mxu0 %v458
  %v578 = vpop.f32.mrf.mxu0
  %v579 = vadd.f32 %v383, %v578
  %v580 = vpop.f32.mrf.mxu0
  %581 = vmatprep.mubr.f32.mxu0 0.0
  %582 = vmatmul.mubr.f32.gmra.mxu0 %v461
  %v583 = vpop.f32.mrf.mxu0
  %v584 = vadd.f32 %v388, %v583
  %v585 = vpop.f32.mrf.mxu0
  %586 = vmatprep.mubr.f32.mxu0 0.0
  %587 = vmatmul.mubr.f32.gmra.mxu0 %v464
  %v588 = vpop.f32.mrf.mxu0
  %v589 = vadd.f32 %v393, %v588
  %v590 = vpop.f32.mrf.mxu0
  %591 = vmatprep.mubr.f32.mxu0 0.0
  %592 = vmatmul.mubr.f32.gmra.mxu0 %v467
  %v593 = vpop.f32.mrf.mxu0
  %v594 = vadd.f32 %v398, %v593
  %v595 = vpop.f32.mrf.mxu0
  %596 = vmatprep.mubr.f32.mxu0 0.0
  %597 = vmatmul.mubr.f32.gmra.mxu0 %v470
  %v598 = vpop.f32.mrf.mxu0
  %v599 = vadd.f32 %v403, %v598
  %v600 = vpop.f32.mrf.mxu0
  %601 = vmatprep.mubr.f32.mxu0 0.0
  %602 = vmatmul.mubr.f32.gmra.mxu0 %v473
  %v603 = vpop.f32.mrf.mxu0
  %v604 = vadd.f32 %v408, %v603
  %v605 = vpop.f32.mrf.mxu0
  %606 = vmatprep.mubr.f32.mxu0 0.0
  %607 = vmatmul.mubr.f32.gmra.mxu0 %v476
  %v608 = vpop.f32.mrf.mxu0
  %v609 = vadd.f32 %v413, %v608
  %v610 = vpop.f32.mrf.mxu0
  %611 = vmatprep.mubr.f32.mxu0 0.0
  %612 = vmatmul.mubr.f32.gmra.mxu0 %v479
  %v613 = vpop.f32.mrf.mxu0
  %v614 = vadd.f32 %v418, %v613
  %v615 = vpop.f32.mrf.mxu0
  %616 = vmatprep.mubr.f32.mxu0 0.0
  %617 = vmatmul.mubr.f32.gmra.mxu0 %v482
  %v618 = vpop.f32.mrf.mxu0
  %v619 = vadd.f32 %v423, %v618
  %v620 = vpop.f32.mrf.mxu0
  %621 = vmatprep.mubr.f32.mxu0 0.0
  %622 = vmatmul.mubr.f32.gmra.mxu0 %v485
  %v623 = vpop.f32.mrf.mxu0
  %v624 = vadd.f32 %v428, %v623
  %v625 = vpop.f32.mrf.mxu0
  %626 = vmatprep.mubr.f32.mxu0 0.0
  %627 = vmatmul.mubr.f32.gmra.mxu0 %v488
  %v628 = vpop.f32.mrf.mxu0
  %v629 = vadd.f32 %v433, %v628
  %v630 = vpop.f32.mrf.mxu0
  %631 = vmatprep.mubr.f32.mxu0 0.0
  %632 = vmatmul.mubr.f32.gmra.mxu0 %v491
  %v633 = vpop.f32.mrf.mxu0
  %v634 = vadd.f32 %v438, %v633
  %v635 = vpop.f32.mrf.mxu0
  %636 = vmatprep.mubr.f32.mxu0 0.0
  %637 = vmatmul.mubr.f32.gmra.mxu0 %v494
  %v638 = vpop.f32.mrf.mxu0
  %v639 = vadd.f32 %v443, %v638
  %v640 = vpop.f32.mrf.mxu0
  %641 = vmatprep.mubr.f32.mxu0 0.0
  %642 = vmatmul.mubr.f32.gmra.mxu0 %v497
  %v643 = vpop.f32.mrf.mxu0
  %v644 = vadd.f32 %v448, %v643
  %v645 = vpop.f32.mrf.mxu0
  %646 = vdwg.mxu0
  %v647 = vld [vmem:[#allocation2 + $0x2] sm:$0xff]
  %v648 = vld [vmem:[#allocation2 + $0x12] sm:$0xff]
  %v649 = vld [vmem:[#allocation2 + $0x22] sm:$0xff]
  %v650 = vld [vmem:[#allocation2 + $0x32] sm:$0xff]
  %v651 = vld [vmem:[#allocation2 + $0x42] sm:$0xff]
  %v652 = vld [vmem:[#allocation2 + $0x52] sm:$0xff]
  %v653 = vld [vmem:[#allocation2 + $0x62] sm:$0xff]
  %v654 = vld [vmem:[#allocation2 + $0x72] sm:$0xff]
  %v655 = vld [vmem:[#allocation2 + $0xa2] sm:$0xff]
  %v656 = vld [vmem:[#allocation2 + $0xb2] sm:$0xff]
  %v657 = vld [vmem:[#allocation2 + $0xc2] sm:$0xff]
  %v658 = vld [vmem:[#allocation2 + $0xd2] sm:$0xff]
  %v659 = vld [vmem:[#allocation2 + $0xe2] sm:$0xff]
  %v660 = vld [vmem:[#allocation2 + $0xf2] sm:$0xff]
  %v661 = vld [vmem:[#allocation2 + $0x102] sm:$0xff]
  %v662 = vld [vmem:[#allocation2 + $0x112] sm:$0xff]
  %v664 = vsel %vm154, %v647, 0
  %v667 = vsel %vm154, %v648, 0
  %v670 = vsel %vm154, %v649, 0
  %v673 = vsel %vm154, %v650, 0
  %v676 = vsel %vm154, %v651, 0
  %v679 = vsel %vm154, %v652, 0
  %v682 = vsel %vm154, %v653, 0
  %v685 = vsel %vm154, %v654, 0
  %v688 = vsel %vm154, %v655, 0
  %v691 = vsel %vm154, %v656, 0
  %v694 = vsel %vm154, %v657, 0
  %v697 = vsel %vm154, %v658, 0
  %v700 = vsel %vm154, %v659, 0
  %v703 = vsel %vm154, %v660, 0
  %v706 = vsel %vm154, %v661, 0
  %v709 = vsel %vm154, %v662, 0
  %v712 = vsel %vm302, %v215, 0
  %714 = vmatprep.subr.mxu0 0.0
  %715 = vmatpush1.msra.mxu0 0.0
  %716 = vmatprep.subr.mxu0 0.0
  %717 = vmatpush1.msra.mxu0 0.0
  %718 = vmatprep.subr.mxu0 0.0
  %719 = vmatpush1.msra.mxu0 0.0
  %720 = vmatprep.subr.mxu0 0.0
  %721 = vmatpush1.msra.mxu0 0.0
  %722 = vmatprep.subr.mxu0 0.0
  %723 = vmatpush1.msra.mxu0 0.0
  %724 = vmatprep.subr.mxu0 0.0
  %725 = vmatpush1.msra.mxu0 0.0
  %726 = vmatprep.subr.mxu0 0.0
  %727 = vmatpush1.msra.mxu0 0.0
  %728 = vmatprep.subr.mxu0 0.0
  %729 = vmatpush1.msra.mxu0 0.0
  %730 = vmatprep.subr.mxu0 0.0
  %731 = vmatpush1.msra.mxu0 0.0
  %732 = vmatprep.subr.mxu0 0.0
  %733 = vmatpush1.msra.mxu0 0.0
  %734 = vmatprep.subr.mxu0 0.0
  %735 = vmatpush1.msra.mxu0 0.0
  %736 = vmatprep.subr.mxu0 0.0
  %737 = vmatpush1.msra.mxu0 0.0
  %738 = vmatprep.subr.mxu0 0.0
  %739 = vmatpush1.msra.mxu0 0.0
  %740 = vmatprep.subr.mxu0 0.0
  %741 = vmatpush1.msra.mxu0 0.0
  %742 = vmatprep.subr.mxu0 0.0
  %743 = vmatpush1.msra.mxu0 0.0
  %744 = vmatprep.subr.mxu0 0.0
  %745 = vmatpush1.msra.mxu0 %v712
  %746 = vmatprep.subr.mxu0 0.0
  %747 = vmatpush2.msra.mxu0 0.0
  %748 = vmatprep.subr.mxu0 0.0
  %749 = vmatpush2.msra.mxu0 0.0
  %750 = vmatprep.subr.mxu0 0.0
  %751 = vmatpush2.msra.mxu0 0.0
  %752 = vmatprep.subr.mxu0 0.0
  %753 = vmatpush2.msra.mxu0 0.0
  %754 = vmatprep.subr.mxu0 0.0
  %755 = vmatpush2.msra.mxu0 0.0
  %756 = vmatprep.subr.mxu0 0.0
  %757 = vmatpush2.msra.mxu0 0.0
  %758 = vmatprep.subr.mxu0 0.0
  %759 = vmatpush2.msra.mxu0 0.0
  %760 = vmatprep.subr.mxu0 0.0
  %761 = vmatpush2.msra.mxu0 0.0
  %762 = vmatprep.subr.mxu0 0.0
  %763 = vmatpush2.msra.mxu0 0.0
  %764 = vmatprep.subr.mxu0 0.0
  %765 = vmatpush2.msra.mxu0 0.0
  %766 = vmatprep.subr.mxu0 0.0
  %767 = vmatpush2.msra.mxu0 0.0
  %768 = vmatprep.subr.mxu0 0.0
  %769 = vmatpush2.msra.mxu0 0.0
  %770 = vmatprep.subr.mxu0 0.0
  %771 = vmatpush2.msra.mxu0 0.0
  %772 = vmatprep.subr.mxu0 0.0
  %773 = vmatpush2.msra.mxu0 0.0
  %774 = vmatprep.subr.mxu0 0.0
  %775 = vmatpush2.msra.mxu0 0.0
  %776 = vmatprep.subr.mxu0 0.0
  %777 = vmatpush2.msra.mxu0 0.0
  %778 = vmatprep.mubr.f32.mxu0 0.0
  %779 = vmatmul.mubr.f32.gmra.mxu0 %v664
  %v780 = vpop.f32.mrf.mxu0
  %v781 = vadd.f32 0.0, %v780
  %v782 = vpop.f32.mrf.mxu0
  %783 = vmatprep.mubr.f32.mxu0 0.0
  %784 = vmatmul.mubr.f32.gmra.mxu0 %v667
  %v785 = vpop.f32.mrf.mxu0
  %v786 = vadd.f32 0.0, %v785
  %v787 = vpop.f32.mrf.mxu0
  %788 = vmatprep.mubr.f32.mxu0 0.0
  %789 = vmatmul.mubr.f32.gmra.mxu0 %v670
  %v790 = vpop.f32.mrf.mxu0
  %v791 = vadd.f32 0.0, %v790
  %v792 = vpop.f32.mrf.mxu0
  %793 = vmatprep.mubr.f32.mxu0 0.0
  %794 = vmatmul.mubr.f32.gmra.mxu0 %v673
  %v795 = vpop.f32.mrf.mxu0
  %v796 = vadd.f32 0.0, %v795
  %v797 = vpop.f32.mrf.mxu0
  %798 = vmatprep.mubr.f32.mxu0 0.0
  %799 = vmatmul.mubr.f32.gmra.mxu0 %v676
  %v800 = vpop.f32.mrf.mxu0
  %v801 = vadd.f32 0.0, %v800
  %v802 = vpop.f32.mrf.mxu0
  %803 = vmatprep.mubr.f32.mxu0 0.0
  %804 = vmatmul.mubr.f32.gmra.mxu0 %v679
  %v805 = vpop.f32.mrf.mxu0
  %v806 = vadd.f32 0.0, %v805
  %v807 = vpop.f32.mrf.mxu0
  %808 = vmatprep.mubr.f32.mxu0 0.0
  %809 = vmatmul.mubr.f32.gmra.mxu0 %v682
  %v810 = vpop.f32.mrf.mxu0
  %v811 = vadd.f32 0.0, %v810
  %v812 = vpop.f32.mrf.mxu0
  %813 = vmatprep.mubr.f32.mxu0 0.0
  %814 = vmatmul.mubr.f32.gmra.mxu0 %v685
  %v815 = vpop.f32.mrf.mxu0
  %v816 = vadd.f32 0.0, %v815
  %v817 = vpop.f32.mrf.mxu0
  %818 = vmatprep.mubr.f32.mxu0 0.0
  %819 = vmatmul.mubr.f32.gmra.mxu0 %v688
  %v820 = vpop.f32.mrf.mxu0
  %v821 = vadd.f32 0.0, %v820
  %v822 = vpop.f32.mrf.mxu0
  %823 = vmatprep.mubr.f32.mxu0 0.0
  %824 = vmatmul.mubr.f32.gmra.mxu0 %v691
  %v825 = vpop.f32.mrf.mxu0
  %v826 = vadd.f32 0.0, %v825
  %v827 = vpop.f32.mrf.mxu0
  %828 = vmatprep.mubr.f32.mxu0 0.0
  %829 = vmatmul.mubr.f32.gmra.mxu0 %v694
  %v830 = vpop.f32.mrf.mxu0
  %v831 = vadd.f32 0.0, %v830
  %v832 = vpop.f32.mrf.mxu0
  %833 = vmatprep.mubr.f32.mxu0 0.0
  %834 = vmatmul.mubr.f32.gmra.mxu0 %v697
  %v835 = vpop.f32.mrf.mxu0
  %v836 = vadd.f32 0.0, %v835
  %v837 = vpop.f32.mrf.mxu0
  %838 = vmatprep.mubr.f32.mxu0 0.0
  %839 = vmatmul.mubr.f32.gmra.mxu0 %v700
  %v840 = vpop.f32.mrf.mxu0
  %v841 = vadd.f32 0.0, %v840
  %v842 = vpop.f32.mrf.mxu0
  %843 = vmatprep.mubr.f32.mxu0 0.0
  %844 = vmatmul.mubr.f32.gmra.mxu0 %v703
  %v845 = vpop.f32.mrf.mxu0
  %v846 = vadd.f32 0.0, %v845
  %v847 = vpop.f32.mrf.mxu0
  %848 = vmatprep.mubr.f32.mxu0 0.0
  %849 = vmatmul.mubr.f32.gmra.mxu0 %v706
  %v850 = vpop.f32.mrf.mxu0
  %v851 = vadd.f32 0.0, %v850
  %v852 = vpop.f32.mrf.mxu0
  %853 = vmatprep.mubr.f32.mxu0 0.0
  %854 = vmatmul.mubr.f32.gmra.mxu0 %v709
  %v855 = vpop.f32.mrf.mxu0
  %v856 = vadd.f32 0.0, %v855
  %v857 = vpop.f32.mrf.mxu0
  %858 = vdwg.mxu0
  %v859 = vadd.f32 %v569, %v781
  %v860 = vadd.f32 %v574, %v786
  %v861 = vadd.f32 %v579, %v791
  %v862 = vadd.f32 %v584, %v796
  %v863 = vadd.f32 %v589, %v801
  %v864 = vadd.f32 %v594, %v806
  %v865 = vadd.f32 %v599, %v811
  %v866 = vadd.f32 %v604, %v816
  %v867 = vadd.f32 %v609, %v821
  %v868 = vadd.f32 %v614, %v826
  %v869 = vadd.f32 %v619, %v831
  %v870 = vadd.f32 %v624, %v836
  %v871 = vadd.f32 %v629, %v841
  %v872 = vadd.f32 %v634, %v846
  %v873 = vadd.f32 %v639, %v851
  %v874 = vadd.f32 %v644, %v856
  %v875 = vld [vmem:[%s196] sm:$0xff]
  %v876 = vld [vmem:[%s196 + $0x10] sm:$0xff]
  %v877 = vld [vmem:[%s196 + $0x20] sm:$0xff]
  %v878 = vld [vmem:[%s196 + $0x30] sm:$0xff]
  %v879 = vld [vmem:[%s196 + $0x40] sm:$0xff]
  %v880 = vld [vmem:[%s196 + $0x50] sm:$0xff]
  %v881 = vld [vmem:[%s196 + $0x60] sm:$0xff]
  %v882 = vld [vmem:[%s196 + $0x70] sm:$0xff]
  %v883 = vld [vmem:[%s196 + $0xa0] sm:$0xff]
  %v884 = vld [vmem:[%s196 + $0xb0] sm:$0xff]
  %v885 = vld [vmem:[%s196 + $0xc0] sm:$0xff]
  %v886 = vld [vmem:[%s196 + $0xd0] sm:$0xff]
  %v887 = vld [vmem:[%s196 + $0xe0] sm:$0xff]
  %v888 = vld [vmem:[%s196 + $0xf0] sm:$0xff]
  %v889 = vld [vmem:[%s196 + $0x100] sm:$0xff]
  %v890 = vld [vmem:[%s196 + $0x110] sm:$0xff]
  %v892 = vsel %vm154, %v875, 0
  %v895 = vsel %vm154, %v876, 0
  %v898 = vsel %vm154, %v877, 0
  %v901 = vsel %vm154, %v878, 0
  %v904 = vsel %vm154, %v879, 0
  %v907 = vsel %vm154, %v880, 0
  %v910 = vsel %vm154, %v881, 0
  %v913 = vsel %vm154, %v882, 0
  %v916 = vsel %vm154, %v883, 0
  %v919 = vsel %vm154, %v884, 0
  %v922 = vsel %vm154, %v885, 0
  %v925 = vsel %vm154, %v886, 0
  %v928 = vsel %vm154, %v887, 0
  %v931 = vsel %vm154, %v888, 0
  %v934 = vsel %vm154, %v889, 0
  %v937 = vsel %vm154, %v890, 0
  %v940 = vsel %vm302, %v216, 0
  %942 = vmatprep.subr.mxu0 0.0
  %943 = vmatpush1.msra.mxu0 0.0
  %944 = vmatprep.subr.mxu0 0.0
  %945 = vmatpush1.msra.mxu0 0.0
  %946 = vmatprep.subr.mxu0 0.0
  %947 = vmatpush1.msra.mxu0 0.0
  %948 = vmatprep.subr.mxu0 0.0
  %949 = vmatpush1.msra.mxu0 0.0
  %950 = vmatprep.subr.mxu0 0.0
  %951 = vmatpush1.msra.mxu0 0.0
  %952 = vmatprep.subr.mxu0 0.0
  %953 = vmatpush1.msra.mxu0 0.0
  %954 = vmatprep.subr.mxu0 0.0
  %955 = vmatpush1.msra.mxu0 0.0
  %956 = vmatprep.subr.mxu0 0.0
  %957 = vmatpush1.msra.mxu0 0.0
  %958 = vmatprep.subr.mxu0 0.0
  %959 = vmatpush1.msra.mxu0 0.0
  %960 = vmatprep.subr.mxu0 0.0
  %961 = vmatpush1.msra.mxu0 0.0
  %962 = vmatprep.subr.mxu0 0.0
  %963 = vmatpush1.msra.mxu0 0.0
  %964 = vmatprep.subr.mxu0 0.0
  %965 = vmatpush1.msra.mxu0 0.0
  %966 = vmatprep.subr.mxu0 0.0
  %967 = vmatpush1.msra.mxu0 0.0
  %968 = vmatprep.subr.mxu0 0.0
  %969 = vmatpush1.msra.mxu0 0.0
  %970 = vmatprep.subr.mxu0 0.0
  %971 = vmatpush1.msra.mxu0 0.0
  %972 = vmatprep.subr.mxu0 0.0
  %973 = vmatpush1.msra.mxu0 %v940
  %974 = vmatprep.subr.mxu0 0.0
  %975 = vmatpush2.msra.mxu0 0.0
  %976 = vmatprep.subr.mxu0 0.0
  %977 = vmatpush2.msra.mxu0 0.0
  %978 = vmatprep.subr.mxu0 0.0
  %979 = vmatpush2.msra.mxu0 0.0
  %980 = vmatprep.subr.mxu0 0.0
  %981 = vmatpush2.msra.mxu0 0.0
  %982 = vmatprep.subr.mxu0 0.0
  %983 = vmatpush2.msra.mxu0 0.0
  %984 = vmatprep.subr.mxu0 0.0
  %985 = vmatpush2.msra.mxu0 0.0
  %986 = vmatprep.subr.mxu0 0.0
  %987 = vmatpush2.msra.mxu0 0.0
  %988 = vmatprep.subr.mxu0 0.0
  %989 = vmatpush2.msra.mxu0 0.0
  %990 = vmatprep.subr.mxu0 0.0
  %991 = vmatpush2.msra.mxu0 0.0
  %992 = vmatprep.subr.mxu0 0.0
  %993 = vmatpush2.msra.mxu0 0.0
  %994 = vmatprep.subr.mxu0 0.0
  %995 = vmatpush2.msra.mxu0 0.0
  %996 = vmatprep.subr.mxu0 0.0
  %997 = vmatpush2.msra.mxu0 0.0
  %998 = vmatprep.subr.mxu0 0.0
  %999 = vmatpush2.msra.mxu0 0.0
  %1000 = vmatprep.subr.mxu0 0.0
  %1001 = vmatpush2.msra.mxu0 0.0
  %1002 = vmatprep.subr.mxu0 0.0
  %1003 = vmatpush2.msra.mxu0 0.0
  %1004 = vmatprep.subr.mxu0 0.0
  %1005 = vmatpush2.msra.mxu0 0.0
  %1006 = vmatprep.mubr.f32.mxu0 0.0
  %1007 = vmatmul.mubr.f32.gmra.mxu0 %v892
  %v1008 = vpop.f32.mrf.mxu0
  %v1009 = vadd.f32 0.0, %v1008
  %v1010 = vpop.f32.mrf.mxu0
  %1011 = vmatprep.mubr.f32.mxu0 0.0
  %1012 = vmatmul.mubr.f32.gmra.mxu0 %v895
  %v1013 = vpop.f32.mrf.mxu0
  %v1014 = vadd.f32 0.0, %v1013
  %v1015 = vpop.f32.mrf.mxu0
  %1016 = vmatprep.mubr.f32.mxu0 0.0
  %1017 = vmatmul.mubr.f32.gmra.mxu0 %v898
  %v1018 = vpop.f32.mrf.mxu0
  %v1019 = vadd.f32 0.0, %v1018
  %v1020 = vpop.f32.mrf.mxu0
  %1021 = vmatprep.mubr.f32.mxu0 0.0
  %1022 = vmatmul.mubr.f32.gmra.mxu0 %v901
  %v1023 = vpop.f32.mrf.mxu0
  %v1024 = vadd.f32 0.0, %v1023
  %v1025 = vpop.f32.mrf.mxu0
  %1026 = vmatprep.mubr.f32.mxu0 0.0
  %1027 = vmatmul.mubr.f32.gmra.mxu0 %v904
  %v1028 = vpop.f32.mrf.mxu0
  %v1029 = vadd.f32 0.0, %v1028
  %v1030 = vpop.f32.mrf.mxu0
  %1031 = vmatprep.mubr.f32.mxu0 0.0
  %1032 = vmatmul.mubr.f32.gmra.mxu0 %v907
  %v1033 = vpop.f32.mrf.mxu0
  %v1034 = vadd.f32 0.0, %v1033
  %v1035 = vpop.f32.mrf.mxu0
  %1036 = vmatprep.mubr.f32.mxu0 0.0
  %1037 = vmatmul.mubr.f32.gmra.mxu0 %v910
  %v1038 = vpop.f32.mrf.mxu0
  %v1039 = vadd.f32 0.0, %v1038
  %v1040 = vpop.f32.mrf.mxu0
  %1041 = vmatprep.mubr.f32.mxu0 0.0
  %1042 = vmatmul.mubr.f32.gmra.mxu0 %v913
  %v1043 = vpop.f32.mrf.mxu0
  %v1044 = vadd.f32 0.0, %v1043
  %v1045 = vpop.f32.mrf.mxu0
  %1046 = vmatprep.mubr.f32.mxu0 0.0
  %1047 = vmatmul.mubr.f32.gmra.mxu0 %v916
  %v1048 = vpop.f32.mrf.mxu0
  %v1049 = vadd.f32 0.0, %v1048
  %v1050 = vpop.f32.mrf.mxu0
  %1051 = vmatprep.mubr.f32.mxu0 0.0
  %1052 = vmatmul.mubr.f32.gmra.mxu0 %v919
  %v1053 = vpop.f32.mrf.mxu0
  %v1054 = vadd.f32 0.0, %v1053
  %v1055 = vpop.f32.mrf.mxu0
  %1056 = vmatprep.mubr.f32.mxu0 0.0
  %1057 = vmatmul.mubr.f32.gmra.mxu0 %v922
  %v1058 = vpop.f32.mrf.mxu0
  %v1059 = vadd.f32 0.0, %v1058
  %v1060 = vpop.f32.mrf.mxu0
  %1061 = vmatprep.mubr.f32.mxu0 0.0
  %1062 = vmatmul.mubr.f32.gmra.mxu0 %v925
  %v1063 = vpop.f32.mrf.mxu0
  %v1064 = vadd.f32 0.0, %v1063
  %v1065 = vpop.f32.mrf.mxu0
  %1066 = vmatprep.mubr.f32.mxu0 0.0
  %1067 = vmatmul.mubr.f32.gmra.mxu0 %v928
  %v1068 = vpop.f32.mrf.mxu0
  %v1069 = vadd.f32 0.0, %v1068
  %v1070 = vpop.f32.mrf.mxu0
  %1071 = vmatprep.mubr.f32.mxu0 0.0
  %1072 = vmatmul.mubr.f32.gmra.mxu0 %v931
  %v1073 = vpop.f32.mrf.mxu0
  %v1074 = vadd.f32 0.0, %v1073
  %v1075 = vpop.f32.mrf.mxu0
  %1076 = vmatprep.mubr.f32.mxu0 0.0
  %1077 = vmatmul.mubr.f32.gmra.mxu0 %v934
  %v1078 = vpop.f32.mrf.mxu0
  %v1079 = vadd.f32 0.0, %v1078
  %v1080 = vpop.f32.mrf.mxu0
  %1081 = vmatprep.mubr.f32.mxu0 0.0
  %1082 = vmatmul.mubr.f32.gmra.mxu0 %v937
  %v1083 = vpop.f32.mrf.mxu0
  %v1084 = vadd.f32 0.0, %v1083
  %v1085 = vpop.f32.mrf.mxu0
  %1086 = vdwg.mxu0
  %v1087 = vadd.f32 %v859, %v1009
  %v1088 = vadd.f32 %v860, %v1014
  %v1089 = vadd.f32 %v861, %v1019
  %v1090 = vadd.f32 %v862, %v1024
  %v1091 = vadd.f32 %v863, %v1029
  %v1092 = vadd.f32 %v864, %v1034
  %v1093 = vadd.f32 %v865, %v1039
  %v1094 = vadd.f32 %v866, %v1044
  %v1095 = vadd.f32 %v867, %v1049
  %v1096 = vadd.f32 %v868, %v1054
  %v1097 = vadd.f32 %v869, %v1059
  %v1098 = vadd.f32 %v870, %v1064
  %v1099 = vadd.f32 %v871, %v1069
  %v1100 = vadd.f32 %v872, %v1074
  %v1101 = vadd.f32 %v873, %v1079
  %v1102 = vadd.f32 %v874, %v1084
  %v1103 = vld [vmem:[%s196 + $0x1] sm:$0xff]
  %v1104 = vld [vmem:[%s196 + $0x11] sm:$0xff]
  %v1105 = vld [vmem:[%s196 + $0x21] sm:$0xff]
  %v1106 = vld [vmem:[%s196 + $0x31] sm:$0xff]
  %v1107 = vld [vmem:[%s196 + $0x41] sm:$0xff]
  %v1108 = vld [vmem:[%s196 + $0x51] sm:$0xff]
  %v1109 = vld [vmem:[%s196 + $0x61] sm:$0xff]
  %v1110 = vld [vmem:[%s196 + $0x71] sm:$0xff]
  %v1111 = vld [vmem:[%s196 + $0xa1] sm:$0xff]
  %v1112 = vld [vmem:[%s196 + $0xb1] sm:$0xff]
  %v1113 = vld [vmem:[%s196 + $0xc1] sm:$0xff]
  %v1114 = vld [vmem:[%s196 + $0xd1] sm:$0xff]
  %v1115 = vld [vmem:[%s196 + $0xe1] sm:$0xff]
  %v1116 = vld [vmem:[%s196 + $0xf1] sm:$0xff]
  %v1117 = vld [vmem:[%s196 + $0x101] sm:$0xff]
  %v1118 = vld [vmem:[%s196 + $0x111] sm:$0xff]
  %v1120 = vsel %vm154, %v1103, 0
  %v1123 = vsel %vm154, %v1104, 0
  %v1126 = vsel %vm154, %v1105, 0
  %v1129 = vsel %vm154, %v1106, 0
  %v1132 = vsel %vm154, %v1107, 0
  %v1135 = vsel %vm154, %v1108, 0
  %v1138 = vsel %vm154, %v1109, 0
  %v1141 = vsel %vm154, %v1110, 0
  %v1144 = vsel %vm154, %v1111, 0
  %v1147 = vsel %vm154, %v1112, 0
  %v1150 = vsel %vm154, %v1113, 0
  %v1153 = vsel %vm154, %v1114, 0
  %v1156 = vsel %vm154, %v1115, 0
  %v1159 = vsel %vm154, %v1116, 0
  %v1162 = vsel %vm154, %v1117, 0
  %v1165 = vsel %vm154, %v1118, 0
  %v1168 = vsel %vm302, %v217, 0
  %1170 = vmatprep.subr.mxu0 0.0
  %1171 = vmatpush1.msra.mxu0 0.0
  %1172 = vmatprep.subr.mxu0 0.0
  %1173 = vmatpush1.msra.mxu0 0.0
  %1174 = vmatprep.subr.mxu0 0.0
  %1175 = vmatpush1.msra.mxu0 0.0
  %1176 = vmatprep.subr.mxu0 0.0
  %1177 = vmatpush1.msra.mxu0 0.0
  %1178 = vmatprep.subr.mxu0 0.0
  %1179 = vmatpush1.msra.mxu0 0.0
  %1180 = vmatprep.subr.mxu0 0.0
  %1181 = vmatpush1.msra.mxu0 0.0
  %1182 = vmatprep.subr.mxu0 0.0
  %1183 = vmatpush1.msra.mxu0 0.0
  %1184 = vmatprep.subr.mxu0 0.0
  %1185 = vmatpush1.msra.mxu0 0.0
  %1186 = vmatprep.subr.mxu0 0.0
  %1187 = vmatpush1.msra.mxu0 0.0
  %1188 = vmatprep.subr.mxu0 0.0
  %1189 = vmatpush1.msra.mxu0 0.0
  %1190 = vmatprep.subr.mxu0 0.0
  %1191 = vmatpush1.msra.mxu0 0.0
  %1192 = vmatprep.subr.mxu0 0.0
  %1193 = vmatpush1.msra.mxu0 0.0
  %1194 = vmatprep.subr.mxu0 0.0
  %1195 = vmatpush1.msra.mxu0 0.0
  %1196 = vmatprep.subr.mxu0 0.0
  %1197 = vmatpush1.msra.mxu0 0.0
  %1198 = vmatprep.subr.mxu0 0.0
  %1199 = vmatpush1.msra.mxu0 0.0
  %1200 = vmatprep.subr.mxu0 0.0
  %1201 = vmatpush1.msra.mxu0 %v1168
  %1202 = vmatprep.subr.mxu0 0.0
  %1203 = vmatpush2.msra.mxu0 0.0
  %1204 = vmatprep.subr.mxu0 0.0
  %1205 = vmatpush2.msra.mxu0 0.0
  %1206 = vmatprep.subr.mxu0 0.0
  %1207 = vmatpush2.msra.mxu0 0.0
  %1208 = vmatprep.subr.mxu0 0.0
  %1209 = vmatpush2.msra.mxu0 0.0
  %1210 = vmatprep.subr.mxu0 0.0
  %1211 = vmatpush2.msra.mxu0 0.0
  %1212 = vmatprep.subr.mxu0 0.0
  %1213 = vmatpush2.msra.mxu0 0.0
  %1214 = vmatprep.subr.mxu0 0.0
  %1215 = vmatpush2.msra.mxu0 0.0
  %1216 = vmatprep.subr.mxu0 0.0
  %1217 = vmatpush2.msra.mxu0 0.0
  %1218 = vmatprep.subr.mxu0 0.0
  %1219 = vmatpush2.msra.mxu0 0.0
  %1220 = vmatprep.subr.mxu0 0.0
  %1221 = vmatpush2.msra.mxu0 0.0
  %1222 = vmatprep.subr.mxu0 0.0
  %1223 = vmatpush2.msra.mxu0 0.0
  %1224 = vmatprep.subr.mxu0 0.0
  %1225 = vmatpush2.msra.mxu0 0.0
  %1226 = vmatprep.subr.mxu0 0.0
  %1227 = vmatpush2.msra.mxu0 0.0
  %1228 = vmatprep.subr.mxu0 0.0
  %1229 = vmatpush2.msra.mxu0 0.0
  %1230 = vmatprep.subr.mxu0 0.0
  %1231 = vmatpush2.msra.mxu0 0.0
  %1232 = vmatprep.subr.mxu0 0.0
  %1233 = vmatpush2.msra.mxu0 0.0
  %1234 = vmatprep.mubr.f32.mxu0 0.0
  %1235 = vmatmul.mubr.f32.gmra.mxu0 %v1120
  %v1236 = vpop.f32.mrf.mxu0
  %v1237 = vadd.f32 0.0, %v1236
  %v1238 = vpop.f32.mrf.mxu0
  %1239 = vmatprep.mubr.f32.mxu0 0.0
  %1240 = vmatmul.mubr.f32.gmra.mxu0 %v1123
  %v1241 = vpop.f32.mrf.mxu0
  %v1242 = vadd.f32 0.0, %v1241
  %v1243 = vpop.f32.mrf.mxu0
  %1244 = vmatprep.mubr.f32.mxu0 0.0
  %1245 = vmatmul.mubr.f32.gmra.mxu0 %v1126
  %v1246 = vpop.f32.mrf.mxu0
  %v1247 = vadd.f32 0.0, %v1246
  %v1248 = vpop.f32.mrf.mxu0
  %1249 = vmatprep.mubr.f32.mxu0 0.0
  %1250 = vmatmul.mubr.f32.gmra.mxu0 %v1129
  %v1251 = vpop.f32.mrf.mxu0
  %v1252 = vadd.f32 0.0, %v1251
  %v1253 = vpop.f32.mrf.mxu0
  %1254 = vmatprep.mubr.f32.mxu0 0.0
  %1255 = vmatmul.mubr.f32.gmra.mxu0 %v1132
  %v1256 = vpop.f32.mrf.mxu0
  %v1257 = vadd.f32 0.0, %v1256
  %v1258 = vpop.f32.mrf.mxu0
  %1259 = vmatprep.mubr.f32.mxu0 0.0
  %1260 = vmatmul.mubr.f32.gmra.mxu0 %v1135
  %v1261 = vpop.f32.mrf.mxu0
  %v1262 = vadd.f32 0.0, %v1261
  %v1263 = vpop.f32.mrf.mxu0
  %1264 = vmatprep.mubr.f32.mxu0 0.0
  %1265 = vmatmul.mubr.f32.gmra.mxu0 %v1138
  %v1266 = vpop.f32.mrf.mxu0
  %v1267 = vadd.f32 0.0, %v1266
  %v1268 = vpop.f32.mrf.mxu0
  %1269 = vmatprep.mubr.f32.mxu0 0.0
  %1270 = vmatmul.mubr.f32.gmra.mxu0 %v1141
  %v1271 = vpop.f32.mrf.mxu0
  %v1272 = vadd.f32 0.0, %v1271
  %v1273 = vpop.f32.mrf.mxu0
  %1274 = vmatprep.mubr.f32.mxu0 0.0
  %1275 = vmatmul.mubr.f32.gmra.mxu0 %v1144
  %v1276 = vpop.f32.mrf.mxu0
  %v1277 = vadd.f32 0.0, %v1276
  %v1278 = vpop.f32.mrf.mxu0
  %1279 = vmatprep.mubr.f32.mxu0 0.0
  %1280 = vmatmul.mubr.f32.gmra.mxu0 %v1147
  %v1281 = vpop.f32.mrf.mxu0
  %v1282 = vadd.f32 0.0, %v1281
  %v1283 = vpop.f32.mrf.mxu0
  %1284 = vmatprep.mubr.f32.mxu0 0.0
  %1285 = vmatmul.mubr.f32.gmra.mxu0 %v1150
  %v1286 = vpop.f32.mrf.mxu0
  %v1287 = vadd.f32 0.0, %v1286
  %v1288 = vpop.f32.mrf.mxu0
  %1289 = vmatprep.mubr.f32.mxu0 0.0
  %1290 = vmatmul.mubr.f32.gmra.mxu0 %v1153
  %v1291 = vpop.f32.mrf.mxu0
  %v1292 = vadd.f32 0.0, %v1291
  %v1293 = vpop.f32.mrf.mxu0
  %1294 = vmatprep.mubr.f32.mxu0 0.0
  %1295 = vmatmul.mubr.f32.gmra.mxu0 %v1156
  %v1296 = vpop.f32.mrf.mxu0
  %v1297 = vadd.f32 0.0, %v1296
  %v1298 = vpop.f32.mrf.mxu0
  %1299 = vmatprep.mubr.f32.mxu0 0.0
  %1300 = vmatmul.mubr.f32.gmra.mxu0 %v1159
  %v1301 = vpop.f32.mrf.mxu0
  %v1302 = vadd.f32 0.0, %v1301
  %v1303 = vpop.f32.mrf.mxu0
  %1304 = vmatprep.mubr.f32.mxu0 0.0
  %1305 = vmatmul.mubr.f32.gmra.mxu0 %v1162
  %v1306 = vpop.f32.mrf.mxu0
  %v1307 = vadd.f32 0.0, %v1306
  %v1308 = vpop.f32.mrf.mxu0
  %1309 = vmatprep.mubr.f32.mxu0 0.0
  %1310 = vmatmul.mubr.f32.gmra.mxu0 %v1165
  %v1311 = vpop.f32.mrf.mxu0
  %v1312 = vadd.f32 0.0, %v1311
  %v1313 = vpop.f32.mrf.mxu0
  %1314 = vdwg.mxu0
  %v1315 = vadd.f32 %v1087, %v1237
  %v1316 = vadd.f32 %v1088, %v1242
  %v1317 = vadd.f32 %v1089, %v1247
  %v1318 = vadd.f32 %v1090, %v1252
  %v1319 = vadd.f32 %v1091, %v1257
  %v1320 = vadd.f32 %v1092, %v1262
  %v1321 = vadd.f32 %v1093, %v1267
  %v1322 = vadd.f32 %v1094, %v1272
  %v1323 = vadd.f32 %v1095, %v1277
  %v1324 = vadd.f32 %v1096, %v1282
  %v1325 = vadd.f32 %v1097, %v1287
  %v1326 = vadd.f32 %v1098, %v1292
  %v1327 = vadd.f32 %v1099, %v1297
  %v1328 = vadd.f32 %v1100, %v1302
  %v1329 = vadd.f32 %v1101, %v1307
  %v1330 = vadd.f32 %v1102, %v1312
  %v1331 = vld [vmem:[%s196 + $0x2] sm:$0xff]
  %v1332 = vld [vmem:[%s196 + $0x12] sm:$0xff]
  %v1333 = vld [vmem:[%s196 + $0x22] sm:$0xff]
  %v1334 = vld [vmem:[%s196 + $0x32] sm:$0xff]
  %v1335 = vld [vmem:[%s196 + $0x42] sm:$0xff]
  %v1336 = vld [vmem:[%s196 + $0x52] sm:$0xff]
  %v1337 = vld [vmem:[%s196 + $0x62] sm:$0xff]
  %v1338 = vld [vmem:[%s196 + $0x72] sm:$0xff]
  %v1339 = vld [vmem:[%s196 + $0xa2] sm:$0xff]
  %v1340 = vld [vmem:[%s196 + $0xb2] sm:$0xff]
  %v1341 = vld [vmem:[%s196 + $0xc2] sm:$0xff]
  %v1342 = vld [vmem:[%s196 + $0xd2] sm:$0xff]
  %v1343 = vld [vmem:[%s196 + $0xe2] sm:$0xff]
  %v1344 = vld [vmem:[%s196 + $0xf2] sm:$0xff]
  %v1345 = vld [vmem:[%s196 + $0x102] sm:$0xff]
  %v1346 = vld [vmem:[%s196 + $0x112] sm:$0xff]
  %v1348 = vsel %vm154, %v1331, 0
  %v1351 = vsel %vm154, %v1332, 0
  %v1354 = vsel %vm154, %v1333, 0
  %v1357 = vsel %vm154, %v1334, 0
  %v1360 = vsel %vm154, %v1335, 0
  %v1363 = vsel %vm154, %v1336, 0
  %v1366 = vsel %vm154, %v1337, 0
  %v1369 = vsel %vm154, %v1338, 0
  %v1372 = vsel %vm154, %v1339, 0
  %v1375 = vsel %vm154, %v1340, 0
  %v1378 = vsel %vm154, %v1341, 0
  %v1381 = vsel %vm154, %v1342, 0
  %v1384 = vsel %vm154, %v1343, 0
  %v1387 = vsel %vm154, %v1344, 0
  %v1390 = vsel %vm154, %v1345, 0
  %v1393 = vsel %vm154, %v1346, 0
  %v1396 = vsel %vm302, %v218, 0
  %1398 = vmatprep.subr.mxu0 0.0
  %1399 = vmatpush1.msra.mxu0 0.0
  %1400 = vmatprep.subr.mxu0 0.0
  %1401 = vmatpush1.msra.mxu0 0.0
  %1402 = vmatprep.subr.mxu0 0.0
  %1403 = vmatpush1.msra.mxu0 0.0
  %1404 = vmatprep.subr.mxu0 0.0
  %1405 = vmatpush1.msra.mxu0 0.0
  %1406 = vmatprep.subr.mxu0 0.0
  %1407 = vmatpush1.msra.mxu0 0.0
  %1408 = vmatprep.subr.mxu0 0.0
  %1409 = vmatpush1.msra.mxu0 0.0
  %1410 = vmatprep.subr.mxu0 0.0
  %1411 = vmatpush1.msra.mxu0 0.0
  %1412 = vmatprep.subr.mxu0 0.0
  %1413 = vmatpush1.msra.mxu0 0.0
  %1414 = vmatprep.subr.mxu0 0.0
  %1415 = vmatpush1.msra.mxu0 0.0
  %1416 = vmatprep.subr.mxu0 0.0
  %1417 = vmatpush1.msra.mxu0 0.0
  %1418 = vmatprep.subr.mxu0 0.0
  %1419 = vmatpush1.msra.mxu0 0.0
  %1420 = vmatprep.subr.mxu0 0.0
  %1421 = vmatpush1.msra.mxu0 0.0
  %1422 = vmatprep.subr.mxu0 0.0
  %1423 = vmatpush1.msra.mxu0 0.0
  %1424 = vmatprep.subr.mxu0 0.0
  %1425 = vmatpush1.msra.mxu0 0.0
  %1426 = vmatprep.subr.mxu0 0.0
  %1427 = vmatpush1.msra.mxu0 0.0
  %1428 = vmatprep.subr.mxu0 0.0
  %1429 = vmatpush1.msra.mxu0 %v1396
  %1430 = vmatprep.subr.mxu0 0.0
  %1431 = vmatpush2.msra.mxu0 0.0
  %1432 = vmatprep.subr.mxu0 0.0
  %1433 = vmatpush2.msra.mxu0 0.0
  %1434 = vmatprep.subr.mxu0 0.0
  %1435 = vmatpush2.msra.mxu0 0.0
  %1436 = vmatprep.subr.mxu0 0.0
  %1437 = vmatpush2.msra.mxu0 0.0
  %1438 = vmatprep.subr.mxu0 0.0
  %1439 = vmatpush2.msra.mxu0 0.0
  %1440 = vmatprep.subr.mxu0 0.0
  %1441 = vmatpush2.msra.mxu0 0.0
  %1442 = vmatprep.subr.mxu0 0.0
  %1443 = vmatpush2.msra.mxu0 0.0
  %1444 = vmatprep.subr.mxu0 0.0
  %1445 = vmatpush2.msra.mxu0 0.0
  %1446 = vmatprep.subr.mxu0 0.0
  %1447 = vmatpush2.msra.mxu0 0.0
  %1448 = vmatprep.subr.mxu0 0.0
  %1449 = vmatpush2.msra.mxu0 0.0
  %1450 = vmatprep.subr.mxu0 0.0
  %1451 = vmatpush2.msra.mxu0 0.0
  %1452 = vmatprep.subr.mxu0 0.0
  %1453 = vmatpush2.msra.mxu0 0.0
  %1454 = vmatprep.subr.mxu0 0.0
  %1455 = vmatpush2.msra.mxu0 0.0
  %1456 = vmatprep.subr.mxu0 0.0
  %1457 = vmatpush2.msra.mxu0 0.0
  %1458 = vmatprep.subr.mxu0 0.0
  %1459 = vmatpush2.msra.mxu0 0.0
  %1460 = vmatprep.subr.mxu0 0.0
  %1461 = vmatpush2.msra.mxu0 0.0
  %1462 = vmatprep.mubr.f32.mxu0 0.0
  %1463 = vmatmul.mubr.f32.gmra.mxu0 %v1348
  %v1464 = vpop.f32.mrf.mxu0
  %v1465 = vadd.f32 0.0, %v1464
  %v1466 = vpop.f32.mrf.mxu0
  %1467 = vmatprep.mubr.f32.mxu0 0.0
  %1468 = vmatmul.mubr.f32.gmra.mxu0 %v1351
  %v1469 = vpop.f32.mrf.mxu0
  %v1470 = vadd.f32 0.0, %v1469
  %v1471 = vpop.f32.mrf.mxu0
  %1472 = vmatprep.mubr.f32.mxu0 0.0
  %1473 = vmatmul.mubr.f32.gmra.mxu0 %v1354
  %v1474 = vpop.f32.mrf.mxu0
  %v1475 = vadd.f32 0.0, %v1474
  %v1476 = vpop.f32.mrf.mxu0
  %1477 = vmatprep.mubr.f32.mxu0 0.0
  %1478 = vmatmul.mubr.f32.gmra.mxu0 %v1357
  %v1479 = vpop.f32.mrf.mxu0
  %v1480 = vadd.f32 0.0, %v1479
  %v1481 = vpop.f32.mrf.mxu0
  %1482 = vmatprep.mubr.f32.mxu0 0.0
  %1483 = vmatmul.mubr.f32.gmra.mxu0 %v1360
  %v1484 = vpop.f32.mrf.mxu0
  %v1485 = vadd.f32 0.0, %v1484
  %v1486 = vpop.f32.mrf.mxu0
  %1487 = vmatprep.mubr.f32.mxu0 0.0
  %1488 = vmatmul.mubr.f32.gmra.mxu0 %v1363
  %v1489 = vpop.f32.mrf.mxu0
  %v1490 = vadd.f32 0.0, %v1489
  %v1491 = vpop.f32.mrf.mxu0
  %1492 = vmatprep.mubr.f32.mxu0 0.0
  %1493 = vmatmul.mubr.f32.gmra.mxu0 %v1366
  %v1494 = vpop.f32.mrf.mxu0
  %v1495 = vadd.f32 0.0, %v1494
  %v1496 = vpop.f32.mrf.mxu0
  %1497 = vmatprep.mubr.f32.mxu0 0.0
  %1498 = vmatmul.mubr.f32.gmra.mxu0 %v1369
  %v1499 = vpop.f32.mrf.mxu0
  %v1500 = vadd.f32 0.0, %v1499
  %v1501 = vpop.f32.mrf.mxu0
  %1502 = vmatprep.mubr.f32.mxu0 0.0
  %1503 = vmatmul.mubr.f32.gmra.mxu0 %v1372
  %v1504 = vpop.f32.mrf.mxu0
  %v1505 = vadd.f32 0.0, %v1504
  %v1506 = vpop.f32.mrf.mxu0
  %1507 = vmatprep.mubr.f32.mxu0 0.0
  %1508 = vmatmul.mubr.f32.gmra.mxu0 %v1375
  %v1509 = vpop.f32.mrf.mxu0
  %v1510 = vadd.f32 0.0, %v1509
  %v1511 = vpop.f32.mrf.mxu0
  %1512 = vmatprep.mubr.f32.mxu0 0.0
  %1513 = vmatmul.mubr.f32.gmra.mxu0 %v1378
  %v1514 = vpop.f32.mrf.mxu0
  %v1515 = vadd.f32 0.0, %v1514
  %v1516 = vpop.f32.mrf.mxu0
  %1517 = vmatprep.mubr.f32.mxu0 0.0
  %1518 = vmatmul.mubr.f32.gmra.mxu0 %v1381
  %v1519 = vpop.f32.mrf.mxu0
  %v1520 = vadd.f32 0.0, %v1519
  %v1521 = vpop.f32.mrf.mxu0
  %1522 = vmatprep.mubr.f32.mxu0 0.0
  %1523 = vmatmul.mubr.f32.gmra.mxu0 %v1384
  %v1524 = vpop.f32.mrf.mxu0
  %v1525 = vadd.f32 0.0, %v1524
  %v1526 = vpop.f32.mrf.mxu0
  %1527 = vmatprep.mubr.f32.mxu0 0.0
  %1528 = vmatmul.mubr.f32.gmra.mxu0 %v1387
  %v1529 = vpop.f32.mrf.mxu0
  %v1530 = vadd.f32 0.0, %v1529
  %v1531 = vpop.f32.mrf.mxu0
  %1532 = vmatprep.mubr.f32.mxu0 0.0
  %1533 = vmatmul.mubr.f32.gmra.mxu0 %v1390
  %v1534 = vpop.f32.mrf.mxu0
  %v1535 = vadd.f32 0.0, %v1534
  %v1536 = vpop.f32.mrf.mxu0
  %1537 = vmatprep.mubr.f32.mxu0 0.0
  %1538 = vmatmul.mubr.f32.gmra.mxu0 %v1393
  %v1539 = vpop.f32.mrf.mxu0
  %v1540 = vadd.f32 0.0, %v1539
  %v1541 = vpop.f32.mrf.mxu0
  %1542 = vdwg.mxu0
  %v1543 = vadd.f32 %v1315, %v1465
  %v1544 = vadd.f32 %v1316, %v1470
  %v1545 = vadd.f32 %v1317, %v1475
  %v1546 = vadd.f32 %v1318, %v1480
  %v1547 = vadd.f32 %v1319, %v1485
  %v1548 = vadd.f32 %v1320, %v1490
  %v1549 = vadd.f32 %v1321, %v1495
  %v1550 = vadd.f32 %v1322, %v1500
  %v1551 = vadd.f32 %v1323, %v1505
  %v1552 = vadd.f32 %v1324, %v1510
  %v1553 = vadd.f32 %v1325, %v1515
  %v1554 = vadd.f32 %v1326, %v1520
  %v1555 = vadd.f32 %v1327, %v1525
  %v1556 = vadd.f32 %v1328, %v1530
  %v1557 = vadd.f32 %v1329, %v1535
  %v1558 = vadd.f32 %v1330, %v1540
  %s1559 = scalar_lea.vmem [#allocation2], 32
  %v1560 = vld [vmem:[%s1559] sm:$0xff]
  %v1561 = vld [vmem:[%s1559 + $0x10] sm:$0xff]
  %v1562 = vld [vmem:[%s1559 + $0x20] sm:$0xff]
  %v1563 = vld [vmem:[%s1559 + $0x30] sm:$0xff]
  %v1564 = vld [vmem:[%s1559 + $0x40] sm:$0xff]
  %v1565 = vld [vmem:[%s1559 + $0x50] sm:$0xff]
  %v1566 = vld [vmem:[%s1559 + $0x60] sm:$0xff]
  %v1567 = vld [vmem:[%s1559 + $0x70] sm:$0xff]
  %v1568 = vld [vmem:[%s1559 + $0xa0] sm:$0xff]
  %v1569 = vld [vmem:[%s1559 + $0xb0] sm:$0xff]
  %v1570 = vld [vmem:[%s1559 + $0xc0] sm:$0xff]
  %v1571 = vld [vmem:[%s1559 + $0xd0] sm:$0xff]
  %v1572 = vld [vmem:[%s1559 + $0xe0] sm:$0xff]
  %v1573 = vld [vmem:[%s1559 + $0xf0] sm:$0xff]
  %v1574 = vld [vmem:[%s1559 + $0x100] sm:$0xff]
  %v1575 = vld [vmem:[%s1559 + $0x110] sm:$0xff]
  %v1577 = vsel %vm154, %v1560, 0
  %v1580 = vsel %vm154, %v1561, 0
  %v1583 = vsel %vm154, %v1562, 0
  %v1586 = vsel %vm154, %v1563, 0
  %v1589 = vsel %vm154, %v1564, 0
  %v1592 = vsel %vm154, %v1565, 0
  %v1595 = vsel %vm154, %v1566, 0
  %v1598 = vsel %vm154, %v1567, 0
  %v1601 = vsel %vm154, %v1568, 0
  %v1604 = vsel %vm154, %v1569, 0
  %v1607 = vsel %vm154, %v1570, 0
  %v1610 = vsel %vm154, %v1571, 0
  %v1613 = vsel %vm154, %v1572, 0
  %v1616 = vsel %vm154, %v1573, 0
  %v1619 = vsel %vm154, %v1574, 0
  %v1622 = vsel %vm154, %v1575, 0
  %v1625 = vsel %vm302, %v219, 0
  %1627 = vmatprep.subr.mxu0 0.0
  %1628 = vmatpush1.msra.mxu0 0.0
  %1629 = vmatprep.subr.mxu0 0.0
  %1630 = vmatpush1.msra.mxu0 0.0
  %1631 = vmatprep.subr.mxu0 0.0
  %1632 = vmatpush1.msra.mxu0 0.0
  %1633 = vmatprep.subr.mxu0 0.0
  %1634 = vmatpush1.msra.mxu0 0.0
  %1635 = vmatprep.subr.mxu0 0.0
  %1636 = vmatpush1.msra.mxu0 0.0
  %1637 = vmatprep.subr.mxu0 0.0
  %1638 = vmatpush1.msra.mxu0 0.0
  %1639 = vmatprep.subr.mxu0 0.0
  %1640 = vmatpush1.msra.mxu0 0.0
  %1641 = vmatprep.subr.mxu0 0.0
  %1642 = vmatpush1.msra.mxu0 0.0
  %1643 = vmatprep.subr.mxu0 0.0
  %1644 = vmatpush1.msra.mxu0 0.0
  %1645 = vmatprep.subr.mxu0 0.0
  %1646 = vmatpush1.msra.mxu0 0.0
  %1647 = vmatprep.subr.mxu0 0.0
  %1648 = vmatpush1.msra.mxu0 0.0
  %1649 = vmatprep.subr.mxu0 0.0
  %1650 = vmatpush1.msra.mxu0 0.0
  %1651 = vmatprep.subr.mxu0 0.0
  %1652 = vmatpush1.msra.mxu0 0.0
  %1653 = vmatprep.subr.mxu0 0.0
  %1654 = vmatpush1.msra.mxu0 0.0
  %1655 = vmatprep.subr.mxu0 0.0
  %1656 = vmatpush1.msra.mxu0 0.0
  %1657 = vmatprep.subr.mxu0 0.0
  %1658 = vmatpush1.msra.mxu0 %v1625
  %1659 = vmatprep.subr.mxu0 0.0
  %1660 = vmatpush2.msra.mxu0 0.0
  %1661 = vmatprep.subr.mxu0 0.0
  %1662 = vmatpush2.msra.mxu0 0.0
  %1663 = vmatprep.subr.mxu0 0.0
  %1664 = vmatpush2.msra.mxu0 0.0
  %1665 = vmatprep.subr.mxu0 0.0
  %1666 = vmatpush2.msra.mxu0 0.0
  %1667 = vmatprep.subr.mxu0 0.0
  %1668 = vmatpush2.msra.mxu0 0.0
  %1669 = vmatprep.subr.mxu0 0.0
  %1670 = vmatpush2.msra.mxu0 0.0
  %1671 = vmatprep.subr.mxu0 0.0
  %1672 = vmatpush2.msra.mxu0 0.0
  %1673 = vmatprep.subr.mxu0 0.0
  %1674 = vmatpush2.msra.mxu0 0.0
  %1675 = vmatprep.subr.mxu0 0.0
  %1676 = vmatpush2.msra.mxu0 0.0
  %1677 = vmatprep.subr.mxu0 0.0
  %1678 = vmatpush2.msra.mxu0 0.0
  %1679 = vmatprep.subr.mxu0 0.0
  %1680 = vmatpush2.msra.mxu0 0.0
  %1681 = vmatprep.subr.mxu0 0.0
  %1682 = vmatpush2.msra.mxu0 0.0
  %1683 = vmatprep.subr.mxu0 0.0
  %1684 = vmatpush2.msra.mxu0 0.0
  %1685 = vmatprep.subr.mxu0 0.0
  %1686 = vmatpush2.msra.mxu0 0.0
  %1687 = vmatprep.subr.mxu0 0.0
  %1688 = vmatpush2.msra.mxu0 0.0
  %1689 = vmatprep.subr.mxu0 0.0
  %1690 = vmatpush2.msra.mxu0 0.0
  %1691 = vmatprep.mubr.f32.mxu0 0.0
  %1692 = vmatmul.mubr.f32.gmra.mxu0 %v1577
  %v1693 = vpop.f32.mrf.mxu0
  %v1694 = vadd.f32 0.0, %v1693
  %v1695 = vpop.f32.mrf.mxu0
  %1696 = vmatprep.mubr.f32.mxu0 0.0
  %1697 = vmatmul.mubr.f32.gmra.mxu0 %v1580
  %v1698 = vpop.f32.mrf.mxu0
  %v1699 = vadd.f32 0.0, %v1698
  %v1700 = vpop.f32.mrf.mxu0
  %1701 = vmatprep.mubr.f32.mxu0 0.0
  %1702 = vmatmul.mubr.f32.gmra.mxu0 %v1583
  %v1703 = vpop.f32.mrf.mxu0
  %v1704 = vadd.f32 0.0, %v1703
  %v1705 = vpop.f32.mrf.mxu0
  %1706 = vmatprep.mubr.f32.mxu0 0.0
  %1707 = vmatmul.mubr.f32.gmra.mxu0 %v1586
  %v1708 = vpop.f32.mrf.mxu0
  %v1709 = vadd.f32 0.0, %v1708
  %v1710 = vpop.f32.mrf.mxu0
  %1711 = vmatprep.mubr.f32.mxu0 0.0
  %1712 = vmatmul.mubr.f32.gmra.mxu0 %v1589
  %v1713 = vpop.f32.mrf.mxu0
  %v1714 = vadd.f32 0.0, %v1713
  %v1715 = vpop.f32.mrf.mxu0
  %1716 = vmatprep.mubr.f32.mxu0 0.0
  %1717 = vmatmul.mubr.f32.gmra.mxu0 %v1592
  %v1718 = vpop.f32.mrf.mxu0
  %v1719 = vadd.f32 0.0, %v1718
  %v1720 = vpop.f32.mrf.mxu0
  %1721 = vmatprep.mubr.f32.mxu0 0.0
  %1722 = vmatmul.mubr.f32.gmra.mxu0 %v1595
  %v1723 = vpop.f32.mrf.mxu0
  %v1724 = vadd.f32 0.0, %v1723
  %v1725 = vpop.f32.mrf.mxu0
  %1726 = vmatprep.mubr.f32.mxu0 0.0
  %1727 = vmatmul.mubr.f32.gmra.mxu0 %v1598
  %v1728 = vpop.f32.mrf.mxu0
  %v1729 = vadd.f32 0.0, %v1728
  %v1730 = vpop.f32.mrf.mxu0
  %1731 = vmatprep.mubr.f32.mxu0 0.0
  %1732 = vmatmul.mubr.f32.gmra.mxu0 %v1601
  %v1733 = vpop.f32.mrf.mxu0
  %v1734 = vadd.f32 0.0, %v1733
  %v1735 = vpop.f32.mrf.mxu0
  %1736 = vmatprep.mubr.f32.mxu0 0.0
  %1737 = vmatmul.mubr.f32.gmra.mxu0 %v1604
  %v1738 = vpop.f32.mrf.mxu0
  %v1739 = vadd.f32 0.0, %v1738
  %v1740 = vpop.f32.mrf.mxu0
  %1741 = vmatprep.mubr.f32.mxu0 0.0
  %1742 = vmatmul.mubr.f32.gmra.mxu0 %v1607
  %v1743 = vpop.f32.mrf.mxu0
  %v1744 = vadd.f32 0.0, %v1743
  %v1745 = vpop.f32.mrf.mxu0
  %1746 = vmatprep.mubr.f32.mxu0 0.0
  %1747 = vmatmul.mubr.f32.gmra.mxu0 %v1610
  %v1748 = vpop.f32.mrf.mxu0
  %v1749 = vadd.f32 0.0, %v1748
  %v1750 = vpop.f32.mrf.mxu0
  %1751 = vmatprep.mubr.f32.mxu0 0.0
  %1752 = vmatmul.mubr.f32.gmra.mxu0 %v1613
  %v1753 = vpop.f32.mrf.mxu0
  %v1754 = vadd.f32 0.0, %v1753
  %v1755 = vpop.f32.mrf.mxu0
  %1756 = vmatprep.mubr.f32.mxu0 0.0
  %1757 = vmatmul.mubr.f32.gmra.mxu0 %v1616
  %v1758 = vpop.f32.mrf.mxu0
  %v1759 = vadd.f32 0.0, %v1758
  %v1760 = vpop.f32.mrf.mxu0
  %1761 = vmatprep.mubr.f32.mxu0 0.0
  %1762 = vmatmul.mubr.f32.gmra.mxu0 %v1619
  %v1763 = vpop.f32.mrf.mxu0
  %v1764 = vadd.f32 0.0, %v1763
  %v1765 = vpop.f32.mrf.mxu0
  %1766 = vmatprep.mubr.f32.mxu0 0.0
  %1767 = vmatmul.mubr.f32.gmra.mxu0 %v1622
  %v1768 = vpop.f32.mrf.mxu0
  %v1769 = vadd.f32 0.0, %v1768
  %v1770 = vpop.f32.mrf.mxu0
  %1771 = vdwg.mxu0
  %v1772 = vadd.f32 %v1543, %v1694
  %v1773 = vadd.f32 %v1544, %v1699
  %v1774 = vadd.f32 %v1545, %v1704
  %v1775 = vadd.f32 %v1546, %v1709
  %v1776 = vadd.f32 %v1547, %v1714
  %v1777 = vadd.f32 %v1548, %v1719
  %v1778 = vadd.f32 %v1549, %v1724
  %v1779 = vadd.f32 %v1550, %v1729
  %v1780 = vadd.f32 %v1551, %v1734
  %v1781 = vadd.f32 %v1552, %v1739
  %v1782 = vadd.f32 %v1553, %v1744
  %v1783 = vadd.f32 %v1554, %v1749
  %v1784 = vadd.f32 %v1555, %v1754
  %v1785 = vadd.f32 %v1556, %v1759
  %v1786 = vadd.f32 %v1557, %v1764
  %v1787 = vadd.f32 %v1558, %v1769
  %v1788 = vld [vmem:[%s1559 + $0x1] sm:$0xff]
  %v1789 = vld [vmem:[%s1559 + $0x11] sm:$0xff]
  %v1790 = vld [vmem:[%s1559 + $0x21] sm:$0xff]
  %v1791 = vld [vmem:[%s1559 + $0x31] sm:$0xff]
  %v1792 = vld [vmem:[%s1559 + $0x41] sm:$0xff]
  %v1793 = vld [vmem:[%s1559 + $0x51] sm:$0xff]
  %v1794 = vld [vmem:[%s1559 + $0x61] sm:$0xff]
  %v1795 = vld [vmem:[%s1559 + $0x71] sm:$0xff]
  %v1796 = vld [vmem:[%s1559 + $0xa1] sm:$0xff]
  %v1797 = vld [vmem:[%s1559 + $0xb1] sm:$0xff]
  %v1798 = vld [vmem:[%s1559 + $0xc1] sm:$0xff]
  %v1799 = vld [vmem:[%s1559 + $0xd1] sm:$0xff]
  %v1800 = vld [vmem:[%s1559 + $0xe1] sm:$0xff]
  %v1801 = vld [vmem:[%s1559 + $0xf1] sm:$0xff]
  %v1802 = vld [vmem:[%s1559 + $0x101] sm:$0xff]
  %v1803 = vld [vmem:[%s1559 + $0x111] sm:$0xff]
  %v1805 = vsel %vm154, %v1788, 0
  %v1808 = vsel %vm154, %v1789, 0
  %v1811 = vsel %vm154, %v1790, 0
  %v1814 = vsel %vm154, %v1791, 0
  %v1817 = vsel %vm154, %v1792, 0
  %v1820 = vsel %vm154, %v1793, 0
  %v1823 = vsel %vm154, %v1794, 0
  %v1826 = vsel %vm154, %v1795, 0
  %v1829 = vsel %vm154, %v1796, 0
  %v1832 = vsel %vm154, %v1797, 0
  %v1835 = vsel %vm154, %v1798, 0
  %v1838 = vsel %vm154, %v1799, 0
  %v1841 = vsel %vm154, %v1800, 0
  %v1844 = vsel %vm154, %v1801, 0
  %v1847 = vsel %vm154, %v1802, 0
  %v1850 = vsel %vm154, %v1803, 0
  %v1853 = vsel %vm302, %v220, 0
  %1855 = vmatprep.subr.mxu0 0.0
  %1856 = vmatpush1.msra.mxu0 0.0
  %1857 = vmatprep.subr.mxu0 0.0
  %1858 = vmatpush1.msra.mxu0 0.0
  %1859 = vmatprep.subr.mxu0 0.0
  %1860 = vmatpush1.msra.mxu0 0.0
  %1861 = vmatprep.subr.mxu0 0.0
  %1862 = vmatpush1.msra.mxu0 0.0
  %1863 = vmatprep.subr.mxu0 0.0
  %1864 = vmatpush1.msra.mxu0 0.0
  %1865 = vmatprep.subr.mxu0 0.0
  %1866 = vmatpush1.msra.mxu0 0.0
  %1867 = vmatprep.subr.mxu0 0.0
  %1868 = vmatpush1.msra.mxu0 0.0
  %1869 = vmatprep.subr.mxu0 0.0
  %1870 = vmatpush1.msra.mxu0 0.0
  %1871 = vmatprep.subr.mxu0 0.0
  %1872 = vmatpush1.msra.mxu0 0.0
  %1873 = vmatprep.subr.mxu0 0.0
  %1874 = vmatpush1.msra.mxu0 0.0
  %1875 = vmatprep.subr.mxu0 0.0
  %1876 = vmatpush1.msra.mxu0 0.0
  %1877 = vmatprep.subr.mxu0 0.0
  %1878 = vmatpush1.msra.mxu0 0.0
  %1879 = vmatprep.subr.mxu0 0.0
  %1880 = vmatpush1.msra.mxu0 0.0
  %1881 = vmatprep.subr.mxu0 0.0
  %1882 = vmatpush1.msra.mxu0 0.0
  %1883 = vmatprep.subr.mxu0 0.0
  %1884 = vmatpush1.msra.mxu0 0.0
  %1885 = vmatprep.subr.mxu0 0.0
  %1886 = vmatpush1.msra.mxu0 %v1853
  %1887 = vmatprep.subr.mxu0 0.0
  %1888 = vmatpush2.msra.mxu0 0.0
  %1889 = vmatprep.subr.mxu0 0.0
  %1890 = vmatpush2.msra.mxu0 0.0
  %1891 = vmatprep.subr.mxu0 0.0
  %1892 = vmatpush2.msra.mxu0 0.0
  %1893 = vmatprep.subr.mxu0 0.0
  %1894 = vmatpush2.msra.mxu0 0.0
  %1895 = vmatprep.subr.mxu0 0.0
  %1896 = vmatpush2.msra.mxu0 0.0
  %1897 = vmatprep.subr.mxu0 0.0
  %1898 = vmatpush2.msra.mxu0 0.0
  %1899 = vmatprep.subr.mxu0 0.0
  %1900 = vmatpush2.msra.mxu0 0.0
  %1901 = vmatprep.subr.mxu0 0.0
  %1902 = vmatpush2.msra.mxu0 0.0
  %1903 = vmatprep.subr.mxu0 0.0
  %1904 = vmatpush2.msra.mxu0 0.0
  %1905 = vmatprep.subr.mxu0 0.0
  %1906 = vmatpush2.msra.mxu0 0.0
  %1907 = vmatprep.subr.mxu0 0.0
  %1908 = vmatpush2.msra.mxu0 0.0
  %1909 = vmatprep.subr.mxu0 0.0
  %1910 = vmatpush2.msra.mxu0 0.0
  %1911 = vmatprep.subr.mxu0 0.0
  %1912 = vmatpush2.msra.mxu0 0.0
  %1913 = vmatprep.subr.mxu0 0.0
  %1914 = vmatpush2.msra.mxu0 0.0
  %1915 = vmatprep.subr.mxu0 0.0
  %1916 = vmatpush2.msra.mxu0 0.0
  %1917 = vmatprep.subr.mxu0 0.0
  %1918 = vmatpush2.msra.mxu0 0.0
  %1919 = vmatprep.mubr.f32.mxu0 0.0
  %1920 = vmatmul.mubr.f32.gmra.mxu0 %v1805
  %v1921 = vpop.f32.mrf.mxu0
  %v1922 = vadd.f32 0.0, %v1921
  %v1923 = vpop.f32.mrf.mxu0
  %1924 = vmatprep.mubr.f32.mxu0 0.0
  %1925 = vmatmul.mubr.f32.gmra.mxu0 %v1808
  %v1926 = vpop.f32.mrf.mxu0
  %v1927 = vadd.f32 0.0, %v1926
  %v1928 = vpop.f32.mrf.mxu0
  %1929 = vmatprep.mubr.f32.mxu0 0.0
  %1930 = vmatmul.mubr.f32.gmra.mxu0 %v1811
  %v1931 = vpop.f32.mrf.mxu0
  %v1932 = vadd.f32 0.0, %v1931
  %v1933 = vpop.f32.mrf.mxu0
  %1934 = vmatprep.mubr.f32.mxu0 0.0
  %1935 = vmatmul.mubr.f32.gmra.mxu0 %v1814
  %v1936 = vpop.f32.mrf.mxu0
  %v1937 = vadd.f32 0.0, %v1936
  %v1938 = vpop.f32.mrf.mxu0
  %1939 = vmatprep.mubr.f32.mxu0 0.0
  %1940 = vmatmul.mubr.f32.gmra.mxu0 %v1817
  %v1941 = vpop.f32.mrf.mxu0
  %v1942 = vadd.f32 0.0, %v1941
  %v1943 = vpop.f32.mrf.mxu0
  %1944 = vmatprep.mubr.f32.mxu0 0.0
  %1945 = vmatmul.mubr.f32.gmra.mxu0 %v1820
  %v1946 = vpop.f32.mrf.mxu0
  %v1947 = vadd.f32 0.0, %v1946
  %v1948 = vpop.f32.mrf.mxu0
  %1949 = vmatprep.mubr.f32.mxu0 0.0
  %1950 = vmatmul.mubr.f32.gmra.mxu0 %v1823
  %v1951 = vpop.f32.mrf.mxu0
  %v1952 = vadd.f32 0.0, %v1951
  %v1953 = vpop.f32.mrf.mxu0
  %1954 = vmatprep.mubr.f32.mxu0 0.0
  %1955 = vmatmul.mubr.f32.gmra.mxu0 %v1826
  %v1956 = vpop.f32.mrf.mxu0
  %v1957 = vadd.f32 0.0, %v1956
  %v1958 = vpop.f32.mrf.mxu0
  %1959 = vmatprep.mubr.f32.mxu0 0.0
  %1960 = vmatmul.mubr.f32.gmra.mxu0 %v1829
  %v1961 = vpop.f32.mrf.mxu0
  %v1962 = vadd.f32 0.0, %v1961
  %v1963 = vpop.f32.mrf.mxu0
  %1964 = vmatprep.mubr.f32.mxu0 0.0
  %1965 = vmatmul.mubr.f32.gmra.mxu0 %v1832
  %v1966 = vpop.f32.mrf.mxu0
  %v1967 = vadd.f32 0.0, %v1966
  %v1968 = vpop.f32.mrf.mxu0
  %1969 = vmatprep.mubr.f32.mxu0 0.0
  %1970 = vmatmul.mubr.f32.gmra.mxu0 %v1835
  %v1971 = vpop.f32.mrf.mxu0
  %v1972 = vadd.f32 0.0, %v1971
  %v1973 = vpop.f32.mrf.mxu0
  %1974 = vmatprep.mubr.f32.mxu0 0.0
  %1975 = vmatmul.mubr.f32.gmra.mxu0 %v1838
  %v1976 = vpop.f32.mrf.mxu0
  %v1977 = vadd.f32 0.0, %v1976
  %v1978 = vpop.f32.mrf.mxu0
  %1979 = vmatprep.mubr.f32.mxu0 0.0
  %1980 = vmatmul.mubr.f32.gmra.mxu0 %v1841
  %v1981 = vpop.f32.mrf.mxu0
  %v1982 = vadd.f32 0.0, %v1981
  %v1983 = vpop.f32.mrf.mxu0
  %1984 = vmatprep.mubr.f32.mxu0 0.0
  %1985 = vmatmul.mubr.f32.gmra.mxu0 %v1844
  %v1986 = vpop.f32.mrf.mxu0
  %v1987 = vadd.f32 0.0, %v1986
  %v1988 = vpop.f32.mrf.mxu0
  %1989 = vmatprep.mubr.f32.mxu0 0.0
  %1990 = vmatmul.mubr.f32.gmra.mxu0 %v1847
  %v1991 = vpop.f32.mrf.mxu0
  %v1992 = vadd.f32 0.0, %v1991
  %v1993 = vpop.f32.mrf.mxu0
  %1994 = vmatprep.mubr.f32.mxu0 0.0
  %1995 = vmatmul.mubr.f32.gmra.mxu0 %v1850
  %v1996 = vpop.f32.mrf.mxu0
  %v1997 = vadd.f32 0.0, %v1996
  %v1998 = vpop.f32.mrf.mxu0
  %1999 = vdwg.mxu0
  %v2000 = vadd.f32 %v1772, %v1922
  %v2001 = vadd.f32 %v1773, %v1927
  %v2002 = vadd.f32 %v1774, %v1932
  %v2003 = vadd.f32 %v1775, %v1937
  %v2004 = vadd.f32 %v1776, %v1942
  %v2005 = vadd.f32 %v1777, %v1947
  %v2006 = vadd.f32 %v1778, %v1952
  %v2007 = vadd.f32 %v1779, %v1957
  %v2008 = vadd.f32 %v1780, %v1962
  %v2009 = vadd.f32 %v1781, %v1967
  %v2010 = vadd.f32 %v1782, %v1972
  %v2011 = vadd.f32 %v1783, %v1977
  %v2012 = vadd.f32 %v1784, %v1982
  %v2013 = vadd.f32 %v1785, %v1987
  %v2014 = vadd.f32 %v1786, %v1992
  %v2015 = vadd.f32 %v1787, %v1997
  %v2016 = vld [vmem:[%s1559 + $0x2] sm:$0xff]
  %v2017 = vld [vmem:[%s1559 + $0x12] sm:$0xff]
  %v2018 = vld [vmem:[%s1559 + $0x22] sm:$0xff]
  %v2019 = vld [vmem:[%s1559 + $0x32] sm:$0xff]
  %v2020 = vld [vmem:[%s1559 + $0x42] sm:$0xff]
  %v2021 = vld [vmem:[%s1559 + $0x52] sm:$0xff]
  %v2022 = vld [vmem:[%s1559 + $0x62] sm:$0xff]
  %v2023 = vld [vmem:[%s1559 + $0x72] sm:$0xff]
  %v2024 = vld [vmem:[%s1559 + $0xa2] sm:$0xff]
  %v2025 = vld [vmem:[%s1559 + $0xb2] sm:$0xff]
  %v2026 = vld [vmem:[%s1559 + $0xc2] sm:$0xff]
  %v2027 = vld [vmem:[%s1559 + $0xd2] sm:$0xff]
  %v2028 = vld [vmem:[%s1559 + $0xe2] sm:$0xff]
  %v2029 = vld [vmem:[%s1559 + $0xf2] sm:$0xff]
  %v2030 = vld [vmem:[%s1559 + $0x102] sm:$0xff]
  %v2031 = vld [vmem:[%s1559 + $0x112] sm:$0xff]
  %v2033 = vsel %vm154, %v2016, 0
  %v2036 = vsel %vm154, %v2017, 0
  %v2039 = vsel %vm154, %v2018, 0
  %v2042 = vsel %vm154, %v2019, 0
  %v2045 = vsel %vm154, %v2020, 0
  %v2048 = vsel %vm154, %v2021, 0
  %v2051 = vsel %vm154, %v2022, 0
  %v2054 = vsel %vm154, %v2023, 0
  %v2057 = vsel %vm154, %v2024, 0
  %v2060 = vsel %vm154, %v2025, 0
  %v2063 = vsel %vm154, %v2026, 0
  %v2066 = vsel %vm154, %v2027, 0
  %v2069 = vsel %vm154, %v2028, 0
  %v2072 = vsel %vm154, %v2029, 0
  %v2075 = vsel %vm154, %v2030, 0
  %v2078 = vsel %vm154, %v2031, 0
  %v2081 = vsel %vm302, %v221, 0
  %2083 = vmatprep.subr.mxu0 0.0
  %2084 = vmatpush1.msra.mxu0 0.0
  %2085 = vmatprep.subr.mxu0 0.0
  %2086 = vmatpush1.msra.mxu0 0.0
  %2087 = vmatprep.subr.mxu0 0.0
  %2088 = vmatpush1.msra.mxu0 0.0
  %2089 = vmatprep.subr.mxu0 0.0
  %2090 = vmatpush1.msra.mxu0 0.0
  %2091 = vmatprep.subr.mxu0 0.0
  %2092 = vmatpush1.msra.mxu0 0.0
  %2093 = vmatprep.subr.mxu0 0.0
  %2094 = vmatpush1.msra.mxu0 0.0
  %2095 = vmatprep.subr.mxu0 0.0
  %2096 = vmatpush1.msra.mxu0 0.0
  %2097 = vmatprep.subr.mxu0 0.0
  %2098 = vmatpush1.msra.mxu0 0.0
  %2099 = vmatprep.subr.mxu0 0.0
  %2100 = vmatpush1.msra.mxu0 0.0
  %2101 = vmatprep.subr.mxu0 0.0
  %2102 = vmatpush1.msra.mxu0 0.0
  %2103 = vmatprep.subr.mxu0 0.0
  %2104 = vmatpush1.msra.mxu0 0.0
  %2105 = vmatprep.subr.mxu0 0.0
  %2106 = vmatpush1.msra.mxu0 0.0
  %2107 = vmatprep.subr.mxu0 0.0
  %2108 = vmatpush1.msra.mxu0 0.0
  %2109 = vmatprep.subr.mxu0 0.0
  %2110 = vmatpush1.msra.mxu0 0.0
  %2111 = vmatprep.subr.mxu0 0.0
  %2112 = vmatpush1.msra.mxu0 0.0
  %2113 = vmatprep.subr.mxu0 0.0
  %2114 = vmatpush1.msra.mxu0 %v2081
  %2115 = vmatprep.subr.mxu0 0.0
  %2116 = vmatpush2.msra.mxu0 0.0
  %2117 = vmatprep.subr.mxu0 0.0
  %2118 = vmatpush2.msra.mxu0 0.0
  %2119 = vmatprep.subr.mxu0 0.0
  %2120 = vmatpush2.msra.mxu0 0.0
  %2121 = vmatprep.subr.mxu0 0.0
  %2122 = vmatpush2.msra.mxu0 0.0
  %2123 = vmatprep.subr.mxu0 0.0
  %2124 = vmatpush2.msra.mxu0 0.0
  %2125 = vmatprep.subr.mxu0 0.0
  %2126 = vmatpush2.msra.mxu0 0.0
  %2127 = vmatprep.subr.mxu0 0.0
  %2128 = vmatpush2.msra.mxu0 0.0
  %2129 = vmatprep.subr.mxu0 0.0
  %2130 = vmatpush2.msra.mxu0 0.0
  %2131 = vmatprep.subr.mxu0 0.0
  %2132 = vmatpush2.msra.mxu0 0.0
  %2133 = vmatprep.subr.mxu0 0.0
  %2134 = vmatpush2.msra.mxu0 0.0
  %2135 = vmatprep.subr.mxu0 0.0
  %2136 = vmatpush2.msra.mxu0 0.0
  %2137 = vmatprep.subr.mxu0 0.0
  %2138 = vmatpush2.msra.mxu0 0.0
  %2139 = vmatprep.subr.mxu0 0.0
  %2140 = vmatpush2.msra.mxu0 0.0
  %2141 = vmatprep.subr.mxu0 0.0
  %2142 = vmatpush2.msra.mxu0 0.0
  %2143 = vmatprep.subr.mxu0 0.0
  %2144 = vmatpush2.msra.mxu0 0.0
  %2145 = vmatprep.subr.mxu0 0.0
  %2146 = vmatpush2.msra.mxu0 0.0
  %2147 = vmatprep.mubr.f32.mxu0 0.0
  %2148 = vmatmul.mubr.f32.gmra.mxu0 %v2033
  %v2149 = vpop.f32.mrf.mxu0
  %v2150 = vadd.f32 0.0, %v2149
  %v2151 = vpop.f32.mrf.mxu0
  %2152 = vmatprep.mubr.f32.mxu0 0.0
  %2153 = vmatmul.mubr.f32.gmra.mxu0 %v2036
  %v2154 = vpop.f32.mrf.mxu0
  %v2155 = vadd.f32 0.0, %v2154
  %v2156 = vpop.f32.mrf.mxu0
  %2157 = vmatprep.mubr.f32.mxu0 0.0
  %2158 = vmatmul.mubr.f32.gmra.mxu0 %v2039
  %v2159 = vpop.f32.mrf.mxu0
  %v2160 = vadd.f32 0.0, %v2159
  %v2161 = vpop.f32.mrf.mxu0
  %2162 = vmatprep.mubr.f32.mxu0 0.0
  %2163 = vmatmul.mubr.f32.gmra.mxu0 %v2042
  %v2164 = vpop.f32.mrf.mxu0
  %v2165 = vadd.f32 0.0, %v2164
  %v2166 = vpop.f32.mrf.mxu0
  %2167 = vmatprep.mubr.f32.mxu0 0.0
  %2168 = vmatmul.mubr.f32.gmra.mxu0 %v2045
  %v2169 = vpop.f32.mrf.mxu0
  %v2170 = vadd.f32 0.0, %v2169
  %v2171 = vpop.f32.mrf.mxu0
  %2172 = vmatprep.mubr.f32.mxu0 0.0
  %2173 = vmatmul.mubr.f32.gmra.mxu0 %v2048
  %v2174 = vpop.f32.mrf.mxu0
  %v2175 = vadd.f32 0.0, %v2174
  %v2176 = vpop.f32.mrf.mxu0
  %2177 = vmatprep.mubr.f32.mxu0 0.0
  %2178 = vmatmul.mubr.f32.gmra.mxu0 %v2051
  %v2179 = vpop.f32.mrf.mxu0
  %v2180 = vadd.f32 0.0, %v2179
  %v2181 = vpop.f32.mrf.mxu0
  %2182 = vmatprep.mubr.f32.mxu0 0.0
  %2183 = vmatmul.mubr.f32.gmra.mxu0 %v2054
  %v2184 = vpop.f32.mrf.mxu0
  %v2185 = vadd.f32 0.0, %v2184
  %v2186 = vpop.f32.mrf.mxu0
  %2187 = vmatprep.mubr.f32.mxu0 0.0
  %2188 = vmatmul.mubr.f32.gmra.mxu0 %v2057
  %v2189 = vpop.f32.mrf.mxu0
  %v2190 = vadd.f32 0.0, %v2189
  %v2191 = vpop.f32.mrf.mxu0
  %2192 = vmatprep.mubr.f32.mxu0 0.0
  %2193 = vmatmul.mubr.f32.gmra.mxu0 %v2060
  %v2194 = vpop.f32.mrf.mxu0
  %v2195 = vadd.f32 0.0, %v2194
  %v2196 = vpop.f32.mrf.mxu0
  %2197 = vmatprep.mubr.f32.mxu0 0.0
  %2198 = vmatmul.mubr.f32.gmra.mxu0 %v2063
  %v2199 = vpop.f32.mrf.mxu0
  %v2200 = vadd.f32 0.0, %v2199
  %v2201 = vpop.f32.mrf.mxu0
  %2202 = vmatprep.mubr.f32.mxu0 0.0
  %2203 = vmatmul.mubr.f32.gmra.mxu0 %v2066
  %v2204 = vpop.f32.mrf.mxu0
  %v2205 = vadd.f32 0.0, %v2204
  %v2206 = vpop.f32.mrf.mxu0
  %2207 = vmatprep.mubr.f32.mxu0 0.0
  %2208 = vmatmul.mubr.f32.gmra.mxu0 %v2069
  %v2209 = vpop.f32.mrf.mxu0
  %v2210 = vadd.f32 0.0, %v2209
  %v2211 = vpop.f32.mrf.mxu0
  %2212 = vmatprep.mubr.f32.mxu0 0.0
  %2213 = vmatmul.mubr.f32.gmra.mxu0 %v2072
  %v2214 = vpop.f32.mrf.mxu0
  %v2215 = vadd.f32 0.0, %v2214
  %v2216 = vpop.f32.mrf.mxu0
  %2217 = vmatprep.mubr.f32.mxu0 0.0
  %2218 = vmatmul.mubr.f32.gmra.mxu0 %v2075
  %v2219 = vpop.f32.mrf.mxu0
  %v2220 = vadd.f32 0.0, %v2219
  %v2221 = vpop.f32.mrf.mxu0
  %2222 = vmatprep.mubr.f32.mxu0 0.0
  %2223 = vmatmul.mubr.f32.gmra.mxu0 %v2078
  %v2224 = vpop.f32.mrf.mxu0
  %v2225 = vadd.f32 0.0, %v2224
  %v2226 = vpop.f32.mrf.mxu0
  %2227 = vdwg.mxu0
  %v2228 = vadd.f32 %v2000, %v2150
  %v2229 = vadd.f32 %v2001, %v2155
  %v2230 = vadd.f32 %v2002, %v2160
  %v2231 = vadd.f32 %v2003, %v2165
  %v2232 = vadd.f32 %v2004, %v2170
  %v2233 = vadd.f32 %v2005, %v2175
  %v2234 = vadd.f32 %v2006, %v2180
  %v2235 = vadd.f32 %v2007, %v2185
  %v2236 = vadd.f32 %v2008, %v2190
  %v2237 = vadd.f32 %v2009, %v2195
  %v2238 = vadd.f32 %v2010, %v2200
  %v2239 = vadd.f32 %v2011, %v2205
  %v2240 = vadd.f32 %v2012, %v2210
  %v2241 = vadd.f32 %v2013, %v2215
  %v2242 = vadd.f32 %v2014, %v2220
  %v2243 = vadd.f32 %v2015, %v2225
  %v2244 = vld [vmem:[%s2] sm:$0x1]
  %v2245 = vld [vmem:[%s3] sm:$0x1]
  %vm2246 = vcmask 64512
  %v2247 = vsel %vm2246, %v2228, 0.0
  %v2248 = vsel %vm2246, %v2229, 0.0
  %v2249 = vadd.f32 %v2247, %v2248
  %v2250 = vsel %vm2246, %v2230, 0.0
  %v2251 = vadd.f32 %v2249, %v2250
  %v2252 = vsel %vm2246, %v2231, 0.0
  %v2253 = vadd.f32 %v2251, %v2252
  %v2254 = vsel %vm2246, %v2232, 0.0
  %v2255 = vadd.f32 %v2253, %v2254
  %v2256 = vsel %vm2246, %v2233, 0.0
  %v2257 = vadd.f32 %v2255, %v2256
  %v2258 = vsel %vm2246, %v2234, 0.0
  %v2259 = vadd.f32 %v2257, %v2258
  %v2260 = vsel %vm2246, %v2235, 0.0
  %v2261 = vadd.f32 %v2259, %v2260
  %v2262 = vsel %vm2246, %v2236, 0.0
  %v2263 = vadd.f32 %v2261, %v2262
  %v2264 = vsel %vm2246, %v2237, 0.0
  %v2265 = vadd.f32 %v2263, %v2264
  %v2266 = vsel %vm2246, %v2238, 0.0
  %v2267 = vadd.f32 %v2265, %v2266
  %v2268 = vsel %vm2246, %v2239, 0.0
  %v2269 = vadd.f32 %v2267, %v2268
  %v2270 = vsel %vm2246, %v2240, 0.0
  %v2271 = vadd.f32 %v2269, %v2270
  %v2272 = vsel %vm2246, %v2241, 0.0
  %v2273 = vadd.f32 %v2271, %v2272
  %v2274 = vsel %vm2246, %v2242, 0.0
  %v2275 = vadd.f32 %v2273, %v2274
  %v2276 = vsel %vm2246, %v2243, 0.0
  %v2277 = vadd.f32 %v2275, %v2276
  %v2278 = vrot.slane %v2277, 4
  %v2279 = vadd.f32 %v2277, %v2278
  %v2280 = vrot.slane %v2279, 2
  %v2281 = vadd.f32 %v2279, %v2280
  %v2282 = vrot.slane %v2281, 1
  %v2283 = vadd.f32 %v2281, %v2282
  %v2284 = vmul.f32 %v2283, 0.0078125
  %v2285 = vmul.f32 %v2228, %v2228
  %v2286 = vmul.f32 %v2229, %v2229
  %v2287 = vmul.f32 %v2230, %v2230
  %v2288 = vmul.f32 %v2231, %v2231
  %v2289 = vmul.f32 %v2232, %v2232
  %v2290 = vmul.f32 %v2233, %v2233
  %v2291 = vmul.f32 %v2234, %v2234
  %v2292 = vmul.f32 %v2235, %v2235
  %v2293 = vmul.f32 %v2236, %v2236
  %v2294 = vmul.f32 %v2237, %v2237
  %v2295 = vmul.f32 %v2238, %v2238
  %v2296 = vmul.f32 %v2239, %v2239
  %v2297 = vmul.f32 %v2240, %v2240
  %v2298 = vmul.f32 %v2241, %v2241
  %v2299 = vmul.f32 %v2242, %v2242
  %v2300 = vmul.f32 %v2243, %v2243
  %v2301 = vsel %vm2246, %v2285, 0.0
  %v2302 = vsel %vm2246, %v2286, 0.0
  %v2303 = vadd.f32 %v2301, %v2302
  %v2304 = vsel %vm2246, %v2287, 0.0
  %v2305 = vadd.f32 %v2303, %v2304
  %v2306 = vsel %vm2246, %v2288, 0.0
  %v2307 = vadd.f32 %v2305, %v2306
  %v2308 = vsel %vm2246, %v2289, 0.0
  %v2309 = vadd.f32 %v2307, %v2308
  %v2310 = vsel %vm2246, %v2290, 0.0
  %v2311 = vadd.f32 %v2309, %v2310
  %v2312 = vsel %vm2246, %v2291, 0.0
  %v2313 = vadd.f32 %v2311, %v2312
  %v2314 = vsel %vm2246, %v2292, 0.0
  %v2315 = vadd.f32 %v2313, %v2314
  %v2316 = vsel %vm2246, %v2293, 0.0
  %v2317 = vadd.f32 %v2315, %v2316
  %v2318 = vsel %vm2246, %v2294, 0.0
  %v2319 = vadd.f32 %v2317, %v2318
  %v2320 = vsel %vm2246, %v2295, 0.0
  %v2321 = vadd.f32 %v2319, %v2320
  %v2322 = vsel %vm2246, %v2296, 0.0
  %v2323 = vadd.f32 %v2321, %v2322
  %v2324 = vsel %vm2246, %v2297, 0.0
  %v2325 = vadd.f32 %v2323, %v2324
  %v2326 = vsel %vm2246, %v2298, 0.0
  %v2327 = vadd.f32 %v2325, %v2326
  %v2328 = vsel %vm2246, %v2299, 0.0
  %v2329 = vadd.f32 %v2327, %v2328
  %v2330 = vsel %vm2246, %v2300, 0.0
  %v2331 = vadd.f32 %v2329, %v2330
  %v2332 = vrot.slane %v2331, 4
  %v2333 = vadd.f32 %v2331, %v2332
  %v2334 = vrot.slane %v2333, 2
  %v2335 = vadd.f32 %v2333, %v2334
  %v2336 = vrot.slane %v2335, 1
  %v2337 = vadd.f32 %v2335, %v2336
  %v2338 = vmul.f32 %v2337, 0.0078125
  %v2339 = vmul.f32 %v2284, %v2284
  %v2340 = vsub.f32 %v2338, %v2339
  %v2341 = vmax.f32 %v2340, 0.0
  %v2342 = vadd.f32 %v2341, 1e-05
  %v2343 = vrsqrt.pop %v2342
  %v2344 = vmul.f32 %v2244, %v2343
  %v2345 = vmul.f32 %v2284, %v2344
  %v2346 = vsub.f32 %v2245, %v2345
  %v2348 = vlaneseq
  %v2349 = vshrl.u32 %v2348, 7
  %v2350 = vsub.s32 0, %v2349
  %v2351 = vrot.slane %v2344, %v2350
  %v2353 = vmul.f32 %v2228, %v2351
  %v2354 = vmul.f32 %v2229, %v2351
  %v2355 = vmul.f32 %v2230, %v2351
  %v2356 = vmul.f32 %v2231, %v2351
  %v2357 = vmul.f32 %v2232, %v2351
  %v2358 = vmul.f32 %v2233, %v2351
  %v2359 = vmul.f32 %v2234, %v2351
  %v2360 = vmul.f32 %v2235, %v2351
  %v2361 = vmul.f32 %v2236, %v2351
  %v2362 = vmul.f32 %v2237, %v2351
  %v2363 = vmul.f32 %v2238, %v2351
  %v2364 = vmul.f32 %v2239, %v2351
  %v2365 = vmul.f32 %v2240, %v2351
  %v2366 = vmul.f32 %v2241, %v2351
  %v2367 = vmul.f32 %v2242, %v2351
  %v2368 = vmul.f32 %v2243, %v2351
  %v2370 = vlaneseq
  %v2371 = vshrl.u32 %v2370, 7
  %v2372 = vsub.s32 0, %v2371
  %v2373 = vrot.slane %v2346, %v2372
  %v2375 = vadd.f32 %v2353, %v2373
  %v2376 = vadd.f32 %v2354, %v2373
  %v2377 = vadd.f32 %v2355, %v2373
  %v2378 = vadd.f32 %v2356, %v2373
  %v2379 = vadd.f32 %v2357, %v2373
  %v2380 = vadd.f32 %v2358, %v2373
  %v2381 = vadd.f32 %v2359, %v2373
  %v2382 = vadd.f32 %v2360, %v2373
  %v2383 = vadd.f32 %v2361, %v2373
  %v2384 = vadd.f32 %v2362, %v2373
  %v2385 = vadd.f32 %v2363, %v2373
  %v2386 = vadd.f32 %v2364, %v2373
  %v2387 = vadd.f32 %v2365, %v2373
  %v2388 = vadd.f32 %v2366, %v2373
  %v2389 = vadd.f32 %v2367, %v2373
  %v2390 = vadd.f32 %v2368, %v2373
  %v2391 = vmax.f32 %v2375, 0.0
  %v2392 = vmax.f32 %v2376, 0.0
  %v2393 = vmax.f32 %v2377, 0.0
  %v2394 = vmax.f32 %v2378, 0.0
  %v2395 = vmax.f32 %v2379, 0.0
  %v2396 = vmax.f32 %v2380, 0.0
  %v2397 = vmax.f32 %v2381, 0.0
  %v2398 = vmax.f32 %v2382, 0.0
  %v2399 = vmax.f32 %v2383, 0.0
  %v2400 = vmax.f32 %v2384, 0.0
  %v2401 = vmax.f32 %v2385, 0.0
  %v2402 = vmax.f32 %v2386, 0.0
  %v2403 = vmax.f32 %v2387, 0.0
  %v2404 = vmax.f32 %v2388, 0.0
  %v2405 = vmax.f32 %v2389, 0.0
  %v2406 = vmax.f32 %v2390, 0.0
  %2407 = vst.msk [vmem:[#allocation3] sm:$0xff] %vm2246, 0.0
  %vm2408 = vcmask 58368
  %2409 = vst.msk [vmem:[#allocation3 + $0x8] sm:$0x3] %vm2408, 0.0
  %2410 = vst.msk [vmem:[#allocation3 + $0x10] sm:$0xff] %vm2246, 0.0
  %2411 = vst.msk [vmem:[#allocation3 + $0x18] sm:$0x3] %vm2408, 0.0
  %2412 = vst.msk [vmem:[#allocation3 + $0x20] sm:$0xff] %vm2246, 0.0
  %2413 = vst.msk [vmem:[#allocation3 + $0x28] sm:$0x3] %vm2408, 0.0
  %2414 = vst.msk [vmem:[#allocation3 + $0x30] sm:$0xff] %vm2246, 0.0
  %2415 = vst.msk [vmem:[#allocation3 + $0x38] sm:$0x3] %vm2408, 0.0
  %2416 = vst.msk [vmem:[#allocation3 + $0x40] sm:$0xff] %vm2246, 0.0
  %2417 = vst.msk [vmem:[#allocation3 + $0x48] sm:$0x3] %vm2408, 0.0
  %2418 = vst.msk [vmem:[#allocation3 + $0x50] sm:$0xff] %vm2246, 0.0
  %2419 = vst.msk [vmem:[#allocation3 + $0x58] sm:$0x3] %vm2408, 0.0
  %2420 = vst.msk [vmem:[#allocation3 + $0x60] sm:$0xff] %vm2246, 0.0
  %2421 = vst.msk [vmem:[#allocation3 + $0x68] sm:$0x3] %vm2408, 0.0
  %2422 = vst.msk [vmem:[#allocation3 + $0x70] sm:$0xff] %vm2246, 0.0
  %2423 = vst.msk [vmem:[#allocation3 + $0x78] sm:$0x3] %vm2408, 0.0
  %2424 = vst.msk [vmem:[#allocation3 + $0x80] sm:$0xff] %vm2246, 0.0
  %2425 = vst.msk [vmem:[#allocation3 + $0x88] sm:$0x3] %vm2408, 0.0
  %2426 = vst.msk [vmem:[#allocation3 + $0x90] sm:$0xff] %vm2246, 0.0
  %2427 = vst.msk [vmem:[#allocation3 + $0x98] sm:$0x3] %vm2408, 0.0
  %2428 = vst.msk [vmem:[#allocation3 + $0xa0] sm:$0xff] %vm2246, 0.0
  %2429 = vst.msk [vmem:[#allocation3 + $0xa8] sm:$0x3] %vm2408, 0.0
  %2430 = vst.msk [vmem:[#allocation3 + $0xb0] sm:$0xff] %vm2246, 0.0
  %2431 = vst.msk [vmem:[#allocation3 + $0xb8] sm:$0x3] %vm2408, 0.0
  %2432 = vst.msk [vmem:[#allocation3 + $0xc0] sm:$0xff] %vm2246, 0.0
  %2433 = vst.msk [vmem:[#allocation3 + $0xc8] sm:$0x3] %vm2408, 0.0
  %2434 = vst.msk [vmem:[#allocation3 + $0xd0] sm:$0xff] %vm2246, 0.0
  %2435 = vst.msk [vmem:[#allocation3 + $0xd8] sm:$0x3] %vm2408, 0.0
  %2436 = vst.msk [vmem:[#allocation3 + $0xe0] sm:$0xff] %vm2246, 0.0
  %2437 = vst.msk [vmem:[#allocation3 + $0xe8] sm:$0x3] %vm2408, 0.0
  %2438 = vst.msk [vmem:[#allocation3 + $0xf0] sm:$0xff] %vm2246, 0.0
  %2439 = vst.msk [vmem:[#allocation3 + $0xf8] sm:$0x3] %vm2408, 0.0
  %2440 = vst.msk [vmem:[#allocation3 + $0x100] sm:$0xff] %vm2246, 0.0
  %2441 = vst.msk [vmem:[#allocation3 + $0x108] sm:$0x3] %vm2408, 0.0
  %2442 = vst.msk [vmem:[#allocation3 + $0x110] sm:$0xff] %vm2246, 0.0
  %2443 = vst.msk [vmem:[#allocation3 + $0x118] sm:$0x3] %vm2408, 0.0
  %2444 = vst.msk [vmem:[#allocation3 + $0x120] sm:$0xff] %vm2246, 0.0
  %2445 = vst.msk [vmem:[#allocation3 + $0x128] sm:$0x3] %vm2408, 0.0
  %2446 = vst.msk [vmem:[#allocation3 + $0x130] sm:$0xff] %vm2246, 0.0
  %2447 = vst.msk [vmem:[#allocation3 + $0x138] sm:$0x3] %vm2408, 0.0
  %s2448 = scalar_lea.vmem [#allocation3], 16
  %2449 = vst.msk [vmem:[%s2448 + $0x1] sm:$0xff] %vm2246, %v2391
  %2450 = vst.msk [vmem:[%s2448 + $0x11] sm:$0xff] %vm2246, %v2392
  %2451 = vst.msk [vmem:[%s2448 + $0x21] sm:$0xff] %vm2246, %v2393
  %2452 = vst.msk [vmem:[%s2448 + $0x31] sm:$0xff] %vm2246, %v2394
  %2453 = vst.msk [vmem:[%s2448 + $0x41] sm:$0xff] %vm2246, %v2395
  %2454 = vst.msk [vmem:[%s2448 + $0x51] sm:$0xff] %vm2246, %v2396
  %2455 = vst.msk [vmem:[%s2448 + $0x61] sm:$0xff] %vm2246, %v2397
  %2456 = vst.msk [vmem:[%s2448 + $0x71] sm:$0xff] %vm2246, %v2398
  %2457 = vst.msk [vmem:[%s2448 + $0xa1] sm:$0xff] %vm2246, %v2399
  %2458 = vst.msk [vmem:[%s2448 + $0xb1] sm:$0xff] %vm2246, %v2400
  %2459 = vst.msk [vmem:[%s2448 + $0xc1] sm:$0xff] %vm2246, %v2401
  %2460 = vst.msk [vmem:[%s2448 + $0xd1] sm:$0xff] %vm2246, %v2402
  %2461 = vst.msk [vmem:[%s2448 + $0xe1] sm:$0xff] %vm2246, %v2403
  %2462 = vst.msk [vmem:[%s2448 + $0xf1] sm:$0xff] %vm2246, %v2404
  %2463 = vst.msk [vmem:[%s2448 + $0x101] sm:$0xff] %vm2246, %v2405
  %2464 = vst.msk [vmem:[%s2448 + $0x111] sm:$0xff] %vm2246, %v2406
  %v2465 = vld [vmem:[%s4] sm:$0xff]
  %v2466 = vld [vmem:[%s4 + $0x8] sm:$0xff]
  %v2467 = vld [vmem:[%s4 + $0x10] sm:$0xff]
  %v2468 = vld [vmem:[%s4 + $0x18] sm:$0xff]
  %v2469 = vld [vmem:[%s4 + $0x20] sm:$0xff]
  %v2470 = vld [vmem:[%s4 + $0x28] sm:$0xff]
  %v2471 = vld [vmem:[%s4 + $0x30] sm:$0xff]
  %v2472 = vld [vmem:[%s4 + $0x38] sm:$0xff]
  %v2473 = vld [vmem:[%s4 + $0x40] sm:$0xff]
  %v2474 = vld [vmem:[#allocation3] sm:$0xff]
  %v2475 = vld [vmem:[#allocation3 + $0x10] sm:$0xff]
  %v2476 = vld [vmem:[#allocation3 + $0x20] sm:$0xff]
  %v2477 = vld [vmem:[#allocation3 + $0x30] sm:$0xff]
  %v2478 = vld [vmem:[#allocation3 + $0x40] sm:$0xff]
  %v2479 = vld [vmem:[#allocation3 + $0x50] sm:$0xff]
  %v2480 = vld [vmem:[#allocation3 + $0x60] sm:$0xff]
  %v2481 = vld [vmem:[#allocation3 + $0x70] sm:$0xff]
  %v2482 = vld [vmem:[#allocation3 + $0xa0] sm:$0xff]
  %v2483 = vld [vmem:[#allocation3 + $0xb0] sm:$0xff]
  %v2484 = vld [vmem:[#allocation3 + $0xc0] sm:$0xff]
  %v2485 = vld [vmem:[#allocation3 + $0xd0] sm:$0xff]
  %v2486 = vld [vmem:[#allocation3 + $0xe0] sm:$0xff]
  %v2487 = vld [vmem:[#allocation3 + $0xf0] sm:$0xff]
  %v2488 = vld [vmem:[#allocation3 + $0x100] sm:$0xff]
  %v2489 = vld [vmem:[#allocation3 + $0x110] sm:$0xff]
  %v2490 = vld [vmem:[#allocation3 + $0x1] sm:$0xff]
  %v2491 = vld [vmem:[#allocation3 + $0x11] sm:$0xff]
  %v2492 = vld [vmem:[#allocation3 + $0x21] sm:$0xff]
  %v2493 = vld [vmem:[#allocation3 + $0x31] sm:$0xff]
  %v2494 = vld [vmem:[#allocation3 + $0x41] sm:$0xff]
  %v2495 = vld [vmem:[#allocation3 + $0x51] sm:$0xff]
  %v2496 = vld [vmem:[#allocation3 + $0x61] sm:$0xff]
  %v2497 = vld [vmem:[#allocation3 + $0x71] sm:$0xff]
  %v2498 = vld [vmem:[#allocation3 + $0xa1] sm:$0xff]
  %v2499 = vld [vmem:[#allocation3 + $0xb1] sm:$0xff]
  %v2500 = vld [vmem:[#allocation3 + $0xc1] sm:$0xff]
  %v2501 = vld [vmem:[#allocation3 + $0xd1] sm:$0xff]
  %v2502 = vld [vmem:[#allocation3 + $0xe1] sm:$0xff]
  %v2503 = vld [vmem:[#allocation3 + $0xf1] sm:$0xff]
  %v2504 = vld [vmem:[#allocation3 + $0x101] sm:$0xff]
  %v2505 = vld [vmem:[#allocation3 + $0x111] sm:$0xff]
  %v2507 = vsel %vm2246, %v2490, 0
  %v2510 = vsel %vm2246, %v2491, 0
  %v2513 = vsel %vm2246, %v2492, 0
  %v2516 = vsel %vm2246, %v2493, 0
  %v2519 = vsel %vm2246, %v2494, 0
  %v2522 = vsel %vm2246, %v2495, 0
  %v2525 = vsel %vm2246, %v2496, 0
  %v2528 = vsel %vm2246, %v2497, 0
  %v2531 = vsel %vm2246, %v2498, 0
  %v2534 = vsel %vm2246, %v2499, 0
  %v2537 = vsel %vm2246, %v2500, 0
  %v2540 = vsel %vm2246, %v2501, 0
  %v2543 = vsel %vm2246, %v2502, 0
  %v2546 = vsel %vm2246, %v2503, 0
  %v2549 = vsel %vm2246, %v2504, 0
  %v2552 = vsel %vm2246, %v2505, 0
  %2554 = vmatprep.subr.mxu0 0.0
  %2555 = vmatpush1.msra.mxu0 0.0
  %2556 = vmatprep.subr.mxu0 0.0
  %2557 = vmatpush1.msra.mxu0 0.0
  %2558 = vmatprep.subr.mxu0 0.0
  %2559 = vmatpush1.msra.mxu0 0.0
  %2560 = vmatprep.subr.mxu0 0.0
  %2561 = vmatpush1.msra.mxu0 0.0
  %2562 = vmatprep.subr.mxu0 0.0
  %2563 = vmatpush1.msra.mxu0 0.0
  %2564 = vmatprep.subr.mxu0 0.0
  %2565 = vmatpush1.msra.mxu0 0.0
  %2566 = vmatprep.subr.mxu0 0.0
  %2567 = vmatpush1.msra.mxu0 0.0
  %2568 = vmatprep.subr.mxu0 0.0
  %2569 = vmatpush1.msra.mxu0 0.0
  %2570 = vmatprep.subr.mxu0 0.0
  %2571 = vmatpush1.msra.mxu0 0.0
  %2572 = vmatprep.subr.mxu0 0.0
  %2573 = vmatpush1.msra.mxu0 0.0
  %2574 = vmatprep.subr.mxu0 0.0
  %2575 = vmatpush1.msra.mxu0 0.0
  %2576 = vmatprep.subr.mxu0 0.0
  %2577 = vmatpush1.msra.mxu0 0.0
  %2578 = vmatprep.subr.mxu0 0.0
  %2579 = vmatpush1.msra.mxu0 0.0
  %2580 = vmatprep.subr.mxu0 0.0
  %2581 = vmatpush1.msra.mxu0 0.0
  %2582 = vmatprep.subr.mxu0 0.0
  %2583 = vmatpush1.msra.mxu0 0.0
  %2584 = vmatprep.subr.mxu0 0.0
  %2585 = vmatpush1.msra.mxu0 %v2466
  %2586 = vmatprep.subr.mxu0 0.0
  %2587 = vmatpush2.msra.mxu0 0.0
  %2588 = vmatprep.subr.mxu0 0.0
  %2589 = vmatpush2.msra.mxu0 0.0
  %2590 = vmatprep.subr.mxu0 0.0
  %2591 = vmatpush2.msra.mxu0 0.0
  %2592 = vmatprep.subr.mxu0 0.0
  %2593 = vmatpush2.msra.mxu0 0.0
  %2594 = vmatprep.subr.mxu0 0.0
  %2595 = vmatpush2.msra.mxu0 0.0
  %2596 = vmatprep.subr.mxu0 0.0
  %2597 = vmatpush2.msra.mxu0 0.0
  %2598 = vmatprep.subr.mxu0 0.0
  %2599 = vmatpush2.msra.mxu0 0.0
  %2600 = vmatprep.subr.mxu0 0.0
  %2601 = vmatpush2.msra.mxu0 0.0
  %2602 = vmatprep.subr.mxu0 0.0
  %2603 = vmatpush2.msra.mxu0 0.0
  %2604 = vmatprep.subr.mxu0 0.0
  %2605 = vmatpush2.msra.mxu0 0.0
  %2606 = vmatprep.subr.mxu0 0.0
  %2607 = vmatpush2.msra.mxu0 0.0
  %2608 = vmatprep.subr.mxu0 0.0
  %2609 = vmatpush2.msra.mxu0 0.0
  %2610 = vmatprep.subr.mxu0 0.0
  %2611 = vmatpush2.msra.mxu0 0.0
  %2612 = vmatprep.subr.mxu0 0.0
  %2613 = vmatpush2.msra.mxu0 0.0
  %2614 = vmatprep.subr.mxu0 0.0
  %2615 = vmatpush2.msra.mxu0 0.0
  %2616 = vmatprep.subr.mxu0 0.0
  %2617 = vmatpush2.msra.mxu0 0.0
  %2618 = vmatprep.mubr.f32.mxu0 0.0
  %2619 = vmatmul.mubr.f32.gmra.mxu0 %v2507
  %v2620 = vpop.f32.mrf.mxu0
  %v2621 = vadd.f32 0.0, %v2620
  %v2622 = vpop.f32.mrf.mxu0
  %2623 = vmatprep.mubr.f32.mxu0 0.0
  %2624 = vmatmul.mubr.f32.gmra.mxu0 %v2510
  %v2625 = vpop.f32.mrf.mxu0
  %v2626 = vadd.f32 0.0, %v2625
  %v2627 = vpop.f32.mrf.mxu0
  %2628 = vmatprep.mubr.f32.mxu0 0.0
  %2629 = vmatmul.mubr.f32.gmra.mxu0 %v2513
  %v2630 = vpop.f32.mrf.mxu0
  %v2631 = vadd.f32 0.0, %v2630
  %v2632 = vpop.f32.mrf.mxu0
  %2633 = vmatprep.mubr.f32.mxu0 0.0
  %2634 = vmatmul.mubr.f32.gmra.mxu0 %v2516
  %v2635 = vpop.f32.mrf.mxu0
  %v2636 = vadd.f32 0.0, %v2635
  %v2637 = vpop.f32.mrf.mxu0
  %2638 = vmatprep.mubr.f32.mxu0 0.0
  %2639 = vmatmul.mubr.f32.gmra.mxu0 %v2519
  %v2640 = vpop.f32.mrf.mxu0
  %v2641 = vadd.f32 0.0, %v2640
  %v2642 = vpop.f32.mrf.mxu0
  %2643 = vmatprep.mubr.f32.mxu0 0.0
  %2644 = vmatmul.mubr.f32.gmra.mxu0 %v2522
  %v2645 = vpop.f32.mrf.mxu0
  %v2646 = vadd.f32 0.0, %v2645
  %v2647 = vpop.f32.mrf.mxu0
  %2648 = vmatprep.mubr.f32.mxu0 0.0
  %2649 = vmatmul.mubr.f32.gmra.mxu0 %v2525
  %v2650 = vpop.f32.mrf.mxu0
  %v2651 = vadd.f32 0.0, %v2650
  %v2652 = vpop.f32.mrf.mxu0
  %2653 = vmatprep.mubr.f32.mxu0 0.0
  %2654 = vmatmul.mubr.f32.gmra.mxu0 %v2528
  %v2655 = vpop.f32.mrf.mxu0
  %v2656 = vadd.f32 0.0, %v2655
  %v2657 = vpop.f32.mrf.mxu0
  %2658 = vmatprep.mubr.f32.mxu0 0.0
  %2659 = vmatmul.mubr.f32.gmra.mxu0 %v2531
  %v2660 = vpop.f32.mrf.mxu0
  %v2661 = vadd.f32 0.0, %v2660
  %v2662 = vpop.f32.mrf.mxu0
  %2663 = vmatprep.mubr.f32.mxu0 0.0
  %2664 = vmatmul.mubr.f32.gmra.mxu0 %v2534
  %v2665 = vpop.f32.mrf.mxu0
  %v2666 = vadd.f32 0.0, %v2665
  %v2667 = vpop.f32.mrf.mxu0
  %2668 = vmatprep.mubr.f32.mxu0 0.0
  %2669 = vmatmul.mubr.f32.gmra.mxu0 %v2537
  %v2670 = vpop.f32.mrf.mxu0
  %v2671 = vadd.f32 0.0, %v2670
  %v2672 = vpop.f32.mrf.mxu0
  %2673 = vmatprep.mubr.f32.mxu0 0.0
  %2674 = vmatmul.mubr.f32.gmra.mxu0 %v2540
  %v2675 = vpop.f32.mrf.mxu0
  %v2676 = vadd.f32 0.0, %v2675
  %v2677 = vpop.f32.mrf.mxu0
  %2678 = vmatprep.mubr.f32.mxu0 0.0
  %2679 = vmatmul.mubr.f32.gmra.mxu0 %v2543
  %v2680 = vpop.f32.mrf.mxu0
  %v2681 = vadd.f32 0.0, %v2680
  %v2682 = vpop.f32.mrf.mxu0
  %2683 = vmatprep.mubr.f32.mxu0 0.0
  %2684 = vmatmul.mubr.f32.gmra.mxu0 %v2546
  %v2685 = vpop.f32.mrf.mxu0
  %v2686 = vadd.f32 0.0, %v2685
  %v2687 = vpop.f32.mrf.mxu0
  %2688 = vmatprep.mubr.f32.mxu0 0.0
  %2689 = vmatmul.mubr.f32.gmra.mxu0 %v2549
  %v2690 = vpop.f32.mrf.mxu0
  %v2691 = vadd.f32 0.0, %v2690
  %v2692 = vpop.f32.mrf.mxu0
  %2693 = vmatprep.mubr.f32.mxu0 0.0
  %2694 = vmatmul.mubr.f32.gmra.mxu0 %v2552
  %v2695 = vpop.f32.mrf.mxu0
  %v2696 = vadd.f32 0.0, %v2695
  %v2697 = vpop.f32.mrf.mxu0
  %2698 = vdwg.mxu0
  %v2700 = vsel %vm2246, %v2474, 0
  %v2703 = vsel %vm2246, %v2475, 0
  %v2706 = vsel %vm2246, %v2476, 0
  %v2709 = vsel %vm2246, %v2477, 0
  %v2712 = vsel %vm2246, %v2478, 0
  %v2715 = vsel %vm2246, %v2479, 0
  %v2718 = vsel %vm2246, %v2480, 0
  %v2721 = vsel %vm2246, %v2481, 0
  %v2724 = vsel %vm2246, %v2482, 0
  %v2727 = vsel %vm2246, %v2483, 0
  %v2730 = vsel %vm2246, %v2484, 0
  %v2733 = vsel %vm2246, %v2485, 0
  %v2736 = vsel %vm2246, %v2486, 0
  %v2739 = vsel %vm2246, %v2487, 0
  %v2742 = vsel %vm2246, %v2488, 0
  %v2745 = vsel %vm2246, %v2489, 0
  %2747 = vmatprep.subr.mxu0 0.0
  %2748 = vmatpush1.msra.mxu0 0.0
  %2749 = vmatprep.subr.mxu0 0.0
  %2750 = vmatpush1.msra.mxu0 0.0
  %2751 = vmatprep.subr.mxu0 0.0
  %2752 = vmatpush1.msra.mxu0 0.0
  %2753 = vmatprep.subr.mxu0 0.0
  %2754 = vmatpush1.msra.mxu0 0.0
  %2755 = vmatprep.subr.mxu0 0.0
  %2756 = vmatpush1.msra.mxu0 0.0
  %2757 = vmatprep.subr.mxu0 0.0
  %2758 = vmatpush1.msra.mxu0 0.0
  %2759 = vmatprep.subr.mxu0 0.0
  %2760 = vmatpush1.msra.mxu0 0.0
  %2761 = vmatprep.subr.mxu0 0.0
  %2762 = vmatpush1.msra.mxu0 0.0
  %2763 = vmatprep.subr.mxu0 0.0
  %2764 = vmatpush1.msra.mxu0 0.0
  %2765 = vmatprep.subr.mxu0 0.0
  %2766 = vmatpush1.msra.mxu0 0.0
  %2767 = vmatprep.subr.mxu0 0.0
  %2768 = vmatpush1.msra.mxu0 0.0
  %2769 = vmatprep.subr.mxu0 0.0
  %2770 = vmatpush1.msra.mxu0 0.0
  %2771 = vmatprep.subr.mxu0 0.0
  %2772 = vmatpush1.msra.mxu0 0.0
  %2773 = vmatprep.subr.mxu0 0.0
  %2774 = vmatpush1.msra.mxu0 0.0
  %2775 = vmatprep.subr.mxu0 0.0
  %2776 = vmatpush1.msra.mxu0 0.0
  %2777 = vmatprep.subr.mxu0 0.0
  %2778 = vmatpush1.msra.mxu0 %v2465
  %2779 = vmatprep.subr.mxu0 0.0
  %2780 = vmatpush2.msra.mxu0 0.0
  %2781 = vmatprep.subr.mxu0 0.0
  %2782 = vmatpush2.msra.mxu0 0.0
  %2783 = vmatprep.subr.mxu0 0.0
  %2784 = vmatpush2.msra.mxu0 0.0
  %2785 = vmatprep.subr.mxu0 0.0
  %2786 = vmatpush2.msra.mxu0 0.0
  %2787 = vmatprep.subr.mxu0 0.0
  %2788 = vmatpush2.msra.mxu0 0.0
  %2789 = vmatprep.subr.mxu0 0.0
  %2790 = vmatpush2.msra.mxu0 0.0
  %2791 = vmatprep.subr.mxu0 0.0
  %2792 = vmatpush2.msra.mxu0 0.0
  %2793 = vmatprep.subr.mxu0 0.0
  %2794 = vmatpush2.msra.mxu0 0.0
  %2795 = vmatprep.subr.mxu0 0.0
  %2796 = vmatpush2.msra.mxu0 0.0
  %2797 = vmatprep.subr.mxu0 0.0
  %2798 = vmatpush2.msra.mxu0 0.0
  %2799 = vmatprep.subr.mxu0 0.0
  %2800 = vmatpush2.msra.mxu0 0.0
  %2801 = vmatprep.subr.mxu0 0.0
  %2802 = vmatpush2.msra.mxu0 0.0
  %2803 = vmatprep.subr.mxu0 0.0
  %2804 = vmatpush2.msra.mxu0 0.0
  %2805 = vmatprep.subr.mxu0 0.0
  %2806 = vmatpush2.msra.mxu0 0.0
  %2807 = vmatprep.subr.mxu0 0.0
  %2808 = vmatpush2.msra.mxu0 0.0
  %2809 = vmatprep.subr.mxu0 0.0
  %2810 = vmatpush2.msra.mxu0 0.0
  %2811 = vmatprep.mubr.f32.mxu0 0.0
  %2812 = vmatmul.mubr.f32.gmra.mxu0 %v2700
  %v2813 = vpop.f32.mrf.mxu0
  %v2814 = vadd.f32 %v2621, %v2813
  %v2815 = vpop.f32.mrf.mxu0
  %2816 = vmatprep.mubr.f32.mxu0 0.0
  %2817 = vmatmul.mubr.f32.gmra.mxu0 %v2703
  %v2818 = vpop.f32.mrf.mxu0
  %v2819 = vadd.f32 %v2626, %v2818
  %v2820 = vpop.f32.mrf.mxu0
  %2821 = vmatprep.mubr.f32.mxu0 0.0
  %2822 = vmatmul.mubr.f32.gmra.mxu0 %v2706
  %v2823 = vpop.f32.mrf.mxu0
  %v2824 = vadd.f32 %v2631, %v2823
  %v2825 = vpop.f32.mrf.mxu0
  %2826 = vmatprep.mubr.f32.mxu0 0.0
  %2827 = vmatmul.mubr.f32.gmra.mxu0 %v2709
  %v2828 = vpop.f32.mrf.mxu0
  %v2829 = vadd.f32 %v2636, %v2828
  %v2830 = vpop.f32.mrf.mxu0
  %2831 = vmatprep.mubr.f32.mxu0 0.0
  %2832 = vmatmul.mubr.f32.gmra.mxu0 %v2712
  %v2833 = vpop.f32.mrf.mxu0
  %v2834 = vadd.f32 %v2641, %v2833
  %v2835 = vpop.f32.mrf.mxu0
  %2836 = vmatprep.mubr.f32.mxu0 0.0
  %2837 = vmatmul.mubr.f32.gmra.mxu0 %v2715
  %v2838 = vpop.f32.mrf.mxu0
  %v2839 = vadd.f32 %v2646, %v2838
  %v2840 = vpop.f32.mrf.mxu0
  %2841 = vmatprep.mubr.f32.mxu0 0.0
  %2842 = vmatmul.mubr.f32.gmra.mxu0 %v2718
  %v2843 = vpop.f32.mrf.mxu0
  %v2844 = vadd.f32 %v2651, %v2843
  %v2845 = vpop.f32.mrf.mxu0
  %2846 = vmatprep.mubr.f32.mxu0 0.0
  %2847 = vmatmul.mubr.f32.gmra.mxu0 %v2721
  %v2848 = vpop.f32.mrf.mxu0
  %v2849 = vadd.f32 %v2656, %v2848
  %v2850 = vpop.f32.mrf.mxu0
  %2851 = vmatprep.mubr.f32.mxu0 0.0
  %2852 = vmatmul.mubr.f32.gmra.mxu0 %v2724
  %v2853 = vpop.f32.mrf.mxu0
  %v2854 = vadd.f32 %v2661, %v2853
  %v2855 = vpop.f32.mrf.mxu0
  %2856 = vmatprep.mubr.f32.mxu0 0.0
  %2857 = vmatmul.mubr.f32.gmra.mxu0 %v2727
  %v2858 = vpop.f32.mrf.mxu0
  %v2859 = vadd.f32 %v2666, %v2858
  %v2860 = vpop.f32.mrf.mxu0
  %2861 = vmatprep.mubr.f32.mxu0 0.0
  %2862 = vmatmul.mubr.f32.gmra.mxu0 %v2730
  %v2863 = vpop.f32.mrf.mxu0
  %v2864 = vadd.f32 %v2671, %v2863
  %v2865 = vpop.f32.mrf.mxu0
  %2866 = vmatprep.mubr.f32.mxu0 0.0
  %2867 = vmatmul.mubr.f32.gmra.mxu0 %v2733
  %v2868 = vpop.f32.mrf.mxu0
  %v2869 = vadd.f32 %v2676, %v2868
  %v2870 = vpop.f32.mrf.mxu0
  %2871 = vmatprep.mubr.f32.mxu0 0.0
  %2872 = vmatmul.mubr.f32.gmra.mxu0 %v2736
  %v2873 = vpop.f32.mrf.mxu0
  %v2874 = vadd.f32 %v2681, %v2873
  %v2875 = vpop.f32.mrf.mxu0
  %2876 = vmatprep.mubr.f32.mxu0 0.0
  %2877 = vmatmul.mubr.f32.gmra.mxu0 %v2739
  %v2878 = vpop.f32.mrf.mxu0
  %v2879 = vadd.f32 %v2686, %v2878
  %v2880 = vpop.f32.mrf.mxu0
  %2881 = vmatprep.mubr.f32.mxu0 0.0
  %2882 = vmatmul.mubr.f32.gmra.mxu0 %v2742
  %v2883 = vpop.f32.mrf.mxu0
  %v2884 = vadd.f32 %v2691, %v2883
  %v2885 = vpop.f32.mrf.mxu0
  %2886 = vmatprep.mubr.f32.mxu0 0.0
  %2887 = vmatmul.mubr.f32.gmra.mxu0 %v2745
  %v2888 = vpop.f32.mrf.mxu0
  %v2889 = vadd.f32 %v2696, %v2888
  %v2890 = vpop.f32.mrf.mxu0
  %2891 = vdwg.mxu0
  %v2892 = vld [vmem:[#allocation3 + $0x2] sm:$0xff]
  %v2893 = vld [vmem:[#allocation3 + $0x12] sm:$0xff]
  %v2894 = vld [vmem:[#allocation3 + $0x22] sm:$0xff]
  %v2895 = vld [vmem:[#allocation3 + $0x32] sm:$0xff]
  %v2896 = vld [vmem:[#allocation3 + $0x42] sm:$0xff]
  %v2897 = vld [vmem:[#allocation3 + $0x52] sm:$0xff]
  %v2898 = vld [vmem:[#allocation3 + $0x62] sm:$0xff]
  %v2899 = vld [vmem:[#allocation3 + $0x72] sm:$0xff]
  %v2900 = vld [vmem:[#allocation3 + $0xa2] sm:$0xff]
  %v2901 = vld [vmem:[#allocation3 + $0xb2] sm:$0xff]
  %v2902 = vld [vmem:[#allocation3 + $0xc2] sm:$0xff]
  %v2903 = vld [vmem:[#allocation3 + $0xd2] sm:$0xff]
  %v2904 = vld [vmem:[#allocation3 + $0xe2] sm:$0xff]
  %v2905 = vld [vmem:[#allocation3 + $0xf2] sm:$0xff]
  %v2906 = vld [vmem:[#allocation3 + $0x102] sm:$0xff]
  %v2907 = vld [vmem:[#allocation3 + $0x112] sm:$0xff]
  %v2909 = vsel %vm2246, %v2892, 0
  %v2912 = vsel %vm2246, %v2893, 0
  %v2915 = vsel %vm2246, %v2894, 0
  %v2918 = vsel %vm2246, %v2895, 0
  %v2921 = vsel %vm2246, %v2896, 0
  %v2924 = vsel %vm2246, %v2897, 0
  %v2927 = vsel %vm2246, %v2898, 0
  %v2930 = vsel %vm2246, %v2899, 0
  %v2933 = vsel %vm2246, %v2900, 0
  %v2936 = vsel %vm2246, %v2901, 0
  %v2939 = vsel %vm2246, %v2902, 0
  %v2942 = vsel %vm2246, %v2903, 0
  %v2945 = vsel %vm2246, %v2904, 0
  %v2948 = vsel %vm2246, %v2905, 0
  %v2951 = vsel %vm2246, %v2906, 0
  %v2954 = vsel %vm2246, %v2907, 0
  %2956 = vmatprep.subr.mxu0 0.0
  %2957 = vmatpush1.msra.mxu0 0.0
  %2958 = vmatprep.subr.mxu0 0.0
  %2959 = vmatpush1.msra.mxu0 0.0
  %2960 = vmatprep.subr.mxu0 0.0
  %2961 = vmatpush1.msra.mxu0 0.0
  %2962 = vmatprep.subr.mxu0 0.0
  %2963 = vmatpush1.msra.mxu0 0.0
  %2964 = vmatprep.subr.mxu0 0.0
  %2965 = vmatpush1.msra.mxu0 0.0
  %2966 = vmatprep.subr.mxu0 0.0
  %2967 = vmatpush1.msra.mxu0 0.0
  %2968 = vmatprep.subr.mxu0 0.0
  %2969 = vmatpush1.msra.mxu0 0.0
  %2970 = vmatprep.subr.mxu0 0.0
  %2971 = vmatpush1.msra.mxu0 0.0
  %2972 = vmatprep.subr.mxu0 0.0
  %2973 = vmatpush1.msra.mxu0 0.0
  %2974 = vmatprep.subr.mxu0 0.0
  %2975 = vmatpush1.msra.mxu0 0.0
  %2976 = vmatprep.subr.mxu0 0.0
  %2977 = vmatpush1.msra.mxu0 0.0
  %2978 = vmatprep.subr.mxu0 0.0
  %2979 = vmatpush1.msra.mxu0 0.0
  %2980 = vmatprep.subr.mxu0 0.0
  %2981 = vmatpush1.msra.mxu0 0.0
  %2982 = vmatprep.subr.mxu0 0.0
  %2983 = vmatpush1.msra.mxu0 0.0
  %2984 = vmatprep.subr.mxu0 0.0
  %2985 = vmatpush1.msra.mxu0 0.0
  %2986 = vmatprep.subr.mxu0 0.0
  %2987 = vmatpush1.msra.mxu0 %v2467
  %2988 = vmatprep.subr.mxu0 0.0
  %2989 = vmatpush2.msra.mxu0 0.0
  %2990 = vmatprep.subr.mxu0 0.0
  %2991 = vmatpush2.msra.mxu0 0.0
  %2992 = vmatprep.subr.mxu0 0.0
  %2993 = vmatpush2.msra.mxu0 0.0
  %2994 = vmatprep.subr.mxu0 0.0
  %2995 = vmatpush2.msra.mxu0 0.0
  %2996 = vmatprep.subr.mxu0 0.0
  %2997 = vmatpush2.msra.mxu0 0.0
  %2998 = vmatprep.subr.mxu0 0.0
  %2999 = vmatpush2.msra.mxu0 0.0
  %3000 = vmatprep.subr.mxu0 0.0
  %3001 = vmatpush2.msra.mxu0 0.0
  %3002 = vmatprep.subr.mxu0 0.0
  %3003 = vmatpush2.msra.mxu0 0.0
  %3004 = vmatprep.subr.mxu0 0.0
  %3005 = vmatpush2.msra.mxu0 0.0
  %3006 = vmatprep.subr.mxu0 0.0
  %3007 = vmatpush2.msra.mxu0 0.0
  %3008 = vmatprep.subr.mxu0 0.0
  %3009 = vmatpush2.msra.mxu0 0.0
  %3010 = vmatprep.subr.mxu0 0.0
  %3011 = vmatpush2.msra.mxu0 0.0
  %3012 = vmatprep.subr.mxu0 0.0
  %3013 = vmatpush2.msra.mxu0 0.0
  %3014 = vmatprep.subr.mxu0 0.0
  %3015 = vmatpush2.msra.mxu0 0.0
  %3016 = vmatprep.subr.mxu0 0.0
  %3017 = vmatpush2.msra.mxu0 0.0
  %3018 = vmatprep.subr.mxu0 0.0
  %3019 = vmatpush2.msra.mxu0 0.0
  %3020 = vmatprep.mubr.f32.mxu0 0.0
  %3021 = vmatmul.mubr.f32.gmra.mxu0 %v2909
  %v3022 = vpop.f32.mrf.mxu0
  %v3023 = vadd.f32 0.0, %v3022
  %v3024 = vpop.f32.mrf.mxu0
  %3025 = vmatprep.mubr.f32.mxu0 0.0
  %3026 = vmatmul.mubr.f32.gmra.mxu0 %v2912
  %v3027 = vpop.f32.mrf.mxu0
  %v3028 = vadd.f32 0.0, %v3027
  %v3029 = vpop.f32.mrf.mxu0
  %3030 = vmatprep.mubr.f32.mxu0 0.0
  %3031 = vmatmul.mubr.f32.gmra.mxu0 %v2915
  %v3032 = vpop.f32.mrf.mxu0
  %v3033 = vadd.f32 0.0, %v3032
  %v3034 = vpop.f32.mrf.mxu0
  %3035 = vmatprep.mubr.f32.mxu0 0.0
  %3036 = vmatmul.mubr.f32.gmra.mxu0 %v2918
  %v3037 = vpop.f32.mrf.mxu0
  %v3038 = vadd.f32 0.0, %v3037
  %v3039 = vpop.f32.mrf.mxu0
  %3040 = vmatprep.mubr.f32.mxu0 0.0
  %3041 = vmatmul.mubr.f32.gmra.mxu0 %v2921
  %v3042 = vpop.f32.mrf.mxu0
  %v3043 = vadd.f32 0.0, %v3042
  %v3044 = vpop.f32.mrf.mxu0
  %3045 = vmatprep.mubr.f32.mxu0 0.0
  %3046 = vmatmul.mubr.f32.gmra.mxu0 %v2924
  %v3047 = vpop.f32.mrf.mxu0
  %v3048 = vadd.f32 0.0, %v3047
  %v3049 = vpop.f32.mrf.mxu0
  %3050 = vmatprep.mubr.f32.mxu0 0.0
  %3051 = vmatmul.mubr.f32.gmra.mxu0 %v2927
  %v3052 = vpop.f32.mrf.mxu0
  %v3053 = vadd.f32 0.0, %v3052
  %v3054 = vpop.f32.mrf.mxu0
  %3055 = vmatprep.mubr.f32.mxu0 0.0
  %3056 = vmatmul.mubr.f32.gmra.mxu0 %v2930
  %v3057 = vpop.f32.mrf.mxu0
  %v3058 = vadd.f32 0.0, %v3057
  %v3059 = vpop.f32.mrf.mxu0
  %3060 = vmatprep.mubr.f32.mxu0 0.0
  %3061 = vmatmul.mubr.f32.gmra.mxu0 %v2933
  %v3062 = vpop.f32.mrf.mxu0
  %v3063 = vadd.f32 0.0, %v3062
  %v3064 = vpop.f32.mrf.mxu0
  %3065 = vmatprep.mubr.f32.mxu0 0.0
  %3066 = vmatmul.mubr.f32.gmra.mxu0 %v2936
  %v3067 = vpop.f32.mrf.mxu0
  %v3068 = vadd.f32 0.0, %v3067
  %v3069 = vpop.f32.mrf.mxu0
  %3070 = vmatprep.mubr.f32.mxu0 0.0
  %3071 = vmatmul.mubr.f32.gmra.mxu0 %v2939
  %v3072 = vpop.f32.mrf.mxu0
  %v3073 = vadd.f32 0.0, %v3072
  %v3074 = vpop.f32.mrf.mxu0
  %3075 = vmatprep.mubr.f32.mxu0 0.0
  %3076 = vmatmul.mubr.f32.gmra.mxu0 %v2942
  %v3077 = vpop.f32.mrf.mxu0
  %v3078 = vadd.f32 0.0, %v3077
  %v3079 = vpop.f32.mrf.mxu0
  %3080 = vmatprep.mubr.f32.mxu0 0.0
  %3081 = vmatmul.mubr.f32.gmra.mxu0 %v2945
  %v3082 = vpop.f32.mrf.mxu0
  %v3083 = vadd.f32 0.0, %v3082
  %v3084 = vpop.f32.mrf.mxu0
  %3085 = vmatprep.mubr.f32.mxu0 0.0
  %3086 = vmatmul.mubr.f32.gmra.mxu0 %v2948
  %v3087 = vpop.f32.mrf.mxu0
  %v3088 = vadd.f32 0.0, %v3087
  %v3089 = vpop.f32.mrf.mxu0
  %3090 = vmatprep.mubr.f32.mxu0 0.0
  %3091 = vmatmul.mubr.f32.gmra.mxu0 %v2951
  %v3092 = vpop.f32.mrf.mxu0
  %v3093 = vadd.f32 0.0, %v3092
  %v3094 = vpop.f32.mrf.mxu0
  %3095 = vmatprep.mubr.f32.mxu0 0.0
  %3096 = vmatmul.mubr.f32.gmra.mxu0 %v2954
  %v3097 = vpop.f32.mrf.mxu0
  %v3098 = vadd.f32 0.0, %v3097
  %v3099 = vpop.f32.mrf.mxu0
  %3100 = vdwg.mxu0
  %v3101 = vadd.f32 %v2814, %v3023
  %v3102 = vadd.f32 %v2819, %v3028
  %v3103 = vadd.f32 %v2824, %v3033
  %v3104 = vadd.f32 %v2829, %v3038
  %v3105 = vadd.f32 %v2834, %v3043
  %v3106 = vadd.f32 %v2839, %v3048
  %v3107 = vadd.f32 %v2844, %v3053
  %v3108 = vadd.f32 %v2849, %v3058
  %v3109 = vadd.f32 %v2854, %v3063
  %v3110 = vadd.f32 %v2859, %v3068
  %v3111 = vadd.f32 %v2864, %v3073
  %v3112 = vadd.f32 %v2869, %v3078
  %v3113 = vadd.f32 %v2874, %v3083
  %v3114 = vadd.f32 %v2879, %v3088
  %v3115 = vadd.f32 %v2884, %v3093
  %v3116 = vadd.f32 %v2889, %v3098
  %v3117 = vld [vmem:[%s2448] sm:$0xff]
  %v3118 = vld [vmem:[%s2448 + $0x10] sm:$0xff]
  %v3119 = vld [vmem:[%s2448 + $0x20] sm:$0xff]
  %v3120 = vld [vmem:[%s2448 + $0x30] sm:$0xff]
  %v3121 = vld [vmem:[%s2448 + $0x40] sm:$0xff]
  %v3122 = vld [vmem:[%s2448 + $0x50] sm:$0xff]
  %v3123 = vld [vmem:[%s2448 + $0x60] sm:$0xff]
  %v3124 = vld [vmem:[%s2448 + $0x70] sm:$0xff]
  %v3125 = vld [vmem:[%s2448 + $0xa0] sm:$0xff]
  %v3126 = vld [vmem:[%s2448 + $0xb0] sm:$0xff]
  %v3127 = vld [vmem:[%s2448 + $0xc0] sm:$0xff]
  %v3128 = vld [vmem:[%s2448 + $0xd0] sm:$0xff]
  %v3129 = vld [vmem:[%s2448 + $0xe0] sm:$0xff]
  %v3130 = vld [vmem:[%s2448 + $0xf0] sm:$0xff]
  %v3131 = vld [vmem:[%s2448 + $0x100] sm:$0xff]
  %v3132 = vld [vmem:[%s2448 + $0x110] sm:$0xff]
  %v3134 = vsel %vm2246, %v3117, 0
  %v3137 = vsel %vm2246, %v3118, 0
  %v3140 = vsel %vm2246, %v3119, 0
  %v3143 = vsel %vm2246, %v3120, 0
  %v3146 = vsel %vm2246, %v3121, 0
  %v3149 = vsel %vm2246, %v3122, 0
  %v3152 = vsel %vm2246, %v3123, 0
  %v3155 = vsel %vm2246, %v3124, 0
  %v3158 = vsel %vm2246, %v3125, 0
  %v3161 = vsel %vm2246, %v3126, 0
  %v3164 = vsel %vm2246, %v3127, 0
  %v3167 = vsel %vm2246, %v3128, 0
  %v3170 = vsel %vm2246, %v3129, 0
  %v3173 = vsel %vm2246, %v3130, 0
  %v3176 = vsel %vm2246, %v3131, 0
  %v3179 = vsel %vm2246, %v3132, 0
  %3181 = vmatprep.subr.mxu0 0.0
  %3182 = vmatpush1.msra.mxu0 0.0
  %3183 = vmatprep.subr.mxu0 0.0
  %3184 = vmatpush1.msra.mxu0 0.0
  %3185 = vmatprep.subr.mxu0 0.0
  %3186 = vmatpush1.msra.mxu0 0.0
  %3187 = vmatprep.subr.mxu0 0.0
  %3188 = vmatpush1.msra.mxu0 0.0
  %3189 = vmatprep.subr.mxu0 0.0
  %3190 = vmatpush1.msra.mxu0 0.0
  %3191 = vmatprep.subr.mxu0 0.0
  %3192 = vmatpush1.msra.mxu0 0.0
  %3193 = vmatprep.subr.mxu0 0.0
  %3194 = vmatpush1.msra.mxu0 0.0
  %3195 = vmatprep.subr.mxu0 0.0
  %3196 = vmatpush1.msra.mxu0 0.0
  %3197 = vmatprep.subr.mxu0 0.0
  %3198 = vmatpush1.msra.mxu0 0.0
  %3199 = vmatprep.subr.mxu0 0.0
  %3200 = vmatpush1.msra.mxu0 0.0
  %3201 = vmatprep.subr.mxu0 0.0
  %3202 = vmatpush1.msra.mxu0 0.0
  %3203 = vmatprep.subr.mxu0 0.0
  %3204 = vmatpush1.msra.mxu0 0.0
  %3205 = vmatprep.subr.mxu0 0.0
  %3206 = vmatpush1.msra.mxu0 0.0
  %3207 = vmatprep.subr.mxu0 0.0
  %3208 = vmatpush1.msra.mxu0 0.0
  %3209 = vmatprep.subr.mxu0 0.0
  %3210 = vmatpush1.msra.mxu0 0.0
  %3211 = vmatprep.subr.mxu0 0.0
  %3212 = vmatpush1.msra.mxu0 %v2468
  %3213 = vmatprep.subr.mxu0 0.0
  %3214 = vmatpush2.msra.mxu0 0.0
  %3215 = vmatprep.subr.mxu0 0.0
  %3216 = vmatpush2.msra.mxu0 0.0
  %3217 = vmatprep.subr.mxu0 0.0
  %3218 = vmatpush2.msra.mxu0 0.0
  %3219 = vmatprep.subr.mxu0 0.0
  %3220 = vmatpush2.msra.mxu0 0.0
  %3221 = vmatprep.subr.mxu0 0.0
  %3222 = vmatpush2.msra.mxu0 0.0
  %3223 = vmatprep.subr.mxu0 0.0
  %3224 = vmatpush2.msra.mxu0 0.0
  %3225 = vmatprep.subr.mxu0 0.0
  %3226 = vmatpush2.msra.mxu0 0.0
  %3227 = vmatprep.subr.mxu0 0.0
  %3228 = vmatpush2.msra.mxu0 0.0
  %3229 = vmatprep.subr.mxu0 0.0
  %3230 = vmatpush2.msra.mxu0 0.0
  %3231 = vmatprep.subr.mxu0 0.0
  %3232 = vmatpush2.msra.mxu0 0.0
  %3233 = vmatprep.subr.mxu0 0.0
  %3234 = vmatpush2.msra.mxu0 0.0
  %3235 = vmatprep.subr.mxu0 0.0
  %3236 = vmatpush2.msra.mxu0 0.0
  %3237 = vmatprep.subr.mxu0 0.0
  %3238 = vmatpush2.msra.mxu0 0.0
  %3239 = vmatprep.subr.mxu0 0.0
  %3240 = vmatpush2.msra.mxu0 0.0
  %3241 = vmatprep.subr.mxu0 0.0
  %3242 = vmatpush2.msra.mxu0 0.0
  %3243 = vmatprep.subr.mxu0 0.0
  %3244 = vmatpush2.msra.mxu0 0.0
  %3245 = vmatprep.mubr.f32.mxu0 0.0
  %3246 = vmatmul.mubr.f32.gmra.mxu0 %v3134
  %v3247 = vpop.f32.mrf.mxu0
  %v3248 = vadd.f32 0.0, %v3247
  %v3249 = vpop.f32.mrf.mxu0
  %3250 = vmatprep.mubr.f32.mxu0 0.0
  %3251 = vmatmul.mubr.f32.gmra.mxu0 %v3137
  %v3252 = vpop.f32.mrf.mxu0
  %v3253 = vadd.f32 0.0, %v3252
  %v3254 = vpop.f32.mrf.mxu0
  %3255 = vmatprep.mubr.f32.mxu0 0.0
  %3256 = vmatmul.mubr.f32.gmra.mxu0 %v3140
  %v3257 = vpop.f32.mrf.mxu0
  %v3258 = vadd.f32 0.0, %v3257
  %v3259 = vpop.f32.mrf.mxu0
  %3260 = vmatprep.mubr.f32.mxu0 0.0
  %3261 = vmatmul.mubr.f32.gmra.mxu0 %v3143
  %v3262 = vpop.f32.mrf.mxu0
  %v3263 = vadd.f32 0.0, %v3262
  %v3264 = vpop.f32.mrf.mxu0
  %3265 = vmatprep.mubr.f32.mxu0 0.0
  %3266 = vmatmul.mubr.f32.gmra.mxu0 %v3146
  %v3267 = vpop.f32.mrf.mxu0
  %v3268 = vadd.f32 0.0, %v3267
  %v3269 = vpop.f32.mrf.mxu0
  %3270 = vmatprep.mubr.f32.mxu0 0.0
  %3271 = vmatmul.mubr.f32.gmra.mxu0 %v3149
  %v3272 = vpop.f32.mrf.mxu0
  %v3273 = vadd.f32 0.0, %v3272
  %v3274 = vpop.f32.mrf.mxu0
  %3275 = vmatprep.mubr.f32.mxu0 0.0
  %3276 = vmatmul.mubr.f32.gmra.mxu0 %v3152
  %v3277 = vpop.f32.mrf.mxu0
  %v3278 = vadd.f32 0.0, %v3277
  %v3279 = vpop.f32.mrf.mxu0
  %3280 = vmatprep.mubr.f32.mxu0 0.0
  %3281 = vmatmul.mubr.f32.gmra.mxu0 %v3155
  %v3282 = vpop.f32.mrf.mxu0
  %v3283 = vadd.f32 0.0, %v3282
  %v3284 = vpop.f32.mrf.mxu0
  %3285 = vmatprep.mubr.f32.mxu0 0.0
  %3286 = vmatmul.mubr.f32.gmra.mxu0 %v3158
  %v3287 = vpop.f32.mrf.mxu0
  %v3288 = vadd.f32 0.0, %v3287
  %v3289 = vpop.f32.mrf.mxu0
  %3290 = vmatprep.mubr.f32.mxu0 0.0
  %3291 = vmatmul.mubr.f32.gmra.mxu0 %v3161
  %v3292 = vpop.f32.mrf.mxu0
  %v3293 = vadd.f32 0.0, %v3292
  %v3294 = vpop.f32.mrf.mxu0
  %3295 = vmatprep.mubr.f32.mxu0 0.0
  %3296 = vmatmul.mubr.f32.gmra.mxu0 %v3164
  %v3297 = vpop.f32.mrf.mxu0
  %v3298 = vadd.f32 0.0, %v3297
  %v3299 = vpop.f32.mrf.mxu0
  %3300 = vmatprep.mubr.f32.mxu0 0.0
  %3301 = vmatmul.mubr.f32.gmra.mxu0 %v3167
  %v3302 = vpop.f32.mrf.mxu0
  %v3303 = vadd.f32 0.0, %v3302
  %v3304 = vpop.f32.mrf.mxu0
  %3305 = vmatprep.mubr.f32.mxu0 0.0
  %3306 = vmatmul.mubr.f32.gmra.mxu0 %v3170
  %v3307 = vpop.f32.mrf.mxu0
  %v3308 = vadd.f32 0.0, %v3307
  %v3309 = vpop.f32.mrf.mxu0
  %3310 = vmatprep.mubr.f32.mxu0 0.0
  %3311 = vmatmul.mubr.f32.gmra.mxu0 %v3173
  %v3312 = vpop.f32.mrf.mxu0
  %v3313 = vadd.f32 0.0, %v3312
  %v3314 = vpop.f32.mrf.mxu0
  %3315 = vmatprep.mubr.f32.mxu0 0.0
  %3316 = vmatmul.mubr.f32.gmra.mxu0 %v3176
  %v3317 = vpop.f32.mrf.mxu0
  %v3318 = vadd.f32 0.0, %v3317
  %v3319 = vpop.f32.mrf.mxu0
  %3320 = vmatprep.mubr.f32.mxu0 0.0
  %3321 = vmatmul.mubr.f32.gmra.mxu0 %v3179
  %v3322 = vpop.f32.mrf.mxu0
  %v3323 = vadd.f32 0.0, %v3322
  %v3324 = vpop.f32.mrf.mxu0
  %3325 = vdwg.mxu0
  %v3326 = vadd.f32 %v3101, %v3248
  %v3327 = vadd.f32 %v3102, %v3253
  %v3328 = vadd.f32 %v3103, %v3258
  %v3329 = vadd.f32 %v3104, %v3263
  %v3330 = vadd.f32 %v3105, %v3268
  %v3331 = vadd.f32 %v3106, %v3273
  %v3332 = vadd.f32 %v3107, %v3278
  %v3333 = vadd.f32 %v3108, %v3283
  %v3334 = vadd.f32 %v3109, %v3288
  %v3335 = vadd.f32 %v3110, %v3293
  %v3336 = vadd.f32 %v3111, %v3298
  %v3337 = vadd.f32 %v3112, %v3303
  %v3338 = vadd.f32 %v3113, %v3308
  %v3339 = vadd.f32 %v3114, %v3313
  %v3340 = vadd.f32 %v3115, %v3318
  %v3341 = vadd.f32 %v3116, %v3323
  %v3342 = vld [vmem:[%s2448 + $0x1] sm:$0xff]
  %v3343 = vld [vmem:[%s2448 + $0x11] sm:$0xff]
  %v3344 = vld [vmem:[%s2448 + $0x21] sm:$0xff]
  %v3345 = vld [vmem:[%s2448 + $0x31] sm:$0xff]
  %v3346 = vld [vmem:[%s2448 + $0x41] sm:$0xff]
  %v3347 = vld [vmem:[%s2448 + $0x51] sm:$0xff]
  %v3348 = vld [vmem:[%s2448 + $0x61] sm:$0xff]
  %v3349 = vld [vmem:[%s2448 + $0x71] sm:$0xff]
  %v3350 = vld [vmem:[%s2448 + $0xa1] sm:$0xff]
  %v3351 = vld [vmem:[%s2448 + $0xb1] sm:$0xff]
  %v3352 = vld [vmem:[%s2448 + $0xc1] sm:$0xff]
  %v3353 = vld [vmem:[%s2448 + $0xd1] sm:$0xff]
  %v3354 = vld [vmem:[%s2448 + $0xe1] sm:$0xff]
  %v3355 = vld [vmem:[%s2448 + $0xf1] sm:$0xff]
  %v3356 = vld [vmem:[%s2448 + $0x101] sm:$0xff]
  %v3357 = vld [vmem:[%s2448 + $0x111] sm:$0xff]
  %v3359 = vsel %vm2246, %v3342, 0
  %v3362 = vsel %vm2246, %v3343, 0
  %v3365 = vsel %vm2246, %v3344, 0
  %v3368 = vsel %vm2246, %v3345, 0
  %v3371 = vsel %vm2246, %v3346, 0
  %v3374 = vsel %vm2246, %v3347, 0
  %v3377 = vsel %vm2246, %v3348, 0
  %v3380 = vsel %vm2246, %v3349, 0
  %v3383 = vsel %vm2246, %v3350, 0
  %v3386 = vsel %vm2246, %v3351, 0
  %v3389 = vsel %vm2246, %v3352, 0
  %v3392 = vsel %vm2246, %v3353, 0
  %v3395 = vsel %vm2246, %v3354, 0
  %v3398 = vsel %vm2246, %v3355, 0
  %v3401 = vsel %vm2246, %v3356, 0
  %v3404 = vsel %vm2246, %v3357, 0
  %3406 = vmatprep.subr.mxu0 0.0
  %3407 = vmatpush1.msra.mxu0 0.0
  %3408 = vmatprep.subr.mxu0 0.0
  %3409 = vmatpush1.msra.mxu0 0.0
  %3410 = vmatprep.subr.mxu0 0.0
  %3411 = vmatpush1.msra.mxu0 0.0
  %3412 = vmatprep.subr.mxu0 0.0
  %3413 = vmatpush1.msra.mxu0 0.0
  %3414 = vmatprep.subr.mxu0 0.0
  %3415 = vmatpush1.msra.mxu0 0.0
  %3416 = vmatprep.subr.mxu0 0.0
  %3417 = vmatpush1.msra.mxu0 0.0
  %3418 = vmatprep.subr.mxu0 0.0
  %3419 = vmatpush1.msra.mxu0 0.0
  %3420 = vmatprep.subr.mxu0 0.0
  %3421 = vmatpush1.msra.mxu0 0.0
  %3422 = vmatprep.subr.mxu0 0.0
  %3423 = vmatpush1.msra.mxu0 0.0
  %3424 = vmatprep.subr.mxu0 0.0
  %3425 = vmatpush1.msra.mxu0 0.0
  %3426 = vmatprep.subr.mxu0 0.0
  %3427 = vmatpush1.msra.mxu0 0.0
  %3428 = vmatprep.subr.mxu0 0.0
  %3429 = vmatpush1.msra.mxu0 0.0
  %3430 = vmatprep.subr.mxu0 0.0
  %3431 = vmatpush1.msra.mxu0 0.0
  %3432 = vmatprep.subr.mxu0 0.0
  %3433 = vmatpush1.msra.mxu0 0.0
  %3434 = vmatprep.subr.mxu0 0.0
  %3435 = vmatpush1.msra.mxu0 0.0
  %3436 = vmatprep.subr.mxu0 0.0
  %3437 = vmatpush1.msra.mxu0 %v2469
  %3438 = vmatprep.subr.mxu0 0.0
  %3439 = vmatpush2.msra.mxu0 0.0
  %3440 = vmatprep.subr.mxu0 0.0
  %3441 = vmatpush2.msra.mxu0 0.0
  %3442 = vmatprep.subr.mxu0 0.0
  %3443 = vmatpush2.msra.mxu0 0.0
  %3444 = vmatprep.subr.mxu0 0.0
  %3445 = vmatpush2.msra.mxu0 0.0
  %3446 = vmatprep.subr.mxu0 0.0
  %3447 = vmatpush2.msra.mxu0 0.0
  %3448 = vmatprep.subr.mxu0 0.0
  %3449 = vmatpush2.msra.mxu0 0.0
  %3450 = vmatprep.subr.mxu0 0.0
  %3451 = vmatpush2.msra.mxu0 0.0
  %3452 = vmatprep.subr.mxu0 0.0
  %3453 = vmatpush2.msra.mxu0 0.0
  %3454 = vmatprep.subr.mxu0 0.0
  %3455 = vmatpush2.msra.mxu0 0.0
  %3456 = vmatprep.subr.mxu0 0.0
  %3457 = vmatpush2.msra.mxu0 0.0
  %3458 = vmatprep.subr.mxu0 0.0
  %3459 = vmatpush2.msra.mxu0 0.0
  %3460 = vmatprep.subr.mxu0 0.0
  %3461 = vmatpush2.msra.mxu0 0.0
  %3462 = vmatprep.subr.mxu0 0.0
  %3463 = vmatpush2.msra.mxu0 0.0
  %3464 = vmatprep.subr.mxu0 0.0
  %3465 = vmatpush2.msra.mxu0 0.0
  %3466 = vmatprep.subr.mxu0 0.0
  %3467 = vmatpush2.msra.mxu0 0.0
  %3468 = vmatprep.subr.mxu0 0.0
  %3469 = vmatpush2.msra.mxu0 0.0
  %3470 = vmatprep.mubr.f32.mxu0 0.0
  %3471 = vmatmul.mubr.f32.gmra.mxu0 %v3359
  %v3472 = vpop.f32.mrf.mxu0
  %v3473 = vadd.f32 0.0, %v3472
  %v3474 = vpop.f32.mrf.mxu0
  %3475 = vmatprep.mubr.f32.mxu0 0.0
  %3476 = vmatmul.mubr.f32.gmra.mxu0 %v3362
  %v3477 = vpop.f32.mrf.mxu0
  %v3478 = vadd.f32 0.0, %v3477
  %v3479 = vpop.f32.mrf.mxu0
  %3480 = vmatprep.mubr.f32.mxu0 0.0
  %3481 = vmatmul.mubr.f32.gmra.mxu0 %v3365
  %v3482 = vpop.f32.mrf.mxu0
  %v3483 = vadd.f32 0.0, %v3482
  %v3484 = vpop.f32.mrf.mxu0
  %3485 = vmatprep.mubr.f32.mxu0 0.0
  %3486 = vmatmul.mubr.f32.gmra.mxu0 %v3368
  %v3487 = vpop.f32.mrf.mxu0
  %v3488 = vadd.f32 0.0, %v3487
  %v3489 = vpop.f32.mrf.mxu0
  %3490 = vmatprep.mubr.f32.mxu0 0.0
  %3491 = vmatmul.mubr.f32.gmra.mxu0 %v3371
  %v3492 = vpop.f32.mrf.mxu0
  %v3493 = vadd.f32 0.0, %v3492
  %v3494 = vpop.f32.mrf.mxu0
  %3495 = vmatprep.mubr.f32.mxu0 0.0
  %3496 = vmatmul.mubr.f32.gmra.mxu0 %v3374
  %v3497 = vpop.f32.mrf.mxu0
  %v3498 = vadd.f32 0.0, %v3497
  %v3499 = vpop.f32.mrf.mxu0
  %3500 = vmatprep.mubr.f32.mxu0 0.0
  %3501 = vmatmul.mubr.f32.gmra.mxu0 %v3377
  %v3502 = vpop.f32.mrf.mxu0
  %v3503 = vadd.f32 0.0, %v3502
  %v3504 = vpop.f32.mrf.mxu0
  %3505 = vmatprep.mubr.f32.mxu0 0.0
  %3506 = vmatmul.mubr.f32.gmra.mxu0 %v3380
  %v3507 = vpop.f32.mrf.mxu0
  %v3508 = vadd.f32 0.0, %v3507
  %v3509 = vpop.f32.mrf.mxu0
  %3510 = vmatprep.mubr.f32.mxu0 0.0
  %3511 = vmatmul.mubr.f32.gmra.mxu0 %v3383
  %v3512 = vpop.f32.mrf.mxu0
  %v3513 = vadd.f32 0.0, %v3512
  %v3514 = vpop.f32.mrf.mxu0
  %3515 = vmatprep.mubr.f32.mxu0 0.0
  %3516 = vmatmul.mubr.f32.gmra.mxu0 %v3386
  %v3517 = vpop.f32.mrf.mxu0
  %v3518 = vadd.f32 0.0, %v3517
  %v3519 = vpop.f32.mrf.mxu0
  %3520 = vmatprep.mubr.f32.mxu0 0.0
  %3521 = vmatmul.mubr.f32.gmra.mxu0 %v3389
  %v3522 = vpop.f32.mrf.mxu0
  %v3523 = vadd.f32 0.0, %v3522
  %v3524 = vpop.f32.mrf.mxu0
  %3525 = vmatprep.mubr.f32.mxu0 0.0
  %3526 = vmatmul.mubr.f32.gmra.mxu0 %v3392
  %v3527 = vpop.f32.mrf.mxu0
  %v3528 = vadd.f32 0.0, %v3527
  %v3529 = vpop.f32.mrf.mxu0
  %3530 = vmatprep.mubr.f32.mxu0 0.0
  %3531 = vmatmul.mubr.f32.gmra.mxu0 %v3395
  %v3532 = vpop.f32.mrf.mxu0
  %v3533 = vadd.f32 0.0, %v3532
  %v3534 = vpop.f32.mrf.mxu0
  %3535 = vmatprep.mubr.f32.mxu0 0.0
  %3536 = vmatmul.mubr.f32.gmra.mxu0 %v3398
  %v3537 = vpop.f32.mrf.mxu0
  %v3538 = vadd.f32 0.0, %v3537
  %v3539 = vpop.f32.mrf.mxu0
  %3540 = vmatprep.mubr.f32.mxu0 0.0
  %3541 = vmatmul.mubr.f32.gmra.mxu0 %v3401
  %v3542 = vpop.f32.mrf.mxu0
  %v3543 = vadd.f32 0.0, %v3542
  %v3544 = vpop.f32.mrf.mxu0
  %3545 = vmatprep.mubr.f32.mxu0 0.0
  %3546 = vmatmul.mubr.f32.gmra.mxu0 %v3404
  %v3547 = vpop.f32.mrf.mxu0
  %v3548 = vadd.f32 0.0, %v3547
  %v3549 = vpop.f32.mrf.mxu0
  %3550 = vdwg.mxu0
  %v3551 = vadd.f32 %v3326, %v3473
  %v3552 = vadd.f32 %v3327, %v3478
  %v3553 = vadd.f32 %v3328, %v3483
  %v3554 = vadd.f32 %v3329, %v3488
  %v3555 = vadd.f32 %v3330, %v3493
  %v3556 = vadd.f32 %v3331, %v3498
  %v3557 = vadd.f32 %v3332, %v3503
  %v3558 = vadd.f32 %v3333, %v3508
  %v3559 = vadd.f32 %v3334, %v3513
  %v3560 = vadd.f32 %v3335, %v3518
  %v3561 = vadd.f32 %v3336, %v3523
  %v3562 = vadd.f32 %v3337, %v3528
  %v3563 = vadd.f32 %v3338, %v3533
  %v3564 = vadd.f32 %v3339, %v3538
  %v3565 = vadd.f32 %v3340, %v3543
  %v3566 = vadd.f32 %v3341, %v3548
  %v3567 = vld [vmem:[%s2448 + $0x2] sm:$0xff]
  %v3568 = vld [vmem:[%s2448 + $0x12] sm:$0xff]
  %v3569 = vld [vmem:[%s2448 + $0x22] sm:$0xff]
  %v3570 = vld [vmem:[%s2448 + $0x32] sm:$0xff]
  %v3571 = vld [vmem:[%s2448 + $0x42] sm:$0xff]
  %v3572 = vld [vmem:[%s2448 + $0x52] sm:$0xff]
  %v3573 = vld [vmem:[%s2448 + $0x62] sm:$0xff]
  %v3574 = vld [vmem:[%s2448 + $0x72] sm:$0xff]
  %v3575 = vld [vmem:[%s2448 + $0xa2] sm:$0xff]
  %v3576 = vld [vmem:[%s2448 + $0xb2] sm:$0xff]
  %v3577 = vld [vmem:[%s2448 + $0xc2] sm:$0xff]
  %v3578 = vld [vmem:[%s2448 + $0xd2] sm:$0xff]
  %v3579 = vld [vmem:[%s2448 + $0xe2] sm:$0xff]
  %v3580 = vld [vmem:[%s2448 + $0xf2] sm:$0xff]
  %v3581 = vld [vmem:[%s2448 + $0x102] sm:$0xff]
  %v3582 = vld [vmem:[%s2448 + $0x112] sm:$0xff]
  %v3584 = vsel %vm2246, %v3567, 0
  %v3587 = vsel %vm2246, %v3568, 0
  %v3590 = vsel %vm2246, %v3569, 0
  %v3593 = vsel %vm2246, %v3570, 0
  %v3596 = vsel %vm2246, %v3571, 0
  %v3599 = vsel %vm2246, %v3572, 0
  %v3602 = vsel %vm2246, %v3573, 0
  %v3605 = vsel %vm2246, %v3574, 0
  %v3608 = vsel %vm2246, %v3575, 0
  %v3611 = vsel %vm2246, %v3576, 0
  %v3614 = vsel %vm2246, %v3577, 0
  %v3617 = vsel %vm2246, %v3578, 0
  %v3620 = vsel %vm2246, %v3579, 0
  %v3623 = vsel %vm2246, %v3580, 0
  %v3626 = vsel %vm2246, %v3581, 0
  %v3629 = vsel %vm2246, %v3582, 0
  %3631 = vmatprep.subr.mxu0 0.0
  %3632 = vmatpush1.msra.mxu0 0.0
  %3633 = vmatprep.subr.mxu0 0.0
  %3634 = vmatpush1.msra.mxu0 0.0
  %3635 = vmatprep.subr.mxu0 0.0
  %3636 = vmatpush1.msra.mxu0 0.0
  %3637 = vmatprep.subr.mxu0 0.0
  %3638 = vmatpush1.msra.mxu0 0.0
  %3639 = vmatprep.subr.mxu0 0.0
  %3640 = vmatpush1.msra.mxu0 0.0
  %3641 = vmatprep.subr.mxu0 0.0
  %3642 = vmatpush1.msra.mxu0 0.0
  %3643 = vmatprep.subr.mxu0 0.0
  %3644 = vmatpush1.msra.mxu0 0.0
  %3645 = vmatprep.subr.mxu0 0.0
  %3646 = vmatpush1.msra.mxu0 0.0
  %3647 = vmatprep.subr.mxu0 0.0
  %3648 = vmatpush1.msra.mxu0 0.0
  %3649 = vmatprep.subr.mxu0 0.0
  %3650 = vmatpush1.msra.mxu0 0.0
  %3651 = vmatprep.subr.mxu0 0.0
  %3652 = vmatpush1.msra.mxu0 0.0
  %3653 = vmatprep.subr.mxu0 0.0
  %3654 = vmatpush1.msra.mxu0 0.0
  %3655 = vmatprep.subr.mxu0 0.0
  %3656 = vmatpush1.msra.mxu0 0.0
  %3657 = vmatprep.subr.mxu0 0.0
  %3658 = vmatpush1.msra.mxu0 0.0
  %3659 = vmatprep.subr.mxu0 0.0
  %3660 = vmatpush1.msra.mxu0 0.0
  %3661 = vmatprep.subr.mxu0 0.0
  %3662 = vmatpush1.msra.mxu0 %v2470
  %3663 = vmatprep.subr.mxu0 0.0
  %3664 = vmatpush2.msra.mxu0 0.0
  %3665 = vmatprep.subr.mxu0 0.0
  %3666 = vmatpush2.msra.mxu0 0.0
  %3667 = vmatprep.subr.mxu0 0.0
  %3668 = vmatpush2.msra.mxu0 0.0
  %3669 = vmatprep.subr.mxu0 0.0
  %3670 = vmatpush2.msra.mxu0 0.0
  %3671 = vmatprep.subr.mxu0 0.0
  %3672 = vmatpush2.msra.mxu0 0.0
  %3673 = vmatprep.subr.mxu0 0.0
  %3674 = vmatpush2.msra.mxu0 0.0
  %3675 = vmatprep.subr.mxu0 0.0
  %3676 = vmatpush2.msra.mxu0 0.0
  %3677 = vmatprep.subr.mxu0 0.0
  %3678 = vmatpush2.msra.mxu0 0.0
  %3679 = vmatprep.subr.mxu0 0.0
  %3680 = vmatpush2.msra.mxu0 0.0
  %3681 = vmatprep.subr.mxu0 0.0
  %3682 = vmatpush2.msra.mxu0 0.0
  %3683 = vmatprep.subr.mxu0 0.0
  %3684 = vmatpush2.msra.mxu0 0.0
  %3685 = vmatprep.subr.mxu0 0.0
  %3686 = vmatpush2.msra.mxu0 0.0
  %3687 = vmatprep.subr.mxu0 0.0
  %3688 = vmatpush2.msra.mxu0 0.0
  %3689 = vmatprep.subr.mxu0 0.0
  %3690 = vmatpush2.msra.mxu0 0.0
  %3691 = vmatprep.subr.mxu0 0.0
  %3692 = vmatpush2.msra.mxu0 0.0
  %3693 = vmatprep.subr.mxu0 0.0
  %3694 = vmatpush2.msra.mxu0 0.0
  %3695 = vmatprep.mubr.f32.mxu0 0.0
  %3696 = vmatmul.mubr.f32.gmra.mxu0 %v3584
  %v3697 = vpop.f32.mrf.mxu0
  %v3698 = vadd.f32 0.0, %v3697
  %v3699 = vpop.f32.mrf.mxu0
  %3700 = vmatprep.mubr.f32.mxu0 0.0
  %3701 = vmatmul.mubr.f32.gmra.mxu0 %v3587
  %v3702 = vpop.f32.mrf.mxu0
  %v3703 = vadd.f32 0.0, %v3702
  %v3704 = vpop.f32.mrf.mxu0
  %3705 = vmatprep.mubr.f32.mxu0 0.0
  %3706 = vmatmul.mubr.f32.gmra.mxu0 %v3590
  %v3707 = vpop.f32.mrf.mxu0
  %v3708 = vadd.f32 0.0, %v3707
  %v3709 = vpop.f32.mrf.mxu0
  %3710 = vmatprep.mubr.f32.mxu0 0.0
  %3711 = vmatmul.mubr.f32.gmra.mxu0 %v3593
  %v3712 = vpop.f32.mrf.mxu0
  %v3713 = vadd.f32 0.0, %v3712
  %v3714 = vpop.f32.mrf.mxu0
  %3715 = vmatprep.mubr.f32.mxu0 0.0
  %3716 = vmatmul.mubr.f32.gmra.mxu0 %v3596
  %v3717 = vpop.f32.mrf.mxu0
  %v3718 = vadd.f32 0.0, %v3717
  %v3719 = vpop.f32.mrf.mxu0
  %3720 = vmatprep.mubr.f32.mxu0 0.0
  %3721 = vmatmul.mubr.f32.gmra.mxu0 %v3599
  %v3722 = vpop.f32.mrf.mxu0
  %v3723 = vadd.f32 0.0, %v3722
  %v3724 = vpop.f32.mrf.mxu0
  %3725 = vmatprep.mubr.f32.mxu0 0.0
  %3726 = vmatmul.mubr.f32.gmra.mxu0 %v3602
  %v3727 = vpop.f32.mrf.mxu0
  %v3728 = vadd.f32 0.0, %v3727
  %v3729 = vpop.f32.mrf.mxu0
  %3730 = vmatprep.mubr.f32.mxu0 0.0
  %3731 = vmatmul.mubr.f32.gmra.mxu0 %v3605
  %v3732 = vpop.f32.mrf.mxu0
  %v3733 = vadd.f32 0.0, %v3732
  %v3734 = vpop.f32.mrf.mxu0
  %3735 = vmatprep.mubr.f32.mxu0 0.0
  %3736 = vmatmul.mubr.f32.gmra.mxu0 %v3608
  %v3737 = vpop.f32.mrf.mxu0
  %v3738 = vadd.f32 0.0, %v3737
  %v3739 = vpop.f32.mrf.mxu0
  %3740 = vmatprep.mubr.f32.mxu0 0.0
  %3741 = vmatmul.mubr.f32.gmra.mxu0 %v3611
  %v3742 = vpop.f32.mrf.mxu0
  %v3743 = vadd.f32 0.0, %v3742
  %v3744 = vpop.f32.mrf.mxu0
  %3745 = vmatprep.mubr.f32.mxu0 0.0
  %3746 = vmatmul.mubr.f32.gmra.mxu0 %v3614
  %v3747 = vpop.f32.mrf.mxu0
  %v3748 = vadd.f32 0.0, %v3747
  %v3749 = vpop.f32.mrf.mxu0
  %3750 = vmatprep.mubr.f32.mxu0 0.0
  %3751 = vmatmul.mubr.f32.gmra.mxu0 %v3617
  %v3752 = vpop.f32.mrf.mxu0
  %v3753 = vadd.f32 0.0, %v3752
  %v3754 = vpop.f32.mrf.mxu0
  %3755 = vmatprep.mubr.f32.mxu0 0.0
  %3756 = vmatmul.mubr.f32.gmra.mxu0 %v3620
  %v3757 = vpop.f32.mrf.mxu0
  %v3758 = vadd.f32 0.0, %v3757
  %v3759 = vpop.f32.mrf.mxu0
  %3760 = vmatprep.mubr.f32.mxu0 0.0
  %3761 = vmatmul.mubr.f32.gmra.mxu0 %v3623
  %v3762 = vpop.f32.mrf.mxu0
  %v3763 = vadd.f32 0.0, %v3762
  %v3764 = vpop.f32.mrf.mxu0
  %3765 = vmatprep.mubr.f32.mxu0 0.0
  %3766 = vmatmul.mubr.f32.gmra.mxu0 %v3626
  %v3767 = vpop.f32.mrf.mxu0
  %v3768 = vadd.f32 0.0, %v3767
  %v3769 = vpop.f32.mrf.mxu0
  %3770 = vmatprep.mubr.f32.mxu0 0.0
  %3771 = vmatmul.mubr.f32.gmra.mxu0 %v3629
  %v3772 = vpop.f32.mrf.mxu0
  %v3773 = vadd.f32 0.0, %v3772
  %v3774 = vpop.f32.mrf.mxu0
  %3775 = vdwg.mxu0
  %v3776 = vadd.f32 %v3551, %v3698
  %v3777 = vadd.f32 %v3552, %v3703
  %v3778 = vadd.f32 %v3553, %v3708
  %v3779 = vadd.f32 %v3554, %v3713
  %v3780 = vadd.f32 %v3555, %v3718
  %v3781 = vadd.f32 %v3556, %v3723
  %v3782 = vadd.f32 %v3557, %v3728
  %v3783 = vadd.f32 %v3558, %v3733
  %v3784 = vadd.f32 %v3559, %v3738
  %v3785 = vadd.f32 %v3560, %v3743
  %v3786 = vadd.f32 %v3561, %v3748
  %v3787 = vadd.f32 %v3562, %v3753
  %v3788 = vadd.f32 %v3563, %v3758
  %v3789 = vadd.f32 %v3564, %v3763
  %v3790 = vadd.f32 %v3565, %v3768
  %v3791 = vadd.f32 %v3566, %v3773
  %s3792 = scalar_lea.vmem [#allocation3], 32
  %v3793 = vld [vmem:[%s3792] sm:$0xff]
  %v3794 = vld [vmem:[%s3792 + $0x10] sm:$0xff]
  %v3795 = vld [vmem:[%s3792 + $0x20] sm:$0xff]
  %v3796 = vld [vmem:[%s3792 + $0x30] sm:$0xff]
  %v3797 = vld [vmem:[%s3792 + $0x40] sm:$0xff]
  %v3798 = vld [vmem:[%s3792 + $0x50] sm:$0xff]
  %v3799 = vld [vmem:[%s3792 + $0x60] sm:$0xff]
  %v3800 = vld [vmem:[%s3792 + $0x70] sm:$0xff]
  %v3801 = vld [vmem:[%s3792 + $0xa0] sm:$0xff]
  %v3802 = vld [vmem:[%s3792 + $0xb0] sm:$0xff]
  %v3803 = vld [vmem:[%s3792 + $0xc0] sm:$0xff]
  %v3804 = vld [vmem:[%s3792 + $0xd0] sm:$0xff]
  %v3805 = vld [vmem:[%s3792 + $0xe0] sm:$0xff]
  %v3806 = vld [vmem:[%s3792 + $0xf0] sm:$0xff]
  %v3807 = vld [vmem:[%s3792 + $0x100] sm:$0xff]
  %v3808 = vld [vmem:[%s3792 + $0x110] sm:$0xff]
  %v3810 = vsel %vm2246, %v3793, 0
  %v3813 = vsel %vm2246, %v3794, 0
  %v3816 = vsel %vm2246, %v3795, 0
  %v3819 = vsel %vm2246, %v3796, 0
  %v3822 = vsel %vm2246, %v3797, 0
  %v3825 = vsel %vm2246, %v3798, 0
  %v3828 = vsel %vm2246, %v3799, 0
  %v3831 = vsel %vm2246, %v3800, 0
  %v3834 = vsel %vm2246, %v3801, 0
  %v3837 = vsel %vm2246, %v3802, 0
  %v3840 = vsel %vm2246, %v3803, 0
  %v3843 = vsel %vm2246, %v3804, 0
  %v3846 = vsel %vm2246, %v3805, 0
  %v3849 = vsel %vm2246, %v3806, 0
  %v3852 = vsel %vm2246, %v3807, 0
  %v3855 = vsel %vm2246, %v3808, 0
  %3857 = vmatprep.subr.mxu0 0.0
  %3858 = vmatpush1.msra.mxu0 0.0
  %3859 = vmatprep.subr.mxu0 0.0
  %3860 = vmatpush1.msra.mxu0 0.0
  %3861 = vmatprep.subr.mxu0 0.0
  %3862 = vmatpush1.msra.mxu0 0.0
  %3863 = vmatprep.subr.mxu0 0.0
  %3864 = vmatpush1.msra.mxu0 0.0
  %3865 = vmatprep.subr.mxu0 0.0
  %3866 = vmatpush1.msra.mxu0 0.0
  %3867 = vmatprep.subr.mxu0 0.0
  %3868 = vmatpush1.msra.mxu0 0.0
  %3869 = vmatprep.subr.mxu0 0.0
  %3870 = vmatpush1.msra.mxu0 0.0
  %3871 = vmatprep.subr.mxu0 0.0
  %3872 = vmatpush1.msra.mxu0 0.0
  %3873 = vmatprep.subr.mxu0 0.0
  %3874 = vmatpush1.msra.mxu0 0.0
  %3875 = vmatprep.subr.mxu0 0.0
  %3876 = vmatpush1.msra.mxu0 0.0
  %3877 = vmatprep.subr.mxu0 0.0
  %3878 = vmatpush1.msra.mxu0 0.0
  %3879 = vmatprep.subr.mxu0 0.0
  %3880 = vmatpush1.msra.mxu0 0.0
  %3881 = vmatprep.subr.mxu0 0.0
  %3882 = vmatpush1.msra.mxu0 0.0
  %3883 = vmatprep.subr.mxu0 0.0
  %3884 = vmatpush1.msra.mxu0 0.0
  %3885 = vmatprep.subr.mxu0 0.0
  %3886 = vmatpush1.msra.mxu0 0.0
  %3887 = vmatprep.subr.mxu0 0.0
  %3888 = vmatpush1.msra.mxu0 %v2471
  %3889 = vmatprep.subr.mxu0 0.0
  %3890 = vmatpush2.msra.mxu0 0.0
  %3891 = vmatprep.subr.mxu0 0.0
  %3892 = vmatpush2.msra.mxu0 0.0
  %3893 = vmatprep.subr.mxu0 0.0
  %3894 = vmatpush2.msra.mxu0 0.0
  %3895 = vmatprep.subr.mxu0 0.0
  %3896 = vmatpush2.msra.mxu0 0.0
  %3897 = vmatprep.subr.mxu0 0.0
  %3898 = vmatpush2.msra.mxu0 0.0
  %3899 = vmatprep.subr.mxu0 0.0
  %3900 = vmatpush2.msra.mxu0 0.0
  %3901 = vmatprep.subr.mxu0 0.0
  %3902 = vmatpush2.msra.mxu0 0.0
  %3903 = vmatprep.subr.mxu0 0.0
  %3904 = vmatpush2.msra.mxu0 0.0
  %3905 = vmatprep.subr.mxu0 0.0
  %3906 = vmatpush2.msra.mxu0 0.0
  %3907 = vmatprep.subr.mxu0 0.0
  %3908 = vmatpush2.msra.mxu0 0.0
  %3909 = vmatprep.subr.mxu0 0.0
  %3910 = vmatpush2.msra.mxu0 0.0
  %3911 = vmatprep.subr.mxu0 0.0
  %3912 = vmatpush2.msra.mxu0 0.0
  %3913 = vmatprep.subr.mxu0 0.0
  %3914 = vmatpush2.msra.mxu0 0.0
  %3915 = vmatprep.subr.mxu0 0.0
  %3916 = vmatpush2.msra.mxu0 0.0
  %3917 = vmatprep.subr.mxu0 0.0
  %3918 = vmatpush2.msra.mxu0 0.0
  %3919 = vmatprep.subr.mxu0 0.0
  %3920 = vmatpush2.msra.mxu0 0.0
  %3921 = vmatprep.mubr.f32.mxu0 0.0
  %3922 = vmatmul.mubr.f32.gmra.mxu0 %v3810
  %v3923 = vpop.f32.mrf.mxu0
  %v3924 = vadd.f32 0.0, %v3923
  %v3925 = vpop.f32.mrf.mxu0
  %3926 = vmatprep.mubr.f32.mxu0 0.0
  %3927 = vmatmul.mubr.f32.gmra.mxu0 %v3813
  %v3928 = vpop.f32.mrf.mxu0
  %v3929 = vadd.f32 0.0, %v3928
  %v3930 = vpop.f32.mrf.mxu0
  %3931 = vmatprep.mubr.f32.mxu0 0.0
  %3932 = vmatmul.mubr.f32.gmra.mxu0 %v3816
  %v3933 = vpop.f32.mrf.mxu0
  %v3934 = vadd.f32 0.0, %v3933
  %v3935 = vpop.f32.mrf.mxu0
  %3936 = vmatprep.mubr.f32.mxu0 0.0
  %3937 = vmatmul.mubr.f32.gmra.mxu0 %v3819
  %v3938 = vpop.f32.mrf.mxu0
  %v3939 = vadd.f32 0.0, %v3938
  %v3940 = vpop.f32.mrf.mxu0
  %3941 = vmatprep.mubr.f32.mxu0 0.0
  %3942 = vmatmul.mubr.f32.gmra.mxu0 %v3822
  %v3943 = vpop.f32.mrf.mxu0
  %v3944 = vadd.f32 0.0, %v3943
  %v3945 = vpop.f32.mrf.mxu0
  %3946 = vmatprep.mubr.f32.mxu0 0.0
  %3947 = vmatmul.mubr.f32.gmra.mxu0 %v3825
  %v3948 = vpop.f32.mrf.mxu0
  %v3949 = vadd.f32 0.0, %v3948
  %v3950 = vpop.f32.mrf.mxu0
  %3951 = vmatprep.mubr.f32.mxu0 0.0
  %3952 = vmatmul.mubr.f32.gmra.mxu0 %v3828
  %v3953 = vpop.f32.mrf.mxu0
  %v3954 = vadd.f32 0.0, %v3953
  %v3955 = vpop.f32.mrf.mxu0
  %3956 = vmatprep.mubr.f32.mxu0 0.0
  %3957 = vmatmul.mubr.f32.gmra.mxu0 %v3831
  %v3958 = vpop.f32.mrf.mxu0
  %v3959 = vadd.f32 0.0, %v3958
  %v3960 = vpop.f32.mrf.mxu0
  %3961 = vmatprep.mubr.f32.mxu0 0.0
  %3962 = vmatmul.mubr.f32.gmra.mxu0 %v3834
  %v3963 = vpop.f32.mrf.mxu0
  %v3964 = vadd.f32 0.0, %v3963
  %v3965 = vpop.f32.mrf.mxu0
  %3966 = vmatprep.mubr.f32.mxu0 0.0
  %3967 = vmatmul.mubr.f32.gmra.mxu0 %v3837
  %v3968 = vpop.f32.mrf.mxu0
  %v3969 = vadd.f32 0.0, %v3968
  %v3970 = vpop.f32.mrf.mxu0
  %3971 = vmatprep.mubr.f32.mxu0 0.0
  %3972 = vmatmul.mubr.f32.gmra.mxu0 %v3840
  %v3973 = vpop.f32.mrf.mxu0
  %v3974 = vadd.f32 0.0, %v3973
  %v3975 = vpop.f32.mrf.mxu0
  %3976 = vmatprep.mubr.f32.mxu0 0.0
  %3977 = vmatmul.mubr.f32.gmra.mxu0 %v3843
  %v3978 = vpop.f32.mrf.mxu0
  %v3979 = vadd.f32 0.0, %v3978
  %v3980 = vpop.f32.mrf.mxu0
  %3981 = vmatprep.mubr.f32.mxu0 0.0
  %3982 = vmatmul.mubr.f32.gmra.mxu0 %v3846
  %v3983 = vpop.f32.mrf.mxu0
  %v3984 = vadd.f32 0.0, %v3983
  %v3985 = vpop.f32.mrf.mxu0
  %3986 = vmatprep.mubr.f32.mxu0 0.0
  %3987 = vmatmul.mubr.f32.gmra.mxu0 %v3849
  %v3988 = vpop.f32.mrf.mxu0
  %v3989 = vadd.f32 0.0, %v3988
  %v3990 = vpop.f32.mrf.mxu0
  %3991 = vmatprep.mubr.f32.mxu0 0.0
  %3992 = vmatmul.mubr.f32.gmra.mxu0 %v3852
  %v3993 = vpop.f32.mrf.mxu0
  %v3994 = vadd.f32 0.0, %v3993
  %v3995 = vpop.f32.mrf.mxu0
  %3996 = vmatprep.mubr.f32.mxu0 0.0
  %3997 = vmatmul.mubr.f32.gmra.mxu0 %v3855
  %v3998 = vpop.f32.mrf.mxu0
  %v3999 = vadd.f32 0.0, %v3998
  %v4000 = vpop.f32.mrf.mxu0
  %4001 = vdwg.mxu0
  %v4002 = vadd.f32 %v3776, %v3924
  %v4003 = vadd.f32 %v3777, %v3929
  %v4004 = vadd.f32 %v3778, %v3934
  %v4005 = vadd.f32 %v3779, %v3939
  %v4006 = vadd.f32 %v3780, %v3944
  %v4007 = vadd.f32 %v3781, %v3949
  %v4008 = vadd.f32 %v3782, %v3954
  %v4009 = vadd.f32 %v3783, %v3959
  %v4010 = vadd.f32 %v3784, %v3964
  %v4011 = vadd.f32 %v3785, %v3969
  %v4012 = vadd.f32 %v3786, %v3974
  %v4013 = vadd.f32 %v3787, %v3979
  %v4014 = vadd.f32 %v3788, %v3984
  %v4015 = vadd.f32 %v3789, %v3989
  %v4016 = vadd.f32 %v3790, %v3994
  %v4017 = vadd.f32 %v3791, %v3999
  %v4018 = vld [vmem:[%s3792 + $0x1] sm:$0xff]
  %v4019 = vld [vmem:[%s3792 + $0x11] sm:$0xff]
  %v4020 = vld [vmem:[%s3792 + $0x21] sm:$0xff]
  %v4021 = vld [vmem:[%s3792 + $0x31] sm:$0xff]
  %v4022 = vld [vmem:[%s3792 + $0x41] sm:$0xff]
  %v4023 = vld [vmem:[%s3792 + $0x51] sm:$0xff]
  %v4024 = vld [vmem:[%s3792 + $0x61] sm:$0xff]
  %v4025 = vld [vmem:[%s3792 + $0x71] sm:$0xff]
  %v4026 = vld [vmem:[%s3792 + $0xa1] sm:$0xff]
  %v4027 = vld [vmem:[%s3792 + $0xb1] sm:$0xff]
  %v4028 = vld [vmem:[%s3792 + $0xc1] sm:$0xff]
  %v4029 = vld [vmem:[%s3792 + $0xd1] sm:$0xff]
  %v4030 = vld [vmem:[%s3792 + $0xe1] sm:$0xff]
  %v4031 = vld [vmem:[%s3792 + $0xf1] sm:$0xff]
  %v4032 = vld [vmem:[%s3792 + $0x101] sm:$0xff]
  %v4033 = vld [vmem:[%s3792 + $0x111] sm:$0xff]
  %v4035 = vsel %vm2246, %v4018, 0
  %v4038 = vsel %vm2246, %v4019, 0
  %v4041 = vsel %vm2246, %v4020, 0
  %v4044 = vsel %vm2246, %v4021, 0
  %v4047 = vsel %vm2246, %v4022, 0
  %v4050 = vsel %vm2246, %v4023, 0
  %v4053 = vsel %vm2246, %v4024, 0
  %v4056 = vsel %vm2246, %v4025, 0
  %v4059 = vsel %vm2246, %v4026, 0
  %v4062 = vsel %vm2246, %v4027, 0
  %v4065 = vsel %vm2246, %v4028, 0
  %v4068 = vsel %vm2246, %v4029, 0
  %v4071 = vsel %vm2246, %v4030, 0
  %v4074 = vsel %vm2246, %v4031, 0
  %v4077 = vsel %vm2246, %v4032, 0
  %v4080 = vsel %vm2246, %v4033, 0
  %4082 = vmatprep.subr.mxu0 0.0
  %4083 = vmatpush1.msra.mxu0 0.0
  %4084 = vmatprep.subr.mxu0 0.0
  %4085 = vmatpush1.msra.mxu0 0.0
  %4086 = vmatprep.subr.mxu0 0.0
  %4087 = vmatpush1.msra.mxu0 0.0
  %4088 = vmatprep.subr.mxu0 0.0
  %4089 = vmatpush1.msra.mxu0 0.0
  %4090 = vmatprep.subr.mxu0 0.0
  %4091 = vmatpush1.msra.mxu0 0.0
  %4092 = vmatprep.subr.mxu0 0.0
  %4093 = vmatpush1.msra.mxu0 0.0
  %4094 = vmatprep.subr.mxu0 0.0
  %4095 = vmatpush1.msra.mxu0 0.0
  %4096 = vmatprep.subr.mxu0 0.0
  %4097 = vmatpush1.msra.mxu0 0.0
  %4098 = vmatprep.subr.mxu0 0.0
  %4099 = vmatpush1.msra.mxu0 0.0
  %4100 = vmatprep.subr.mxu0 0.0
  %4101 = vmatpush1.msra.mxu0 0.0
  %4102 = vmatprep.subr.mxu0 0.0
  %4103 = vmatpush1.msra.mxu0 0.0
  %4104 = vmatprep.subr.mxu0 0.0
  %4105 = vmatpush1.msra.mxu0 0.0
  %4106 = vmatprep.subr.mxu0 0.0
  %4107 = vmatpush1.msra.mxu0 0.0
  %4108 = vmatprep.subr.mxu0 0.0
  %4109 = vmatpush1.msra.mxu0 0.0
  %4110 = vmatprep.subr.mxu0 0.0
  %4111 = vmatpush1.msra.mxu0 0.0
  %4112 = vmatprep.subr.mxu0 0.0
  %4113 = vmatpush1.msra.mxu0 %v2472
  %4114 = vmatprep.subr.mxu0 0.0
  %4115 = vmatpush2.msra.mxu0 0.0
  %4116 = vmatprep.subr.mxu0 0.0
  %4117 = vmatpush2.msra.mxu0 0.0
  %4118 = vmatprep.subr.mxu0 0.0
  %4119 = vmatpush2.msra.mxu0 0.0
  %4120 = vmatprep.subr.mxu0 0.0
  %4121 = vmatpush2.msra.mxu0 0.0
  %4122 = vmatprep.subr.mxu0 0.0
  %4123 = vmatpush2.msra.mxu0 0.0
  %4124 = vmatprep.subr.mxu0 0.0
  %4125 = vmatpush2.msra.mxu0 0.0
  %4126 = vmatprep.subr.mxu0 0.0
  %4127 = vmatpush2.msra.mxu0 0.0
  %4128 = vmatprep.subr.mxu0 0.0
  %4129 = vmatpush2.msra.mxu0 0.0
  %4130 = vmatprep.subr.mxu0 0.0
  %4131 = vmatpush2.msra.mxu0 0.0
  %4132 = vmatprep.subr.mxu0 0.0
  %4133 = vmatpush2.msra.mxu0 0.0
  %4134 = vmatprep.subr.mxu0 0.0
  %4135 = vmatpush2.msra.mxu0 0.0
  %4136 = vmatprep.subr.mxu0 0.0
  %4137 = vmatpush2.msra.mxu0 0.0
  %4138 = vmatprep.subr.mxu0 0.0
  %4139 = vmatpush2.msra.mxu0 0.0
  %4140 = vmatprep.subr.mxu0 0.0
  %4141 = vmatpush2.msra.mxu0 0.0
  %4142 = vmatprep.subr.mxu0 0.0
  %4143 = vmatpush2.msra.mxu0 0.0
  %4144 = vmatprep.subr.mxu0 0.0
  %4145 = vmatpush2.msra.mxu0 0.0
  %4146 = vmatprep.mubr.f32.mxu0 0.0
  %4147 = vmatmul.mubr.f32.gmra.mxu0 %v4035
  %v4148 = vpop.f32.mrf.mxu0
  %v4149 = vadd.f32 0.0, %v4148
  %v4150 = vpop.f32.mrf.mxu0
  %4151 = vmatprep.mubr.f32.mxu0 0.0
  %4152 = vmatmul.mubr.f32.gmra.mxu0 %v4038
  %v4153 = vpop.f32.mrf.mxu0
  %v4154 = vadd.f32 0.0, %v4153
  %v4155 = vpop.f32.mrf.mxu0
  %4156 = vmatprep.mubr.f32.mxu0 0.0
  %4157 = vmatmul.mubr.f32.gmra.mxu0 %v4041
  %v4158 = vpop.f32.mrf.mxu0
  %v4159 = vadd.f32 0.0, %v4158
  %v4160 = vpop.f32.mrf.mxu0
  %4161 = vmatprep.mubr.f32.mxu0 0.0
  %4162 = vmatmul.mubr.f32.gmra.mxu0 %v4044
  %v4163 = vpop.f32.mrf.mxu0
  %v4164 = vadd.f32 0.0, %v4163
  %v4165 = vpop.f32.mrf.mxu0
  %4166 = vmatprep.mubr.f32.mxu0 0.0
  %4167 = vmatmul.mubr.f32.gmra.mxu0 %v4047
  %v4168 = vpop.f32.mrf.mxu0
  %v4169 = vadd.f32 0.0, %v4168
  %v4170 = vpop.f32.mrf.mxu0
  %4171 = vmatprep.mubr.f32.mxu0 0.0
  %4172 = vmatmul.mubr.f32.gmra.mxu0 %v4050
  %v4173 = vpop.f32.mrf.mxu0
  %v4174 = vadd.f32 0.0, %v4173
  %v4175 = vpop.f32.mrf.mxu0
  %4176 = vmatprep.mubr.f32.mxu0 0.0
  %4177 = vmatmul.mubr.f32.gmra.mxu0 %v4053
  %v4178 = vpop.f32.mrf.mxu0
  %v4179 = vadd.f32 0.0, %v4178
  %v4180 = vpop.f32.mrf.mxu0
  %4181 = vmatprep.mubr.f32.mxu0 0.0
  %4182 = vmatmul.mubr.f32.gmra.mxu0 %v4056
  %v4183 = vpop.f32.mrf.mxu0
  %v4184 = vadd.f32 0.0, %v4183
  %v4185 = vpop.f32.mrf.mxu0
  %4186 = vmatprep.mubr.f32.mxu0 0.0
  %4187 = vmatmul.mubr.f32.gmra.mxu0 %v4059
  %v4188 = vpop.f32.mrf.mxu0
  %v4189 = vadd.f32 0.0, %v4188
  %v4190 = vpop.f32.mrf.mxu0
  %4191 = vmatprep.mubr.f32.mxu0 0.0
  %4192 = vmatmul.mubr.f32.gmra.mxu0 %v4062
  %v4193 = vpop.f32.mrf.mxu0
  %v4194 = vadd.f32 0.0, %v4193
  %v4195 = vpop.f32.mrf.mxu0
  %4196 = vmatprep.mubr.f32.mxu0 0.0
  %4197 = vmatmul.mubr.f32.gmra.mxu0 %v4065
  %v4198 = vpop.f32.mrf.mxu0
  %v4199 = vadd.f32 0.0, %v4198
  %v4200 = vpop.f32.mrf.mxu0
  %4201 = vmatprep.mubr.f32.mxu0 0.0
  %4202 = vmatmul.mubr.f32.gmra.mxu0 %v4068
  %v4203 = vpop.f32.mrf.mxu0
  %v4204 = vadd.f32 0.0, %v4203
  %v4205 = vpop.f32.mrf.mxu0
  %4206 = vmatprep.mubr.f32.mxu0 0.0
  %4207 = vmatmul.mubr.f32.gmra.mxu0 %v4071
  %v4208 = vpop.f32.mrf.mxu0
  %v4209 = vadd.f32 0.0, %v4208
  %v4210 = vpop.f32.mrf.mxu0
  %4211 = vmatprep.mubr.f32.mxu0 0.0
  %4212 = vmatmul.mubr.f32.gmra.mxu0 %v4074
  %v4213 = vpop.f32.mrf.mxu0
  %v4214 = vadd.f32 0.0, %v4213
  %v4215 = vpop.f32.mrf.mxu0
  %4216 = vmatprep.mubr.f32.mxu0 0.0
  %4217 = vmatmul.mubr.f32.gmra.mxu0 %v4077
  %v4218 = vpop.f32.mrf.mxu0
  %v4219 = vadd.f32 0.0, %v4218
  %v4220 = vpop.f32.mrf.mxu0
  %4221 = vmatprep.mubr.f32.mxu0 0.0
  %4222 = vmatmul.mubr.f32.gmra.mxu0 %v4080
  %v4223 = vpop.f32.mrf.mxu0
  %v4224 = vadd.f32 0.0, %v4223
  %v4225 = vpop.f32.mrf.mxu0
  %4226 = vdwg.mxu0
  %v4227 = vadd.f32 %v4002, %v4149
  %v4228 = vadd.f32 %v4003, %v4154
  %v4229 = vadd.f32 %v4004, %v4159
  %v4230 = vadd.f32 %v4005, %v4164
  %v4231 = vadd.f32 %v4006, %v4169
  %v4232 = vadd.f32 %v4007, %v4174
  %v4233 = vadd.f32 %v4008, %v4179
  %v4234 = vadd.f32 %v4009, %v4184
  %v4235 = vadd.f32 %v4010, %v4189
  %v4236 = vadd.f32 %v4011, %v4194
  %v4237 = vadd.f32 %v4012, %v4199
  %v4238 = vadd.f32 %v4013, %v4204
  %v4239 = vadd.f32 %v4014, %v4209
  %v4240 = vadd.f32 %v4015, %v4214
  %v4241 = vadd.f32 %v4016, %v4219
  %v4242 = vadd.f32 %v4017, %v4224
  %v4243 = vld [vmem:[%s3792 + $0x2] sm:$0xff]
  %v4244 = vld [vmem:[%s3792 + $0x12] sm:$0xff]
  %v4245 = vld [vmem:[%s3792 + $0x22] sm:$0xff]
  %v4246 = vld [vmem:[%s3792 + $0x32] sm:$0xff]
  %v4247 = vld [vmem:[%s3792 + $0x42] sm:$0xff]
  %v4248 = vld [vmem:[%s3792 + $0x52] sm:$0xff]
  %v4249 = vld [vmem:[%s3792 + $0x62] sm:$0xff]
  %v4250 = vld [vmem:[%s3792 + $0x72] sm:$0xff]
  %v4251 = vld [vmem:[%s3792 + $0xa2] sm:$0xff]
  %v4252 = vld [vmem:[%s3792 + $0xb2] sm:$0xff]
  %v4253 = vld [vmem:[%s3792 + $0xc2] sm:$0xff]
  %v4254 = vld [vmem:[%s3792 + $0xd2] sm:$0xff]
  %v4255 = vld [vmem:[%s3792 + $0xe2] sm:$0xff]
  %v4256 = vld [vmem:[%s3792 + $0xf2] sm:$0xff]
  %v4257 = vld [vmem:[%s3792 + $0x102] sm:$0xff]
  %v4258 = vld [vmem:[%s3792 + $0x112] sm:$0xff]
  %v4260 = vsel %vm2246, %v4243, 0
  %v4263 = vsel %vm2246, %v4244, 0
  %v4266 = vsel %vm2246, %v4245, 0
  %v4269 = vsel %vm2246, %v4246, 0
  %v4272 = vsel %vm2246, %v4247, 0
  %v4275 = vsel %vm2246, %v4248, 0
  %v4278 = vsel %vm2246, %v4249, 0
  %v4281 = vsel %vm2246, %v4250, 0
  %v4284 = vsel %vm2246, %v4251, 0
  %v4287 = vsel %vm2246, %v4252, 0
  %v4290 = vsel %vm2246, %v4253, 0
  %v4293 = vsel %vm2246, %v4254, 0
  %v4296 = vsel %vm2246, %v4255, 0
  %v4299 = vsel %vm2246, %v4256, 0
  %v4302 = vsel %vm2246, %v4257, 0
  %v4305 = vsel %vm2246, %v4258, 0
  %4307 = vmatprep.subr.mxu0 0.0
  %4308 = vmatpush1.msra.mxu0 0.0
  %4309 = vmatprep.subr.mxu0 0.0
  %4310 = vmatpush1.msra.mxu0 0.0
  %4311 = vmatprep.subr.mxu0 0.0
  %4312 = vmatpush1.msra.mxu0 0.0
  %4313 = vmatprep.subr.mxu0 0.0
  %4314 = vmatpush1.msra.mxu0 0.0
  %4315 = vmatprep.subr.mxu0 0.0
  %4316 = vmatpush1.msra.mxu0 0.0
  %4317 = vmatprep.subr.mxu0 0.0
  %4318 = vmatpush1.msra.mxu0 0.0
  %4319 = vmatprep.subr.mxu0 0.0
  %4320 = vmatpush1.msra.mxu0 0.0
  %4321 = vmatprep.subr.mxu0 0.0
  %4322 = vmatpush1.msra.mxu0 0.0
  %4323 = vmatprep.subr.mxu0 0.0
  %4324 = vmatpush1.msra.mxu0 0.0
  %4325 = vmatprep.subr.mxu0 0.0
  %4326 = vmatpush1.msra.mxu0 0.0
  %4327 = vmatprep.subr.mxu0 0.0
  %4328 = vmatpush1.msra.mxu0 0.0
  %4329 = vmatprep.subr.mxu0 0.0
  %4330 = vmatpush1.msra.mxu0 0.0
  %4331 = vmatprep.subr.mxu0 0.0
  %4332 = vmatpush1.msra.mxu0 0.0
  %4333 = vmatprep.subr.mxu0 0.0
  %4334 = vmatpush1.msra.mxu0 0.0
  %4335 = vmatprep.subr.mxu0 0.0
  %4336 = vmatpush1.msra.mxu0 0.0
  %4337 = vmatprep.subr.mxu0 0.0
  %4338 = vmatpush1.msra.mxu0 %v2473
  %4339 = vmatprep.subr.mxu0 0.0
  %4340 = vmatpush2.msra.mxu0 0.0
  %4341 = vmatprep.subr.mxu0 0.0
  %4342 = vmatpush2.msra.mxu0 0.0
  %4343 = vmatprep.subr.mxu0 0.0
  %4344 = vmatpush2.msra.mxu0 0.0
  %4345 = vmatprep.subr.mxu0 0.0
  %4346 = vmatpush2.msra.mxu0 0.0
  %4347 = vmatprep.subr.mxu0 0.0
  %4348 = vmatpush2.msra.mxu0 0.0
  %4349 = vmatprep.subr.mxu0 0.0
  %4350 = vmatpush2.msra.mxu0 0.0
  %4351 = vmatprep.subr.mxu0 0.0
  %4352 = vmatpush2.msra.mxu0 0.0
  %4353 = vmatprep.subr.mxu0 0.0
  %4354 = vmatpush2.msra.mxu0 0.0
  %4355 = vmatprep.subr.mxu0 0.0
  %4356 = vmatpush2.msra.mxu0 0.0
  %4357 = vmatprep.subr.mxu0 0.0
  %4358 = vmatpush2.msra.mxu0 0.0
  %4359 = vmatprep.subr.mxu0 0.0
  %4360 = vmatpush2.msra.mxu0 0.0
  %4361 = vmatprep.subr.mxu0 0.0
  %4362 = vmatpush2.msra.mxu0 0.0
  %4363 = vmatprep.subr.mxu0 0.0
  %4364 = vmatpush2.msra.mxu0 0.0
  %4365 = vmatprep.subr.mxu0 0.0
  %4366 = vmatpush2.msra.mxu0 0.0
  %4367 = vmatprep.subr.mxu0 0.0
  %4368 = vmatpush2.msra.mxu0 0.0
  %4369 = vmatprep.subr.mxu0 0.0
  %4370 = vmatpush2.msra.mxu0 0.0
  %4371 = vmatprep.mubr.f32.mxu0 0.0
  %4372 = vmatmul.mubr.f32.gmra.mxu0 %v4260
  %v4373 = vpop.f32.mrf.mxu0
  %v4374 = vadd.f32 0.0, %v4373
  %v4375 = vpop.f32.mrf.mxu0
  %4376 = vmatprep.mubr.f32.mxu0 0.0
  %4377 = vmatmul.mubr.f32.gmra.mxu0 %v4263
  %v4378 = vpop.f32.mrf.mxu0
  %v4379 = vadd.f32 0.0, %v4378
  %v4380 = vpop.f32.mrf.mxu0
  %4381 = vmatprep.mubr.f32.mxu0 0.0
  %4382 = vmatmul.mubr.f32.gmra.mxu0 %v4266
  %v4383 = vpop.f32.mrf.mxu0
  %v4384 = vadd.f32 0.0, %v4383
  %v4385 = vpop.f32.mrf.mxu0
  %4386 = vmatprep.mubr.f32.mxu0 0.0
  %4387 = vmatmul.mubr.f32.gmra.mxu0 %v4269
  %v4388 = vpop.f32.mrf.mxu0
  %v4389 = vadd.f32 0.0, %v4388
  %v4390 = vpop.f32.mrf.mxu0
  %4391 = vmatprep.mubr.f32.mxu0 0.0
  %4392 = vmatmul.mubr.f32.gmra.mxu0 %v4272
  %v4393 = vpop.f32.mrf.mxu0
  %v4394 = vadd.f32 0.0, %v4393
  %v4395 = vpop.f32.mrf.mxu0
  %4396 = vmatprep.mubr.f32.mxu0 0.0
  %4397 = vmatmul.mubr.f32.gmra.mxu0 %v4275
  %v4398 = vpop.f32.mrf.mxu0
  %v4399 = vadd.f32 0.0, %v4398
  %v4400 = vpop.f32.mrf.mxu0
  %4401 = vmatprep.mubr.f32.mxu0 0.0
  %4402 = vmatmul.mubr.f32.gmra.mxu0 %v4278
  %v4403 = vpop.f32.mrf.mxu0
  %v4404 = vadd.f32 0.0, %v4403
  %v4405 = vpop.f32.mrf.mxu0
  %4406 = vmatprep.mubr.f32.mxu0 0.0
  %4407 = vmatmul.mubr.f32.gmra.mxu0 %v4281
  %v4408 = vpop.f32.mrf.mxu0
  %v4409 = vadd.f32 0.0, %v4408
  %v4410 = vpop.f32.mrf.mxu0
  %4411 = vmatprep.mubr.f32.mxu0 0.0
  %4412 = vmatmul.mubr.f32.gmra.mxu0 %v4284
  %v4413 = vpop.f32.mrf.mxu0
  %v4414 = vadd.f32 0.0, %v4413
  %v4415 = vpop.f32.mrf.mxu0
  %4416 = vmatprep.mubr.f32.mxu0 0.0
  %4417 = vmatmul.mubr.f32.gmra.mxu0 %v4287
  %v4418 = vpop.f32.mrf.mxu0
  %v4419 = vadd.f32 0.0, %v4418
  %v4420 = vpop.f32.mrf.mxu0
  %4421 = vmatprep.mubr.f32.mxu0 0.0
  %4422 = vmatmul.mubr.f32.gmra.mxu0 %v4290
  %v4423 = vpop.f32.mrf.mxu0
  %v4424 = vadd.f32 0.0, %v4423
  %v4425 = vpop.f32.mrf.mxu0
  %4426 = vmatprep.mubr.f32.mxu0 0.0
  %4427 = vmatmul.mubr.f32.gmra.mxu0 %v4293
  %v4428 = vpop.f32.mrf.mxu0
  %v4429 = vadd.f32 0.0, %v4428
  %v4430 = vpop.f32.mrf.mxu0
  %4431 = vmatprep.mubr.f32.mxu0 0.0
  %4432 = vmatmul.mubr.f32.gmra.mxu0 %v4296
  %v4433 = vpop.f32.mrf.mxu0
  %v4434 = vadd.f32 0.0, %v4433
  %v4435 = vpop.f32.mrf.mxu0
  %4436 = vmatprep.mubr.f32.mxu0 0.0
  %4437 = vmatmul.mubr.f32.gmra.mxu0 %v4299
  %v4438 = vpop.f32.mrf.mxu0
  %v4439 = vadd.f32 0.0, %v4438
  %v4440 = vpop.f32.mrf.mxu0
  %4441 = vmatprep.mubr.f32.mxu0 0.0
  %4442 = vmatmul.mubr.f32.gmra.mxu0 %v4302
  %v4443 = vpop.f32.mrf.mxu0
  %v4444 = vadd.f32 0.0, %v4443
  %v4445 = vpop.f32.mrf.mxu0
  %4446 = vmatprep.mubr.f32.mxu0 0.0
  %4447 = vmatmul.mubr.f32.gmra.mxu0 %v4305
  %v4448 = vpop.f32.mrf.mxu0
  %v4449 = vadd.f32 0.0, %v4448
  %v4450 = vpop.f32.mrf.mxu0
  %4451 = vdwg.mxu0
  %v4452 = vadd.f32 %v4227, %v4374
  %v4453 = vadd.f32 %v4228, %v4379
  %v4454 = vadd.f32 %v4229, %v4384
  %v4455 = vadd.f32 %v4230, %v4389
  %v4456 = vadd.f32 %v4231, %v4394
  %v4457 = vadd.f32 %v4232, %v4399
  %v4458 = vadd.f32 %v4233, %v4404
  %v4459 = vadd.f32 %v4234, %v4409
  %v4460 = vadd.f32 %v4235, %v4414
  %v4461 = vadd.f32 %v4236, %v4419
  %v4462 = vadd.f32 %v4237, %v4424
  %v4463 = vadd.f32 %v4238, %v4429
  %v4464 = vadd.f32 %v4239, %v4434
  %v4465 = vadd.f32 %v4240, %v4439
  %v4466 = vadd.f32 %v4241, %v4444
  %v4467 = vadd.f32 %v4242, %v4449
  %v4468 = vld [vmem:[%s5] sm:$0x1]
  %v4469 = vld [vmem:[%s6] sm:$0x1]
  %v4470 = vsel %vm2246, %v4452, 0.0
  %v4471 = vsel %vm2246, %v4453, 0.0
  %v4472 = vadd.f32 %v4470, %v4471
  %v4473 = vsel %vm2246, %v4454, 0.0
  %v4474 = vadd.f32 %v4472, %v4473
  %v4475 = vsel %vm2246, %v4455, 0.0
  %v4476 = vadd.f32 %v4474, %v4475
  %v4477 = vsel %vm2246, %v4456, 0.0
  %v4478 = vadd.f32 %v4476, %v4477
  %v4479 = vsel %vm2246, %v4457, 0.0
  %v4480 = vadd.f32 %v4478, %v4479
  %v4481 = vsel %vm2246, %v4458, 0.0
  %v4482 = vadd.f32 %v4480, %v4481
  %v4483 = vsel %vm2246, %v4459, 0.0
  %v4484 = vadd.f32 %v4482, %v4483
  %v4485 = vsel %vm2246, %v4460, 0.0
  %v4486 = vadd.f32 %v4484, %v4485
  %v4487 = vsel %vm2246, %v4461, 0.0
  %v4488 = vadd.f32 %v4486, %v4487
  %v4489 = vsel %vm2246, %v4462, 0.0
  %v4490 = vadd.f32 %v4488, %v4489
  %v4491 = vsel %vm2246, %v4463, 0.0
  %v4492 = vadd.f32 %v4490, %v4491
  %v4493 = vsel %vm2246, %v4464, 0.0
  %v4494 = vadd.f32 %v4492, %v4493
  %v4495 = vsel %vm2246, %v4465, 0.0
  %v4496 = vadd.f32 %v4494, %v4495
  %v4497 = vsel %vm2246, %v4466, 0.0
  %v4498 = vadd.f32 %v4496, %v4497
  %v4499 = vsel %vm2246, %v4467, 0.0
  %v4500 = vadd.f32 %v4498, %v4499
  %v4501 = vrot.slane %v4500, 4
  %v4502 = vadd.f32 %v4500, %v4501
  %v4503 = vrot.slane %v4502, 2
  %v4504 = vadd.f32 %v4502, %v4503
  %v4505 = vrot.slane %v4504, 1
  %v4506 = vadd.f32 %v4504, %v4505
  %v4507 = vmul.f32 %v4506, 0.0078125
  %v4508 = vmul.f32 %v4452, %v4452
  %v4509 = vmul.f32 %v4453, %v4453
  %v4510 = vmul.f32 %v4454, %v4454
  %v4511 = vmul.f32 %v4455, %v4455
  %v4512 = vmul.f32 %v4456, %v4456
  %v4513 = vmul.f32 %v4457, %v4457
  %v4514 = vmul.f32 %v4458, %v4458
  %v4515 = vmul.f32 %v4459, %v4459
  %v4516 = vmul.f32 %v4460, %v4460
  %v4517 = vmul.f32 %v4461, %v4461
  %v4518 = vmul.f32 %v4462, %v4462
  %v4519 = vmul.f32 %v4463, %v4463
  %v4520 = vmul.f32 %v4464, %v4464
  %v4521 = vmul.f32 %v4465, %v4465
  %v4522 = vmul.f32 %v4466, %v4466
  %v4523 = vmul.f32 %v4467, %v4467
  %v4524 = vsel %vm2246, %v4508, 0.0
  %v4525 = vsel %vm2246, %v4509, 0.0
  %v4526 = vadd.f32 %v4524, %v4525
  %v4527 = vsel %vm2246, %v4510, 0.0
  %v4528 = vadd.f32 %v4526, %v4527
  %v4529 = vsel %vm2246, %v4511, 0.0
  %v4530 = vadd.f32 %v4528, %v4529
  %v4531 = vsel %vm2246, %v4512, 0.0
  %v4532 = vadd.f32 %v4530, %v4531
  %v4533 = vsel %vm2246, %v4513, 0.0
  %v4534 = vadd.f32 %v4532, %v4533
  %v4535 = vsel %vm2246, %v4514, 0.0
  %v4536 = vadd.f32 %v4534, %v4535
  %v4537 = vsel %vm2246, %v4515, 0.0
  %v4538 = vadd.f32 %v4536, %v4537
  %v4539 = vsel %vm2246, %v4516, 0.0
  %v4540 = vadd.f32 %v4538, %v4539
  %v4541 = vsel %vm2246, %v4517, 0.0
  %v4542 = vadd.f32 %v4540, %v4541
  %v4543 = vsel %vm2246, %v4518, 0.0
  %v4544 = vadd.f32 %v4542, %v4543
  %v4545 = vsel %vm2246, %v4519, 0.0
  %v4546 = vadd.f32 %v4544, %v4545
  %v4547 = vsel %vm2246, %v4520, 0.0
  %v4548 = vadd.f32 %v4546, %v4547
  %v4549 = vsel %vm2246, %v4521, 0.0
  %v4550 = vadd.f32 %v4548, %v4549
  %v4551 = vsel %vm2246, %v4522, 0.0
  %v4552 = vadd.f32 %v4550, %v4551
  %v4553 = vsel %vm2246, %v4523, 0.0
  %v4554 = vadd.f32 %v4552, %v4553
  %v4555 = vrot.slane %v4554, 4
  %v4556 = vadd.f32 %v4554, %v4555
  %v4557 = vrot.slane %v4556, 2
  %v4558 = vadd.f32 %v4556, %v4557
  %v4559 = vrot.slane %v4558, 1
  %v4560 = vadd.f32 %v4558, %v4559
  %v4561 = vmul.f32 %v4560, 0.0078125
  %v4562 = vmul.f32 %v4507, %v4507
  %v4563 = vsub.f32 %v4561, %v4562
  %v4564 = vmax.f32 %v4563, 0.0
  %v4565 = vadd.f32 %v4564, 1e-05
  %v4566 = vrsqrt.pop %v4565
  %v4567 = vmul.f32 %v4468, %v4566
  %v4568 = vmul.f32 %v4507, %v4567
  %v4569 = vsub.f32 %v4469, %v4568
  %v4571 = vlaneseq
  %v4572 = vshrl.u32 %v4571, 7
  %v4573 = vsub.s32 0, %v4572
  %v4574 = vrot.slane %v4567, %v4573
  %v4576 = vmul.f32 %v4452, %v4574
  %v4577 = vmul.f32 %v4453, %v4574
  %v4578 = vmul.f32 %v4454, %v4574
  %v4579 = vmul.f32 %v4455, %v4574
  %v4580 = vmul.f32 %v4456, %v4574
  %v4581 = vmul.f32 %v4457, %v4574
  %v4582 = vmul.f32 %v4458, %v4574
  %v4583 = vmul.f32 %v4459, %v4574
  %v4584 = vmul.f32 %v4460, %v4574
  %v4585 = vmul.f32 %v4461, %v4574
  %v4586 = vmul.f32 %v4462, %v4574
  %v4587 = vmul.f32 %v4463, %v4574
  %v4588 = vmul.f32 %v4464, %v4574
  %v4589 = vmul.f32 %v4465, %v4574
  %v4590 = vmul.f32 %v4466, %v4574
  %v4591 = vmul.f32 %v4467, %v4574
  %v4593 = vlaneseq
  %v4594 = vshrl.u32 %v4593, 7
  %v4595 = vsub.s32 0, %v4594
  %v4596 = vrot.slane %v4569, %v4595
  %v4598 = vadd.f32 %v4576, %v4596
  %v4599 = vadd.f32 %v4577, %v4596
  %v4600 = vadd.f32 %v4578, %v4596
  %v4601 = vadd.f32 %v4579, %v4596
  %v4602 = vadd.f32 %v4580, %v4596
  %v4603 = vadd.f32 %v4581, %v4596
  %v4604 = vadd.f32 %v4582, %v4596
  %v4605 = vadd.f32 %v4583, %v4596
  %v4606 = vadd.f32 %v4584, %v4596
  %v4607 = vadd.f32 %v4585, %v4596
  %v4608 = vadd.f32 %v4586, %v4596
  %v4609 = vadd.f32 %v4587, %v4596
  %v4610 = vadd.f32 %v4588, %v4596
  %v4611 = vadd.f32 %v4589, %v4596
  %v4612 = vadd.f32 %v4590, %v4596
  %v4613 = vadd.f32 %v4591, %v4596
  %v4614 = vmax.f32 %v4598, 0.0
  %v4615 = vmax.f32 %v4599, 0.0
  %v4616 = vmax.f32 %v4600, 0.0
  %v4617 = vmax.f32 %v4601, 0.0
  %v4618 = vmax.f32 %v4602, 0.0
  %v4619 = vmax.f32 %v4603, 0.0
  %v4620 = vmax.f32 %v4604, 0.0
  %v4621 = vmax.f32 %v4605, 0.0
  %v4622 = vmax.f32 %v4606, 0.0
  %v4623 = vmax.f32 %v4607, 0.0
  %v4624 = vmax.f32 %v4608, 0.0
  %v4625 = vmax.f32 %v4609, 0.0
  %v4626 = vmax.f32 %v4610, 0.0
  %v4627 = vmax.f32 %v4611, 0.0
  %v4628 = vmax.f32 %v4612, 0.0
  %v4629 = vmax.f32 %v4613, 0.0
  %4630 = vst.msk [vmem:[%s7] sm:$0xff] %vm2246, %v4614
  %4631 = vst.msk [vmem:[%s7 + $0x8] sm:$0xff] %vm2246, %v4615
  %4632 = vst.msk [vmem:[%s7 + $0x10] sm:$0xff] %vm2246, %v4616
  %4633 = vst.msk [vmem:[%s7 + $0x18] sm:$0xff] %vm2246, %v4617
  %4634 = vst.msk [vmem:[%s7 + $0x20] sm:$0xff] %vm2246, %v4618
  %4635 = vst.msk [vmem:[%s7 + $0x28] sm:$0xff] %vm2246, %v4619
  %4636 = vst.msk [vmem:[%s7 + $0x30] sm:$0xff] %vm2246, %v4620
  %4637 = vst.msk [vmem:[%s7 + $0x38] sm:$0xff] %vm2246, %v4621
  %4638 = vst.msk [vmem:[%s7 + $0x40] sm:$0xff] %vm2246, %v4622
  %4639 = vst.msk [vmem:[%s7 + $0x48] sm:$0xff] %vm2246, %v4623
  %4640 = vst.msk [vmem:[%s7 + $0x50] sm:$0xff] %vm2246, %v4624
  %4641 = vst.msk [vmem:[%s7 + $0x58] sm:$0xff] %vm2246, %v4625
  %4642 = vst.msk [vmem:[%s7 + $0x60] sm:$0xff] %vm2246, %v4626
  %4643 = vst.msk [vmem:[%s7 + $0x68] sm:$0xff] %vm2246, %v4627
  %4644 = vst.msk [vmem:[%s7 + $0x70] sm:$0xff] %vm2246, %v4628
  %4645 = vst.msk [vmem:[%s7 + $0x78] sm:$0xff] %vm2246, %v4629
  // Predicated region
  $region30: #{encoder_forward.3} parent=0 // pred_check
    _
  $region31: #{encoder_forward.3} parent=0 // pred_check_branch
    %4647 = sbr.rel (0) target = $region33
  $region32: #{encoder_forward.3} parent=0 // pred_region
    _
  $region33: #{encoder_forward.3} parent=0 // pred_fallthru
    _
  // Predicated region
  $region34: #{encoder_forward.3} parent=0 // pred_check
    _
  $region35: #{encoder_forward.3} parent=0 // pred_check_branch
    %4649 = sbr.rel (0) target = $region37
  $region36: #{encoder_forward.3} parent=0 // pred_region
    _
  $region37: #{encoder_forward.3} parent=0 // pred_fallthru
    _

</llo_original>
